<compile_context>
chip_gen: v7x
topology: tpu7x:2x2x1
jax: 0.10.0
libtpu: 0.0.40
codegen_flags: <defaults>
</compile_context>

<pallas_src>
import functools

import jax
import jax.numpy as jnp
from jax.experimental import pallas as pl
from jax.experimental.pallas import tpu as pltpu


# ----------------------------- Pallas kernel ------------------------------- #

def _conv_fused_kernel(p_ref, w_ref, b_ref, o_ref, *, apply_norm, apply_lrelu):
    """One sample: im2col patches [HW, K] (bf16) @ weights [K, Cp] (bf16)
    -> f32 accumulate, + bias, optional InstanceNorm (per-channel over HW,
    biased variance, eps=1e-5), optional LeakyReLU(0.2)."""
    x = p_ref[...]                                        # [HW, K]  bf16
    y = jnp.dot(x, w_ref[...], preferred_element_type=jnp.float32)  # [HW, Cp] f32
    y = y + b_ref[...]                                    # bias broadcast [1, Cp]
    if apply_norm:
        mean = jnp.mean(y, axis=0, keepdims=True)         # stats in f32
        var = jnp.mean((y - mean) ** 2, axis=0, keepdims=True)
        y = (y - mean) * jax.lax.rsqrt(var + 1e-5)
    if apply_lrelu:
        y = jnp.where(y >= 0, y, 0.2 * y)
    o_ref[...] = y.astype(o_ref.dtype)


def _conv_fused(patches, w_mat, bias_row, *, apply_norm, apply_lrelu, out_dtype):
    """patches: [N, HW, K] bf16; w_mat: [K, Cp] bf16; bias_row: [1, Cp] f32."""
    N, HW, K = patches.shape
    Cp = w_mat.shape[1]
    kern = functools.partial(
        _conv_fused_kernel, apply_norm=apply_norm, apply_lrelu=apply_lrelu)
    return pl.pallas_call(
        kern,
        out_shape=jax.ShapeDtypeStruct((N, HW, Cp), out_dtype),
        grid=(N,),
        in_specs=[
            pl.BlockSpec((None, HW, K), lambda n: (n, 0, 0)),   # per-sample patches
            pl.BlockSpec((K, Cp), lambda n: (0, 0)),            # weights (resident)
            pl.BlockSpec((1, Cp), lambda n: (0, 0)),            # bias (resident)
        ],
        out_specs=pl.BlockSpec((None, HW, Cp), lambda n: (n, 0, 0)),
        compiler_params=pltpu.CompilerParams(
            dimension_semantics=("parallel",),          # shard batch over TCs
            vmem_limit_bytes=48 * 1024 * 1024,          # fits v7x's 64 MiB VMEM
        ),
    )(patches, w_mat, bias_row)


# ------------------------------ Conv plumbing ------------------------------ #

def _im2col(x_nhwc, kh, kw, stride, pad):
    """Extract conv patches -> [N, Ho*Wo, kh*kw*C] (channels fastest).

    XLA-side glue; hot path (matmul/norm/act) is in the Pallas kernel.
    """
    N, H, W, C = x_nhwc.shape
    xp = jnp.pad(x_nhwc, ((0, 0), (pad, pad), (pad, pad), (0, 0)))
    Ho = (H + 2 * pad - kh) // stride + 1
    Wo = (W + 2 * pad - kw) // stride + 1
    cols = []
    for i in range(kh):
        for j in range(kw):
            cols.append(xp[:, i:i + stride * (Ho - 1) + 1:stride,
                              j:j + stride * (Wo - 1) + 1:stride, :])  # [N,Ho,Wo,C]
    patches = jnp.stack(cols, axis=3)                    # [N,Ho,Wo,kh*kw,C]
    return patches.reshape(N, Ho * Wo, kh * kw * C), (Ho, Wo)


# ----------------------------- Model definition ---------------------------- #

def _round_up(x, m):
    return ((x + m - 1) // m) * m


def init_params(key, input_nc, ndf, init_gain=0.02):
    """Raw PatchGAN (n_layers=3) parameters; weights N(0, init_gain), bias 0.
    Layout matches PyTorch Conv2d: [Cout, Cin, kh, kw]."""
    chans = [input_nc, ndf, ndf * 2, ndf * 4, ndf * 8, 1]
    params = []
    for li in range(5):
        key, sub = jax.random.split(key)
        w = init_gain * jax.random.normal(
            sub, (chans[li + 1], chans[li], 4, 4), dtype=jnp.float32)
        b = jnp.zeros((chans[li + 1],), dtype=jnp.float32)
        params.append((w, b))
    return params


def pack_params(raw_params, input_nc):
    """Pre-pack weights ONCE: transpose to (kh,kw,Cin,Cout), zero-pad input
    channels to the previous layer's padded width and output channels to a
    multiple of 128 (lane-dense MXU/store), flatten to [K, Cp] bf16."""
    packed = []
    cin_pad = input_nc                       # layer-0 input channels not padded
    for (w, b) in raw_params:
        cout, cin, kh, kw = w.shape
        cout_pad = _round_up(cout, 128)
        w_t = jnp.transpose(w, (2, 3, 1, 0))                     # [kh,kw,cin,cout]
        w_t = jnp.pad(w_t, ((0, 0), (0, 0),
                            (0, cin_pad - cin), (0, cout_pad - cout)))
        w_mat = w_t.reshape(kh * kw * cin_pad, cout_pad).astype(jnp.bfloat16)
        b_row = jnp.pad(b, (0, cout_pad - cout)).reshape(1, cout_pad)
        b_row = b_row.astype(jnp.float32)
        packed.append((w_mat, b_row))
        cin_pad = cout_pad                  # next layer sees padded activations
    return packed


# (stride, instance_norm, leaky_relu) per layer
_LAYERS = (
    (2, False, True),
    (2, True, True),
    (2, True, True),
    (1, True, True),
    (1, False, False),
)


def define_d_forward(x_nchw, packed_params):
    """Forward of Define_D(netD='basic', norm='instance'). Input/output NCHW."""
    x = jnp.transpose(x_nchw, (0, 2, 3, 1)).astype(jnp.bfloat16)   # -> NHWC bf16
    n = x.shape[0]
    n_layers = len(_LAYERS)
    for li, ((stride, norm, act), (w_mat, b_row)) in enumerate(
            zip(_LAYERS, packed_params)):
        patches, (Ho, Wo) = _im2col(x, 4, 4, stride, 1)
        last = li == n_layers - 1
        y = _conv_fused(patches, w_mat, b_row,
                        apply_norm=norm, apply_lrelu=act,
                        out_dtype=jnp.float32 if last else jnp.bfloat16)
        x = y.reshape(n, Ho, Wo, y.shape[-1])
    # Final layer has true Cout=1 (padded to 128 with zero columns): take col 0.
    logits = x[..., 0:1]                                  # [N, Ho, Wo, 1]
    return jnp.transpose(logits, (0, 3, 1, 2))            # -> NCHW [N,1,Ho,Wo]


# ---------------------------------- Main ------------------------------------ #

if __name__ == "__main__":
    key = jax.random.PRNGKey(0)
    k_x, k_p = jax.random.split(key)

    # Small shapes consistent with the module: batch=2, input_nc=4, ndf=8.
    # Spatial must be >= 32 to survive three stride-2 convs + two k4 s1 p1 convs.
    N, input_nc, H, W = 2, 4, 32, 32
    ndf = 8

    x = jax.random.normal(k_x, (N, input_nc, H, W), dtype=jnp.float32)
    raw_params = init_params(k_p, input_nc, ndf)
    packed = pack_params(raw_params, input_nc)   # pre-pack once, outside forward

    fwd = jax.jit(define_d_forward)
    out = fwd(x, packed)
    jax.block_until_ready(out)

    assert out.shape == (N, 1, 2, 2), out.shape
    assert bool(jnp.all(jnp.isfinite(out)))
    print("KERNEL_OK")
</pallas_src>

<mosaic_0001>
module attributes {stable_mosaic.version = 11 : i64} {
  func.func @_conv_fused_kernel(%arg0: i32, %arg1: memref<1x256x64xbf16, #tpu.memory_space<vmem>>, %arg2: memref<64x128xbf16, #tpu.memory_space<vmem>>, %arg3: memref<1x128xf32, #tpu.memory_space<vmem>>, %arg4: memref<1x256x128xbf16, #tpu.memory_space<vmem>>) attributes {dimension_semantics = [#tpu.dimension_semantics<parallel>], iteration_bounds = array<i64: 2>, scalar_prefetch = 0 : i64, scratch_operands = 0 : i64, tpu.core_type = #tpu.core_type<tc>, window_params = [{transform_indices = @transform_0, window_bounds = array<i64: 1, 256, 64>}, {pipeline_mode = #tpu.pipeline_mode<synchronous>, transform_indices = @transform_1, window_bounds = array<i64: 64, 128>}, {pipeline_mode = #tpu.pipeline_mode<synchronous>, transform_indices = @transform_2, window_bounds = array<i64: 1, 128>}, {transform_indices = @transform_3, window_bounds = array<i64: 1, 256, 128>}]} {
    %c0 = arith.constant 0 : index
    %c0_0 = arith.constant 0 : index
    %c0_1 = arith.constant 0 : index
    %0 = vector.load %arg1[%c0, %c0_0, %c0_1] : memref<1x256x64xbf16, #tpu.memory_space<vmem>>, vector<1x256x64xbf16>
    %1 = vector.shape_cast %0 : vector<1x256x64xbf16> to vector<256x64xbf16>
    %c0_2 = arith.constant 0 : index
    %c0_3 = arith.constant 0 : index
    %2 = vector.load %arg2[%c0_2, %c0_3] : memref<64x128xbf16, #tpu.memory_space<vmem>>, vector<64x128xbf16>
    %cst = arith.constant dense<0.000000e+00> : vector<256x128xf32>
    %3 = tpu.matmul %1, %2, %cst {dimension_numbers = #tpu.dot_dimension_numbers<[1], [0], [0], [1], [0, 0, 1, 1], [], []>} : vector<256x64xbf16>, vector<64x128xbf16>, vector<256x128xf32> -> vector<256x128xf32>
    %c0_4 = arith.constant 0 : index
    %c0_5 = arith.constant 0 : index
    %4 = vector.load %arg3[%c0_4, %c0_5] : memref<1x128xf32, #tpu.memory_space<vmem>>, vector<1x128xf32>
    %5 = vector.broadcast %4 : vector<1x128xf32> to vector<256x128xf32>
    %6 = arith.addf %3, %5 : vector<256x128xf32>
    %cst_6 = arith.constant 0.000000e+00 : f32
    %7 = vector.broadcast %cst_6 : f32 to vector<256x128xf32>
    %8 = arith.cmpf oge, %6, %7 : vector<256x128xf32>
    %cst_7 = arith.constant 2.000000e-01 : f32
    %9 = vector.broadcast %cst_7 : f32 to vector<256x128xf32>
    %10 = arith.mulf %9, %6 : vector<256x128xf32>
    %11 = arith.select %8, %6, %10 : vector<256x128xi1>, vector<256x128xf32>
    %12 = arith.truncf %11 : vector<256x128xf32> to vector<256x128xbf16>
    %c0_8 = arith.constant 0 : index
    %c0_9 = arith.constant 0 : index
    %c0_10 = arith.constant 0 : index
    %13 = vector.load %arg4[%c0_8, %c0_9, %c0_10] : memref<1x256x128xbf16, #tpu.memory_space<vmem>>, vector<1x256x128xbf16>
    %14 = vector.shape_cast %13 : vector<1x256x128xbf16> to vector<256x128xbf16>
    %15 = vector.shape_cast %12 : vector<256x128xbf16> to vector<1x256x128xbf16>
    tpu.vector_store %arg4[%c0_8, %c0_9, %c0_10], %15 {strides = array<i32>} : memref<1x256x128xbf16, #tpu.memory_space<vmem>>, vector<1x256x128xbf16>,
    return
  }
  func.func @transform_0(%arg0: i32) -> (i32, i32, i32) {
    %c0_i32 = arith.constant 0 : i32
    %c0_i32_0 = arith.constant 0 : i32
    %c0_i32_1 = arith.constant 0 : i32
    return %arg0, %c0_i32, %c0_i32_0 : i32, i32, i32
  }
  func.func @transform_1(%arg0: i32) -> (i32, i32) {
    %c0_i32 = arith.constant 0 : i32
    %c0_i32_0 = arith.constant 0 : i32
    %c0_i32_1 = arith.constant 0 : i32
    return %c0_i32, %c0_i32_0 : i32, i32
  }
  func.func @transform_2(%arg0: i32) -> (i32, i32) {
    %c0_i32 = arith.constant 0 : i32
    %c0_i32_0 = arith.constant 0 : i32
    %c0_i32_1 = arith.constant 0 : i32
    return %c0_i32, %c0_i32_0 : i32, i32
  }
  func.func @transform_3(%arg0: i32) -> (i32, i32, i32) {
    %c0_i32 = arith.constant 0 : i32
    %c0_i32_0 = arith.constant 0 : i32
    %c0_i32_1 = arith.constant 0 : i32
    return %arg0, %c0_i32, %c0_i32_0 : i32, i32, i32
  }
}

module attributes {stable_mosaic.version = 11 : i64} {
  func.func @_conv_fused_kernel(%arg0: i32, %arg1: memref<1x64x2048xbf16, #tpu.memory_space<vmem>>, %arg2: memref<2048x128xbf16, #tpu.memory_space<vmem>>, %arg3: memref<1x128xf32, #tpu.memory_space<vmem>>, %arg4: memref<1x64x128xbf16, #tpu.memory_space<vmem>>) attributes {dimension_semantics = [#tpu.dimension_semantics<parallel>], iteration_bounds = array<i64: 2>, scalar_prefetch = 0 : i64, scratch_operands = 0 : i64, tpu.core_type = #tpu.core_type<tc>, window_params = [{transform_indices = @transform_0, window_bounds = array<i64: 1, 64, 2048>}, {pipeline_mode = #tpu.pipeline_mode<synchronous>, transform_indices = @transform_1, window_bounds = array<i64: 2048, 128>}, {pipeline_mode = #tpu.pipeline_mode<synchronous>, transform_indices = @transform_2, window_bounds = array<i64: 1, 128>}, {transform_indices = @transform_3, window_bounds = array<i64: 1, 64, 128>}]} {
    %c0 = arith.constant 0 : index
    %c0_0 = arith.constant 0 : index
    %c0_1 = arith.constant 0 : index
    %0 = vector.load %arg1[%c0, %c0_0, %c0_1] : memref<1x64x2048xbf16, #tpu.memory_space<vmem>>, vector<1x64x2048xbf16>
    %1 = vector.shape_cast %0 : vector<1x64x2048xbf16> to vector<64x2048xbf16>
    %c0_2 = arith.constant 0 : index
    %c0_3 = arith.constant 0 : index
    %2 = vector.load %arg2[%c0_2, %c0_3] : memref<2048x128xbf16, #tpu.memory_space<vmem>>, vector<2048x128xbf16>
    %cst = arith.constant dense<0.000000e+00> : vector<64x128xf32>
    %3 = tpu.matmul %1, %2, %cst {dimension_numbers = #tpu.dot_dimension_numbers<[1], [0], [0], [1], [0, 0, 1, 1], [], []>} : vector<64x2048xbf16>, vector<2048x128xbf16>, vector<64x128xf32> -> vector<64x128xf32>
    %c0_4 = arith.constant 0 : index
    %c0_5 = arith.constant 0 : index
    %4 = vector.load %arg3[%c0_4, %c0_5] : memref<1x128xf32, #tpu.memory_space<vmem>>, vector<1x128xf32>
    %5 = vector.broadcast %4 : vector<1x128xf32> to vector<64x128xf32>
    %6 = arith.addf %3, %5 : vector<64x128xf32>
    %cst_6 = arith.constant dense<0.000000e+00> : vector<128xf32>
    %7 = vector.multi_reduction <add>, %6, %cst_6 [0] : vector<64x128xf32> to vector<128xf32>
    %8 = vector.shape_cast %7 : vector<128xf32> to vector<1x128xf32>
    %cst_7 = arith.constant 6.400000e+01 : f32
    %9 = vector.broadcast %cst_7 : f32 to vector<1x128xf32>
    %10 = arith.divf %8, %9 : vector<1x128xf32>
    %11 = vector.broadcast %10 : vector<1x128xf32> to vector<64x128xf32>
    %12 = arith.subf %6, %11 : vector<64x128xf32>
    %13 = arith.mulf %12, %12 : vector<64x128xf32>
    %cst_8 = arith.constant dense<0.000000e+00> : vector<128xf32>
    %14 = vector.multi_reduction <add>, %13, %cst_8 [0] : vector<64x128xf32> to vector<128xf32>
    %15 = vector.shape_cast %14 : vector<128xf32> to vector<1x128xf32>
    %cst_9 = arith.constant 6.400000e+01 : f32
    %16 = vector.broadcast %cst_9 : f32 to vector<1x128xf32>
    %17 = arith.divf %15, %16 : vector<1x128xf32>
    %18 = vector.broadcast %10 : vector<1x128xf32> to vector<64x128xf32>
    %19 = arith.subf %6, %18 : vector<64x128xf32>
    %cst_10 = arith.constant 9.99999974E-6 : f32
    %20 = vector.broadcast %cst_10 : f32 to vector<1x128xf32>
    %21 = arith.addf %17, %20 : vector<1x128xf32>
    %22 = math.rsqrt %21 : vector<1x128xf32>
    %23 = vector.broadcast %22 : vector<1x128xf32> to vector<64x128xf32>
    %24 = arith.mulf %19, %23 : vector<64x128xf32>
    %cst_11 = arith.constant 0.000000e+00 : f32
    %25 = vector.broadcast %cst_11 : f32 to vector<64x128xf32>
    %26 = arith.cmpf oge, %24, %25 : vector<64x128xf32>
    %cst_12 = arith.constant 2.000000e-01 : f32
    %27 = vector.broadcast %cst_12 : f32 to vector<64x128xf32>
    %28 = arith.mulf %27, %24 : vector<64x128xf32>
    %29 = arith.select %26, %24, %28 : vector<64x128xi1>, vector<64x128xf32>
    %30 = arith.truncf %29 : vector<64x128xf32> to vector<64x128xbf16>
    %c0_13 = arith.constant 0 : index
    %c0_14 = arith.constant 0 : index
    %c0_15 = arith.constant 0 : index
    %31 = vector.load %arg4[%c0_13, %c0_14, %c0_15] : memref<1x64x128xbf16, #tpu.memory_space<vmem>>, vector<1x64x128xbf16>
    %32 = vector.shape_cast %31 : vector<1x64x128xbf16> to vector<64x128xbf16>
    %33 = vector.shape_cast %30 : vector<64x128xbf16> to vector<1x64x128xbf16>
    tpu.vector_store %arg4[%c0_13, %c0_14, %c0_15], %33 {strides = array<i32>} : memref<1x64x128xbf16, #tpu.memory_space<vmem>>, vector<1x64x128xbf16>,
    return
  }
  func.func @transform_0(%arg0: i32) -> (i32, i32, i32) {
    %c0_i32 = arith.constant 0 : i32
    %c0_i32_0 = arith.constant 0 : i32
    %c0_i32_1 = arith.constant 0 : i32
    return %arg0, %c0_i32, %c0_i32_0 : i32, i32, i32
  }
  func.func @transform_1(%arg0: i32) -> (i32, i32) {
    %c0_i32 = arith.constant 0 : i32
    %c0_i32_0 = arith.constant 0 : i32
    %c0_i32_1 = arith.constant 0 : i32
    return %c0_i32, %c0_i32_0 : i32, i32
  }
  func.func @transform_2(%arg0: i32) -> (i32, i32) {
    %c0_i32 = arith.constant 0 : i32
    %c0_i32_0 = arith.constant 0 : i32
    %c0_i32_1 = arith.constant 0 : i32
    return %c0_i32, %c0_i32_0 : i32, i32
  }
  func.func @transform_3(%arg0: i32) -> (i32, i32, i32) {
    %c0_i32 = arith.constant 0 : i32
    %c0_i32_0 = arith.constant 0 : i32
    %c0_i32_1 = arith.constant 0 : i32
    return %arg0, %c0_i32, %c0_i32_0 : i32, i32, i32
  }
}

module attributes {stable_mosaic.version = 11 : i64} {
  func.func @_conv_fused_kernel(%arg0: i32, %arg1: memref<1x16x2048xbf16, #tpu.memory_space<vmem>>, %arg2: memref<2048x128xbf16, #tpu.memory_space<vmem>>, %arg3: memref<1x128xf32, #tpu.memory_space<vmem>>, %arg4: memref<1x16x128xbf16, #tpu.memory_space<vmem>>) attributes {dimension_semantics = [#tpu.dimension_semantics<parallel>], iteration_bounds = array<i64: 2>, scalar_prefetch = 0 : i64, scratch_operands = 0 : i64, tpu.core_type = #tpu.core_type<tc>, window_params = [{transform_indices = @transform_0, window_bounds = array<i64: 1, 16, 2048>}, {pipeline_mode = #tpu.pipeline_mode<synchronous>, transform_indices = @transform_1, window_bounds = array<i64: 2048, 128>}, {pipeline_mode = #tpu.pipeline_mode<synchronous>, transform_indices = @transform_2, window_bounds = array<i64: 1, 128>}, {transform_indices = @transform_3, window_bounds = array<i64: 1, 16, 128>}]} {
    %c0 = arith.constant 0 : index
    %c0_0 = arith.constant 0 : index
    %c0_1 = arith.constant 0 : index
    %0 = vector.load %arg1[%c0, %c0_0, %c0_1] : memref<1x16x2048xbf16, #tpu.memory_space<vmem>>, vector<1x16x2048xbf16>
    %1 = vector.shape_cast %0 : vector<1x16x2048xbf16> to vector<16x2048xbf16>
    %c0_2 = arith.constant 0 : index
    %c0_3 = arith.constant 0 : index
    %2 = vector.load %arg2[%c0_2, %c0_3] : memref<2048x128xbf16, #tpu.memory_space<vmem>>, vector<2048x128xbf16>
    %cst = arith.constant dense<0.000000e+00> : vector<16x128xf32>
    %3 = tpu.matmul %1, %2, %cst {dimension_numbers = #tpu.dot_dimension_numbers<[1], [0], [0], [1], [0, 0, 1, 1], [], []>} : vector<16x2048xbf16>, vector<2048x128xbf16>, vector<16x128xf32> -> vector<16x128xf32>
    %c0_4 = arith.constant 0 : index
    %c0_5 = arith.constant 0 : index
    %4 = vector.load %arg3[%c0_4, %c0_5] : memref<1x128xf32, #tpu.memory_space<vmem>>, vector<1x128xf32>
    %5 = vector.broadcast %4 : vector<1x128xf32> to vector<16x128xf32>
    %6 = arith.addf %3, %5 : vector<16x128xf32>
    %cst_6 = arith.constant dense<0.000000e+00> : vector<128xf32>
    %7 = vector.multi_reduction <add>, %6, %cst_6 [0] : vector<16x128xf32> to vector<128xf32>
    %8 = vector.shape_cast %7 : vector<128xf32> to vector<1x128xf32>
    %cst_7 = arith.constant 1.600000e+01 : f32
    %9 = vector.broadcast %cst_7 : f32 to vector<1x128xf32>
    %10 = arith.divf %8, %9 : vector<1x128xf32>
    %11 = vector.broadcast %10 : vector<1x128xf32> to vector<16x128xf32>
    %12 = arith.subf %6, %11 : vector<16x128xf32>
    %13 = arith.mulf %12, %12 : vector<16x128xf32>
    %cst_8 = arith.constant dense<0.000000e+00> : vector<128xf32>
    %14 = vector.multi_reduction <add>, %13, %cst_8 [0] : vector<16x128xf32> to vector<128xf32>
    %15 = vector.shape_cast %14 : vector<128xf32> to vector<1x128xf32>
    %cst_9 = arith.constant 1.600000e+01 : f32
    %16 = vector.broadcast %cst_9 : f32 to vector<1x128xf32>
    %17 = arith.divf %15, %16 : vector<1x128xf32>
    %18 = vector.broadcast %10 : vector<1x128xf32> to vector<16x128xf32>
    %19 = arith.subf %6, %18 : vector<16x128xf32>
    %cst_10 = arith.constant 9.99999974E-6 : f32
    %20 = vector.broadcast %cst_10 : f32 to vector<1x128xf32>
    %21 = arith.addf %17, %20 : vector<1x128xf32>
    %22 = math.rsqrt %21 : vector<1x128xf32>
    %23 = vector.broadcast %22 : vector<1x128xf32> to vector<16x128xf32>
    %24 = arith.mulf %19, %23 : vector<16x128xf32>
    %cst_11 = arith.constant 0.000000e+00 : f32
    %25 = vector.broadcast %cst_11 : f32 to vector<16x128xf32>
    %26 = arith.cmpf oge, %24, %25 : vector<16x128xf32>
    %cst_12 = arith.constant 2.000000e-01 : f32
    %27 = vector.broadcast %cst_12 : f32 to vector<16x128xf32>
    %28 = arith.mulf %27, %24 : vector<16x128xf32>
    %29 = arith.select %26, %24, %28 : vector<16x128xi1>, vector<16x128xf32>
    %30 = arith.truncf %29 : vector<16x128xf32> to vector<16x128xbf16>
    %c0_13 = arith.constant 0 : index
    %c0_14 = arith.constant 0 : index
    %c0_15 = arith.constant 0 : index
    %31 = vector.load %arg4[%c0_13, %c0_14, %c0_15] : memref<1x16x128xbf16, #tpu.memory_space<vmem>>, vector<1x16x128xbf16>
    %32 = vector.shape_cast %31 : vector<1x16x128xbf16> to vector<16x128xbf16>
    %33 = vector.shape_cast %30 : vector<16x128xbf16> to vector<1x16x128xbf16>
    tpu.vector_store %arg4[%c0_13, %c0_14, %c0_15], %33 {strides = array<i32>} : memref<1x16x128xbf16, #tpu.memory_space<vmem>>, vector<1x16x128xbf16>,
    return
  }
  func.func @transform_0(%arg0: i32) -> (i32, i32, i32) {
    %c0_i32 = arith.constant 0 : i32
    %c0_i32_0 = arith.constant 0 : i32
    %c0_i32_1 = arith.constant 0 : i32
    return %arg0, %c0_i32, %c0_i32_0 : i32, i32, i32
  }
  func.func @transform_1(%arg0: i32) -> (i32, i32) {
    %c0_i32 = arith.constant 0 : i32
    %c0_i32_0 = arith.constant 0 : i32
    %c0_i32_1 = arith.constant 0 : i32
    return %c0_i32, %c0_i32_0 : i32, i32
  }
  func.func @transform_2(%arg0: i32) -> (i32, i32) {
    %c0_i32 = arith.constant 0 : i32
    %c0_i32_0 = arith.constant 0 : i32
    %c0_i32_1 = arith.constant 0 : i32
    return %c0_i32, %c0_i32_0 : i32, i32
  }
  func.func @transform_3(%arg0: i32) -> (i32, i32, i32) {
    %c0_i32 = arith.constant 0 : i32
    %c0_i32_0 = arith.constant 0 : i32
    %c0_i32_1 = arith.constant 0 : i32
    return %arg0, %c0_i32, %c0_i32_0 : i32, i32, i32
  }
}

module attributes {stable_mosaic.version = 11 : i64} {
  func.func @_conv_fused_kernel(%arg0: i32, %arg1: memref<1x9x2048xbf16, #tpu.memory_space<vmem>>, %arg2: memref<2048x128xbf16, #tpu.memory_space<vmem>>, %arg3: memref<1x128xf32, #tpu.memory_space<vmem>>, %arg4: memref<1x9x128xbf16, #tpu.memory_space<vmem>>) attributes {dimension_semantics = [#tpu.dimension_semantics<parallel>], iteration_bounds = array<i64: 2>, scalar_prefetch = 0 : i64, scratch_operands = 0 : i64, tpu.core_type = #tpu.core_type<tc>, window_params = [{transform_indices = @transform_0, window_bounds = array<i64: 1, 9, 2048>}, {pipeline_mode = #tpu.pipeline_mode<synchronous>, transform_indices = @transform_1, window_bounds = array<i64: 2048, 128>}, {pipeline_mode = #tpu.pipeline_mode<synchronous>, transform_indices = @transform_2, window_bounds = array<i64: 1, 128>}, {transform_indices = @transform_3, window_bounds = array<i64: 1, 9, 128>}]} {
    %c0 = arith.constant 0 : index
    %c0_0 = arith.constant 0 : index
    %c0_1 = arith.constant 0 : index
    %0 = vector.load %arg1[%c0, %c0_0, %c0_1] : memref<1x9x2048xbf16, #tpu.memory_space<vmem>>, vector<1x9x2048xbf16>
    %1 = vector.shape_cast %0 : vector<1x9x2048xbf16> to vector<9x2048xbf16>
    %c0_2 = arith.constant 0 : index
    %c0_3 = arith.constant 0 : index
    %2 = vector.load %arg2[%c0_2, %c0_3] : memref<2048x128xbf16, #tpu.memory_space<vmem>>, vector<2048x128xbf16>
    %cst = arith.constant dense<0.000000e+00> : vector<9x128xf32>
    %3 = tpu.matmul %1, %2, %cst {dimension_numbers = #tpu.dot_dimension_numbers<[1], [0], [0], [1], [0, 0, 1, 1], [], []>} : vector<9x2048xbf16>, vector<2048x128xbf16>, vector<9x128xf32> -> vector<9x128xf32>
    %c0_4 = arith.constant 0 : index
    %c0_5 = arith.constant 0 : index
    %4 = vector.load %arg3[%c0_4, %c0_5] : memref<1x128xf32, #tpu.memory_space<vmem>>, vector<1x128xf32>
    %5 = vector.broadcast %4 : vector<1x128xf32> to vector<9x128xf32>
    %6 = arith.addf %3, %5 : vector<9x128xf32>
    %cst_6 = arith.constant dense<0.000000e+00> : vector<128xf32>
    %7 = vector.multi_reduction <add>, %6, %cst_6 [0] : vector<9x128xf32> to vector<128xf32>
    %8 = vector.shape_cast %7 : vector<128xf32> to vector<1x128xf32>
    %cst_7 = arith.constant 9.000000e+00 : f32
    %9 = vector.broadcast %cst_7 : f32 to vector<1x128xf32>
    %10 = arith.divf %8, %9 : vector<1x128xf32>
    %11 = vector.broadcast %10 : vector<1x128xf32> to vector<9x128xf32>
    %12 = arith.subf %6, %11 : vector<9x128xf32>
    %13 = arith.mulf %12, %12 : vector<9x128xf32>
    %cst_8 = arith.constant dense<0.000000e+00> : vector<128xf32>
    %14 = vector.multi_reduction <add>, %13, %cst_8 [0] : vector<9x128xf32> to vector<128xf32>
    %15 = vector.shape_cast %14 : vector<128xf32> to vector<1x128xf32>
    %cst_9 = arith.constant 9.000000e+00 : f32
    %16 = vector.broadcast %cst_9 : f32 to vector<1x128xf32>
    %17 = arith.divf %15, %16 : vector<1x128xf32>
    %18 = vector.broadcast %10 : vector<1x128xf32> to vector<9x128xf32>
    %19 = arith.subf %6, %18 : vector<9x128xf32>
    %cst_10 = arith.constant 9.99999974E-6 : f32
    %20 = vector.broadcast %cst_10 : f32 to vector<1x128xf32>
    %21 = arith.addf %17, %20 : vector<1x128xf32>
    %22 = math.rsqrt %21 : vector<1x128xf32>
    %23 = vector.broadcast %22 : vector<1x128xf32> to vector<9x128xf32>
    %24 = arith.mulf %19, %23 : vector<9x128xf32>
    %cst_11 = arith.constant 0.000000e+00 : f32
    %25 = vector.broadcast %cst_11 : f32 to vector<9x128xf32>
    %26 = arith.cmpf oge, %24, %25 : vector<9x128xf32>
    %cst_12 = arith.constant 2.000000e-01 : f32
    %27 = vector.broadcast %cst_12 : f32 to vector<9x128xf32>
    %28 = arith.mulf %27, %24 : vector<9x128xf32>
    %29 = arith.select %26, %24, %28 : vector<9x128xi1>, vector<9x128xf32>
    %30 = arith.truncf %29 : vector<9x128xf32> to vector<9x128xbf16>
    %c0_13 = arith.constant 0 : index
    %c0_14 = arith.constant 0 : index
    %c0_15 = arith.constant 0 : index
    %31 = vector.load %arg4[%c0_13, %c0_14, %c0_15] : memref<1x9x128xbf16, #tpu.memory_space<vmem>>, vector<1x9x128xbf16>
    %32 = vector.shape_cast %31 : vector<1x9x128xbf16> to vector<9x128xbf16>
    %33 = vector.shape_cast %30 : vector<9x128xbf16> to vector<1x9x128xbf16>
    tpu.vector_store %arg4[%c0_13, %c0_14, %c0_15], %33 {strides = array<i32>} : memref<1x9x128xbf16, #tpu.memory_space<vmem>>, vector<1x9x128xbf16>,
    return
  }
  func.func @transform_0(%arg0: i32) -> (i32, i32, i32) {
    %c0_i32 = arith.constant 0 : i32
    %c0_i32_0 = arith.constant 0 : i32
    %c0_i32_1 = arith.constant 0 : i32
    return %arg0, %c0_i32, %c0_i32_0 : i32, i32, i32
  }
  func.func @transform_1(%arg0: i32) -> (i32, i32) {
    %c0_i32 = arith.constant 0 : i32
    %c0_i32_0 = arith.constant 0 : i32
    %c0_i32_1 = arith.constant 0 : i32
    return %c0_i32, %c0_i32_0 : i32, i32
  }
  func.func @transform_2(%arg0: i32) -> (i32, i32) {
    %c0_i32 = arith.constant 0 : i32
    %c0_i32_0 = arith.constant 0 : i32
    %c0_i32_1 = arith.constant 0 : i32
    return %c0_i32, %c0_i32_0 : i32, i32
  }
  func.func @transform_3(%arg0: i32) -> (i32, i32, i32) {
    %c0_i32 = arith.constant 0 : i32
    %c0_i32_0 = arith.constant 0 : i32
    %c0_i32_1 = arith.constant 0 : i32
    return %arg0, %c0_i32, %c0_i32_0 : i32, i32, i32
  }
}

module attributes {stable_mosaic.version = 11 : i64} {
  func.func @_conv_fused_kernel(%arg0: i32, %arg1: memref<1x4x2048xbf16, #tpu.memory_space<vmem>>, %arg2: memref<2048x128xbf16, #tpu.memory_space<vmem>>, %arg3: memref<1x128xf32, #tpu.memory_space<vmem>>, %arg4: memref<1x4x128xf32, #tpu.memory_space<vmem>>) attributes {dimension_semantics = [#tpu.dimension_semantics<parallel>], iteration_bounds = array<i64: 2>, scalar_prefetch = 0 : i64, scratch_operands = 0 : i64, tpu.core_type = #tpu.core_type<tc>, window_params = [{transform_indices = @transform_0, window_bounds = array<i64: 1, 4, 2048>}, {pipeline_mode = #tpu.pipeline_mode<synchronous>, transform_indices = @transform_1, window_bounds = array<i64: 2048, 128>}, {pipeline_mode = #tpu.pipeline_mode<synchronous>, transform_indices = @transform_2, window_bounds = array<i64: 1, 128>}, {transform_indices = @transform_3, window_bounds = array<i64: 1, 4, 128>}]} {
    %c0 = arith.constant 0 : index
    %c0_0 = arith.constant 0 : index
    %c0_1 = arith.constant 0 : index
    %0 = vector.load %arg1[%c0, %c0_0, %c0_1] : memref<1x4x2048xbf16, #tpu.memory_space<vmem>>, vector<1x4x2048xbf16>
    %1 = vector.shape_cast %0 : vector<1x4x2048xbf16> to vector<4x2048xbf16>
    %c0_2 = arith.constant 0 : index
    %c0_3 = arith.constant 0 : index
    %2 = vector.load %arg2[%c0_2, %c0_3] : memref<2048x128xbf16, #tpu.memory_space<vmem>>, vector<2048x128xbf16>
    %cst = arith.constant dense<0.000000e+00> : vector<4x128xf32>
    %3 = tpu.matmul %1, %2, %cst {dimension_numbers = #tpu.dot_dimension_numbers<[1], [0], [0], [1], [0, 0, 1, 1], [], []>} : vector<4x2048xbf16>, vector<2048x128xbf16>, vector<4x128xf32> -> vector<4x128xf32>
    %c0_4 = arith.constant 0 : index
    %c0_5 = arith.constant 0 : index
    %4 = vector.load %arg3[%c0_4, %c0_5] : memref<1x128xf32, #tpu.memory_space<vmem>>, vector<1x128xf32>
    %5 = vector.broadcast %4 : vector<1x128xf32> to vector<4x128xf32>
    %6 = arith.addf %3, %5 : vector<4x128xf32>
    %c0_6 = arith.constant 0 : index
    %c0_7 = arith.constant 0 : index
    %c0_8 = arith.constant 0 : index
    %7 = vector.load %arg4[%c0_6, %c0_7, %c0_8] : memref<1x4x128xf32, #tpu.memory_space<vmem>>, vector<1x4x128xf32>
    %8 = vector.shape_cast %7 : vector<1x4x128xf32> to vector<4x128xf32>
    %9 = vector.shape_cast %6 : vector<4x128xf32> to vector<1x4x128xf32>
    tpu.vector_store %arg4[%c0_6, %c0_7, %c0_8], %9 {strides = array<i32>} : memref<1x4x128xf32, #tpu.memory_space<vmem>>, vector<1x4x128xf32>,
    return
  }
  func.func @transform_0(%arg0: i32) -> (i32, i32, i32) {
    %c0_i32 = arith.constant 0 : i32
    %c0_i32_0 = arith.constant 0 : i32
    %c0_i32_1 = arith.constant 0 : i32
    return %arg0, %c0_i32, %c0_i32_0 : i32, i32, i32
  }
  func.func @transform_1(%arg0: i32) -> (i32, i32) {
    %c0_i32 = arith.constant 0 : i32
    %c0_i32_0 = arith.constant 0 : i32
    %c0_i32_1 = arith.constant 0 : i32
    return %c0_i32, %c0_i32_0 : i32, i32
  }
  func.func @transform_2(%arg0: i32) -> (i32, i32) {
    %c0_i32 = arith.constant 0 : i32
    %c0_i32_0 = arith.constant 0 : i32
    %c0_i32_1 = arith.constant 0 : i32
    return %c0_i32, %c0_i32_0 : i32, i32
  }
  func.func @transform_3(%arg0: i32) -> (i32, i32, i32) {
    %c0_i32 = arith.constant 0 : i32
    %c0_i32_0 = arith.constant 0 : i32
    %c0_i32_1 = arith.constant 0 : i32
    return %arg0, %c0_i32, %c0_i32_0 : i32, i32, i32
  }
}

</mosaic_0001>

<llo_original>
// kernel: define_d_forward.5
$region0: #{define_d_forward.5}
  #allocation0 [shape = 'u32[]', space=smem, size = 0x4, offset = 0x4, fixed_abs, tag = 'smem constant byte address 0x4 - core index']
  #allocation1 [shape = 'u32[144,128]{1,0:T(1,128)}', space=vmem, size = 0x12000, scoped, tag = 'internal scratch']
  %s0 = inlined_call_operand.vmem [shape: bf16[2,256,64], index: 0, kind: input, shape index: {}]
  %s1 = inlined_call_operand.vmem [shape: bf16[64,128], index: 1, kind: input, shape index: {}]
  %s2 = inlined_call_operand.vmem [shape: f32[1,128], index: 2, kind: input, shape index: {}]
  %s3 = inlined_call_operand.vmem [shape: bf16[2,256,128], index: 3, kind: output, shape index: {}]
  %s4 = sld [smem:[#allocation0]]
  $region45: #{define_d_forward.5} parent=0
    _
  %s6 = ssub.s32 1, %s4
  %s7 = scalar_select 0, %s6, %s4
  loop: start=0, step=1, limit=4
  $region2: #{define_d_forward.5} parent=0 // loop_pre_header
    _
  $region3: #{define_d_forward.5} parent=0 // loop_header
    %s9 = sphi 0, %s13
    %p10 = scmp.ge.s32.totalorder %s9, 4
    %s19 = sphi 0, %s21
    %s22 = sphi 0, %s19
    %s23 = sphi 0, %s22
    %s39 = sphi 0, %s23
    %s43 = sphi 0, %s43
    %s45 = sphi 0, %s43
    %s46 = sphi 0, %s45
    %s60 = sphi 0, %s46
    %s64 = sphi 0, %s64
    %s66 = sphi 0, %s64
    %s67 = sphi 0, %s66
    %s81 = sphi 0, %s67
    %s87 = sphi 0, %s89
    %s90 = sphi 0, %s87
    %s91 = sphi 0, %s90
    %s107 = sphi 0, %s91
  $region4: #{define_d_forward.5} parent=0 // loop_header_branch
    %12 = sbr.rel (%p10) target = $region8
  $region5: #{define_d_forward.5} parent=0 // loop_body
    %s14 = ssub.s32 %s9, 1
    %s15 = ssub.s32 %s9, 2
    %s16 = sadd.s32 %s9, 1
    %s17 = ssub.s32 %s9, %s16
    %p18 = scmp.eq.s32.totalorder %s17, 0
    %s20 = sadd.s32 %s19, 1
    %s21 = scalar_select %p18, %s19, %s20
    %p24 = pneg %p18
    %p25 = scmp.eq.s32.totalorder %s9, 1
    %p26 = por %p24, %p25
    %p27 = scmp.ne.s32.totalorder %s19, %s22
    %p28 = scmp.eq.s32.totalorder %s9, 0
    %p29 = por %p27, %p28
    %p30 = scmp.ne.s32.totalorder %s19, %s22
    %p31 = scmp.eq.s32.totalorder %s14, 1
    %p32 = por %p30, %p31
    %p33 = scmp.ne.s32.totalorder %s22, %s23
    %p34 = scmp.eq.s32.totalorder %s14, 0
    %p35 = por %p33, %p34
    %p36 = scmp.ne.s32.totalorder %s22, %s23
    %p37 = scmp.eq.s32.totalorder %s15, 1
    %p38 = por %p36, %p37
    %p40 = scmp.ne.s32.totalorder %s23, %s39
    %p41 = scmp.eq.s32.totalorder %s15, 0
    %p42 = por %p40, %p41
    %s44 = sadd.s32 %s43, 1
    %p47 = scmp.eq.s32.totalorder %s9, 1
    %p48 = scmp.ne.s32.totalorder %s43, %s45
    %p49 = scmp.eq.s32.totalorder %s9, 0
    %p50 = por %p48, %p49
    %p51 = scmp.ne.s32.totalorder %s43, %s45
    %p52 = scmp.eq.s32.totalorder %s14, 1
    %p53 = por %p51, %p52
    %p54 = scmp.ne.s32.totalorder %s45, %s46
    %p55 = scmp.eq.s32.totalorder %s14, 0
    %p56 = por %p54, %p55
    %p57 = scmp.ne.s32.totalorder %s45, %s46
    %p58 = scmp.eq.s32.totalorder %s15, 1
    %p59 = por %p57, %p58
    %p61 = scmp.ne.s32.totalorder %s46, %s60
    %p62 = scmp.eq.s32.totalorder %s15, 0
    %p63 = por %p61, %p62
    %s65 = sadd.s32 %s64, 1
    %p68 = scmp.eq.s32.totalorder %s9, 1
    %p69 = scmp.ne.s32.totalorder %s64, %s66
    %p70 = scmp.eq.s32.totalorder %s9, 0
    %p71 = por %p69, %p70
    %p72 = scmp.ne.s32.totalorder %s64, %s66
    %p73 = scmp.eq.s32.totalorder %s14, 1
    %p74 = por %p72, %p73
    %p75 = scmp.ne.s32.totalorder %s66, %s67
    %p76 = scmp.eq.s32.totalorder %s14, 0
    %p77 = por %p75, %p76
    %p78 = scmp.ne.s32.totalorder %s66, %s67
    %p79 = scmp.eq.s32.totalorder %s15, 1
    %p80 = por %p78, %p79
    %p82 = scmp.ne.s32.totalorder %s67, %s81
    %p83 = scmp.eq.s32.totalorder %s15, 0
    %p84 = por %p82, %p83
    %s85 = ssub.s32 %s9, %s16
    %p86 = scmp.eq.s32.totalorder %s85, 0
    %s88 = sadd.s32 %s87, 1
    %s89 = scalar_select %p86, %s87, %s88
    %p92 = pneg %p86
    %p93 = scmp.eq.s32.totalorder %s9, 1
    %p94 = por %p92, %p93
    %p95 = scmp.ne.s32.totalorder %s87, %s90
    %p96 = scmp.eq.s32.totalorder %s9, 0
    %p97 = por %p95, %p96
    %p98 = scmp.ne.s32.totalorder %s87, %s90
    %p99 = scmp.eq.s32.totalorder %s14, 1
    %p100 = por %p98, %p99
    %p101 = scmp.ne.s32.totalorder %s90, %s91
    %p102 = scmp.eq.s32.totalorder %s14, 0
    %p103 = por %p101, %p102
    %p104 = scmp.ne.s32.totalorder %s90, %s91
    %p105 = scmp.eq.s32.totalorder %s15, 1
    %p106 = por %p104, %p105
    %p108 = scmp.ne.s32.totalorder %s91, %s107
    %p109 = scmp.eq.s32.totalorder %s15, 0
    %p110 = por %p108, %p109
    %p111 = scmp.le.s32.totalorder 1, %s9
    %p112 = scmp.lt.s32.totalorder %s9, 3
    %p113 = pnand %p111, %p112
    %p114 = pneg %p113
    // Predicated region
    $region9: #{define_d_forward.5} parent=5 // pred_check
      _
    $region10: #{define_d_forward.5} parent=5 // pred_check_branch
      %116 = sbr.rel (%p113) target = $region12
    $region11: #{define_d_forward.5} parent=5 // pred_region
      %s117 = ssub.s32 %s9, 1
      // Predicated region
      $region13: #{define_d_forward.5} parent=11 // pred_check
        %p118 = pneg %p56
      $region14: #{define_d_forward.5} parent=11 // pred_check_branch
        %120 = sbr.rel (%p118) target = $region16
      $region15: #{define_d_forward.5} parent=11 // pred_region
        _
      $region16: #{define_d_forward.5} parent=11 // pred_fallthru
        _
      // Predicated region
      $region17: #{define_d_forward.5} parent=11 // pred_check
        %p121 = pneg %p77
      $region18: #{define_d_forward.5} parent=11 // pred_check_branch
        %123 = sbr.rel (%p121) target = $region20
      $region19: #{define_d_forward.5} parent=11 // pred_region
        _
      $region20: #{define_d_forward.5} parent=11 // pred_fallthru
        _
    $region12: #{define_d_forward.5} parent=5 // pred_fallthru
      _
    %p124 = scmp.lt.s32.totalorder %s9, 2
    // Predicated region
    $region21: #{define_d_forward.5} parent=5 // pred_check
      %p125 = pneg %p124
    $region22: #{define_d_forward.5} parent=5 // pred_check_branch
      %127 = sbr.rel (%p125) target = $region24
    $region23: #{define_d_forward.5} parent=5 // pred_region
      // Predicated region
      $region25: #{define_d_forward.5} parent=23 // pred_check
        %p128 = pneg %p29
      $region26: #{define_d_forward.5} parent=23 // pred_check_branch
        %130 = sbr.rel (%p128) target = $region28
      $region27: #{define_d_forward.5} parent=23 // pred_region
        %p131 = scmp.lt.s32.totalorder %s9, 1
        %s132 = scalar_select %p131, %s9, 1
        %s133 = smul.addr %s132, 32
        %s134 = smul.addr %s133, 4
        %s135 = scalar_lea.vmem %s0, %s134
      $region28: #{define_d_forward.5} parent=23 // pred_fallthru
        _
    $region24: #{define_d_forward.5} parent=5 // pred_fallthru
      _
    %p136 = scmp.le.s32.totalorder 1, %s9
    %p137 = scmp.lt.s32.totalorder %s9, 3
    %p138 = pnand %p136, %p137
    %p139 = pneg %p138
    // Predicated region
    $region29: #{define_d_forward.5} parent=5 // pred_check
      _
    $region30: #{define_d_forward.5} parent=5 // pred_check_branch
      %141 = sbr.rel (%p138) target = $region32
    $region31: #{define_d_forward.5} parent=5 // pred_region
      %s142 = ssub.s32 %s9, 1
      %p143 = scmp.lt.s32.totalorder %s14, 1
      %s144 = scalar_select %p143, %s14, 1
      %s145 = smul.addr %s144, 32
      %s146 = smul.addr %s145, 4
      %s147 = scalar_lea.vmem %s0, %s146
      %p148 = pneg %p35
      %p149 = pneg %p32
      %p150 = pneg %p56
      %p151 = pneg %p53
      %p152 = pneg %p77
      %p153 = pneg %p74
      %p154 = pneg %p103
      %p155 = pneg %p100
      %p156 = scmp.lt.s32.totalorder %s14, 1
      %s157 = scalar_select %p156, %s14, 1
      %s158 = smul.addr %s157, 32
      %s159 = smul.addr %s158, 4
      %s160 = scalar_lea.vmem %s3, %s159
      %p161 = scmp.lt.s32.totalorder %s14, 1
      %s162 = scalar_select %p161, %s14, 1
      %s163 = smul.addr %s162, 32
      %s164 = smul.addr %s163, 4
      %s165 = scalar_lea.vmem %s0, %s164
      %p166 = scmp.lt.s32.totalorder %s14, 1
      %s167 = scalar_select %p166, %s14, 1
      %s168 = smul.addr %s167, 32
      %s169 = smul.addr %s168, 4
      %s170 = scalar_lea.vmem %s3, %s169
      %v172 = vld [vmem:[%s165] sm:$0xf]
      %v173 = vld [vmem:[%s165 + $0x4] sm:$0xf]
      %v174 = vld [vmem:[%s165 + $0x8] sm:$0xf]
      %v175 = vld [vmem:[%s165 + $0xc] sm:$0xf]
      %v176 = vld [vmem:[%s165 + $0x10] sm:$0xf]
      %v177 = vld [vmem:[%s165 + $0x14] sm:$0xf]
      %v178 = vld [vmem:[%s165 + $0x18] sm:$0xf]
      %v179 = vld [vmem:[%s165 + $0x1c] sm:$0xf]
      %v180 = vld [vmem:[%s165 + $0x20] sm:$0xf]
      %v181 = vld [vmem:[%s165 + $0x24] sm:$0xf]
      %v182 = vld [vmem:[%s165 + $0x28] sm:$0xf]
      %v183 = vld [vmem:[%s165 + $0x2c] sm:$0xf]
      %v184 = vld [vmem:[%s165 + $0x30] sm:$0xf]
      %v185 = vld [vmem:[%s165 + $0x34] sm:$0xf]
      %v186 = vld [vmem:[%s165 + $0x38] sm:$0xf]
      %v187 = vld [vmem:[%s165 + $0x3c] sm:$0xf]
      %v188 = vld [vmem:[%s165 + $0x40] sm:$0xf]
      %v189 = vld [vmem:[%s165 + $0x44] sm:$0xf]
      %v190 = vld [vmem:[%s165 + $0x48] sm:$0xf]
      %v191 = vld [vmem:[%s165 + $0x4c] sm:$0xf]
      %v192 = vld [vmem:[%s165 + $0x50] sm:$0xf]
      %v193 = vld [vmem:[%s165 + $0x54] sm:$0xf]
      %v194 = vld [vmem:[%s165 + $0x58] sm:$0xf]
      %v195 = vld [vmem:[%s165 + $0x5c] sm:$0xf]
      %v196 = vld [vmem:[%s165 + $0x60] sm:$0xf]
      %v197 = vld [vmem:[%s165 + $0x64] sm:$0xf]
      %v198 = vld [vmem:[%s165 + $0x68] sm:$0xf]
      %v199 = vld [vmem:[%s165 + $0x6c] sm:$0xf]
      %v200 = vld [vmem:[%s165 + $0x70] sm:$0xf]
      %v201 = vld [vmem:[%s165 + $0x74] sm:$0xf]
      %v202 = vld [vmem:[%s165 + $0x78] sm:$0xf]
      %v203 = vld [vmem:[%s165 + $0x7c] sm:$0xf]
      %v204 = vld [vmem:[%s1] sm:$0xf]
      %v205 = vld [vmem:[%s1 + $0x4] sm:$0xf]
      %v206 = vld [vmem:[%s1 + $0x8] sm:$0xf]
      %v207 = vld [vmem:[%s1 + $0xc] sm:$0xf]
      %v208 = vld [vmem:[%s1 + $0x10] sm:$0xf]
      %v209 = vld [vmem:[%s1 + $0x14] sm:$0xf]
      %v210 = vld [vmem:[%s1 + $0x18] sm:$0xf]
      %v211 = vld [vmem:[%s1 + $0x1c] sm:$0xf]
      %v212 = vld [vmem:[%s2] sm:$0x1]
      %v214 = vlaneseq
      %v215 = vshrl.u32 %v214, 7
      %v216 = vsub.s32 0, %v215
      %v217 = vrot.slane %v212, %v216
      %v251 = vunpack.c.l.b16 %v172
      %v252 = vunpack.c.l.b16 %v173
      %v253 = vunpack.c.l.b16 %v174
      %v254 = vunpack.c.l.b16 %v175
      %v255 = vunpack.c.l.b16 %v176
      %v256 = vunpack.c.l.b16 %v177
      %v257 = vunpack.c.l.b16 %v178
      %v258 = vunpack.c.l.b16 %v179
      %v259 = vunpack.c.l.b16 %v180
      %v260 = vunpack.c.l.b16 %v181
      %v261 = vunpack.c.l.b16 %v182
      %v262 = vunpack.c.l.b16 %v183
      %v263 = vunpack.c.l.b16 %v184
      %v264 = vunpack.c.l.b16 %v185
      %v265 = vunpack.c.l.b16 %v186
      %v266 = vunpack.c.l.b16 %v187
      %v267 = vunpack.c.l.b16 %v188
      %v268 = vunpack.c.l.b16 %v189
      %v269 = vunpack.c.l.b16 %v190
      %v270 = vunpack.c.l.b16 %v191
      %v271 = vunpack.c.l.b16 %v192
      %v272 = vunpack.c.l.b16 %v193
      %v273 = vunpack.c.l.b16 %v194
      %v274 = vunpack.c.l.b16 %v195
      %v275 = vunpack.c.l.b16 %v196
      %v276 = vunpack.c.l.b16 %v197
      %v277 = vunpack.c.l.b16 %v198
      %v278 = vunpack.c.l.b16 %v199
      %v279 = vunpack.c.l.b16 %v200
      %v280 = vunpack.c.l.b16 %v201
      %v281 = vunpack.c.l.b16 %v202
      %v282 = vunpack.c.l.b16 %v203
      %v283 = vpack.c.b16 %v252, %v251
      %v284 = vpack.c.b16 %v254, %v253
      %v285 = vpack.c.b16 %v256, %v255
      %v286 = vpack.c.b16 %v258, %v257
      %v287 = vpack.c.b16 %v260, %v259
      %v288 = vpack.c.b16 %v262, %v261
      %v289 = vpack.c.b16 %v264, %v263
      %v290 = vpack.c.b16 %v266, %v265
      %v291 = vpack.c.b16 %v268, %v267
      %v292 = vpack.c.b16 %v270, %v269
      %v293 = vpack.c.b16 %v272, %v271
      %v294 = vpack.c.b16 %v274, %v273
      %v295 = vpack.c.b16 %v276, %v275
      %v296 = vpack.c.b16 %v278, %v277
      %v297 = vpack.c.b16 %v280, %v279
      %v298 = vpack.c.b16 %v282, %v281
      %v307 = vunpack.c.l.b16 %v204
      %v308 = vunpack.c.l.b16 %v205
      %v309 = vunpack.c.l.b16 %v206
      %v310 = vunpack.c.l.b16 %v207
      %v311 = vunpack.c.l.b16 %v208
      %v312 = vunpack.c.l.b16 %v209
      %v313 = vunpack.c.l.b16 %v210
      %v314 = vunpack.c.l.b16 %v211
      %v315 = vpack.c.b16 %v308, %v307
      %v316 = vpack.c.b16 %v310, %v309
      %v317 = vpack.c.b16 %v312, %v311
      %v318 = vpack.c.b16 %v314, %v313
      %vm323 = vcmask 523264
      %v325 = vsel %vm323, %v283, 0
      %v328 = vsel %vm323, %v284, 0
      %v331 = vsel %vm323, %v285, 0
      %v334 = vsel %vm323, %v286, 0
      %v337 = vsel %vm323, %v287, 0
      %v340 = vsel %vm323, %v288, 0
      %v343 = vsel %vm323, %v289, 0
      %v346 = vsel %vm323, %v290, 0
      %v349 = vsel %vm323, %v291, 0
      %v352 = vsel %vm323, %v292, 0
      %v355 = vsel %vm323, %v293, 0
      %v358 = vsel %vm323, %v294, 0
      %v361 = vsel %vm323, %v295, 0
      %v364 = vsel %vm323, %v296, 0
      %v367 = vsel %vm323, %v297, 0
      %v370 = vsel %vm323, %v298, 0
      %372 = vmatprep.subr.bf16.mxu0 0
      %373 = vmatpush1.bf16.msra.mxu0 %v315
      %374 = vmatprep.subr.bf16.mxu0 0
      %375 = vmatpush1.bf16.msra.mxu0 %v316
      %376 = vmatprep.subr.bf16.mxu0 0
      %377 = vmatpush1.bf16.msra.mxu0 %v317
      %378 = vmatprep.subr.bf16.mxu0 0
      %379 = vmatpush1.bf16.msra.mxu0 %v318
      %380 = vmatprep.subr.bf16.mxu0 0
      %381 = vmatpush1.bf16.msra.mxu0 0
      %382 = vmatprep.subr.bf16.mxu0 0
      %383 = vmatpush1.bf16.msra.mxu0 0
      %384 = vmatprep.subr.bf16.mxu0 0
      %385 = vmatpush1.bf16.msra.mxu0 0
      %386 = vmatprep.subr.bf16.mxu0 0
      %387 = vmatpush1.bf16.msra.mxu0 0
      %388 = vmatprep.subr.bf16.mxu0 0
      %389 = vmatpush1.bf16.msra.mxu0 0
      %390 = vmatprep.subr.bf16.mxu0 0
      %391 = vmatpush1.bf16.msra.mxu0 0
      %392 = vmatprep.subr.bf16.mxu0 0
      %393 = vmatpush1.bf16.msra.mxu0 0
      %394 = vmatprep.subr.bf16.mxu0 0
      %395 = vmatpush1.bf16.msra.mxu0 0
      %396 = vmatprep.subr.bf16.mxu0 0
      %397 = vmatpush1.bf16.msra.mxu0 0
      %398 = vmatprep.subr.bf16.mxu0 0
      %399 = vmatpush1.bf16.msra.mxu0 0
      %400 = vmatprep.subr.bf16.mxu0 0
      %401 = vmatpush1.bf16.msra.mxu0 0
      %402 = vmatprep.subr.bf16.mxu0 0
      %403 = vmatpush1.bf16.msra.mxu0 0
      %404 = vmatprep.mubr.bf16.mxu0 0
      %405 = vmatmul.mubr.bf16.gmra.mrb[0].mxu0 %v325
      %v406 = vpop.f32.mrb[0].mxu0
      %v407 = vadd.f32 %v217, %v406
      %v408 = vpop.f32.mrb[0].mxu0
      %v409 = vpop.f32.mrb[0].mxu0
      %v410 = vadd.f32 %v217, %v409
      %v411 = vpop.f32.mrb[0].mxu0
      %412 = vmatprep.mubr.bf16.mxu0 0
      %413 = vmatmul.mubr.bf16.gmra.mrb[0].mxu0 %v328
      %v414 = vpop.f32.mrb[0].mxu0
      %v415 = vadd.f32 %v217, %v414
      %v416 = vpop.f32.mrb[0].mxu0
      %v417 = vpop.f32.mrb[0].mxu0
      %v418 = vadd.f32 %v217, %v417
      %v419 = vpop.f32.mrb[0].mxu0
      %420 = vmatprep.mubr.bf16.mxu0 0
      %421 = vmatmul.mubr.bf16.gmra.mrb[0].mxu0 %v331
      %v422 = vpop.f32.mrb[0].mxu0
      %v423 = vadd.f32 %v217, %v422
      %v424 = vpop.f32.mrb[0].mxu0
      %v425 = vpop.f32.mrb[0].mxu0
      %v426 = vadd.f32 %v217, %v425
      %v427 = vpop.f32.mrb[0].mxu0
      %428 = vmatprep.mubr.bf16.mxu0 0
      %429 = vmatmul.mubr.bf16.gmra.mrb[0].mxu0 %v334
      %v430 = vpop.f32.mrb[0].mxu0
      %v431 = vadd.f32 %v217, %v430
      %v432 = vpop.f32.mrb[0].mxu0
      %v433 = vpop.f32.mrb[0].mxu0
      %v434 = vadd.f32 %v217, %v433
      %v435 = vpop.f32.mrb[0].mxu0
      %436 = vmatprep.mubr.bf16.mxu0 0
      %437 = vmatmul.mubr.bf16.gmra.mrb[0].mxu0 %v337
      %v438 = vpop.f32.mrb[0].mxu0
      %v439 = vadd.f32 %v217, %v438
      %v440 = vpop.f32.mrb[0].mxu0
      %v441 = vpop.f32.mrb[0].mxu0
      %v442 = vadd.f32 %v217, %v441
      %v443 = vpop.f32.mrb[0].mxu0
      %444 = vmatprep.mubr.bf16.mxu0 0
      %445 = vmatmul.mubr.bf16.gmra.mrb[0].mxu0 %v340
      %v446 = vpop.f32.mrb[0].mxu0
      %v447 = vadd.f32 %v217, %v446
      %v448 = vpop.f32.mrb[0].mxu0
      %v449 = vpop.f32.mrb[0].mxu0
      %v450 = vadd.f32 %v217, %v449
      %v451 = vpop.f32.mrb[0].mxu0
      %452 = vmatprep.mubr.bf16.mxu0 0
      %453 = vmatmul.mubr.bf16.gmra.mrb[0].mxu0 %v343
      %v454 = vpop.f32.mrb[0].mxu0
      %v455 = vadd.f32 %v217, %v454
      %v456 = vpop.f32.mrb[0].mxu0
      %v457 = vpop.f32.mrb[0].mxu0
      %v458 = vadd.f32 %v217, %v457
      %v459 = vpop.f32.mrb[0].mxu0
      %460 = vmatprep.mubr.bf16.mxu0 0
      %461 = vmatmul.mubr.bf16.gmra.mrb[0].mxu0 %v346
      %v462 = vpop.f32.mrb[0].mxu0
      %v463 = vadd.f32 %v217, %v462
      %v464 = vpop.f32.mrb[0].mxu0
      %v465 = vpop.f32.mrb[0].mxu0
      %v466 = vadd.f32 %v217, %v465
      %v467 = vpop.f32.mrb[0].mxu0
      %468 = vmatprep.mubr.bf16.mxu0 0
      %469 = vmatmul.mubr.bf16.gmra.mrb[0].mxu0 %v349
      %v470 = vpop.f32.mrb[0].mxu0
      %v471 = vadd.f32 %v217, %v470
      %v472 = vpop.f32.mrb[0].mxu0
      %v473 = vpop.f32.mrb[0].mxu0
      %v474 = vadd.f32 %v217, %v473
      %v475 = vpop.f32.mrb[0].mxu0
      %476 = vmatprep.mubr.bf16.mxu0 0
      %477 = vmatmul.mubr.bf16.gmra.mrb[0].mxu0 %v352
      %v478 = vpop.f32.mrb[0].mxu0
      %v479 = vadd.f32 %v217, %v478
      %v480 = vpop.f32.mrb[0].mxu0
      %v481 = vpop.f32.mrb[0].mxu0
      %v482 = vadd.f32 %v217, %v481
      %v483 = vpop.f32.mrb[0].mxu0
      %484 = vmatprep.mubr.bf16.mxu0 0
      %485 = vmatmul.mubr.bf16.gmra.mrb[0].mxu0 %v355
      %v486 = vpop.f32.mrb[0].mxu0
      %v487 = vadd.f32 %v217, %v486
      %v488 = vpop.f32.mrb[0].mxu0
      %v489 = vpop.f32.mrb[0].mxu0
      %v490 = vadd.f32 %v217, %v489
      %v491 = vpop.f32.mrb[0].mxu0
      %492 = vmatprep.mubr.bf16.mxu0 0
      %493 = vmatmul.mubr.bf16.gmra.mrb[0].mxu0 %v358
      %v494 = vpop.f32.mrb[0].mxu0
      %v495 = vadd.f32 %v217, %v494
      %v496 = vpop.f32.mrb[0].mxu0
      %v497 = vpop.f32.mrb[0].mxu0
      %v498 = vadd.f32 %v217, %v497
      %v499 = vpop.f32.mrb[0].mxu0
      %500 = vmatprep.mubr.bf16.mxu0 0
      %501 = vmatmul.mubr.bf16.gmra.mrb[0].mxu0 %v361
      %v502 = vpop.f32.mrb[0].mxu0
      %v503 = vadd.f32 %v217, %v502
      %v504 = vpop.f32.mrb[0].mxu0
      %v505 = vpop.f32.mrb[0].mxu0
      %v506 = vadd.f32 %v217, %v505
      %v507 = vpop.f32.mrb[0].mxu0
      %508 = vmatprep.mubr.bf16.mxu0 0
      %509 = vmatmul.mubr.bf16.gmra.mrb[0].mxu0 %v364
      %v510 = vpop.f32.mrb[0].mxu0
      %v511 = vadd.f32 %v217, %v510
      %v512 = vpop.f32.mrb[0].mxu0
      %v513 = vpop.f32.mrb[0].mxu0
      %v514 = vadd.f32 %v217, %v513
      %v515 = vpop.f32.mrb[0].mxu0
      %516 = vmatprep.mubr.bf16.mxu0 0
      %517 = vmatmul.mubr.bf16.gmra.mrb[0].mxu0 %v367
      %v518 = vpop.f32.mrb[0].mxu0
      %v519 = vadd.f32 %v217, %v518
      %v520 = vpop.f32.mrb[0].mxu0
      %v521 = vpop.f32.mrb[0].mxu0
      %v522 = vadd.f32 %v217, %v521
      %v523 = vpop.f32.mrb[0].mxu0
      %524 = vmatprep.mubr.bf16.mxu0 0
      %525 = vmatmul.mubr.bf16.gmra.mrb[0].mxu0 %v370
      %v526 = vpop.f32.mrb[0].mxu0
      %v527 = vadd.f32 %v217, %v526
      %v528 = vpop.f32.mrb[0].mxu0
      %v529 = vpop.f32.mrb[0].mxu0
      %v530 = vadd.f32 %v217, %v529
      %v531 = vpop.f32.mrb[0].mxu0
      %532 = vdwg.mxu0
      %vm533 = vcmp.ge.f32.partialorder %v407, 0.0
      %vm534 = vcmp.ge.f32.partialorder %v410, 0.0
      %vm535 = vcmp.ge.f32.partialorder %v415, 0.0
      %vm536 = vcmp.ge.f32.partialorder %v418, 0.0
      %vm537 = vcmp.ge.f32.partialorder %v423, 0.0
      %vm538 = vcmp.ge.f32.partialorder %v426, 0.0
      %vm539 = vcmp.ge.f32.partialorder %v431, 0.0
      %vm540 = vcmp.ge.f32.partialorder %v434, 0.0
      %vm541 = vcmp.ge.f32.partialorder %v439, 0.0
      %vm542 = vcmp.ge.f32.partialorder %v442, 0.0
      %vm543 = vcmp.ge.f32.partialorder %v447, 0.0
      %vm544 = vcmp.ge.f32.partialorder %v450, 0.0
      %vm545 = vcmp.ge.f32.partialorder %v455, 0.0
      %vm546 = vcmp.ge.f32.partialorder %v458, 0.0
      %vm547 = vcmp.ge.f32.partialorder %v463, 0.0
      %vm548 = vcmp.ge.f32.partialorder %v466, 0.0
      %vm549 = vcmp.ge.f32.partialorder %v471, 0.0
      %vm550 = vcmp.ge.f32.partialorder %v474, 0.0
      %vm551 = vcmp.ge.f32.partialorder %v479, 0.0
      %vm552 = vcmp.ge.f32.partialorder %v482, 0.0
      %vm553 = vcmp.ge.f32.partialorder %v487, 0.0
      %vm554 = vcmp.ge.f32.partialorder %v490, 0.0
      %vm555 = vcmp.ge.f32.partialorder %v495, 0.0
      %vm556 = vcmp.ge.f32.partialorder %v498, 0.0
      %vm557 = vcmp.ge.f32.partialorder %v503, 0.0
      %vm558 = vcmp.ge.f32.partialorder %v506, 0.0
      %vm559 = vcmp.ge.f32.partialorder %v511, 0.0
      %vm560 = vcmp.ge.f32.partialorder %v514, 0.0
      %vm561 = vcmp.ge.f32.partialorder %v519, 0.0
      %vm562 = vcmp.ge.f32.partialorder %v522, 0.0
      %vm563 = vcmp.ge.f32.partialorder %v527, 0.0
      %vm564 = vcmp.ge.f32.partialorder %v530, 0.0
      %v565 = vmul.f32 %v407, 0.2
      %v566 = vmul.f32 %v410, 0.2
      %v567 = vmul.f32 %v415, 0.2
      %v568 = vmul.f32 %v418, 0.2
      %v569 = vmul.f32 %v423, 0.2
      %v570 = vmul.f32 %v426, 0.2
      %v571 = vmul.f32 %v431, 0.2
      %v572 = vmul.f32 %v434, 0.2
      %v573 = vmul.f32 %v439, 0.2
      %v574 = vmul.f32 %v442, 0.2
      %v575 = vmul.f32 %v447, 0.2
      %v576 = vmul.f32 %v450, 0.2
      %v577 = vmul.f32 %v455, 0.2
      %v578 = vmul.f32 %v458, 0.2
      %v579 = vmul.f32 %v463, 0.2
      %v580 = vmul.f32 %v466, 0.2
      %v581 = vmul.f32 %v471, 0.2
      %v582 = vmul.f32 %v474, 0.2
      %v583 = vmul.f32 %v479, 0.2
      %v584 = vmul.f32 %v482, 0.2
      %v585 = vmul.f32 %v487, 0.2
      %v586 = vmul.f32 %v490, 0.2
      %v587 = vmul.f32 %v495, 0.2
      %v588 = vmul.f32 %v498, 0.2
      %v589 = vmul.f32 %v503, 0.2
      %v590 = vmul.f32 %v506, 0.2
      %v591 = vmul.f32 %v511, 0.2
      %v592 = vmul.f32 %v514, 0.2
      %v593 = vmul.f32 %v519, 0.2
      %v594 = vmul.f32 %v522, 0.2
      %v595 = vmul.f32 %v527, 0.2
      %v596 = vmul.f32 %v530, 0.2
      %v597 = vsel %vm533, %v407, %v565
      %v598 = vsel %vm534, %v410, %v566
      %v599 = vsel %vm535, %v415, %v567
      %v600 = vsel %vm536, %v418, %v568
      %v601 = vsel %vm537, %v423, %v569
      %v602 = vsel %vm538, %v426, %v570
      %v603 = vsel %vm539, %v431, %v571
      %v604 = vsel %vm540, %v434, %v572
      %v605 = vsel %vm541, %v439, %v573
      %v606 = vsel %vm542, %v442, %v574
      %v607 = vsel %vm543, %v447, %v575
      %v608 = vsel %vm544, %v450, %v576
      %v609 = vsel %vm545, %v455, %v577
      %v610 = vsel %vm546, %v458, %v578
      %v611 = vsel %vm547, %v463, %v579
      %v612 = vsel %vm548, %v466, %v580
      %v613 = vsel %vm549, %v471, %v581
      %v614 = vsel %vm550, %v474, %v582
      %v615 = vsel %vm551, %v479, %v583
      %v616 = vsel %vm552, %v482, %v584
      %v617 = vsel %vm553, %v487, %v585
      %v618 = vsel %vm554, %v490, %v586
      %v619 = vsel %vm555, %v495, %v587
      %v620 = vsel %vm556, %v498, %v588
      %v621 = vsel %vm557, %v503, %v589
      %v622 = vsel %vm558, %v506, %v590
      %v623 = vsel %vm559, %v511, %v591
      %v624 = vsel %vm560, %v514, %v592
      %v625 = vsel %vm561, %v519, %v593
      %v626 = vsel %vm562, %v522, %v594
      %v627 = vsel %vm563, %v527, %v595
      %v628 = vsel %vm564, %v530, %v596
      %v629 = vpack.c.bf16 %v598, %v597
      %v630 = vpack.c.bf16 %v600, %v599
      %v631 = vpack.c.bf16 %v602, %v601
      %v632 = vpack.c.bf16 %v604, %v603
      %v633 = vpack.c.bf16 %v606, %v605
      %v634 = vpack.c.bf16 %v608, %v607
      %v635 = vpack.c.bf16 %v610, %v609
      %v636 = vpack.c.bf16 %v612, %v611
      %v637 = vpack.c.bf16 %v614, %v613
      %v638 = vpack.c.bf16 %v616, %v615
      %v639 = vpack.c.bf16 %v618, %v617
      %v640 = vpack.c.bf16 %v620, %v619
      %v641 = vpack.c.bf16 %v622, %v621
      %v642 = vpack.c.bf16 %v624, %v623
      %v643 = vpack.c.bf16 %v626, %v625
      %v644 = vpack.c.bf16 %v628, %v627
      %v661 = vunpack.c.l.b16 %v629
      %v662 = vunpack.c.h.b16 %v629
      %v663 = vunpack.c.l.b16 %v630
      %v664 = vunpack.c.h.b16 %v630
      %v665 = vunpack.c.l.b16 %v631
      %v666 = vunpack.c.h.b16 %v631
      %v667 = vunpack.c.l.b16 %v632
      %v668 = vunpack.c.h.b16 %v632
      %v669 = vunpack.c.l.b16 %v633
      %v670 = vunpack.c.h.b16 %v633
      %v671 = vunpack.c.l.b16 %v634
      %v672 = vunpack.c.h.b16 %v634
      %v673 = vunpack.c.l.b16 %v635
      %v674 = vunpack.c.h.b16 %v635
      %v675 = vunpack.c.l.b16 %v636
      %v676 = vunpack.c.h.b16 %v636
      %v677 = vunpack.c.l.b16 %v637
      %v678 = vunpack.c.h.b16 %v637
      %v679 = vunpack.c.l.b16 %v638
      %v680 = vunpack.c.h.b16 %v638
      %v681 = vunpack.c.l.b16 %v639
      %v682 = vunpack.c.h.b16 %v639
      %v683 = vunpack.c.l.b16 %v640
      %v684 = vunpack.c.h.b16 %v640
      %v685 = vunpack.c.l.b16 %v641
      %v686 = vunpack.c.h.b16 %v641
      %v687 = vunpack.c.l.b16 %v642
      %v688 = vunpack.c.h.b16 %v642
      %v689 = vunpack.c.l.b16 %v643
      %v690 = vunpack.c.h.b16 %v643
      %v691 = vunpack.c.l.b16 %v644
      %v692 = vunpack.c.h.b16 %v644
      %v693 = vpack.c.b16 %v661, %v661
      %v694 = vpack.c.b16 %v662, %v662
      %v695 = vpack.c.b16 %v663, %v663
      %v696 = vpack.c.b16 %v664, %v664
      %v697 = vpack.c.b16 %v665, %v665
      %v698 = vpack.c.b16 %v666, %v666
      %v699 = vpack.c.b16 %v667, %v667
      %v700 = vpack.c.b16 %v668, %v668
      %v701 = vpack.c.b16 %v669, %v669
      %v702 = vpack.c.b16 %v670, %v670
      %v703 = vpack.c.b16 %v671, %v671
      %v704 = vpack.c.b16 %v672, %v672
      %v705 = vpack.c.b16 %v673, %v673
      %v706 = vpack.c.b16 %v674, %v674
      %v707 = vpack.c.b16 %v675, %v675
      %v708 = vpack.c.b16 %v676, %v676
      %v709 = vpack.c.b16 %v677, %v677
      %v710 = vpack.c.b16 %v678, %v678
      %v711 = vpack.c.b16 %v679, %v679
      %v712 = vpack.c.b16 %v680, %v680
      %v713 = vpack.c.b16 %v681, %v681
      %v714 = vpack.c.b16 %v682, %v682
      %v715 = vpack.c.b16 %v683, %v683
      %v716 = vpack.c.b16 %v684, %v684
      %v717 = vpack.c.b16 %v685, %v685
      %v718 = vpack.c.b16 %v686, %v686
      %v719 = vpack.c.b16 %v687, %v687
      %v720 = vpack.c.b16 %v688, %v688
      %v721 = vpack.c.b16 %v689, %v689
      %v722 = vpack.c.b16 %v690, %v690
      %v723 = vpack.c.b16 %v691, %v691
      %v724 = vpack.c.b16 %v692, %v692
      %757 = vst [vmem:[%s170] sm:$0xf] %v693
      %758 = vst [vmem:[%s170 + $0x4] sm:$0xf] %v694
      %759 = vst [vmem:[%s170 + $0x8] sm:$0xf] %v695
      %760 = vst [vmem:[%s170 + $0xc] sm:$0xf] %v696
      %761 = vst [vmem:[%s170 + $0x10] sm:$0xf] %v697
      %762 = vst [vmem:[%s170 + $0x14] sm:$0xf] %v698
      %763 = vst [vmem:[%s170 + $0x18] sm:$0xf] %v699
      %764 = vst [vmem:[%s170 + $0x1c] sm:$0xf] %v700
      %765 = vst [vmem:[%s170 + $0x20] sm:$0xf] %v701
      %766 = vst [vmem:[%s170 + $0x24] sm:$0xf] %v702
      %767 = vst [vmem:[%s170 + $0x28] sm:$0xf] %v703
      %768 = vst [vmem:[%s170 + $0x2c] sm:$0xf] %v704
      %769 = vst [vmem:[%s170 + $0x30] sm:$0xf] %v705
      %770 = vst [vmem:[%s170 + $0x34] sm:$0xf] %v706
      %771 = vst [vmem:[%s170 + $0x38] sm:$0xf] %v707
      %772 = vst [vmem:[%s170 + $0x3c] sm:$0xf] %v708
      %773 = vst [vmem:[%s170 + $0x40] sm:$0xf] %v709
      %774 = vst [vmem:[%s170 + $0x44] sm:$0xf] %v710
      %775 = vst [vmem:[%s170 + $0x48] sm:$0xf] %v711
      %776 = vst [vmem:[%s170 + $0x4c] sm:$0xf] %v712
      %777 = vst [vmem:[%s170 + $0x50] sm:$0xf] %v713
      %778 = vst [vmem:[%s170 + $0x54] sm:$0xf] %v714
      %779 = vst [vmem:[%s170 + $0x58] sm:$0xf] %v715
      %780 = vst [vmem:[%s170 + $0x5c] sm:$0xf] %v716
      %781 = vst [vmem:[%s170 + $0x60] sm:$0xf] %v717
      %782 = vst [vmem:[%s170 + $0x64] sm:$0xf] %v718
      %783 = vst [vmem:[%s170 + $0x68] sm:$0xf] %v719
      %784 = vst [vmem:[%s170 + $0x6c] sm:$0xf] %v720
      %785 = vst [vmem:[%s170 + $0x70] sm:$0xf] %v721
      %786 = vst [vmem:[%s170 + $0x74] sm:$0xf] %v722
      %787 = vst [vmem:[%s170 + $0x78] sm:$0xf] %v723
      %788 = vst [vmem:[%s170 + $0x7c] sm:$0xf] %v724
      %p789 = scmp.lt.s32.totalorder %s14, 1
      %s790 = scalar_select %p789, %s14, 1
      %s791 = smul.addr %s790, 32
      %s792 = smul.addr %s791, 4
      %s793 = scalar_lea.vmem %s3, %s792
      // Predicated region
      $region33: #{define_d_forward.5} parent=31 // pred_check
        %p794 = pneg %p100
      $region34: #{define_d_forward.5} parent=31 // pred_check_branch
        %796 = sbr.rel (%p794) target = $region36
      $region35: #{define_d_forward.5} parent=31 // pred_region
        _
      $region36: #{define_d_forward.5} parent=31 // pred_fallthru
        _
    $region32: #{define_d_forward.5} parent=5 // pred_fallthru
      _
    %p797 = scmp.le.s32.totalorder 2, %s9
    // Predicated region
    $region37: #{define_d_forward.5} parent=5 // pred_check
      %p798 = pneg %p797
    $region38: #{define_d_forward.5} parent=5 // pred_check_branch
      %800 = sbr.rel (%p798) target = $region40
    $region39: #{define_d_forward.5} parent=5 // pred_region
      %s801 = ssub.s32 %s9, 2
      // Predicated region
      $region41: #{define_d_forward.5} parent=39 // pred_check
        %p802 = pneg %p106
      $region42: #{define_d_forward.5} parent=39 // pred_check_branch
        %804 = sbr.rel (%p802) target = $region44
      $region43: #{define_d_forward.5} parent=39 // pred_region
        %p805 = scmp.lt.s32.totalorder %s15, 1
        %s806 = scalar_select %p805, %s15, 1
        %s807 = smul.addr %s806, 32
        %s808 = smul.addr %s807, 4
        %s809 = scalar_lea.vmem %s3, %s808
      $region44: #{define_d_forward.5} parent=39 // pred_fallthru
        _
    $region40: #{define_d_forward.5} parent=5 // pred_fallthru
      _
  $region6: #{define_d_forward.5} parent=0 // loop_footer
    %s13 = sadd.s32 1, %s9
  $region7: #{define_d_forward.5} parent=0 // loop_footer_branch
    %8 = sbr.rel target = $region3
  $region8: #{define_d_forward.5} parent=0 // loop_exit
    _

// kernel: define_d_forward.6
$region0: #{define_d_forward.6}
  #allocation0 [shape = 'u32[]', space=smem, size = 0x4, offset = 0x4, fixed_abs, tag = 'smem constant byte address 0x4 - core index']
  #allocation1 [shape = 'u32[144,128]{1,0:T(1,128)}', space=vmem, size = 0x12000, scoped, tag = 'internal scratch']
  %s0 = inlined_call_operand.vmem [shape: bf16[2,64,2048], index: 0, kind: input, shape index: {}]
  %s1 = inlined_call_operand.vmem [shape: bf16[2048,128], index: 1, kind: input, shape index: {}]
  %s2 = inlined_call_operand.vmem [shape: f32[1,128], index: 2, kind: input, shape index: {}]
  %s3 = inlined_call_operand.vmem [shape: bf16[2,64,128], index: 3, kind: output, shape index: {}]
  %s4 = sld [smem:[#allocation0]]
  $region45: #{define_d_forward.6} parent=0
    _
  %s6 = ssub.s32 1, %s4
  %s7 = scalar_select 0, %s6, %s4
  loop: start=0, step=1, limit=4
  $region2: #{define_d_forward.6} parent=0 // loop_pre_header
    _
  $region3: #{define_d_forward.6} parent=0 // loop_header
    %s9 = sphi 0, %s13
    %p10 = scmp.ge.s32.totalorder %s9, 4
    %s19 = sphi 0, %s21
    %s22 = sphi 0, %s19
    %s23 = sphi 0, %s22
    %s39 = sphi 0, %s23
    %s43 = sphi 0, %s43
    %s45 = sphi 0, %s43
    %s46 = sphi 0, %s45
    %s60 = sphi 0, %s46
    %s64 = sphi 0, %s64
    %s66 = sphi 0, %s64
    %s67 = sphi 0, %s66
    %s81 = sphi 0, %s67
    %s87 = sphi 0, %s89
    %s90 = sphi 0, %s87
    %s91 = sphi 0, %s90
    %s107 = sphi 0, %s91
  $region4: #{define_d_forward.6} parent=0 // loop_header_branch
    %12 = sbr.rel (%p10) target = $region8
  $region5: #{define_d_forward.6} parent=0 // loop_body
    %s14 = ssub.s32 %s9, 1
    %s15 = ssub.s32 %s9, 2
    %s16 = sadd.s32 %s9, 1
    %s17 = ssub.s32 %s9, %s16
    %p18 = scmp.eq.s32.totalorder %s17, 0
    %s20 = sadd.s32 %s19, 1
    %s21 = scalar_select %p18, %s19, %s20
    %p24 = pneg %p18
    %p25 = scmp.eq.s32.totalorder %s9, 1
    %p26 = por %p24, %p25
    %p27 = scmp.ne.s32.totalorder %s19, %s22
    %p28 = scmp.eq.s32.totalorder %s9, 0
    %p29 = por %p27, %p28
    %p30 = scmp.ne.s32.totalorder %s19, %s22
    %p31 = scmp.eq.s32.totalorder %s14, 1
    %p32 = por %p30, %p31
    %p33 = scmp.ne.s32.totalorder %s22, %s23
    %p34 = scmp.eq.s32.totalorder %s14, 0
    %p35 = por %p33, %p34
    %p36 = scmp.ne.s32.totalorder %s22, %s23
    %p37 = scmp.eq.s32.totalorder %s15, 1
    %p38 = por %p36, %p37
    %p40 = scmp.ne.s32.totalorder %s23, %s39
    %p41 = scmp.eq.s32.totalorder %s15, 0
    %p42 = por %p40, %p41
    %s44 = sadd.s32 %s43, 1
    %p47 = scmp.eq.s32.totalorder %s9, 1
    %p48 = scmp.ne.s32.totalorder %s43, %s45
    %p49 = scmp.eq.s32.totalorder %s9, 0
    %p50 = por %p48, %p49
    %p51 = scmp.ne.s32.totalorder %s43, %s45
    %p52 = scmp.eq.s32.totalorder %s14, 1
    %p53 = por %p51, %p52
    %p54 = scmp.ne.s32.totalorder %s45, %s46
    %p55 = scmp.eq.s32.totalorder %s14, 0
    %p56 = por %p54, %p55
    %p57 = scmp.ne.s32.totalorder %s45, %s46
    %p58 = scmp.eq.s32.totalorder %s15, 1
    %p59 = por %p57, %p58
    %p61 = scmp.ne.s32.totalorder %s46, %s60
    %p62 = scmp.eq.s32.totalorder %s15, 0
    %p63 = por %p61, %p62
    %s65 = sadd.s32 %s64, 1
    %p68 = scmp.eq.s32.totalorder %s9, 1
    %p69 = scmp.ne.s32.totalorder %s64, %s66
    %p70 = scmp.eq.s32.totalorder %s9, 0
    %p71 = por %p69, %p70
    %p72 = scmp.ne.s32.totalorder %s64, %s66
    %p73 = scmp.eq.s32.totalorder %s14, 1
    %p74 = por %p72, %p73
    %p75 = scmp.ne.s32.totalorder %s66, %s67
    %p76 = scmp.eq.s32.totalorder %s14, 0
    %p77 = por %p75, %p76
    %p78 = scmp.ne.s32.totalorder %s66, %s67
    %p79 = scmp.eq.s32.totalorder %s15, 1
    %p80 = por %p78, %p79
    %p82 = scmp.ne.s32.totalorder %s67, %s81
    %p83 = scmp.eq.s32.totalorder %s15, 0
    %p84 = por %p82, %p83
    %s85 = ssub.s32 %s9, %s16
    %p86 = scmp.eq.s32.totalorder %s85, 0
    %s88 = sadd.s32 %s87, 1
    %s89 = scalar_select %p86, %s87, %s88
    %p92 = pneg %p86
    %p93 = scmp.eq.s32.totalorder %s9, 1
    %p94 = por %p92, %p93
    %p95 = scmp.ne.s32.totalorder %s87, %s90
    %p96 = scmp.eq.s32.totalorder %s9, 0
    %p97 = por %p95, %p96
    %p98 = scmp.ne.s32.totalorder %s87, %s90
    %p99 = scmp.eq.s32.totalorder %s14, 1
    %p100 = por %p98, %p99
    %p101 = scmp.ne.s32.totalorder %s90, %s91
    %p102 = scmp.eq.s32.totalorder %s14, 0
    %p103 = por %p101, %p102
    %p104 = scmp.ne.s32.totalorder %s90, %s91
    %p105 = scmp.eq.s32.totalorder %s15, 1
    %p106 = por %p104, %p105
    %p108 = scmp.ne.s32.totalorder %s91, %s107
    %p109 = scmp.eq.s32.totalorder %s15, 0
    %p110 = por %p108, %p109
    %p111 = scmp.le.s32.totalorder 1, %s9
    %p112 = scmp.lt.s32.totalorder %s9, 3
    %p113 = pnand %p111, %p112
    %p114 = pneg %p113
    // Predicated region
    $region9: #{define_d_forward.6} parent=5 // pred_check
      _
    $region10: #{define_d_forward.6} parent=5 // pred_check_branch
      %116 = sbr.rel (%p113) target = $region12
    $region11: #{define_d_forward.6} parent=5 // pred_region
      %s117 = ssub.s32 %s9, 1
      // Predicated region
      $region13: #{define_d_forward.6} parent=11 // pred_check
        %p118 = pneg %p56
      $region14: #{define_d_forward.6} parent=11 // pred_check_branch
        %120 = sbr.rel (%p118) target = $region16
      $region15: #{define_d_forward.6} parent=11 // pred_region
        _
      $region16: #{define_d_forward.6} parent=11 // pred_fallthru
        _
      // Predicated region
      $region17: #{define_d_forward.6} parent=11 // pred_check
        %p121 = pneg %p77
      $region18: #{define_d_forward.6} parent=11 // pred_check_branch
        %123 = sbr.rel (%p121) target = $region20
      $region19: #{define_d_forward.6} parent=11 // pred_region
        _
      $region20: #{define_d_forward.6} parent=11 // pred_fallthru
        _
    $region12: #{define_d_forward.6} parent=5 // pred_fallthru
      _
    %p124 = scmp.lt.s32.totalorder %s9, 2
    // Predicated region
    $region21: #{define_d_forward.6} parent=5 // pred_check
      %p125 = pneg %p124
    $region22: #{define_d_forward.6} parent=5 // pred_check_branch
      %127 = sbr.rel (%p125) target = $region24
    $region23: #{define_d_forward.6} parent=5 // pred_region
      // Predicated region
      $region25: #{define_d_forward.6} parent=23 // pred_check
        %p128 = pneg %p29
      $region26: #{define_d_forward.6} parent=23 // pred_check_branch
        %130 = sbr.rel (%p128) target = $region28
      $region27: #{define_d_forward.6} parent=23 // pred_region
        %p131 = scmp.lt.s32.totalorder %s9, 1
        %s132 = scalar_select %p131, %s9, 1
        %s133 = smul.addr %s132, 128
        %s134 = smul.addr %s133, 4
        %s135 = scalar_lea.vmem %s0, %s134
      $region28: #{define_d_forward.6} parent=23 // pred_fallthru
        _
    $region24: #{define_d_forward.6} parent=5 // pred_fallthru
      _
    %p136 = scmp.le.s32.totalorder 1, %s9
    %p137 = scmp.lt.s32.totalorder %s9, 3
    %p138 = pnand %p136, %p137
    %p139 = pneg %p138
    // Predicated region
    $region29: #{define_d_forward.6} parent=5 // pred_check
      _
    $region30: #{define_d_forward.6} parent=5 // pred_check_branch
      %141 = sbr.rel (%p138) target = $region32
    $region31: #{define_d_forward.6} parent=5 // pred_region
      %s142 = ssub.s32 %s9, 1
      %p143 = scmp.lt.s32.totalorder %s14, 1
      %s144 = scalar_select %p143, %s14, 1
      %s145 = smul.addr %s144, 128
      %s146 = smul.addr %s145, 4
      %s147 = scalar_lea.vmem %s0, %s146
      %p148 = pneg %p35
      %p149 = pneg %p32
      %p150 = pneg %p56
      %p151 = pneg %p53
      %p152 = pneg %p77
      %p153 = pneg %p74
      %p154 = pneg %p103
      %p155 = pneg %p100
      %p156 = scmp.lt.s32.totalorder %s14, 1
      %s157 = scalar_select %p156, %s14, 1
      %s158 = smul.addr %s157, 8
      %s159 = smul.addr %s158, 4
      %s160 = scalar_lea.vmem %s3, %s159
      %p161 = scmp.lt.s32.totalorder %s14, 1
      %s162 = scalar_select %p161, %s14, 1
      %s163 = smul.addr %s162, 128
      %s164 = smul.addr %s163, 4
      %s165 = scalar_lea.vmem %s0, %s164
      %p166 = scmp.lt.s32.totalorder %s14, 1
      %s167 = scalar_select %p166, %s14, 1
      %s168 = smul.addr %s167, 8
      %s169 = smul.addr %s168, 4
      %s170 = scalar_lea.vmem %s3, %s169
      %v172 = vld [vmem:[%s165] sm:$0xff]
      %v173 = vld [vmem:[%s165 + $0x8] sm:$0xff]
      %v174 = vld [vmem:[%s165 + $0x10] sm:$0xff]
      %v175 = vld [vmem:[%s165 + $0x18] sm:$0xff]
      %v176 = vld [vmem:[%s165 + $0x20] sm:$0xff]
      %v177 = vld [vmem:[%s165 + $0x28] sm:$0xff]
      %v178 = vld [vmem:[%s165 + $0x30] sm:$0xff]
      %v179 = vld [vmem:[%s165 + $0x38] sm:$0xff]
      %v180 = vld [vmem:[%s165 + $0x40] sm:$0xff]
      %v181 = vld [vmem:[%s165 + $0x48] sm:$0xff]
      %v182 = vld [vmem:[%s165 + $0x50] sm:$0xff]
      %v183 = vld [vmem:[%s165 + $0x58] sm:$0xff]
      %v184 = vld [vmem:[%s165 + $0x60] sm:$0xff]
      %v185 = vld [vmem:[%s165 + $0x68] sm:$0xff]
      %v186 = vld [vmem:[%s165 + $0x70] sm:$0xff]
      %v187 = vld [vmem:[%s165 + $0x78] sm:$0xff]
      %v188 = vld [vmem:[%s165 + $0x80] sm:$0xff]
      %v189 = vld [vmem:[%s165 + $0x88] sm:$0xff]
      %v190 = vld [vmem:[%s165 + $0x90] sm:$0xff]
      %v191 = vld [vmem:[%s165 + $0x98] sm:$0xff]
      %v192 = vld [vmem:[%s165 + $0xa0] sm:$0xff]
      %v193 = vld [vmem:[%s165 + $0xa8] sm:$0xff]
      %v194 = vld [vmem:[%s165 + $0xb0] sm:$0xff]
      %v195 = vld [vmem:[%s165 + $0xb8] sm:$0xff]
      %v196 = vld [vmem:[%s165 + $0xc0] sm:$0xff]
      %v197 = vld [vmem:[%s165 + $0xc8] sm:$0xff]
      %v198 = vld [vmem:[%s165 + $0xd0] sm:$0xff]
      %v199 = vld [vmem:[%s165 + $0xd8] sm:$0xff]
      %v200 = vld [vmem:[%s165 + $0xe0] sm:$0xff]
      %v201 = vld [vmem:[%s165 + $0xe8] sm:$0xff]
      %v202 = vld [vmem:[%s165 + $0xf0] sm:$0xff]
      %v203 = vld [vmem:[%s165 + $0xf8] sm:$0xff]
      %v204 = vld [vmem:[%s165 + $0x100] sm:$0xff]
      %v205 = vld [vmem:[%s165 + $0x108] sm:$0xff]
      %v206 = vld [vmem:[%s165 + $0x110] sm:$0xff]
      %v207 = vld [vmem:[%s165 + $0x118] sm:$0xff]
      %v208 = vld [vmem:[%s165 + $0x120] sm:$0xff]
      %v209 = vld [vmem:[%s165 + $0x128] sm:$0xff]
      %v210 = vld [vmem:[%s165 + $0x130] sm:$0xff]
      %v211 = vld [vmem:[%s165 + $0x138] sm:$0xff]
      %v212 = vld [vmem:[%s165 + $0x140] sm:$0xff]
      %v213 = vld [vmem:[%s165 + $0x148] sm:$0xff]
      %v214 = vld [vmem:[%s165 + $0x150] sm:$0xff]
      %v215 = vld [vmem:[%s165 + $0x158] sm:$0xff]
      %v216 = vld [vmem:[%s165 + $0x160] sm:$0xff]
      %v217 = vld [vmem:[%s165 + $0x168] sm:$0xff]
      %v218 = vld [vmem:[%s165 + $0x170] sm:$0xff]
      %v219 = vld [vmem:[%s165 + $0x178] sm:$0xff]
      %v220 = vld [vmem:[%s165 + $0x180] sm:$0xff]
      %v221 = vld [vmem:[%s165 + $0x188] sm:$0xff]
      %v222 = vld [vmem:[%s165 + $0x190] sm:$0xff]
      %v223 = vld [vmem:[%s165 + $0x198] sm:$0xff]
      %v224 = vld [vmem:[%s165 + $0x1a0] sm:$0xff]
      %v225 = vld [vmem:[%s165 + $0x1a8] sm:$0xff]
      %v226 = vld [vmem:[%s165 + $0x1b0] sm:$0xff]
      %v227 = vld [vmem:[%s165 + $0x1b8] sm:$0xff]
      %v228 = vld [vmem:[%s165 + $0x1c0] sm:$0xff]
      %v229 = vld [vmem:[%s165 + $0x1c8] sm:$0xff]
      %v230 = vld [vmem:[%s165 + $0x1d0] sm:$0xff]
      %v231 = vld [vmem:[%s165 + $0x1d8] sm:$0xff]
      %v232 = vld [vmem:[%s165 + $0x1e0] sm:$0xff]
      %v233 = vld [vmem:[%s165 + $0x1e8] sm:$0xff]
      %v234 = vld [vmem:[%s165 + $0x1f0] sm:$0xff]
      %v235 = vld [vmem:[%s165 + $0x1f8] sm:$0xff]
      %v236 = vld [vmem:[%s1] sm:$0xf]
      %v237 = vld [vmem:[%s1 + $0x4] sm:$0xf]
      %v238 = vld [vmem:[%s1 + $0x8] sm:$0xf]
      %v239 = vld [vmem:[%s1 + $0xc] sm:$0xf]
      %v240 = vld [vmem:[%s1 + $0x10] sm:$0xf]
      %v241 = vld [vmem:[%s1 + $0x14] sm:$0xf]
      %v242 = vld [vmem:[%s1 + $0x18] sm:$0xf]
      %v243 = vld [vmem:[%s1 + $0x1c] sm:$0xf]
      %v244 = vld [vmem:[%s1 + $0x20] sm:$0xf]
      %v245 = vld [vmem:[%s1 + $0x24] sm:$0xf]
      %v246 = vld [vmem:[%s1 + $0x28] sm:$0xf]
      %v247 = vld [vmem:[%s1 + $0x2c] sm:$0xf]
      %v248 = vld [vmem:[%s1 + $0x30] sm:$0xf]
      %v249 = vld [vmem:[%s1 + $0x34] sm:$0xf]
      %v250 = vld [vmem:[%s1 + $0x38] sm:$0xf]
      %v251 = vld [vmem:[%s1 + $0x3c] sm:$0xf]
      %v252 = vld [vmem:[%s1 + $0x40] sm:$0xf]
      %v253 = vld [vmem:[%s1 + $0x44] sm:$0xf]
      %v254 = vld [vmem:[%s1 + $0x48] sm:$0xf]
      %v255 = vld [vmem:[%s1 + $0x4c] sm:$0xf]
      %v256 = vld [vmem:[%s1 + $0x50] sm:$0xf]
      %v257 = vld [vmem:[%s1 + $0x54] sm:$0xf]
      %v258 = vld [vmem:[%s1 + $0x58] sm:$0xf]
      %v259 = vld [vmem:[%s1 + $0x5c] sm:$0xf]
      %v260 = vld [vmem:[%s1 + $0x60] sm:$0xf]
      %v261 = vld [vmem:[%s1 + $0x64] sm:$0xf]
      %v262 = vld [vmem:[%s1 + $0x68] sm:$0xf]
      %v263 = vld [vmem:[%s1 + $0x6c] sm:$0xf]
      %v264 = vld [vmem:[%s1 + $0x70] sm:$0xf]
      %v265 = vld [vmem:[%s1 + $0x74] sm:$0xf]
      %v266 = vld [vmem:[%s1 + $0x78] sm:$0xf]
      %v267 = vld [vmem:[%s1 + $0x7c] sm:$0xf]
      %v268 = vld [vmem:[%s1 + $0x80] sm:$0xf]
      %v269 = vld [vmem:[%s1 + $0x84] sm:$0xf]
      %v270 = vld [vmem:[%s1 + $0x88] sm:$0xf]
      %v271 = vld [vmem:[%s1 + $0x8c] sm:$0xf]
      %v272 = vld [vmem:[%s1 + $0x90] sm:$0xf]
      %v273 = vld [vmem:[%s1 + $0x94] sm:$0xf]
      %v274 = vld [vmem:[%s1 + $0x98] sm:$0xf]
      %v275 = vld [vmem:[%s1 + $0x9c] sm:$0xf]
      %v276 = vld [vmem:[%s1 + $0xa0] sm:$0xf]
      %v277 = vld [vmem:[%s1 + $0xa4] sm:$0xf]
      %v278 = vld [vmem:[%s1 + $0xa8] sm:$0xf]
      %v279 = vld [vmem:[%s1 + $0xac] sm:$0xf]
      %v280 = vld [vmem:[%s1 + $0xb0] sm:$0xf]
      %v281 = vld [vmem:[%s1 + $0xb4] sm:$0xf]
      %v282 = vld [vmem:[%s1 + $0xb8] sm:$0xf]
      %v283 = vld [vmem:[%s1 + $0xbc] sm:$0xf]
      %v284 = vld [vmem:[%s1 + $0xc0] sm:$0xf]
      %v285 = vld [vmem:[%s1 + $0xc4] sm:$0xf]
      %v286 = vld [vmem:[%s1 + $0xc8] sm:$0xf]
      %v287 = vld [vmem:[%s1 + $0xcc] sm:$0xf]
      %v288 = vld [vmem:[%s1 + $0xd0] sm:$0xf]
      %v289 = vld [vmem:[%s1 + $0xd4] sm:$0xf]
      %v290 = vld [vmem:[%s1 + $0xd8] sm:$0xf]
      %v291 = vld [vmem:[%s1 + $0xdc] sm:$0xf]
      %v292 = vld [vmem:[%s1 + $0xe0] sm:$0xf]
      %v293 = vld [vmem:[%s1 + $0xe4] sm:$0xf]
      %v294 = vld [vmem:[%s1 + $0xe8] sm:$0xf]
      %v295 = vld [vmem:[%s1 + $0xec] sm:$0xf]
      %v296 = vld [vmem:[%s1 + $0xf0] sm:$0xf]
      %v297 = vld [vmem:[%s1 + $0xf4] sm:$0xf]
      %v298 = vld [vmem:[%s1 + $0xf8] sm:$0xf]
      %v299 = vld [vmem:[%s1 + $0xfc] sm:$0xf]
      %v300 = vld [vmem:[%s1 + $0x100] sm:$0xf]
      %v301 = vld [vmem:[%s1 + $0x104] sm:$0xf]
      %v302 = vld [vmem:[%s1 + $0x108] sm:$0xf]
      %v303 = vld [vmem:[%s1 + $0x10c] sm:$0xf]
      %v304 = vld [vmem:[%s1 + $0x110] sm:$0xf]
      %v305 = vld [vmem:[%s1 + $0x114] sm:$0xf]
      %v306 = vld [vmem:[%s1 + $0x118] sm:$0xf]
      %v307 = vld [vmem:[%s1 + $0x11c] sm:$0xf]
      %v308 = vld [vmem:[%s1 + $0x120] sm:$0xf]
      %v309 = vld [vmem:[%s1 + $0x124] sm:$0xf]
      %v310 = vld [vmem:[%s1 + $0x128] sm:$0xf]
      %v311 = vld [vmem:[%s1 + $0x12c] sm:$0xf]
      %v312 = vld [vmem:[%s1 + $0x130] sm:$0xf]
      %v313 = vld [vmem:[%s1 + $0x134] sm:$0xf]
      %v314 = vld [vmem:[%s1 + $0x138] sm:$0xf]
      %v315 = vld [vmem:[%s1 + $0x13c] sm:$0xf]
      %v316 = vld [vmem:[%s1 + $0x140] sm:$0xf]
      %v317 = vld [vmem:[%s1 + $0x144] sm:$0xf]
      %v318 = vld [vmem:[%s1 + $0x148] sm:$0xf]
      %v319 = vld [vmem:[%s1 + $0x14c] sm:$0xf]
      %v320 = vld [vmem:[%s1 + $0x150] sm:$0xf]
      %v321 = vld [vmem:[%s1 + $0x154] sm:$0xf]
      %v322 = vld [vmem:[%s1 + $0x158] sm:$0xf]
      %v323 = vld [vmem:[%s1 + $0x15c] sm:$0xf]
      %v324 = vld [vmem:[%s1 + $0x160] sm:$0xf]
      %v325 = vld [vmem:[%s1 + $0x164] sm:$0xf]
      %v326 = vld [vmem:[%s1 + $0x168] sm:$0xf]
      %v327 = vld [vmem:[%s1 + $0x16c] sm:$0xf]
      %v328 = vld [vmem:[%s1 + $0x170] sm:$0xf]
      %v329 = vld [vmem:[%s1 + $0x174] sm:$0xf]
      %v330 = vld [vmem:[%s1 + $0x178] sm:$0xf]
      %v331 = vld [vmem:[%s1 + $0x17c] sm:$0xf]
      %v332 = vld [vmem:[%s1 + $0x180] sm:$0xf]
      %v333 = vld [vmem:[%s1 + $0x184] sm:$0xf]
      %v334 = vld [vmem:[%s1 + $0x188] sm:$0xf]
      %v335 = vld [vmem:[%s1 + $0x18c] sm:$0xf]
      %v336 = vld [vmem:[%s1 + $0x190] sm:$0xf]
      %v337 = vld [vmem:[%s1 + $0x194] sm:$0xf]
      %v338 = vld [vmem:[%s1 + $0x198] sm:$0xf]
      %v339 = vld [vmem:[%s1 + $0x19c] sm:$0xf]
      %v340 = vld [vmem:[%s1 + $0x1a0] sm:$0xf]
      %v341 = vld [vmem:[%s1 + $0x1a4] sm:$0xf]
      %v342 = vld [vmem:[%s1 + $0x1a8] sm:$0xf]
      %v343 = vld [vmem:[%s1 + $0x1ac] sm:$0xf]
      %v344 = vld [vmem:[%s1 + $0x1b0] sm:$0xf]
      %v345 = vld [vmem:[%s1 + $0x1b4] sm:$0xf]
      %v346 = vld [vmem:[%s1 + $0x1b8] sm:$0xf]
      %v347 = vld [vmem:[%s1 + $0x1bc] sm:$0xf]
      %v348 = vld [vmem:[%s1 + $0x1c0] sm:$0xf]
      %v349 = vld [vmem:[%s1 + $0x1c4] sm:$0xf]
      %v350 = vld [vmem:[%s1 + $0x1c8] sm:$0xf]
      %v351 = vld [vmem:[%s1 + $0x1cc] sm:$0xf]
      %v352 = vld [vmem:[%s1 + $0x1d0] sm:$0xf]
      %v353 = vld [vmem:[%s1 + $0x1d4] sm:$0xf]
      %v354 = vld [vmem:[%s1 + $0x1d8] sm:$0xf]
      %v355 = vld [vmem:[%s1 + $0x1dc] sm:$0xf]
      %v356 = vld [vmem:[%s1 + $0x1e0] sm:$0xf]
      %v357 = vld [vmem:[%s1 + $0x1e4] sm:$0xf]
      %v358 = vld [vmem:[%s1 + $0x1e8] sm:$0xf]
      %v359 = vld [vmem:[%s1 + $0x1ec] sm:$0xf]
      %v360 = vld [vmem:[%s1 + $0x1f0] sm:$0xf]
      %v361 = vld [vmem:[%s1 + $0x1f4] sm:$0xf]
      %v362 = vld [vmem:[%s1 + $0x1f8] sm:$0xf]
      %v363 = vld [vmem:[%s1 + $0x1fc] sm:$0xf]
      %v364 = vld [vmem:[%s1 + $0x200] sm:$0xf]
      %v365 = vld [vmem:[%s1 + $0x204] sm:$0xf]
      %v366 = vld [vmem:[%s1 + $0x208] sm:$0xf]
      %v367 = vld [vmem:[%s1 + $0x20c] sm:$0xf]
      %v368 = vld [vmem:[%s1 + $0x210] sm:$0xf]
      %v369 = vld [vmem:[%s1 + $0x214] sm:$0xf]
      %v370 = vld [vmem:[%s1 + $0x218] sm:$0xf]
      %v371 = vld [vmem:[%s1 + $0x21c] sm:$0xf]
      %v372 = vld [vmem:[%s1 + $0x220] sm:$0xf]
      %v373 = vld [vmem:[%s1 + $0x224] sm:$0xf]
      %v374 = vld [vmem:[%s1 + $0x228] sm:$0xf]
      %v375 = vld [vmem:[%s1 + $0x22c] sm:$0xf]
      %v376 = vld [vmem:[%s1 + $0x230] sm:$0xf]
      %v377 = vld [vmem:[%s1 + $0x234] sm:$0xf]
      %v378 = vld [vmem:[%s1 + $0x238] sm:$0xf]
      %v379 = vld [vmem:[%s1 + $0x23c] sm:$0xf]
      %v380 = vld [vmem:[%s1 + $0x240] sm:$0xf]
      %v381 = vld [vmem:[%s1 + $0x244] sm:$0xf]
      %v382 = vld [vmem:[%s1 + $0x248] sm:$0xf]
      %v383 = vld [vmem:[%s1 + $0x24c] sm:$0xf]
      %v384 = vld [vmem:[%s1 + $0x250] sm:$0xf]
      %v385 = vld [vmem:[%s1 + $0x254] sm:$0xf]
      %v386 = vld [vmem:[%s1 + $0x258] sm:$0xf]
      %v387 = vld [vmem:[%s1 + $0x25c] sm:$0xf]
      %v388 = vld [vmem:[%s1 + $0x260] sm:$0xf]
      %v389 = vld [vmem:[%s1 + $0x264] sm:$0xf]
      %v390 = vld [vmem:[%s1 + $0x268] sm:$0xf]
      %v391 = vld [vmem:[%s1 + $0x26c] sm:$0xf]
      %v392 = vld [vmem:[%s1 + $0x270] sm:$0xf]
      %v393 = vld [vmem:[%s1 + $0x274] sm:$0xf]
      %v394 = vld [vmem:[%s1 + $0x278] sm:$0xf]
      %v395 = vld [vmem:[%s1 + $0x27c] sm:$0xf]
      %v396 = vld [vmem:[%s1 + $0x280] sm:$0xf]
      %v397 = vld [vmem:[%s1 + $0x284] sm:$0xf]
      %v398 = vld [vmem:[%s1 + $0x288] sm:$0xf]
      %v399 = vld [vmem:[%s1 + $0x28c] sm:$0xf]
      %v400 = vld [vmem:[%s1 + $0x290] sm:$0xf]
      %v401 = vld [vmem:[%s1 + $0x294] sm:$0xf]
      %v402 = vld [vmem:[%s1 + $0x298] sm:$0xf]
      %v403 = vld [vmem:[%s1 + $0x29c] sm:$0xf]
      %v404 = vld [vmem:[%s1 + $0x2a0] sm:$0xf]
      %v405 = vld [vmem:[%s1 + $0x2a4] sm:$0xf]
      %v406 = vld [vmem:[%s1 + $0x2a8] sm:$0xf]
      %v407 = vld [vmem:[%s1 + $0x2ac] sm:$0xf]
      %v408 = vld [vmem:[%s1 + $0x2b0] sm:$0xf]
      %v409 = vld [vmem:[%s1 + $0x2b4] sm:$0xf]
      %v410 = vld [vmem:[%s1 + $0x2b8] sm:$0xf]
      %v411 = vld [vmem:[%s1 + $0x2bc] sm:$0xf]
      %v412 = vld [vmem:[%s1 + $0x2c0] sm:$0xf]
      %v413 = vld [vmem:[%s1 + $0x2c4] sm:$0xf]
      %v414 = vld [vmem:[%s1 + $0x2c8] sm:$0xf]
      %v415 = vld [vmem:[%s1 + $0x2cc] sm:$0xf]
      %v416 = vld [vmem:[%s1 + $0x2d0] sm:$0xf]
      %v417 = vld [vmem:[%s1 + $0x2d4] sm:$0xf]
      %v418 = vld [vmem:[%s1 + $0x2d8] sm:$0xf]
      %v419 = vld [vmem:[%s1 + $0x2dc] sm:$0xf]
      %v420 = vld [vmem:[%s1 + $0x2e0] sm:$0xf]
      %v421 = vld [vmem:[%s1 + $0x2e4] sm:$0xf]
      %v422 = vld [vmem:[%s1 + $0x2e8] sm:$0xf]
      %v423 = vld [vmem:[%s1 + $0x2ec] sm:$0xf]
      %v424 = vld [vmem:[%s1 + $0x2f0] sm:$0xf]
      %v425 = vld [vmem:[%s1 + $0x2f4] sm:$0xf]
      %v426 = vld [vmem:[%s1 + $0x2f8] sm:$0xf]
      %v427 = vld [vmem:[%s1 + $0x2fc] sm:$0xf]
      %v428 = vld [vmem:[%s1 + $0x300] sm:$0xf]
      %v429 = vld [vmem:[%s1 + $0x304] sm:$0xf]
      %v430 = vld [vmem:[%s1 + $0x308] sm:$0xf]
      %v431 = vld [vmem:[%s1 + $0x30c] sm:$0xf]
      %v432 = vld [vmem:[%s1 + $0x310] sm:$0xf]
      %v433 = vld [vmem:[%s1 + $0x314] sm:$0xf]
      %v434 = vld [vmem:[%s1 + $0x318] sm:$0xf]
      %v435 = vld [vmem:[%s1 + $0x31c] sm:$0xf]
      %v436 = vld [vmem:[%s1 + $0x320] sm:$0xf]
      %v437 = vld [vmem:[%s1 + $0x324] sm:$0xf]
      %v438 = vld [vmem:[%s1 + $0x328] sm:$0xf]
      %v439 = vld [vmem:[%s1 + $0x32c] sm:$0xf]
      %v440 = vld [vmem:[%s1 + $0x330] sm:$0xf]
      %v441 = vld [vmem:[%s1 + $0x334] sm:$0xf]
      %v442 = vld [vmem:[%s1 + $0x338] sm:$0xf]
      %v443 = vld [vmem:[%s1 + $0x33c] sm:$0xf]
      %v444 = vld [vmem:[%s1 + $0x340] sm:$0xf]
      %v445 = vld [vmem:[%s1 + $0x344] sm:$0xf]
      %v446 = vld [vmem:[%s1 + $0x348] sm:$0xf]
      %v447 = vld [vmem:[%s1 + $0x34c] sm:$0xf]
      %v448 = vld [vmem:[%s1 + $0x350] sm:$0xf]
      %v449 = vld [vmem:[%s1 + $0x354] sm:$0xf]
      %v450 = vld [vmem:[%s1 + $0x358] sm:$0xf]
      %v451 = vld [vmem:[%s1 + $0x35c] sm:$0xf]
      %v452 = vld [vmem:[%s1 + $0x360] sm:$0xf]
      %v453 = vld [vmem:[%s1 + $0x364] sm:$0xf]
      %v454 = vld [vmem:[%s1 + $0x368] sm:$0xf]
      %v455 = vld [vmem:[%s1 + $0x36c] sm:$0xf]
      %v456 = vld [vmem:[%s1 + $0x370] sm:$0xf]
      %v457 = vld [vmem:[%s1 + $0x374] sm:$0xf]
      %v458 = vld [vmem:[%s1 + $0x378] sm:$0xf]
      %v459 = vld [vmem:[%s1 + $0x37c] sm:$0xf]
      %v460 = vld [vmem:[%s1 + $0x380] sm:$0xf]
      %v461 = vld [vmem:[%s1 + $0x384] sm:$0xf]
      %v462 = vld [vmem:[%s1 + $0x388] sm:$0xf]
      %v463 = vld [vmem:[%s1 + $0x38c] sm:$0xf]
      %v464 = vld [vmem:[%s1 + $0x390] sm:$0xf]
      %v465 = vld [vmem:[%s1 + $0x394] sm:$0xf]
      %v466 = vld [vmem:[%s1 + $0x398] sm:$0xf]
      %v467 = vld [vmem:[%s1 + $0x39c] sm:$0xf]
      %v468 = vld [vmem:[%s1 + $0x3a0] sm:$0xf]
      %v469 = vld [vmem:[%s1 + $0x3a4] sm:$0xf]
      %v470 = vld [vmem:[%s1 + $0x3a8] sm:$0xf]
      %v471 = vld [vmem:[%s1 + $0x3ac] sm:$0xf]
      %v472 = vld [vmem:[%s1 + $0x3b0] sm:$0xf]
      %v473 = vld [vmem:[%s1 + $0x3b4] sm:$0xf]
      %v474 = vld [vmem:[%s1 + $0x3b8] sm:$0xf]
      %v475 = vld [vmem:[%s1 + $0x3bc] sm:$0xf]
      %v476 = vld [vmem:[%s1 + $0x3c0] sm:$0xf]
      %v477 = vld [vmem:[%s1 + $0x3c4] sm:$0xf]
      %v478 = vld [vmem:[%s1 + $0x3c8] sm:$0xf]
      %v479 = vld [vmem:[%s1 + $0x3cc] sm:$0xf]
      %v480 = vld [vmem:[%s1 + $0x3d0] sm:$0xf]
      %v481 = vld [vmem:[%s1 + $0x3d4] sm:$0xf]
      %v482 = vld [vmem:[%s1 + $0x3d8] sm:$0xf]
      %v483 = vld [vmem:[%s1 + $0x3dc] sm:$0xf]
      %v484 = vld [vmem:[%s1 + $0x3e0] sm:$0xf]
      %v485 = vld [vmem:[%s1 + $0x3e4] sm:$0xf]
      %v486 = vld [vmem:[%s1 + $0x3e8] sm:$0xf]
      %v487 = vld [vmem:[%s1 + $0x3ec] sm:$0xf]
      %v488 = vld [vmem:[%s1 + $0x3f0] sm:$0xf]
      %v489 = vld [vmem:[%s1 + $0x3f4] sm:$0xf]
      %v490 = vld [vmem:[%s1 + $0x3f8] sm:$0xf]
      %v491 = vld [vmem:[%s1 + $0x3fc] sm:$0xf]
      %v492 = vld [vmem:[%s2] sm:$0x1]
      %v494 = vlaneseq
      %v495 = vshrl.u32 %v494, 7
      %v496 = vsub.s32 0, %v495
      %v497 = vrot.slane %v492, %v496
      %v563 = vunpack.c.l.b16 %v172
      %v564 = vunpack.c.h.b16 %v172
      %v565 = vunpack.c.l.b16 %v173
      %v566 = vunpack.c.h.b16 %v173
      %v567 = vunpack.c.l.b16 %v174
      %v568 = vunpack.c.h.b16 %v174
      %v569 = vunpack.c.l.b16 %v175
      %v570 = vunpack.c.h.b16 %v175
      %v571 = vunpack.c.l.b16 %v176
      %v572 = vunpack.c.h.b16 %v176
      %v573 = vunpack.c.l.b16 %v177
      %v574 = vunpack.c.h.b16 %v177
      %v575 = vunpack.c.l.b16 %v178
      %v576 = vunpack.c.h.b16 %v178
      %v577 = vunpack.c.l.b16 %v179
      %v578 = vunpack.c.h.b16 %v179
      %v579 = vunpack.c.l.b16 %v180
      %v580 = vunpack.c.h.b16 %v180
      %v581 = vunpack.c.l.b16 %v181
      %v582 = vunpack.c.h.b16 %v181
      %v583 = vunpack.c.l.b16 %v182
      %v584 = vunpack.c.h.b16 %v182
      %v585 = vunpack.c.l.b16 %v183
      %v586 = vunpack.c.h.b16 %v183
      %v587 = vunpack.c.l.b16 %v184
      %v588 = vunpack.c.h.b16 %v184
      %v589 = vunpack.c.l.b16 %v185
      %v590 = vunpack.c.h.b16 %v185
      %v591 = vunpack.c.l.b16 %v186
      %v592 = vunpack.c.h.b16 %v186
      %v593 = vunpack.c.l.b16 %v187
      %v594 = vunpack.c.h.b16 %v187
      %v595 = vunpack.c.l.b16 %v188
      %v596 = vunpack.c.h.b16 %v188
      %v597 = vunpack.c.l.b16 %v189
      %v598 = vunpack.c.h.b16 %v189
      %v599 = vunpack.c.l.b16 %v190
      %v600 = vunpack.c.h.b16 %v190
      %v601 = vunpack.c.l.b16 %v191
      %v602 = vunpack.c.h.b16 %v191
      %v603 = vunpack.c.l.b16 %v192
      %v604 = vunpack.c.h.b16 %v192
      %v605 = vunpack.c.l.b16 %v193
      %v606 = vunpack.c.h.b16 %v193
      %v607 = vunpack.c.l.b16 %v194
      %v608 = vunpack.c.h.b16 %v194
      %v609 = vunpack.c.l.b16 %v195
      %v610 = vunpack.c.h.b16 %v195
      %v611 = vunpack.c.l.b16 %v196
      %v612 = vunpack.c.h.b16 %v196
      %v613 = vunpack.c.l.b16 %v197
      %v614 = vunpack.c.h.b16 %v197
      %v615 = vunpack.c.l.b16 %v198
      %v616 = vunpack.c.h.b16 %v198
      %v617 = vunpack.c.l.b16 %v199
      %v618 = vunpack.c.h.b16 %v199
      %v619 = vunpack.c.l.b16 %v200
      %v620 = vunpack.c.h.b16 %v200
      %v621 = vunpack.c.l.b16 %v201
      %v622 = vunpack.c.h.b16 %v201
      %v623 = vunpack.c.l.b16 %v202
      %v624 = vunpack.c.h.b16 %v202
      %v625 = vunpack.c.l.b16 %v203
      %v626 = vunpack.c.h.b16 %v203
      %v627 = vunpack.c.l.b16 %v204
      %v628 = vunpack.c.h.b16 %v204
      %v629 = vunpack.c.l.b16 %v205
      %v630 = vunpack.c.h.b16 %v205
      %v631 = vunpack.c.l.b16 %v206
      %v632 = vunpack.c.h.b16 %v206
      %v633 = vunpack.c.l.b16 %v207
      %v634 = vunpack.c.h.b16 %v207
      %v635 = vunpack.c.l.b16 %v208
      %v636 = vunpack.c.h.b16 %v208
      %v637 = vunpack.c.l.b16 %v209
      %v638 = vunpack.c.h.b16 %v209
      %v639 = vunpack.c.l.b16 %v210
      %v640 = vunpack.c.h.b16 %v210
      %v641 = vunpack.c.l.b16 %v211
      %v642 = vunpack.c.h.b16 %v211
      %v643 = vunpack.c.l.b16 %v212
      %v644 = vunpack.c.h.b16 %v212
      %v645 = vunpack.c.l.b16 %v213
      %v646 = vunpack.c.h.b16 %v213
      %v647 = vunpack.c.l.b16 %v214
      %v648 = vunpack.c.h.b16 %v214
      %v649 = vunpack.c.l.b16 %v215
      %v650 = vunpack.c.h.b16 %v215
      %v651 = vunpack.c.l.b16 %v216
      %v652 = vunpack.c.h.b16 %v216
      %v653 = vunpack.c.l.b16 %v217
      %v654 = vunpack.c.h.b16 %v217
      %v655 = vunpack.c.l.b16 %v218
      %v656 = vunpack.c.h.b16 %v218
      %v657 = vunpack.c.l.b16 %v219
      %v658 = vunpack.c.h.b16 %v219
      %v659 = vunpack.c.l.b16 %v220
      %v660 = vunpack.c.h.b16 %v220
      %v661 = vunpack.c.l.b16 %v221
      %v662 = vunpack.c.h.b16 %v221
      %v663 = vunpack.c.l.b16 %v222
      %v664 = vunpack.c.h.b16 %v222
      %v665 = vunpack.c.l.b16 %v223
      %v666 = vunpack.c.h.b16 %v223
      %v667 = vunpack.c.l.b16 %v224
      %v668 = vunpack.c.h.b16 %v224
      %v669 = vunpack.c.l.b16 %v225
      %v670 = vunpack.c.h.b16 %v225
      %v671 = vunpack.c.l.b16 %v226
      %v672 = vunpack.c.h.b16 %v226
      %v673 = vunpack.c.l.b16 %v227
      %v674 = vunpack.c.h.b16 %v227
      %v675 = vunpack.c.l.b16 %v228
      %v676 = vunpack.c.h.b16 %v228
      %v677 = vunpack.c.l.b16 %v229
      %v678 = vunpack.c.h.b16 %v229
      %v679 = vunpack.c.l.b16 %v230
      %v680 = vunpack.c.h.b16 %v230
      %v681 = vunpack.c.l.b16 %v231
      %v682 = vunpack.c.h.b16 %v231
      %v683 = vunpack.c.l.b16 %v232
      %v684 = vunpack.c.h.b16 %v232
      %v685 = vunpack.c.l.b16 %v233
      %v686 = vunpack.c.h.b16 %v233
      %v687 = vunpack.c.l.b16 %v234
      %v688 = vunpack.c.h.b16 %v234
      %v689 = vunpack.c.l.b16 %v235
      %v690 = vunpack.c.h.b16 %v235
      %v691 = vpack.c.b16 %v579, %v563
      %v692 = vpack.c.b16 %v580, %v564
      %v693 = vpack.c.b16 %v581, %v565
      %v694 = vpack.c.b16 %v582, %v566
      %v695 = vpack.c.b16 %v583, %v567
      %v696 = vpack.c.b16 %v584, %v568
      %v697 = vpack.c.b16 %v585, %v569
      %v698 = vpack.c.b16 %v586, %v570
      %v699 = vpack.c.b16 %v587, %v571
      %v700 = vpack.c.b16 %v588, %v572
      %v701 = vpack.c.b16 %v589, %v573
      %v702 = vpack.c.b16 %v590, %v574
      %v703 = vpack.c.b16 %v591, %v575
      %v704 = vpack.c.b16 %v592, %v576
      %v705 = vpack.c.b16 %v593, %v577
      %v706 = vpack.c.b16 %v594, %v578
      %v707 = vpack.c.b16 %v611, %v595
      %v708 = vpack.c.b16 %v612, %v596
      %v709 = vpack.c.b16 %v613, %v597
      %v710 = vpack.c.b16 %v614, %v598
      %v711 = vpack.c.b16 %v615, %v599
      %v712 = vpack.c.b16 %v616, %v600
      %v713 = vpack.c.b16 %v617, %v601
      %v714 = vpack.c.b16 %v618, %v602
      %v715 = vpack.c.b16 %v619, %v603
      %v716 = vpack.c.b16 %v620, %v604
      %v717 = vpack.c.b16 %v621, %v605
      %v718 = vpack.c.b16 %v622, %v606
      %v719 = vpack.c.b16 %v623, %v607
      %v720 = vpack.c.b16 %v624, %v608
      %v721 = vpack.c.b16 %v625, %v609
      %v722 = vpack.c.b16 %v626, %v610
      %v723 = vpack.c.b16 %v643, %v627
      %v724 = vpack.c.b16 %v644, %v628
      %v725 = vpack.c.b16 %v645, %v629
      %v726 = vpack.c.b16 %v646, %v630
      %v727 = vpack.c.b16 %v647, %v631
      %v728 = vpack.c.b16 %v648, %v632
      %v729 = vpack.c.b16 %v649, %v633
      %v730 = vpack.c.b16 %v650, %v634
      %v731 = vpack.c.b16 %v651, %v635
      %v732 = vpack.c.b16 %v652, %v636
      %v733 = vpack.c.b16 %v653, %v637
      %v734 = vpack.c.b16 %v654, %v638
      %v735 = vpack.c.b16 %v655, %v639
      %v736 = vpack.c.b16 %v656, %v640
      %v737 = vpack.c.b16 %v657, %v641
      %v738 = vpack.c.b16 %v658, %v642
      %v739 = vpack.c.b16 %v675, %v659
      %v740 = vpack.c.b16 %v676, %v660
      %v741 = vpack.c.b16 %v677, %v661
      %v742 = vpack.c.b16 %v678, %v662
      %v743 = vpack.c.b16 %v679, %v663
      %v744 = vpack.c.b16 %v680, %v664
      %v745 = vpack.c.b16 %v681, %v665
      %v746 = vpack.c.b16 %v682, %v666
      %v747 = vpack.c.b16 %v683, %v667
      %v748 = vpack.c.b16 %v684, %v668
      %v749 = vpack.c.b16 %v685, %v669
      %v750 = vpack.c.b16 %v686, %v670
      %v751 = vpack.c.b16 %v687, %v671
      %v752 = vpack.c.b16 %v688, %v672
      %v753 = vpack.c.b16 %v689, %v673
      %v754 = vpack.c.b16 %v690, %v674
      %v1075 = vunpack.c.l.b16 %v236
      %v1076 = vunpack.c.l.b16 %v237
      %v1077 = vunpack.c.l.b16 %v238
      %v1078 = vunpack.c.l.b16 %v239
      %v1079 = vunpack.c.l.b16 %v240
      %v1080 = vunpack.c.l.b16 %v241
      %v1081 = vunpack.c.l.b16 %v242
      %v1082 = vunpack.c.l.b16 %v243
      %v1083 = vunpack.c.l.b16 %v244
      %v1084 = vunpack.c.l.b16 %v245
      %v1085 = vunpack.c.l.b16 %v246
      %v1086 = vunpack.c.l.b16 %v247
      %v1087 = vunpack.c.l.b16 %v248
      %v1088 = vunpack.c.l.b16 %v249
      %v1089 = vunpack.c.l.b16 %v250
      %v1090 = vunpack.c.l.b16 %v251
      %v1091 = vunpack.c.l.b16 %v252
      %v1092 = vunpack.c.l.b16 %v253
      %v1093 = vunpack.c.l.b16 %v254
      %v1094 = vunpack.c.l.b16 %v255
      %v1095 = vunpack.c.l.b16 %v256
      %v1096 = vunpack.c.l.b16 %v257
      %v1097 = vunpack.c.l.b16 %v258
      %v1098 = vunpack.c.l.b16 %v259
      %v1099 = vunpack.c.l.b16 %v260
      %v1100 = vunpack.c.l.b16 %v261
      %v1101 = vunpack.c.l.b16 %v262
      %v1102 = vunpack.c.l.b16 %v263
      %v1103 = vunpack.c.l.b16 %v264
      %v1104 = vunpack.c.l.b16 %v265
      %v1105 = vunpack.c.l.b16 %v266
      %v1106 = vunpack.c.l.b16 %v267
      %v1107 = vunpack.c.l.b16 %v268
      %v1108 = vunpack.c.l.b16 %v269
      %v1109 = vunpack.c.l.b16 %v270
      %v1110 = vunpack.c.l.b16 %v271
      %v1111 = vunpack.c.l.b16 %v272
      %v1112 = vunpack.c.l.b16 %v273
      %v1113 = vunpack.c.l.b16 %v274
      %v1114 = vunpack.c.l.b16 %v275
      %v1115 = vunpack.c.l.b16 %v276
      %v1116 = vunpack.c.l.b16 %v277
      %v1117 = vunpack.c.l.b16 %v278
      %v1118 = vunpack.c.l.b16 %v279
      %v1119 = vunpack.c.l.b16 %v280
      %v1120 = vunpack.c.l.b16 %v281
      %v1121 = vunpack.c.l.b16 %v282
      %v1122 = vunpack.c.l.b16 %v283
      %v1123 = vunpack.c.l.b16 %v284
      %v1124 = vunpack.c.l.b16 %v285
      %v1125 = vunpack.c.l.b16 %v286
      %v1126 = vunpack.c.l.b16 %v287
      %v1127 = vunpack.c.l.b16 %v288
      %v1128 = vunpack.c.l.b16 %v289
      %v1129 = vunpack.c.l.b16 %v290
      %v1130 = vunpack.c.l.b16 %v291
      %v1131 = vunpack.c.l.b16 %v292
      %v1132 = vunpack.c.l.b16 %v293
      %v1133 = vunpack.c.l.b16 %v294
      %v1134 = vunpack.c.l.b16 %v295
      %v1135 = vunpack.c.l.b16 %v296
      %v1136 = vunpack.c.l.b16 %v297
      %v1137 = vunpack.c.l.b16 %v298
      %v1138 = vunpack.c.l.b16 %v299
      %v1139 = vunpack.c.l.b16 %v300
      %v1140 = vunpack.c.l.b16 %v301
      %v1141 = vunpack.c.l.b16 %v302
      %v1142 = vunpack.c.l.b16 %v303
      %v1143 = vunpack.c.l.b16 %v304
      %v1144 = vunpack.c.l.b16 %v305
      %v1145 = vunpack.c.l.b16 %v306
      %v1146 = vunpack.c.l.b16 %v307
      %v1147 = vunpack.c.l.b16 %v308
      %v1148 = vunpack.c.l.b16 %v309
      %v1149 = vunpack.c.l.b16 %v310
      %v1150 = vunpack.c.l.b16 %v311
      %v1151 = vunpack.c.l.b16 %v312
      %v1152 = vunpack.c.l.b16 %v313
      %v1153 = vunpack.c.l.b16 %v314
      %v1154 = vunpack.c.l.b16 %v315
      %v1155 = vunpack.c.l.b16 %v316
      %v1156 = vunpack.c.l.b16 %v317
      %v1157 = vunpack.c.l.b16 %v318
      %v1158 = vunpack.c.l.b16 %v319
      %v1159 = vunpack.c.l.b16 %v320
      %v1160 = vunpack.c.l.b16 %v321
      %v1161 = vunpack.c.l.b16 %v322
      %v1162 = vunpack.c.l.b16 %v323
      %v1163 = vunpack.c.l.b16 %v324
      %v1164 = vunpack.c.l.b16 %v325
      %v1165 = vunpack.c.l.b16 %v326
      %v1166 = vunpack.c.l.b16 %v327
      %v1167 = vunpack.c.l.b16 %v328
      %v1168 = vunpack.c.l.b16 %v329
      %v1169 = vunpack.c.l.b16 %v330
      %v1170 = vunpack.c.l.b16 %v331
      %v1171 = vunpack.c.l.b16 %v332
      %v1172 = vunpack.c.l.b16 %v333
      %v1173 = vunpack.c.l.b16 %v334
      %v1174 = vunpack.c.l.b16 %v335
      %v1175 = vunpack.c.l.b16 %v336
      %v1176 = vunpack.c.l.b16 %v337
      %v1177 = vunpack.c.l.b16 %v338
      %v1178 = vunpack.c.l.b16 %v339
      %v1179 = vunpack.c.l.b16 %v340
      %v1180 = vunpack.c.l.b16 %v341
      %v1181 = vunpack.c.l.b16 %v342
      %v1182 = vunpack.c.l.b16 %v343
      %v1183 = vunpack.c.l.b16 %v344
      %v1184 = vunpack.c.l.b16 %v345
      %v1185 = vunpack.c.l.b16 %v346
      %v1186 = vunpack.c.l.b16 %v347
      %v1187 = vunpack.c.l.b16 %v348
      %v1188 = vunpack.c.l.b16 %v349
      %v1189 = vunpack.c.l.b16 %v350
      %v1190 = vunpack.c.l.b16 %v351
      %v1191 = vunpack.c.l.b16 %v352
      %v1192 = vunpack.c.l.b16 %v353
      %v1193 = vunpack.c.l.b16 %v354
      %v1194 = vunpack.c.l.b16 %v355
      %v1195 = vunpack.c.l.b16 %v356
      %v1196 = vunpack.c.l.b16 %v357
      %v1197 = vunpack.c.l.b16 %v358
      %v1198 = vunpack.c.l.b16 %v359
      %v1199 = vunpack.c.l.b16 %v360
      %v1200 = vunpack.c.l.b16 %v361
      %v1201 = vunpack.c.l.b16 %v362
      %v1202 = vunpack.c.l.b16 %v363
      %v1203 = vunpack.c.l.b16 %v364
      %v1204 = vunpack.c.l.b16 %v365
      %v1205 = vunpack.c.l.b16 %v366
      %v1206 = vunpack.c.l.b16 %v367
      %v1207 = vunpack.c.l.b16 %v368
      %v1208 = vunpack.c.l.b16 %v369
      %v1209 = vunpack.c.l.b16 %v370
      %v1210 = vunpack.c.l.b16 %v371
      %v1211 = vunpack.c.l.b16 %v372
      %v1212 = vunpack.c.l.b16 %v373
      %v1213 = vunpack.c.l.b16 %v374
      %v1214 = vunpack.c.l.b16 %v375
      %v1215 = vunpack.c.l.b16 %v376
      %v1216 = vunpack.c.l.b16 %v377
      %v1217 = vunpack.c.l.b16 %v378
      %v1218 = vunpack.c.l.b16 %v379
      %v1219 = vunpack.c.l.b16 %v380
      %v1220 = vunpack.c.l.b16 %v381
      %v1221 = vunpack.c.l.b16 %v382
      %v1222 = vunpack.c.l.b16 %v383
      %v1223 = vunpack.c.l.b16 %v384
      %v1224 = vunpack.c.l.b16 %v385
      %v1225 = vunpack.c.l.b16 %v386
      %v1226 = vunpack.c.l.b16 %v387
      %v1227 = vunpack.c.l.b16 %v388
      %v1228 = vunpack.c.l.b16 %v389
      %v1229 = vunpack.c.l.b16 %v390
      %v1230 = vunpack.c.l.b16 %v391
      %v1231 = vunpack.c.l.b16 %v392
      %v1232 = vunpack.c.l.b16 %v393
      %v1233 = vunpack.c.l.b16 %v394
      %v1234 = vunpack.c.l.b16 %v395
      %v1235 = vunpack.c.l.b16 %v396
      %v1236 = vunpack.c.l.b16 %v397
      %v1237 = vunpack.c.l.b16 %v398
      %v1238 = vunpack.c.l.b16 %v399
      %v1239 = vunpack.c.l.b16 %v400
      %v1240 = vunpack.c.l.b16 %v401
      %v1241 = vunpack.c.l.b16 %v402
      %v1242 = vunpack.c.l.b16 %v403
      %v1243 = vunpack.c.l.b16 %v404
      %v1244 = vunpack.c.l.b16 %v405
      %v1245 = vunpack.c.l.b16 %v406
      %v1246 = vunpack.c.l.b16 %v407
      %v1247 = vunpack.c.l.b16 %v408
      %v1248 = vunpack.c.l.b16 %v409
      %v1249 = vunpack.c.l.b16 %v410
      %v1250 = vunpack.c.l.b16 %v411
      %v1251 = vunpack.c.l.b16 %v412
      %v1252 = vunpack.c.l.b16 %v413
      %v1253 = vunpack.c.l.b16 %v414
      %v1254 = vunpack.c.l.b16 %v415
      %v1255 = vunpack.c.l.b16 %v416
      %v1256 = vunpack.c.l.b16 %v417
      %v1257 = vunpack.c.l.b16 %v418
      %v1258 = vunpack.c.l.b16 %v419
      %v1259 = vunpack.c.l.b16 %v420
      %v1260 = vunpack.c.l.b16 %v421
      %v1261 = vunpack.c.l.b16 %v422
      %v1262 = vunpack.c.l.b16 %v423
      %v1263 = vunpack.c.l.b16 %v424
      %v1264 = vunpack.c.l.b16 %v425
      %v1265 = vunpack.c.l.b16 %v426
      %v1266 = vunpack.c.l.b16 %v427
      %v1267 = vunpack.c.l.b16 %v428
      %v1268 = vunpack.c.l.b16 %v429
      %v1269 = vunpack.c.l.b16 %v430
      %v1270 = vunpack.c.l.b16 %v431
      %v1271 = vunpack.c.l.b16 %v432
      %v1272 = vunpack.c.l.b16 %v433
      %v1273 = vunpack.c.l.b16 %v434
      %v1274 = vunpack.c.l.b16 %v435
      %v1275 = vunpack.c.l.b16 %v436
      %v1276 = vunpack.c.l.b16 %v437
      %v1277 = vunpack.c.l.b16 %v438
      %v1278 = vunpack.c.l.b16 %v439
      %v1279 = vunpack.c.l.b16 %v440
      %v1280 = vunpack.c.l.b16 %v441
      %v1281 = vunpack.c.l.b16 %v442
      %v1282 = vunpack.c.l.b16 %v443
      %v1283 = vunpack.c.l.b16 %v444
      %v1284 = vunpack.c.l.b16 %v445
      %v1285 = vunpack.c.l.b16 %v446
      %v1286 = vunpack.c.l.b16 %v447
      %v1287 = vunpack.c.l.b16 %v448
      %v1288 = vunpack.c.l.b16 %v449
      %v1289 = vunpack.c.l.b16 %v450
      %v1290 = vunpack.c.l.b16 %v451
      %v1291 = vunpack.c.l.b16 %v452
      %v1292 = vunpack.c.l.b16 %v453
      %v1293 = vunpack.c.l.b16 %v454
      %v1294 = vunpack.c.l.b16 %v455
      %v1295 = vunpack.c.l.b16 %v456
      %v1296 = vunpack.c.l.b16 %v457
      %v1297 = vunpack.c.l.b16 %v458
      %v1298 = vunpack.c.l.b16 %v459
      %v1299 = vunpack.c.l.b16 %v460
      %v1300 = vunpack.c.l.b16 %v461
      %v1301 = vunpack.c.l.b16 %v462
      %v1302 = vunpack.c.l.b16 %v463
      %v1303 = vunpack.c.l.b16 %v464
      %v1304 = vunpack.c.l.b16 %v465
      %v1305 = vunpack.c.l.b16 %v466
      %v1306 = vunpack.c.l.b16 %v467
      %v1307 = vunpack.c.l.b16 %v468
      %v1308 = vunpack.c.l.b16 %v469
      %v1309 = vunpack.c.l.b16 %v470
      %v1310 = vunpack.c.l.b16 %v471
      %v1311 = vunpack.c.l.b16 %v472
      %v1312 = vunpack.c.l.b16 %v473
      %v1313 = vunpack.c.l.b16 %v474
      %v1314 = vunpack.c.l.b16 %v475
      %v1315 = vunpack.c.l.b16 %v476
      %v1316 = vunpack.c.l.b16 %v477
      %v1317 = vunpack.c.l.b16 %v478
      %v1318 = vunpack.c.l.b16 %v479
      %v1319 = vunpack.c.l.b16 %v480
      %v1320 = vunpack.c.l.b16 %v481
      %v1321 = vunpack.c.l.b16 %v482
      %v1322 = vunpack.c.l.b16 %v483
      %v1323 = vunpack.c.l.b16 %v484
      %v1324 = vunpack.c.l.b16 %v485
      %v1325 = vunpack.c.l.b16 %v486
      %v1326 = vunpack.c.l.b16 %v487
      %v1327 = vunpack.c.l.b16 %v488
      %v1328 = vunpack.c.l.b16 %v489
      %v1329 = vunpack.c.l.b16 %v490
      %v1330 = vunpack.c.l.b16 %v491
      %v1331 = vpack.c.b16 %v1076, %v1075
      %v1332 = vpack.c.b16 %v1078, %v1077
      %v1333 = vpack.c.b16 %v1080, %v1079
      %v1334 = vpack.c.b16 %v1082, %v1081
      %v1335 = vpack.c.b16 %v1084, %v1083
      %v1336 = vpack.c.b16 %v1086, %v1085
      %v1337 = vpack.c.b16 %v1088, %v1087
      %v1338 = vpack.c.b16 %v1090, %v1089
      %v1339 = vpack.c.b16 %v1092, %v1091
      %v1340 = vpack.c.b16 %v1094, %v1093
      %v1341 = vpack.c.b16 %v1096, %v1095
      %v1342 = vpack.c.b16 %v1098, %v1097
      %v1343 = vpack.c.b16 %v1100, %v1099
      %v1344 = vpack.c.b16 %v1102, %v1101
      %v1345 = vpack.c.b16 %v1104, %v1103
      %v1346 = vpack.c.b16 %v1106, %v1105
      %v1347 = vpack.c.b16 %v1108, %v1107
      %v1348 = vpack.c.b16 %v1110, %v1109
      %v1349 = vpack.c.b16 %v1112, %v1111
      %v1350 = vpack.c.b16 %v1114, %v1113
      %v1351 = vpack.c.b16 %v1116, %v1115
      %v1352 = vpack.c.b16 %v1118, %v1117
      %v1353 = vpack.c.b16 %v1120, %v1119
      %v1354 = vpack.c.b16 %v1122, %v1121
      %v1355 = vpack.c.b16 %v1124, %v1123
      %v1356 = vpack.c.b16 %v1126, %v1125
      %v1357 = vpack.c.b16 %v1128, %v1127
      %v1358 = vpack.c.b16 %v1130, %v1129
      %v1359 = vpack.c.b16 %v1132, %v1131
      %v1360 = vpack.c.b16 %v1134, %v1133
      %v1361 = vpack.c.b16 %v1136, %v1135
      %v1362 = vpack.c.b16 %v1138, %v1137
      %v1363 = vpack.c.b16 %v1140, %v1139
      %v1364 = vpack.c.b16 %v1142, %v1141
      %v1365 = vpack.c.b16 %v1144, %v1143
      %v1366 = vpack.c.b16 %v1146, %v1145
      %v1367 = vpack.c.b16 %v1148, %v1147
      %v1368 = vpack.c.b16 %v1150, %v1149
      %v1369 = vpack.c.b16 %v1152, %v1151
      %v1370 = vpack.c.b16 %v1154, %v1153
      %v1371 = vpack.c.b16 %v1156, %v1155
      %v1372 = vpack.c.b16 %v1158, %v1157
      %v1373 = vpack.c.b16 %v1160, %v1159
      %v1374 = vpack.c.b16 %v1162, %v1161
      %v1375 = vpack.c.b16 %v1164, %v1163
      %v1376 = vpack.c.b16 %v1166, %v1165
      %v1377 = vpack.c.b16 %v1168, %v1167
      %v1378 = vpack.c.b16 %v1170, %v1169
      %v1379 = vpack.c.b16 %v1172, %v1171
      %v1380 = vpack.c.b16 %v1174, %v1173
      %v1381 = vpack.c.b16 %v1176, %v1175
      %v1382 = vpack.c.b16 %v1178, %v1177
      %v1383 = vpack.c.b16 %v1180, %v1179
      %v1384 = vpack.c.b16 %v1182, %v1181
      %v1385 = vpack.c.b16 %v1184, %v1183
      %v1386 = vpack.c.b16 %v1186, %v1185
      %v1387 = vpack.c.b16 %v1188, %v1187
      %v1388 = vpack.c.b16 %v1190, %v1189
      %v1389 = vpack.c.b16 %v1192, %v1191
      %v1390 = vpack.c.b16 %v1194, %v1193
      %v1391 = vpack.c.b16 %v1196, %v1195
      %v1392 = vpack.c.b16 %v1198, %v1197
      %v1393 = vpack.c.b16 %v1200, %v1199
      %v1394 = vpack.c.b16 %v1202, %v1201
      %v1395 = vpack.c.b16 %v1204, %v1203
      %v1396 = vpack.c.b16 %v1206, %v1205
      %v1397 = vpack.c.b16 %v1208, %v1207
      %v1398 = vpack.c.b16 %v1210, %v1209
      %v1399 = vpack.c.b16 %v1212, %v1211
      %v1400 = vpack.c.b16 %v1214, %v1213
      %v1401 = vpack.c.b16 %v1216, %v1215
      %v1402 = vpack.c.b16 %v1218, %v1217
      %v1403 = vpack.c.b16 %v1220, %v1219
      %v1404 = vpack.c.b16 %v1222, %v1221
      %v1405 = vpack.c.b16 %v1224, %v1223
      %v1406 = vpack.c.b16 %v1226, %v1225
      %v1407 = vpack.c.b16 %v1228, %v1227
      %v1408 = vpack.c.b16 %v1230, %v1229
      %v1409 = vpack.c.b16 %v1232, %v1231
      %v1410 = vpack.c.b16 %v1234, %v1233
      %v1411 = vpack.c.b16 %v1236, %v1235
      %v1412 = vpack.c.b16 %v1238, %v1237
      %v1413 = vpack.c.b16 %v1240, %v1239
      %v1414 = vpack.c.b16 %v1242, %v1241
      %v1415 = vpack.c.b16 %v1244, %v1243
      %v1416 = vpack.c.b16 %v1246, %v1245
      %v1417 = vpack.c.b16 %v1248, %v1247
      %v1418 = vpack.c.b16 %v1250, %v1249
      %v1419 = vpack.c.b16 %v1252, %v1251
      %v1420 = vpack.c.b16 %v1254, %v1253
      %v1421 = vpack.c.b16 %v1256, %v1255
      %v1422 = vpack.c.b16 %v1258, %v1257
      %v1423 = vpack.c.b16 %v1260, %v1259
      %v1424 = vpack.c.b16 %v1262, %v1261
      %v1425 = vpack.c.b16 %v1264, %v1263
      %v1426 = vpack.c.b16 %v1266, %v1265
      %v1427 = vpack.c.b16 %v1268, %v1267
      %v1428 = vpack.c.b16 %v1270, %v1269
      %v1429 = vpack.c.b16 %v1272, %v1271
      %v1430 = vpack.c.b16 %v1274, %v1273
      %v1431 = vpack.c.b16 %v1276, %v1275
      %v1432 = vpack.c.b16 %v1278, %v1277
      %v1433 = vpack.c.b16 %v1280, %v1279
      %v1434 = vpack.c.b16 %v1282, %v1281
      %v1435 = vpack.c.b16 %v1284, %v1283
      %v1436 = vpack.c.b16 %v1286, %v1285
      %v1437 = vpack.c.b16 %v1288, %v1287
      %v1438 = vpack.c.b16 %v1290, %v1289
      %v1439 = vpack.c.b16 %v1292, %v1291
      %v1440 = vpack.c.b16 %v1294, %v1293
      %v1441 = vpack.c.b16 %v1296, %v1295
      %v1442 = vpack.c.b16 %v1298, %v1297
      %v1443 = vpack.c.b16 %v1300, %v1299
      %v1444 = vpack.c.b16 %v1302, %v1301
      %v1445 = vpack.c.b16 %v1304, %v1303
      %v1446 = vpack.c.b16 %v1306, %v1305
      %v1447 = vpack.c.b16 %v1308, %v1307
      %v1448 = vpack.c.b16 %v1310, %v1309
      %v1449 = vpack.c.b16 %v1312, %v1311
      %v1450 = vpack.c.b16 %v1314, %v1313
      %v1451 = vpack.c.b16 %v1316, %v1315
      %v1452 = vpack.c.b16 %v1318, %v1317
      %v1453 = vpack.c.b16 %v1320, %v1319
      %v1454 = vpack.c.b16 %v1322, %v1321
      %v1455 = vpack.c.b16 %v1324, %v1323
      %v1456 = vpack.c.b16 %v1326, %v1325
      %v1457 = vpack.c.b16 %v1328, %v1327
      %v1458 = vpack.c.b16 %v1330, %v1329
      %1587 = vmatprep.subr.bf16.mxu0 0
      %1588 = vmatpush1.bf16.msra.mxu0 %v1331
      %1589 = vmatprep.subr.bf16.mxu0 0
      %1590 = vmatpush1.bf16.msra.mxu0 %v1332
      %1591 = vmatprep.subr.bf16.mxu0 0
      %1592 = vmatpush1.bf16.msra.mxu0 %v1333
      %1593 = vmatprep.subr.bf16.mxu0 0
      %1594 = vmatpush1.bf16.msra.mxu0 %v1334
      %1595 = vmatprep.subr.bf16.mxu0 0
      %1596 = vmatpush1.bf16.msra.mxu0 %v1335
      %1597 = vmatprep.subr.bf16.mxu0 0
      %1598 = vmatpush1.bf16.msra.mxu0 %v1336
      %1599 = vmatprep.subr.bf16.mxu0 0
      %1600 = vmatpush1.bf16.msra.mxu0 %v1337
      %1601 = vmatprep.subr.bf16.mxu0 0
      %1602 = vmatpush1.bf16.msra.mxu0 %v1338
      %1603 = vmatprep.subr.bf16.mxu0 0
      %1604 = vmatpush1.bf16.msra.mxu0 %v1339
      %1605 = vmatprep.subr.bf16.mxu0 0
      %1606 = vmatpush1.bf16.msra.mxu0 %v1340
      %1607 = vmatprep.subr.bf16.mxu0 0
      %1608 = vmatpush1.bf16.msra.mxu0 %v1341
      %1609 = vmatprep.subr.bf16.mxu0 0
      %1610 = vmatpush1.bf16.msra.mxu0 %v1342
      %1611 = vmatprep.subr.bf16.mxu0 0
      %1612 = vmatpush1.bf16.msra.mxu0 %v1343
      %1613 = vmatprep.subr.bf16.mxu0 0
      %1614 = vmatpush1.bf16.msra.mxu0 %v1344
      %1615 = vmatprep.subr.bf16.mxu0 0
      %1616 = vmatpush1.bf16.msra.mxu0 %v1345
      %1617 = vmatprep.subr.bf16.mxu0 0
      %1618 = vmatpush1.bf16.msra.mxu0 %v1346
      %1619 = vmatprep.mubr.bf16.mxu0 %v692
      %1620 = vmatmul.mubr.bf16.gmra.mrb[0].mxu0 %v691
      %v1621 = vpop.f32.mrb[0].mxu0
      %v1622 = vadd.f32 %v497, %v1621
      %v1623 = vpop.f32.mrb[0].mxu0
      %v1624 = vpop.f32.mrb[0].mxu0
      %v1625 = vadd.f32 %v497, %v1624
      %v1626 = vpop.f32.mrb[0].mxu0
      %1627 = vmatprep.mubr.bf16.mxu0 %v708
      %1628 = vmatmul.mubr.bf16.gmra.mrb[0].mxu0 %v707
      %v1629 = vpop.f32.mrb[0].mxu0
      %v1630 = vadd.f32 %v497, %v1629
      %v1631 = vpop.f32.mrb[0].mxu0
      %v1632 = vpop.f32.mrb[0].mxu0
      %v1633 = vadd.f32 %v497, %v1632
      %v1634 = vpop.f32.mrb[0].mxu0
      %1635 = vmatprep.mubr.bf16.mxu0 %v724
      %1636 = vmatmul.mubr.bf16.gmra.mrb[0].mxu0 %v723
      %v1637 = vpop.f32.mrb[0].mxu0
      %v1638 = vadd.f32 %v497, %v1637
      %v1639 = vpop.f32.mrb[0].mxu0
      %v1640 = vpop.f32.mrb[0].mxu0
      %v1641 = vadd.f32 %v497, %v1640
      %v1642 = vpop.f32.mrb[0].mxu0
      %1643 = vmatprep.mubr.bf16.mxu0 %v740
      %1644 = vmatmul.mubr.bf16.gmra.mrb[0].mxu0 %v739
      %v1645 = vpop.f32.mrb[0].mxu0
      %v1646 = vadd.f32 %v497, %v1645
      %v1647 = vpop.f32.mrb[0].mxu0
      %v1648 = vpop.f32.mrb[0].mxu0
      %v1649 = vadd.f32 %v497, %v1648
      %v1650 = vpop.f32.mrb[0].mxu0
      %1651 = vdwg.mxu0
      %1652 = vmatprep.subr.bf16.mxu0 0
      %1653 = vmatpush1.bf16.msra.mxu0 %v1347
      %1654 = vmatprep.subr.bf16.mxu0 0
      %1655 = vmatpush1.bf16.msra.mxu0 %v1348
      %1656 = vmatprep.subr.bf16.mxu0 0
      %1657 = vmatpush1.bf16.msra.mxu0 %v1349
      %1658 = vmatprep.subr.bf16.mxu0 0
      %1659 = vmatpush1.bf16.msra.mxu0 %v1350
      %1660 = vmatprep.subr.bf16.mxu0 0
      %1661 = vmatpush1.bf16.msra.mxu0 %v1351
      %1662 = vmatprep.subr.bf16.mxu0 0
      %1663 = vmatpush1.bf16.msra.mxu0 %v1352
      %1664 = vmatprep.subr.bf16.mxu0 0
      %1665 = vmatpush1.bf16.msra.mxu0 %v1353
      %1666 = vmatprep.subr.bf16.mxu0 0
      %1667 = vmatpush1.bf16.msra.mxu0 %v1354
      %1668 = vmatprep.subr.bf16.mxu0 0
      %1669 = vmatpush1.bf16.msra.mxu0 %v1355
      %1670 = vmatprep.subr.bf16.mxu0 0
      %1671 = vmatpush1.bf16.msra.mxu0 %v1356
      %1672 = vmatprep.subr.bf16.mxu0 0
      %1673 = vmatpush1.bf16.msra.mxu0 %v1357
      %1674 = vmatprep.subr.bf16.mxu0 0
      %1675 = vmatpush1.bf16.msra.mxu0 %v1358
      %1676 = vmatprep.subr.bf16.mxu0 0
      %1677 = vmatpush1.bf16.msra.mxu0 %v1359
      %1678 = vmatprep.subr.bf16.mxu0 0
      %1679 = vmatpush1.bf16.msra.mxu0 %v1360
      %1680 = vmatprep.subr.bf16.mxu0 0
      %1681 = vmatpush1.bf16.msra.mxu0 %v1361
      %1682 = vmatprep.subr.bf16.mxu0 0
      %1683 = vmatpush1.bf16.msra.mxu0 %v1362
      %1684 = vmatprep.mubr.bf16.mxu0 %v694
      %1685 = vmatmul.mubr.bf16.gmra.mrb[0].mxu0 %v693
      %v1686 = vpop.f32.mrb[0].mxu0
      %v1687 = vadd.f32 %v1622, %v1686
      %v1688 = vpop.f32.mrb[0].mxu0
      %v1689 = vpop.f32.mrb[0].mxu0
      %v1690 = vadd.f32 %v1625, %v1689
      %v1691 = vpop.f32.mrb[0].mxu0
      %1692 = vmatprep.mubr.bf16.mxu0 %v710
      %1693 = vmatmul.mubr.bf16.gmra.mrb[0].mxu0 %v709
      %v1694 = vpop.f32.mrb[0].mxu0
      %v1695 = vadd.f32 %v1630, %v1694
      %v1696 = vpop.f32.mrb[0].mxu0
      %v1697 = vpop.f32.mrb[0].mxu0
      %v1698 = vadd.f32 %v1633, %v1697
      %v1699 = vpop.f32.mrb[0].mxu0
      %1700 = vmatprep.mubr.bf16.mxu0 %v726
      %1701 = vmatmul.mubr.bf16.gmra.mrb[0].mxu0 %v725
      %v1702 = vpop.f32.mrb[0].mxu0
      %v1703 = vadd.f32 %v1638, %v1702
      %v1704 = vpop.f32.mrb[0].mxu0
      %v1705 = vpop.f32.mrb[0].mxu0
      %v1706 = vadd.f32 %v1641, %v1705
      %v1707 = vpop.f32.mrb[0].mxu0
      %1708 = vmatprep.mubr.bf16.mxu0 %v742
      %1709 = vmatmul.mubr.bf16.gmra.mrb[0].mxu0 %v741
      %v1710 = vpop.f32.mrb[0].mxu0
      %v1711 = vadd.f32 %v1646, %v1710
      %v1712 = vpop.f32.mrb[0].mxu0
      %v1713 = vpop.f32.mrb[0].mxu0
      %v1714 = vadd.f32 %v1649, %v1713
      %v1715 = vpop.f32.mrb[0].mxu0
      %1716 = vdwg.mxu0
      %1717 = vmatprep.subr.bf16.mxu0 0
      %1718 = vmatpush1.bf16.msra.mxu0 %v1363
      %1719 = vmatprep.subr.bf16.mxu0 0
      %1720 = vmatpush1.bf16.msra.mxu0 %v1364
      %1721 = vmatprep.subr.bf16.mxu0 0
      %1722 = vmatpush1.bf16.msra.mxu0 %v1365
      %1723 = vmatprep.subr.bf16.mxu0 0
      %1724 = vmatpush1.bf16.msra.mxu0 %v1366
      %1725 = vmatprep.subr.bf16.mxu0 0
      %1726 = vmatpush1.bf16.msra.mxu0 %v1367
      %1727 = vmatprep.subr.bf16.mxu0 0
      %1728 = vmatpush1.bf16.msra.mxu0 %v1368
      %1729 = vmatprep.subr.bf16.mxu0 0
      %1730 = vmatpush1.bf16.msra.mxu0 %v1369
      %1731 = vmatprep.subr.bf16.mxu0 0
      %1732 = vmatpush1.bf16.msra.mxu0 %v1370
      %1733 = vmatprep.subr.bf16.mxu0 0
      %1734 = vmatpush1.bf16.msra.mxu0 %v1371
      %1735 = vmatprep.subr.bf16.mxu0 0
      %1736 = vmatpush1.bf16.msra.mxu0 %v1372
      %1737 = vmatprep.subr.bf16.mxu0 0
      %1738 = vmatpush1.bf16.msra.mxu0 %v1373
      %1739 = vmatprep.subr.bf16.mxu0 0
      %1740 = vmatpush1.bf16.msra.mxu0 %v1374
      %1741 = vmatprep.subr.bf16.mxu0 0
      %1742 = vmatpush1.bf16.msra.mxu0 %v1375
      %1743 = vmatprep.subr.bf16.mxu0 0
      %1744 = vmatpush1.bf16.msra.mxu0 %v1376
      %1745 = vmatprep.subr.bf16.mxu0 0
      %1746 = vmatpush1.bf16.msra.mxu0 %v1377
      %1747 = vmatprep.subr.bf16.mxu0 0
      %1748 = vmatpush1.bf16.msra.mxu0 %v1378
      %1749 = vmatprep.mubr.bf16.mxu0 %v696
      %1750 = vmatmul.mubr.bf16.gmra.mrb[0].mxu0 %v695
      %v1751 = vpop.f32.mrb[0].mxu0
      %v1752 = vadd.f32 %v1687, %v1751
      %v1753 = vpop.f32.mrb[0].mxu0
      %v1754 = vpop.f32.mrb[0].mxu0
      %v1755 = vadd.f32 %v1690, %v1754
      %v1756 = vpop.f32.mrb[0].mxu0
      %1757 = vmatprep.mubr.bf16.mxu0 %v712
      %1758 = vmatmul.mubr.bf16.gmra.mrb[0].mxu0 %v711
      %v1759 = vpop.f32.mrb[0].mxu0
      %v1760 = vadd.f32 %v1695, %v1759
      %v1761 = vpop.f32.mrb[0].mxu0
      %v1762 = vpop.f32.mrb[0].mxu0
      %v1763 = vadd.f32 %v1698, %v1762
      %v1764 = vpop.f32.mrb[0].mxu0
      %1765 = vmatprep.mubr.bf16.mxu0 %v728
      %1766 = vmatmul.mubr.bf16.gmra.mrb[0].mxu0 %v727
      %v1767 = vpop.f32.mrb[0].mxu0
      %v1768 = vadd.f32 %v1703, %v1767
      %v1769 = vpop.f32.mrb[0].mxu0
      %v1770 = vpop.f32.mrb[0].mxu0
      %v1771 = vadd.f32 %v1706, %v1770
      %v1772 = vpop.f32.mrb[0].mxu0
      %1773 = vmatprep.mubr.bf16.mxu0 %v744
      %1774 = vmatmul.mubr.bf16.gmra.mrb[0].mxu0 %v743
      %v1775 = vpop.f32.mrb[0].mxu0
      %v1776 = vadd.f32 %v1711, %v1775
      %v1777 = vpop.f32.mrb[0].mxu0
      %v1778 = vpop.f32.mrb[0].mxu0
      %v1779 = vadd.f32 %v1714, %v1778
      %v1780 = vpop.f32.mrb[0].mxu0
      %1781 = vdwg.mxu0
      %1782 = vmatprep.subr.bf16.mxu0 0
      %1783 = vmatpush1.bf16.msra.mxu0 %v1379
      %1784 = vmatprep.subr.bf16.mxu0 0
      %1785 = vmatpush1.bf16.msra.mxu0 %v1380
      %1786 = vmatprep.subr.bf16.mxu0 0
      %1787 = vmatpush1.bf16.msra.mxu0 %v1381
      %1788 = vmatprep.subr.bf16.mxu0 0
      %1789 = vmatpush1.bf16.msra.mxu0 %v1382
      %1790 = vmatprep.subr.bf16.mxu0 0
      %1791 = vmatpush1.bf16.msra.mxu0 %v1383
      %1792 = vmatprep.subr.bf16.mxu0 0
      %1793 = vmatpush1.bf16.msra.mxu0 %v1384
      %1794 = vmatprep.subr.bf16.mxu0 0
      %1795 = vmatpush1.bf16.msra.mxu0 %v1385
      %1796 = vmatprep.subr.bf16.mxu0 0
      %1797 = vmatpush1.bf16.msra.mxu0 %v1386
      %1798 = vmatprep.subr.bf16.mxu0 0
      %1799 = vmatpush1.bf16.msra.mxu0 %v1387
      %1800 = vmatprep.subr.bf16.mxu0 0
      %1801 = vmatpush1.bf16.msra.mxu0 %v1388
      %1802 = vmatprep.subr.bf16.mxu0 0
      %1803 = vmatpush1.bf16.msra.mxu0 %v1389
      %1804 = vmatprep.subr.bf16.mxu0 0
      %1805 = vmatpush1.bf16.msra.mxu0 %v1390
      %1806 = vmatprep.subr.bf16.mxu0 0
      %1807 = vmatpush1.bf16.msra.mxu0 %v1391
      %1808 = vmatprep.subr.bf16.mxu0 0
      %1809 = vmatpush1.bf16.msra.mxu0 %v1392
      %1810 = vmatprep.subr.bf16.mxu0 0
      %1811 = vmatpush1.bf16.msra.mxu0 %v1393
      %1812 = vmatprep.subr.bf16.mxu0 0
      %1813 = vmatpush1.bf16.msra.mxu0 %v1394
      %1814 = vmatprep.mubr.bf16.mxu0 %v698
      %1815 = vmatmul.mubr.bf16.gmra.mrb[0].mxu0 %v697
      %v1816 = vpop.f32.mrb[0].mxu0
      %v1817 = vadd.f32 %v1752, %v1816
      %v1818 = vpop.f32.mrb[0].mxu0
      %v1819 = vpop.f32.mrb[0].mxu0
      %v1820 = vadd.f32 %v1755, %v1819
      %v1821 = vpop.f32.mrb[0].mxu0
      %1822 = vmatprep.mubr.bf16.mxu0 %v714
      %1823 = vmatmul.mubr.bf16.gmra.mrb[0].mxu0 %v713
      %v1824 = vpop.f32.mrb[0].mxu0
      %v1825 = vadd.f32 %v1760, %v1824
      %v1826 = vpop.f32.mrb[0].mxu0
      %v1827 = vpop.f32.mrb[0].mxu0
      %v1828 = vadd.f32 %v1763, %v1827
      %v1829 = vpop.f32.mrb[0].mxu0
      %1830 = vmatprep.mubr.bf16.mxu0 %v730
      %1831 = vmatmul.mubr.bf16.gmra.mrb[0].mxu0 %v729
      %v1832 = vpop.f32.mrb[0].mxu0
      %v1833 = vadd.f32 %v1768, %v1832
      %v1834 = vpop.f32.mrb[0].mxu0
      %v1835 = vpop.f32.mrb[0].mxu0
      %v1836 = vadd.f32 %v1771, %v1835
      %v1837 = vpop.f32.mrb[0].mxu0
      %1838 = vmatprep.mubr.bf16.mxu0 %v746
      %1839 = vmatmul.mubr.bf16.gmra.mrb[0].mxu0 %v745
      %v1840 = vpop.f32.mrb[0].mxu0
      %v1841 = vadd.f32 %v1776, %v1840
      %v1842 = vpop.f32.mrb[0].mxu0
      %v1843 = vpop.f32.mrb[0].mxu0
      %v1844 = vadd.f32 %v1779, %v1843
      %v1845 = vpop.f32.mrb[0].mxu0
      %1846 = vdwg.mxu0
      %1847 = vmatprep.subr.bf16.mxu0 0
      %1848 = vmatpush1.bf16.msra.mxu0 %v1395
      %1849 = vmatprep.subr.bf16.mxu0 0
      %1850 = vmatpush1.bf16.msra.mxu0 %v1396
      %1851 = vmatprep.subr.bf16.mxu0 0
      %1852 = vmatpush1.bf16.msra.mxu0 %v1397
      %1853 = vmatprep.subr.bf16.mxu0 0
      %1854 = vmatpush1.bf16.msra.mxu0 %v1398
      %1855 = vmatprep.subr.bf16.mxu0 0
      %1856 = vmatpush1.bf16.msra.mxu0 %v1399
      %1857 = vmatprep.subr.bf16.mxu0 0
      %1858 = vmatpush1.bf16.msra.mxu0 %v1400
      %1859 = vmatprep.subr.bf16.mxu0 0
      %1860 = vmatpush1.bf16.msra.mxu0 %v1401
      %1861 = vmatprep.subr.bf16.mxu0 0
      %1862 = vmatpush1.bf16.msra.mxu0 %v1402
      %1863 = vmatprep.subr.bf16.mxu0 0
      %1864 = vmatpush1.bf16.msra.mxu0 %v1403
      %1865 = vmatprep.subr.bf16.mxu0 0
      %1866 = vmatpush1.bf16.msra.mxu0 %v1404
      %1867 = vmatprep.subr.bf16.mxu0 0
      %1868 = vmatpush1.bf16.msra.mxu0 %v1405
      %1869 = vmatprep.subr.bf16.mxu0 0
      %1870 = vmatpush1.bf16.msra.mxu0 %v1406
      %1871 = vmatprep.subr.bf16.mxu0 0
      %1872 = vmatpush1.bf16.msra.mxu0 %v1407
      %1873 = vmatprep.subr.bf16.mxu0 0
      %1874 = vmatpush1.bf16.msra.mxu0 %v1408
      %1875 = vmatprep.subr.bf16.mxu0 0
      %1876 = vmatpush1.bf16.msra.mxu0 %v1409
      %1877 = vmatprep.subr.bf16.mxu0 0
      %1878 = vmatpush1.bf16.msra.mxu0 %v1410
      %1879 = vmatprep.mubr.bf16.mxu0 %v700
      %1880 = vmatmul.mubr.bf16.gmra.mrb[0].mxu0 %v699
      %v1881 = vpop.f32.mrb[0].mxu0
      %v1882 = vadd.f32 %v1817, %v1881
      %v1883 = vpop.f32.mrb[0].mxu0
      %v1884 = vpop.f32.mrb[0].mxu0
      %v1885 = vadd.f32 %v1820, %v1884
      %v1886 = vpop.f32.mrb[0].mxu0
      %1887 = vmatprep.mubr.bf16.mxu0 %v716
      %1888 = vmatmul.mubr.bf16.gmra.mrb[0].mxu0 %v715
      %v1889 = vpop.f32.mrb[0].mxu0
      %v1890 = vadd.f32 %v1825, %v1889
      %v1891 = vpop.f32.mrb[0].mxu0
      %v1892 = vpop.f32.mrb[0].mxu0
      %v1893 = vadd.f32 %v1828, %v1892
      %v1894 = vpop.f32.mrb[0].mxu0
      %1895 = vmatprep.mubr.bf16.mxu0 %v732
      %1896 = vmatmul.mubr.bf16.gmra.mrb[0].mxu0 %v731
      %v1897 = vpop.f32.mrb[0].mxu0
      %v1898 = vadd.f32 %v1833, %v1897
      %v1899 = vpop.f32.mrb[0].mxu0
      %v1900 = vpop.f32.mrb[0].mxu0
      %v1901 = vadd.f32 %v1836, %v1900
      %v1902 = vpop.f32.mrb[0].mxu0
      %1903 = vmatprep.mubr.bf16.mxu0 %v748
      %1904 = vmatmul.mubr.bf16.gmra.mrb[0].mxu0 %v747
      %v1905 = vpop.f32.mrb[0].mxu0
      %v1906 = vadd.f32 %v1841, %v1905
      %v1907 = vpop.f32.mrb[0].mxu0
      %v1908 = vpop.f32.mrb[0].mxu0
      %v1909 = vadd.f32 %v1844, %v1908
      %v1910 = vpop.f32.mrb[0].mxu0
      %1911 = vdwg.mxu0
      %1912 = vmatprep.subr.bf16.mxu0 0
      %1913 = vmatpush1.bf16.msra.mxu0 %v1411
      %1914 = vmatprep.subr.bf16.mxu0 0
      %1915 = vmatpush1.bf16.msra.mxu0 %v1412
      %1916 = vmatprep.subr.bf16.mxu0 0
      %1917 = vmatpush1.bf16.msra.mxu0 %v1413
      %1918 = vmatprep.subr.bf16.mxu0 0
      %1919 = vmatpush1.bf16.msra.mxu0 %v1414
      %1920 = vmatprep.subr.bf16.mxu0 0
      %1921 = vmatpush1.bf16.msra.mxu0 %v1415
      %1922 = vmatprep.subr.bf16.mxu0 0
      %1923 = vmatpush1.bf16.msra.mxu0 %v1416
      %1924 = vmatprep.subr.bf16.mxu0 0
      %1925 = vmatpush1.bf16.msra.mxu0 %v1417
      %1926 = vmatprep.subr.bf16.mxu0 0
      %1927 = vmatpush1.bf16.msra.mxu0 %v1418
      %1928 = vmatprep.subr.bf16.mxu0 0
      %1929 = vmatpush1.bf16.msra.mxu0 %v1419
      %1930 = vmatprep.subr.bf16.mxu0 0
      %1931 = vmatpush1.bf16.msra.mxu0 %v1420
      %1932 = vmatprep.subr.bf16.mxu0 0
      %1933 = vmatpush1.bf16.msra.mxu0 %v1421
      %1934 = vmatprep.subr.bf16.mxu0 0
      %1935 = vmatpush1.bf16.msra.mxu0 %v1422
      %1936 = vmatprep.subr.bf16.mxu0 0
      %1937 = vmatpush1.bf16.msra.mxu0 %v1423
      %1938 = vmatprep.subr.bf16.mxu0 0
      %1939 = vmatpush1.bf16.msra.mxu0 %v1424
      %1940 = vmatprep.subr.bf16.mxu0 0
      %1941 = vmatpush1.bf16.msra.mxu0 %v1425
      %1942 = vmatprep.subr.bf16.mxu0 0
      %1943 = vmatpush1.bf16.msra.mxu0 %v1426
      %1944 = vmatprep.mubr.bf16.mxu0 %v702
      %1945 = vmatmul.mubr.bf16.gmra.mrb[0].mxu0 %v701
      %v1946 = vpop.f32.mrb[0].mxu0
      %v1947 = vadd.f32 %v1882, %v1946
      %v1948 = vpop.f32.mrb[0].mxu0
      %v1949 = vpop.f32.mrb[0].mxu0
      %v1950 = vadd.f32 %v1885, %v1949
      %v1951 = vpop.f32.mrb[0].mxu0
      %1952 = vmatprep.mubr.bf16.mxu0 %v718
      %1953 = vmatmul.mubr.bf16.gmra.mrb[0].mxu0 %v717
      %v1954 = vpop.f32.mrb[0].mxu0
      %v1955 = vadd.f32 %v1890, %v1954
      %v1956 = vpop.f32.mrb[0].mxu0
      %v1957 = vpop.f32.mrb[0].mxu0
      %v1958 = vadd.f32 %v1893, %v1957
      %v1959 = vpop.f32.mrb[0].mxu0
      %1960 = vmatprep.mubr.bf16.mxu0 %v734
      %1961 = vmatmul.mubr.bf16.gmra.mrb[0].mxu0 %v733
      %v1962 = vpop.f32.mrb[0].mxu0
      %v1963 = vadd.f32 %v1898, %v1962
      %v1964 = vpop.f32.mrb[0].mxu0
      %v1965 = vpop.f32.mrb[0].mxu0
      %v1966 = vadd.f32 %v1901, %v1965
      %v1967 = vpop.f32.mrb[0].mxu0
      %1968 = vmatprep.mubr.bf16.mxu0 %v750
      %1969 = vmatmul.mubr.bf16.gmra.mrb[0].mxu0 %v749
      %v1970 = vpop.f32.mrb[0].mxu0
      %v1971 = vadd.f32 %v1906, %v1970
      %v1972 = vpop.f32.mrb[0].mxu0
      %v1973 = vpop.f32.mrb[0].mxu0
      %v1974 = vadd.f32 %v1909, %v1973
      %v1975 = vpop.f32.mrb[0].mxu0
      %1976 = vdwg.mxu0
      %1977 = vmatprep.subr.bf16.mxu0 0
      %1978 = vmatpush1.bf16.msra.mxu0 %v1427
      %1979 = vmatprep.subr.bf16.mxu0 0
      %1980 = vmatpush1.bf16.msra.mxu0 %v1428
      %1981 = vmatprep.subr.bf16.mxu0 0
      %1982 = vmatpush1.bf16.msra.mxu0 %v1429
      %1983 = vmatprep.subr.bf16.mxu0 0
      %1984 = vmatpush1.bf16.msra.mxu0 %v1430
      %1985 = vmatprep.subr.bf16.mxu0 0
      %1986 = vmatpush1.bf16.msra.mxu0 %v1431
      %1987 = vmatprep.subr.bf16.mxu0 0
      %1988 = vmatpush1.bf16.msra.mxu0 %v1432
      %1989 = vmatprep.subr.bf16.mxu0 0
      %1990 = vmatpush1.bf16.msra.mxu0 %v1433
      %1991 = vmatprep.subr.bf16.mxu0 0
      %1992 = vmatpush1.bf16.msra.mxu0 %v1434
      %1993 = vmatprep.subr.bf16.mxu0 0
      %1994 = vmatpush1.bf16.msra.mxu0 %v1435
      %1995 = vmatprep.subr.bf16.mxu0 0
      %1996 = vmatpush1.bf16.msra.mxu0 %v1436
      %1997 = vmatprep.subr.bf16.mxu0 0
      %1998 = vmatpush1.bf16.msra.mxu0 %v1437
      %1999 = vmatprep.subr.bf16.mxu0 0
      %2000 = vmatpush1.bf16.msra.mxu0 %v1438
      %2001 = vmatprep.subr.bf16.mxu0 0
      %2002 = vmatpush1.bf16.msra.mxu0 %v1439
      %2003 = vmatprep.subr.bf16.mxu0 0
      %2004 = vmatpush1.bf16.msra.mxu0 %v1440
      %2005 = vmatprep.subr.bf16.mxu0 0
      %2006 = vmatpush1.bf16.msra.mxu0 %v1441
      %2007 = vmatprep.subr.bf16.mxu0 0
      %2008 = vmatpush1.bf16.msra.mxu0 %v1442
      %2009 = vmatprep.mubr.bf16.mxu0 %v704
      %2010 = vmatmul.mubr.bf16.gmra.mrb[0].mxu0 %v703
      %v2011 = vpop.f32.mrb[0].mxu0
      %v2012 = vadd.f32 %v1947, %v2011
      %v2013 = vpop.f32.mrb[0].mxu0
      %v2014 = vpop.f32.mrb[0].mxu0
      %v2015 = vadd.f32 %v1950, %v2014
      %v2016 = vpop.f32.mrb[0].mxu0
      %2017 = vmatprep.mubr.bf16.mxu0 %v720
      %2018 = vmatmul.mubr.bf16.gmra.mrb[0].mxu0 %v719
      %v2019 = vpop.f32.mrb[0].mxu0
      %v2020 = vadd.f32 %v1955, %v2019
      %v2021 = vpop.f32.mrb[0].mxu0
      %v2022 = vpop.f32.mrb[0].mxu0
      %v2023 = vadd.f32 %v1958, %v2022
      %v2024 = vpop.f32.mrb[0].mxu0
      %2025 = vmatprep.mubr.bf16.mxu0 %v736
      %2026 = vmatmul.mubr.bf16.gmra.mrb[0].mxu0 %v735
      %v2027 = vpop.f32.mrb[0].mxu0
      %v2028 = vadd.f32 %v1963, %v2027
      %v2029 = vpop.f32.mrb[0].mxu0
      %v2030 = vpop.f32.mrb[0].mxu0
      %v2031 = vadd.f32 %v1966, %v2030
      %v2032 = vpop.f32.mrb[0].mxu0
      %2033 = vmatprep.mubr.bf16.mxu0 %v752
      %2034 = vmatmul.mubr.bf16.gmra.mrb[0].mxu0 %v751
      %v2035 = vpop.f32.mrb[0].mxu0
      %v2036 = vadd.f32 %v1971, %v2035
      %v2037 = vpop.f32.mrb[0].mxu0
      %v2038 = vpop.f32.mrb[0].mxu0
      %v2039 = vadd.f32 %v1974, %v2038
      %v2040 = vpop.f32.mrb[0].mxu0
      %2041 = vdwg.mxu0
      %2042 = vmatprep.subr.bf16.mxu0 0
      %2043 = vmatpush1.bf16.msra.mxu0 %v1443
      %2044 = vmatprep.subr.bf16.mxu0 0
      %2045 = vmatpush1.bf16.msra.mxu0 %v1444
      %2046 = vmatprep.subr.bf16.mxu0 0
      %2047 = vmatpush1.bf16.msra.mxu0 %v1445
      %2048 = vmatprep.subr.bf16.mxu0 0
      %2049 = vmatpush1.bf16.msra.mxu0 %v1446
      %2050 = vmatprep.subr.bf16.mxu0 0
      %2051 = vmatpush1.bf16.msra.mxu0 %v1447
      %2052 = vmatprep.subr.bf16.mxu0 0
      %2053 = vmatpush1.bf16.msra.mxu0 %v1448
      %2054 = vmatprep.subr.bf16.mxu0 0
      %2055 = vmatpush1.bf16.msra.mxu0 %v1449
      %2056 = vmatprep.subr.bf16.mxu0 0
      %2057 = vmatpush1.bf16.msra.mxu0 %v1450
      %2058 = vmatprep.subr.bf16.mxu0 0
      %2059 = vmatpush1.bf16.msra.mxu0 %v1451
      %2060 = vmatprep.subr.bf16.mxu0 0
      %2061 = vmatpush1.bf16.msra.mxu0 %v1452
      %2062 = vmatprep.subr.bf16.mxu0 0
      %2063 = vmatpush1.bf16.msra.mxu0 %v1453
      %2064 = vmatprep.subr.bf16.mxu0 0
      %2065 = vmatpush1.bf16.msra.mxu0 %v1454
      %2066 = vmatprep.subr.bf16.mxu0 0
      %2067 = vmatpush1.bf16.msra.mxu0 %v1455
      %2068 = vmatprep.subr.bf16.mxu0 0
      %2069 = vmatpush1.bf16.msra.mxu0 %v1456
      %2070 = vmatprep.subr.bf16.mxu0 0
      %2071 = vmatpush1.bf16.msra.mxu0 %v1457
      %2072 = vmatprep.subr.bf16.mxu0 0
      %2073 = vmatpush1.bf16.msra.mxu0 %v1458
      %2074 = vmatprep.mubr.bf16.mxu0 %v706
      %2075 = vmatmul.mubr.bf16.gmra.mrb[0].mxu0 %v705
      %v2076 = vpop.f32.mrb[0].mxu0
      %v2077 = vadd.f32 %v2012, %v2076
      %v2078 = vpop.f32.mrb[0].mxu0
      %v2079 = vpop.f32.mrb[0].mxu0
      %v2080 = vadd.f32 %v2015, %v2079
      %v2081 = vpop.f32.mrb[0].mxu0
      %2082 = vmatprep.mubr.bf16.mxu0 %v722
      %2083 = vmatmul.mubr.bf16.gmra.mrb[0].mxu0 %v721
      %v2084 = vpop.f32.mrb[0].mxu0
      %v2085 = vadd.f32 %v2020, %v2084
      %v2086 = vpop.f32.mrb[0].mxu0
      %v2087 = vpop.f32.mrb[0].mxu0
      %v2088 = vadd.f32 %v2023, %v2087
      %v2089 = vpop.f32.mrb[0].mxu0
      %2090 = vmatprep.mubr.bf16.mxu0 %v738
      %2091 = vmatmul.mubr.bf16.gmra.mrb[0].mxu0 %v737
      %v2092 = vpop.f32.mrb[0].mxu0
      %v2093 = vadd.f32 %v2028, %v2092
      %v2094 = vpop.f32.mrb[0].mxu0
      %v2095 = vpop.f32.mrb[0].mxu0
      %v2096 = vadd.f32 %v2031, %v2095
      %v2097 = vpop.f32.mrb[0].mxu0
      %2098 = vmatprep.mubr.bf16.mxu0 %v754
      %2099 = vmatmul.mubr.bf16.gmra.mrb[0].mxu0 %v753
      %v2100 = vpop.f32.mrb[0].mxu0
      %v2101 = vadd.f32 %v2036, %v2100
      %v2102 = vpop.f32.mrb[0].mxu0
      %v2103 = vpop.f32.mrb[0].mxu0
      %v2104 = vadd.f32 %v2039, %v2103
      %v2105 = vpop.f32.mrb[0].mxu0
      %2106 = vdwg.mxu0
      %v2107 = vadd.f32 %v2077, %v2080
      %v2108 = vadd.f32 %v2107, %v2085
      %v2109 = vadd.f32 %v2108, %v2088
      %v2110 = vadd.f32 %v2109, %v2093
      %v2111 = vadd.f32 %v2110, %v2096
      %v2112 = vadd.f32 %v2111, %v2101
      %v2113 = vadd.f32 %v2112, %v2104
      %v2114 = vrot.slane %v2113, 4
      %v2115 = vadd.f32 %v2113, %v2114
      %v2116 = vrot.slane %v2115, 2
      %v2117 = vadd.f32 %v2115, %v2116
      %v2118 = vrot.slane %v2117, 1
      %v2119 = vadd.f32 %v2117, %v2118
      %v2120 = vrcp.pop 64.0
      %v2121 = vmul.f32 %v2119, %v2120
      %v2122 = vsub.f32 %v2077, %v2121
      %v2123 = vsub.f32 %v2080, %v2121
      %v2124 = vsub.f32 %v2085, %v2121
      %v2125 = vsub.f32 %v2088, %v2121
      %v2126 = vsub.f32 %v2093, %v2121
      %v2127 = vsub.f32 %v2096, %v2121
      %v2128 = vsub.f32 %v2101, %v2121
      %v2129 = vsub.f32 %v2104, %v2121
      %v2130 = vmul.f32 %v2122, %v2122
      %v2131 = vmul.f32 %v2123, %v2123
      %v2132 = vmul.f32 %v2124, %v2124
      %v2133 = vmul.f32 %v2125, %v2125
      %v2134 = vmul.f32 %v2126, %v2126
      %v2135 = vmul.f32 %v2127, %v2127
      %v2136 = vmul.f32 %v2128, %v2128
      %v2137 = vmul.f32 %v2129, %v2129
      %v2138 = vadd.f32 %v2130, %v2131
      %v2139 = vadd.f32 %v2138, %v2132
      %v2140 = vadd.f32 %v2139, %v2133
      %v2141 = vadd.f32 %v2140, %v2134
      %v2142 = vadd.f32 %v2141, %v2135
      %v2143 = vadd.f32 %v2142, %v2136
      %v2144 = vadd.f32 %v2143, %v2137
      %v2145 = vrot.slane %v2144, 4
      %v2146 = vadd.f32 %v2144, %v2145
      %v2147 = vrot.slane %v2146, 2
      %v2148 = vadd.f32 %v2146, %v2147
      %v2149 = vrot.slane %v2148, 1
      %v2150 = vadd.f32 %v2148, %v2149
      %v2151 = vmul.f32 %v2150, %v2120
      %v2152 = vadd.f32 %v2151, 1e-05
      %v2153 = vrsqrt.pop %v2152
      %v2154 = vmul.f32 %v2122, %v2153
      %v2155 = vmul.f32 %v2123, %v2153
      %v2156 = vmul.f32 %v2124, %v2153
      %v2157 = vmul.f32 %v2125, %v2153
      %v2158 = vmul.f32 %v2126, %v2153
      %v2159 = vmul.f32 %v2127, %v2153
      %v2160 = vmul.f32 %v2128, %v2153
      %v2161 = vmul.f32 %v2129, %v2153
      %vm2162 = vcmp.ge.f32.partialorder %v2154, 0.0
      %vm2163 = vcmp.ge.f32.partialorder %v2155, 0.0
      %vm2164 = vcmp.ge.f32.partialorder %v2156, 0.0
      %vm2165 = vcmp.ge.f32.partialorder %v2157, 0.0
      %vm2166 = vcmp.ge.f32.partialorder %v2158, 0.0
      %vm2167 = vcmp.ge.f32.partialorder %v2159, 0.0
      %vm2168 = vcmp.ge.f32.partialorder %v2160, 0.0
      %vm2169 = vcmp.ge.f32.partialorder %v2161, 0.0
      %v2170 = vmul.f32 %v2154, 0.2
      %v2171 = vmul.f32 %v2155, 0.2
      %v2172 = vmul.f32 %v2156, 0.2
      %v2173 = vmul.f32 %v2157, 0.2
      %v2174 = vmul.f32 %v2158, 0.2
      %v2175 = vmul.f32 %v2159, 0.2
      %v2176 = vmul.f32 %v2160, 0.2
      %v2177 = vmul.f32 %v2161, 0.2
      %v2178 = vsel %vm2162, %v2154, %v2170
      %v2179 = vsel %vm2163, %v2155, %v2171
      %v2180 = vsel %vm2164, %v2156, %v2172
      %v2181 = vsel %vm2165, %v2157, %v2173
      %v2182 = vsel %vm2166, %v2158, %v2174
      %v2183 = vsel %vm2167, %v2159, %v2175
      %v2184 = vsel %vm2168, %v2160, %v2176
      %v2185 = vsel %vm2169, %v2161, %v2177
      %v2186 = vpack.c.bf16 %v2179, %v2178
      %v2187 = vpack.c.bf16 %v2181, %v2180
      %v2188 = vpack.c.bf16 %v2183, %v2182
      %v2189 = vpack.c.bf16 %v2185, %v2184
      %v2194 = vunpack.c.l.b16 %v2186
      %v2195 = vunpack.c.h.b16 %v2186
      %v2196 = vunpack.c.l.b16 %v2187
      %v2197 = vunpack.c.h.b16 %v2187
      %v2198 = vunpack.c.l.b16 %v2188
      %v2199 = vunpack.c.h.b16 %v2188
      %v2200 = vunpack.c.l.b16 %v2189
      %v2201 = vunpack.c.h.b16 %v2189
      %v2202 = vpack.c.b16 %v2194, %v2194
      %v2203 = vpack.c.b16 %v2195, %v2195
      %v2204 = vpack.c.b16 %v2196, %v2196
      %v2205 = vpack.c.b16 %v2197, %v2197
      %v2206 = vpack.c.b16 %v2198, %v2198
      %v2207 = vpack.c.b16 %v2199, %v2199
      %v2208 = vpack.c.b16 %v2200, %v2200
      %v2209 = vpack.c.b16 %v2201, %v2201
      %2218 = vst [vmem:[%s170] sm:$0xf] %v2202
      %2219 = vst [vmem:[%s170 + $0x4] sm:$0xf] %v2203
      %2220 = vst [vmem:[%s170 + $0x8] sm:$0xf] %v2204
      %2221 = vst [vmem:[%s170 + $0xc] sm:$0xf] %v2205
      %2222 = vst [vmem:[%s170 + $0x10] sm:$0xf] %v2206
      %2223 = vst [vmem:[%s170 + $0x14] sm:$0xf] %v2207
      %2224 = vst [vmem:[%s170 + $0x18] sm:$0xf] %v2208
      %2225 = vst [vmem:[%s170 + $0x1c] sm:$0xf] %v2209
      %p2226 = scmp.lt.s32.totalorder %s14, 1
      %s2227 = scalar_select %p2226, %s14, 1
      %s2228 = smul.addr %s2227, 8
      %s2229 = smul.addr %s2228, 4
      %s2230 = scalar_lea.vmem %s3, %s2229
      // Predicated region
      $region33: #{define_d_forward.6} parent=31 // pred_check
        %p2231 = pneg %p100
      $region34: #{define_d_forward.6} parent=31 // pred_check_branch
        %2233 = sbr.rel (%p2231) target = $region36
      $region35: #{define_d_forward.6} parent=31 // pred_region
        _
      $region36: #{define_d_forward.6} parent=31 // pred_fallthru
        _
    $region32: #{define_d_forward.6} parent=5 // pred_fallthru
      _
    %p2234 = scmp.le.s32.totalorder 2, %s9
    // Predicated region
    $region37: #{define_d_forward.6} parent=5 // pred_check
      %p2235 = pneg %p2234
    $region38: #{define_d_forward.6} parent=5 // pred_check_branch
      %2237 = sbr.rel (%p2235) target = $region40
    $region39: #{define_d_forward.6} parent=5 // pred_region
      %s2238 = ssub.s32 %s9, 2
      // Predicated region
      $region41: #{define_d_forward.6} parent=39 // pred_check
        %p2239 = pneg %p106
      $region42: #{define_d_forward.6} parent=39 // pred_check_branch
        %2241 = sbr.rel (%p2239) target = $region44
      $region43: #{define_d_forward.6} parent=39 // pred_region
        %p2242 = scmp.lt.s32.totalorder %s15, 1
        %s2243 = scalar_select %p2242, %s15, 1
        %s2244 = smul.addr %s2243, 8
        %s2245 = smul.addr %s2244, 4
        %s2246 = scalar_lea.vmem %s3, %s2245
      $region44: #{define_d_forward.6} parent=39 // pred_fallthru
        _
    $region40: #{define_d_forward.6} parent=5 // pred_fallthru
      _
  $region6: #{define_d_forward.6} parent=0 // loop_footer
    %s13 = sadd.s32 1, %s9
  $region7: #{define_d_forward.6} parent=0 // loop_footer_branch
    %8 = sbr.rel target = $region3
  $region8: #{define_d_forward.6} parent=0 // loop_exit
    _

// kernel: define_d_forward.7
$region0: #{define_d_forward.7}
  #allocation0 [shape = 'u32[]', space=smem, size = 0x4, offset = 0x4, fixed_abs, tag = 'smem constant byte address 0x4 - core index']
  #allocation1 [shape = 'u32[144,128]{1,0:T(1,128)}', space=vmem, size = 0x12000, scoped, tag = 'internal scratch']
  %s0 = inlined_call_operand.vmem [shape: bf16[2,16,2048], index: 0, kind: input, shape index: {}]
  %s1 = inlined_call_operand.vmem [shape: bf16[2048,128], index: 1, kind: input, shape index: {}]
  %s2 = inlined_call_operand.vmem [shape: f32[1,128], index: 2, kind: input, shape index: {}]
  %s3 = inlined_call_operand.vmem [shape: bf16[2,16,128], index: 3, kind: output, shape index: {}]
  %s4 = sld [smem:[#allocation0]]
  $region45: #{define_d_forward.7} parent=0
    _
  %s6 = ssub.s32 1, %s4
  %s7 = scalar_select 0, %s6, %s4
  loop: start=0, step=1, limit=4
  $region2: #{define_d_forward.7} parent=0 // loop_pre_header
    _
  $region3: #{define_d_forward.7} parent=0 // loop_header
    %s9 = sphi 0, %s13
    %p10 = scmp.ge.s32.totalorder %s9, 4
    %s19 = sphi 0, %s21
    %s22 = sphi 0, %s19
    %s23 = sphi 0, %s22
    %s39 = sphi 0, %s23
    %s43 = sphi 0, %s43
    %s45 = sphi 0, %s43
    %s46 = sphi 0, %s45
    %s60 = sphi 0, %s46
    %s64 = sphi 0, %s64
    %s66 = sphi 0, %s64
    %s67 = sphi 0, %s66
    %s81 = sphi 0, %s67
    %s87 = sphi 0, %s89
    %s90 = sphi 0, %s87
    %s91 = sphi 0, %s90
    %s107 = sphi 0, %s91
  $region4: #{define_d_forward.7} parent=0 // loop_header_branch
    %12 = sbr.rel (%p10) target = $region8
  $region5: #{define_d_forward.7} parent=0 // loop_body
    %s14 = ssub.s32 %s9, 1
    %s15 = ssub.s32 %s9, 2
    %s16 = sadd.s32 %s9, 1
    %s17 = ssub.s32 %s9, %s16
    %p18 = scmp.eq.s32.totalorder %s17, 0
    %s20 = sadd.s32 %s19, 1
    %s21 = scalar_select %p18, %s19, %s20
    %p24 = pneg %p18
    %p25 = scmp.eq.s32.totalorder %s9, 1
    %p26 = por %p24, %p25
    %p27 = scmp.ne.s32.totalorder %s19, %s22
    %p28 = scmp.eq.s32.totalorder %s9, 0
    %p29 = por %p27, %p28
    %p30 = scmp.ne.s32.totalorder %s19, %s22
    %p31 = scmp.eq.s32.totalorder %s14, 1
    %p32 = por %p30, %p31
    %p33 = scmp.ne.s32.totalorder %s22, %s23
    %p34 = scmp.eq.s32.totalorder %s14, 0
    %p35 = por %p33, %p34
    %p36 = scmp.ne.s32.totalorder %s22, %s23
    %p37 = scmp.eq.s32.totalorder %s15, 1
    %p38 = por %p36, %p37
    %p40 = scmp.ne.s32.totalorder %s23, %s39
    %p41 = scmp.eq.s32.totalorder %s15, 0
    %p42 = por %p40, %p41
    %s44 = sadd.s32 %s43, 1
    %p47 = scmp.eq.s32.totalorder %s9, 1
    %p48 = scmp.ne.s32.totalorder %s43, %s45
    %p49 = scmp.eq.s32.totalorder %s9, 0
    %p50 = por %p48, %p49
    %p51 = scmp.ne.s32.totalorder %s43, %s45
    %p52 = scmp.eq.s32.totalorder %s14, 1
    %p53 = por %p51, %p52
    %p54 = scmp.ne.s32.totalorder %s45, %s46
    %p55 = scmp.eq.s32.totalorder %s14, 0
    %p56 = por %p54, %p55
    %p57 = scmp.ne.s32.totalorder %s45, %s46
    %p58 = scmp.eq.s32.totalorder %s15, 1
    %p59 = por %p57, %p58
    %p61 = scmp.ne.s32.totalorder %s46, %s60
    %p62 = scmp.eq.s32.totalorder %s15, 0
    %p63 = por %p61, %p62
    %s65 = sadd.s32 %s64, 1
    %p68 = scmp.eq.s32.totalorder %s9, 1
    %p69 = scmp.ne.s32.totalorder %s64, %s66
    %p70 = scmp.eq.s32.totalorder %s9, 0
    %p71 = por %p69, %p70
    %p72 = scmp.ne.s32.totalorder %s64, %s66
    %p73 = scmp.eq.s32.totalorder %s14, 1
    %p74 = por %p72, %p73
    %p75 = scmp.ne.s32.totalorder %s66, %s67
    %p76 = scmp.eq.s32.totalorder %s14, 0
    %p77 = por %p75, %p76
    %p78 = scmp.ne.s32.totalorder %s66, %s67
    %p79 = scmp.eq.s32.totalorder %s15, 1
    %p80 = por %p78, %p79
    %p82 = scmp.ne.s32.totalorder %s67, %s81
    %p83 = scmp.eq.s32.totalorder %s15, 0
    %p84 = por %p82, %p83
    %s85 = ssub.s32 %s9, %s16
    %p86 = scmp.eq.s32.totalorder %s85, 0
    %s88 = sadd.s32 %s87, 1
    %s89 = scalar_select %p86, %s87, %s88
    %p92 = pneg %p86
    %p93 = scmp.eq.s32.totalorder %s9, 1
    %p94 = por %p92, %p93
    %p95 = scmp.ne.s32.totalorder %s87, %s90
    %p96 = scmp.eq.s32.totalorder %s9, 0
    %p97 = por %p95, %p96
    %p98 = scmp.ne.s32.totalorder %s87, %s90
    %p99 = scmp.eq.s32.totalorder %s14, 1
    %p100 = por %p98, %p99
    %p101 = scmp.ne.s32.totalorder %s90, %s91
    %p102 = scmp.eq.s32.totalorder %s14, 0
    %p103 = por %p101, %p102
    %p104 = scmp.ne.s32.totalorder %s90, %s91
    %p105 = scmp.eq.s32.totalorder %s15, 1
    %p106 = por %p104, %p105
    %p108 = scmp.ne.s32.totalorder %s91, %s107
    %p109 = scmp.eq.s32.totalorder %s15, 0
    %p110 = por %p108, %p109
    %p111 = scmp.le.s32.totalorder 1, %s9
    %p112 = scmp.lt.s32.totalorder %s9, 3
    %p113 = pnand %p111, %p112
    %p114 = pneg %p113
    // Predicated region
    $region9: #{define_d_forward.7} parent=5 // pred_check
      _
    $region10: #{define_d_forward.7} parent=5 // pred_check_branch
      %116 = sbr.rel (%p113) target = $region12
    $region11: #{define_d_forward.7} parent=5 // pred_region
      %s117 = ssub.s32 %s9, 1
      // Predicated region
      $region13: #{define_d_forward.7} parent=11 // pred_check
        %p118 = pneg %p56
      $region14: #{define_d_forward.7} parent=11 // pred_check_branch
        %120 = sbr.rel (%p118) target = $region16
      $region15: #{define_d_forward.7} parent=11 // pred_region
        _
      $region16: #{define_d_forward.7} parent=11 // pred_fallthru
        _
      // Predicated region
      $region17: #{define_d_forward.7} parent=11 // pred_check
        %p121 = pneg %p77
      $region18: #{define_d_forward.7} parent=11 // pred_check_branch
        %123 = sbr.rel (%p121) target = $region20
      $region19: #{define_d_forward.7} parent=11 // pred_region
        _
      $region20: #{define_d_forward.7} parent=11 // pred_fallthru
        _
    $region12: #{define_d_forward.7} parent=5 // pred_fallthru
      _
    %p124 = scmp.lt.s32.totalorder %s9, 2
    // Predicated region
    $region21: #{define_d_forward.7} parent=5 // pred_check
      %p125 = pneg %p124
    $region22: #{define_d_forward.7} parent=5 // pred_check_branch
      %127 = sbr.rel (%p125) target = $region24
    $region23: #{define_d_forward.7} parent=5 // pred_region
      // Predicated region
      $region25: #{define_d_forward.7} parent=23 // pred_check
        %p128 = pneg %p29
      $region26: #{define_d_forward.7} parent=23 // pred_check_branch
        %130 = sbr.rel (%p128) target = $region28
      $region27: #{define_d_forward.7} parent=23 // pred_region
        %p131 = scmp.lt.s32.totalorder %s9, 1
        %s132 = scalar_select %p131, %s9, 1
        %s133 = smul.addr %s132, 32
        %s134 = smul.addr %s133, 4
        %s135 = scalar_lea.vmem %s0, %s134
      $region28: #{define_d_forward.7} parent=23 // pred_fallthru
        _
    $region24: #{define_d_forward.7} parent=5 // pred_fallthru
      _
    %p136 = scmp.le.s32.totalorder 1, %s9
    %p137 = scmp.lt.s32.totalorder %s9, 3
    %p138 = pnand %p136, %p137
    %p139 = pneg %p138
    // Predicated region
    $region29: #{define_d_forward.7} parent=5 // pred_check
      _
    $region30: #{define_d_forward.7} parent=5 // pred_check_branch
      %141 = sbr.rel (%p138) target = $region32
    $region31: #{define_d_forward.7} parent=5 // pred_region
      %s142 = ssub.s32 %s9, 1
      %p143 = scmp.lt.s32.totalorder %s14, 1
      %s144 = scalar_select %p143, %s14, 1
      %s145 = smul.addr %s144, 32
      %s146 = smul.addr %s145, 4
      %s147 = scalar_lea.vmem %s0, %s146
      %p148 = pneg %p35
      %p149 = pneg %p32
      %p150 = pneg %p56
      %p151 = pneg %p53
      %p152 = pneg %p77
      %p153 = pneg %p74
      %p154 = pneg %p103
      %p155 = pneg %p100
      %p156 = scmp.lt.s32.totalorder %s14, 1
      %s157 = scalar_select %p156, %s14, 1
      %s158 = smul.addr %s157, 2
      %s159 = smul.addr %s158, 4
      %s160 = scalar_lea.vmem %s3, %s159
      %p161 = scmp.lt.s32.totalorder %s14, 1
      %s162 = scalar_select %p161, %s14, 1
      %s163 = smul.addr %s162, 32
      %s164 = smul.addr %s163, 4
      %s165 = scalar_lea.vmem %s0, %s164
      %p166 = scmp.lt.s32.totalorder %s14, 1
      %s167 = scalar_select %p166, %s14, 1
      %s168 = smul.addr %s167, 2
      %s169 = smul.addr %s168, 4
      %s170 = scalar_lea.vmem %s3, %s169
      %v172 = vld [vmem:[%s165] sm:$0xff]
      %v173 = vld [vmem:[%s165 + $0x8] sm:$0xff]
      %v174 = vld [vmem:[%s165 + $0x10] sm:$0xff]
      %v175 = vld [vmem:[%s165 + $0x18] sm:$0xff]
      %v176 = vld [vmem:[%s165 + $0x20] sm:$0xff]
      %v177 = vld [vmem:[%s165 + $0x28] sm:$0xff]
      %v178 = vld [vmem:[%s165 + $0x30] sm:$0xff]
      %v179 = vld [vmem:[%s165 + $0x38] sm:$0xff]
      %v180 = vld [vmem:[%s165 + $0x40] sm:$0xff]
      %v181 = vld [vmem:[%s165 + $0x48] sm:$0xff]
      %v182 = vld [vmem:[%s165 + $0x50] sm:$0xff]
      %v183 = vld [vmem:[%s165 + $0x58] sm:$0xff]
      %v184 = vld [vmem:[%s165 + $0x60] sm:$0xff]
      %v185 = vld [vmem:[%s165 + $0x68] sm:$0xff]
      %v186 = vld [vmem:[%s165 + $0x70] sm:$0xff]
      %v187 = vld [vmem:[%s165 + $0x78] sm:$0xff]
      %v188 = vld [vmem:[%s1] sm:$0xf]
      %v189 = vld [vmem:[%s1 + $0x4] sm:$0xf]
      %v190 = vld [vmem:[%s1 + $0x8] sm:$0xf]
      %v191 = vld [vmem:[%s1 + $0xc] sm:$0xf]
      %v192 = vld [vmem:[%s1 + $0x10] sm:$0xf]
      %v193 = vld [vmem:[%s1 + $0x14] sm:$0xf]
      %v194 = vld [vmem:[%s1 + $0x18] sm:$0xf]
      %v195 = vld [vmem:[%s1 + $0x1c] sm:$0xf]
      %v196 = vld [vmem:[%s1 + $0x20] sm:$0xf]
      %v197 = vld [vmem:[%s1 + $0x24] sm:$0xf]
      %v198 = vld [vmem:[%s1 + $0x28] sm:$0xf]
      %v199 = vld [vmem:[%s1 + $0x2c] sm:$0xf]
      %v200 = vld [vmem:[%s1 + $0x30] sm:$0xf]
      %v201 = vld [vmem:[%s1 + $0x34] sm:$0xf]
      %v202 = vld [vmem:[%s1 + $0x38] sm:$0xf]
      %v203 = vld [vmem:[%s1 + $0x3c] sm:$0xf]
      %v204 = vld [vmem:[%s1 + $0x40] sm:$0xf]
      %v205 = vld [vmem:[%s1 + $0x44] sm:$0xf]
      %v206 = vld [vmem:[%s1 + $0x48] sm:$0xf]
      %v207 = vld [vmem:[%s1 + $0x4c] sm:$0xf]
      %v208 = vld [vmem:[%s1 + $0x50] sm:$0xf]
      %v209 = vld [vmem:[%s1 + $0x54] sm:$0xf]
      %v210 = vld [vmem:[%s1 + $0x58] sm:$0xf]
      %v211 = vld [vmem:[%s1 + $0x5c] sm:$0xf]
      %v212 = vld [vmem:[%s1 + $0x60] sm:$0xf]
      %v213 = vld [vmem:[%s1 + $0x64] sm:$0xf]
      %v214 = vld [vmem:[%s1 + $0x68] sm:$0xf]
      %v215 = vld [vmem:[%s1 + $0x6c] sm:$0xf]
      %v216 = vld [vmem:[%s1 + $0x70] sm:$0xf]
      %v217 = vld [vmem:[%s1 + $0x74] sm:$0xf]
      %v218 = vld [vmem:[%s1 + $0x78] sm:$0xf]
      %v219 = vld [vmem:[%s1 + $0x7c] sm:$0xf]
      %v220 = vld [vmem:[%s1 + $0x80] sm:$0xf]
      %v221 = vld [vmem:[%s1 + $0x84] sm:$0xf]
      %v222 = vld [vmem:[%s1 + $0x88] sm:$0xf]
      %v223 = vld [vmem:[%s1 + $0x8c] sm:$0xf]
      %v224 = vld [vmem:[%s1 + $0x90] sm:$0xf]
      %v225 = vld [vmem:[%s1 + $0x94] sm:$0xf]
      %v226 = vld [vmem:[%s1 + $0x98] sm:$0xf]
      %v227 = vld [vmem:[%s1 + $0x9c] sm:$0xf]
      %v228 = vld [vmem:[%s1 + $0xa0] sm:$0xf]
      %v229 = vld [vmem:[%s1 + $0xa4] sm:$0xf]
      %v230 = vld [vmem:[%s1 + $0xa8] sm:$0xf]
      %v231 = vld [vmem:[%s1 + $0xac] sm:$0xf]
      %v232 = vld [vmem:[%s1 + $0xb0] sm:$0xf]
      %v233 = vld [vmem:[%s1 + $0xb4] sm:$0xf]
      %v234 = vld [vmem:[%s1 + $0xb8] sm:$0xf]
      %v235 = vld [vmem:[%s1 + $0xbc] sm:$0xf]
      %v236 = vld [vmem:[%s1 + $0xc0] sm:$0xf]
      %v237 = vld [vmem:[%s1 + $0xc4] sm:$0xf]
      %v238 = vld [vmem:[%s1 + $0xc8] sm:$0xf]
      %v239 = vld [vmem:[%s1 + $0xcc] sm:$0xf]
      %v240 = vld [vmem:[%s1 + $0xd0] sm:$0xf]
      %v241 = vld [vmem:[%s1 + $0xd4] sm:$0xf]
      %v242 = vld [vmem:[%s1 + $0xd8] sm:$0xf]
      %v243 = vld [vmem:[%s1 + $0xdc] sm:$0xf]
      %v244 = vld [vmem:[%s1 + $0xe0] sm:$0xf]
      %v245 = vld [vmem:[%s1 + $0xe4] sm:$0xf]
      %v246 = vld [vmem:[%s1 + $0xe8] sm:$0xf]
      %v247 = vld [vmem:[%s1 + $0xec] sm:$0xf]
      %v248 = vld [vmem:[%s1 + $0xf0] sm:$0xf]
      %v249 = vld [vmem:[%s1 + $0xf4] sm:$0xf]
      %v250 = vld [vmem:[%s1 + $0xf8] sm:$0xf]
      %v251 = vld [vmem:[%s1 + $0xfc] sm:$0xf]
      %v252 = vld [vmem:[%s1 + $0x100] sm:$0xf]
      %v253 = vld [vmem:[%s1 + $0x104] sm:$0xf]
      %v254 = vld [vmem:[%s1 + $0x108] sm:$0xf]
      %v255 = vld [vmem:[%s1 + $0x10c] sm:$0xf]
      %v256 = vld [vmem:[%s1 + $0x110] sm:$0xf]
      %v257 = vld [vmem:[%s1 + $0x114] sm:$0xf]
      %v258 = vld [vmem:[%s1 + $0x118] sm:$0xf]
      %v259 = vld [vmem:[%s1 + $0x11c] sm:$0xf]
      %v260 = vld [vmem:[%s1 + $0x120] sm:$0xf]
      %v261 = vld [vmem:[%s1 + $0x124] sm:$0xf]
      %v262 = vld [vmem:[%s1 + $0x128] sm:$0xf]
      %v263 = vld [vmem:[%s1 + $0x12c] sm:$0xf]
      %v264 = vld [vmem:[%s1 + $0x130] sm:$0xf]
      %v265 = vld [vmem:[%s1 + $0x134] sm:$0xf]
      %v266 = vld [vmem:[%s1 + $0x138] sm:$0xf]
      %v267 = vld [vmem:[%s1 + $0x13c] sm:$0xf]
      %v268 = vld [vmem:[%s1 + $0x140] sm:$0xf]
      %v269 = vld [vmem:[%s1 + $0x144] sm:$0xf]
      %v270 = vld [vmem:[%s1 + $0x148] sm:$0xf]
      %v271 = vld [vmem:[%s1 + $0x14c] sm:$0xf]
      %v272 = vld [vmem:[%s1 + $0x150] sm:$0xf]
      %v273 = vld [vmem:[%s1 + $0x154] sm:$0xf]
      %v274 = vld [vmem:[%s1 + $0x158] sm:$0xf]
      %v275 = vld [vmem:[%s1 + $0x15c] sm:$0xf]
      %v276 = vld [vmem:[%s1 + $0x160] sm:$0xf]
      %v277 = vld [vmem:[%s1 + $0x164] sm:$0xf]
      %v278 = vld [vmem:[%s1 + $0x168] sm:$0xf]
      %v279 = vld [vmem:[%s1 + $0x16c] sm:$0xf]
      %v280 = vld [vmem:[%s1 + $0x170] sm:$0xf]
      %v281 = vld [vmem:[%s1 + $0x174] sm:$0xf]
      %v282 = vld [vmem:[%s1 + $0x178] sm:$0xf]
      %v283 = vld [vmem:[%s1 + $0x17c] sm:$0xf]
      %v284 = vld [vmem:[%s1 + $0x180] sm:$0xf]
      %v285 = vld [vmem:[%s1 + $0x184] sm:$0xf]
      %v286 = vld [vmem:[%s1 + $0x188] sm:$0xf]
      %v287 = vld [vmem:[%s1 + $0x18c] sm:$0xf]
      %v288 = vld [vmem:[%s1 + $0x190] sm:$0xf]
      %v289 = vld [vmem:[%s1 + $0x194] sm:$0xf]
      %v290 = vld [vmem:[%s1 + $0x198] sm:$0xf]
      %v291 = vld [vmem:[%s1 + $0x19c] sm:$0xf]
      %v292 = vld [vmem:[%s1 + $0x1a0] sm:$0xf]
      %v293 = vld [vmem:[%s1 + $0x1a4] sm:$0xf]
      %v294 = vld [vmem:[%s1 + $0x1a8] sm:$0xf]
      %v295 = vld [vmem:[%s1 + $0x1ac] sm:$0xf]
      %v296 = vld [vmem:[%s1 + $0x1b0] sm:$0xf]
      %v297 = vld [vmem:[%s1 + $0x1b4] sm:$0xf]
      %v298 = vld [vmem:[%s1 + $0x1b8] sm:$0xf]
      %v299 = vld [vmem:[%s1 + $0x1bc] sm:$0xf]
      %v300 = vld [vmem:[%s1 + $0x1c0] sm:$0xf]
      %v301 = vld [vmem:[%s1 + $0x1c4] sm:$0xf]
      %v302 = vld [vmem:[%s1 + $0x1c8] sm:$0xf]
      %v303 = vld [vmem:[%s1 + $0x1cc] sm:$0xf]
      %v304 = vld [vmem:[%s1 + $0x1d0] sm:$0xf]
      %v305 = vld [vmem:[%s1 + $0x1d4] sm:$0xf]
      %v306 = vld [vmem:[%s1 + $0x1d8] sm:$0xf]
      %v307 = vld [vmem:[%s1 + $0x1dc] sm:$0xf]
      %v308 = vld [vmem:[%s1 + $0x1e0] sm:$0xf]
      %v309 = vld [vmem:[%s1 + $0x1e4] sm:$0xf]
      %v310 = vld [vmem:[%s1 + $0x1e8] sm:$0xf]
      %v311 = vld [vmem:[%s1 + $0x1ec] sm:$0xf]
      %v312 = vld [vmem:[%s1 + $0x1f0] sm:$0xf]
      %v313 = vld [vmem:[%s1 + $0x1f4] sm:$0xf]
      %v314 = vld [vmem:[%s1 + $0x1f8] sm:$0xf]
      %v315 = vld [vmem:[%s1 + $0x1fc] sm:$0xf]
      %v316 = vld [vmem:[%s1 + $0x200] sm:$0xf]
      %v317 = vld [vmem:[%s1 + $0x204] sm:$0xf]
      %v318 = vld [vmem:[%s1 + $0x208] sm:$0xf]
      %v319 = vld [vmem:[%s1 + $0x20c] sm:$0xf]
      %v320 = vld [vmem:[%s1 + $0x210] sm:$0xf]
      %v321 = vld [vmem:[%s1 + $0x214] sm:$0xf]
      %v322 = vld [vmem:[%s1 + $0x218] sm:$0xf]
      %v323 = vld [vmem:[%s1 + $0x21c] sm:$0xf]
      %v324 = vld [vmem:[%s1 + $0x220] sm:$0xf]
      %v325 = vld [vmem:[%s1 + $0x224] sm:$0xf]
      %v326 = vld [vmem:[%s1 + $0x228] sm:$0xf]
      %v327 = vld [vmem:[%s1 + $0x22c] sm:$0xf]
      %v328 = vld [vmem:[%s1 + $0x230] sm:$0xf]
      %v329 = vld [vmem:[%s1 + $0x234] sm:$0xf]
      %v330 = vld [vmem:[%s1 + $0x238] sm:$0xf]
      %v331 = vld [vmem:[%s1 + $0x23c] sm:$0xf]
      %v332 = vld [vmem:[%s1 + $0x240] sm:$0xf]
      %v333 = vld [vmem:[%s1 + $0x244] sm:$0xf]
      %v334 = vld [vmem:[%s1 + $0x248] sm:$0xf]
      %v335 = vld [vmem:[%s1 + $0x24c] sm:$0xf]
      %v336 = vld [vmem:[%s1 + $0x250] sm:$0xf]
      %v337 = vld [vmem:[%s1 + $0x254] sm:$0xf]
      %v338 = vld [vmem:[%s1 + $0x258] sm:$0xf]
      %v339 = vld [vmem:[%s1 + $0x25c] sm:$0xf]
      %v340 = vld [vmem:[%s1 + $0x260] sm:$0xf]
      %v341 = vld [vmem:[%s1 + $0x264] sm:$0xf]
      %v342 = vld [vmem:[%s1 + $0x268] sm:$0xf]
      %v343 = vld [vmem:[%s1 + $0x26c] sm:$0xf]
      %v344 = vld [vmem:[%s1 + $0x270] sm:$0xf]
      %v345 = vld [vmem:[%s1 + $0x274] sm:$0xf]
      %v346 = vld [vmem:[%s1 + $0x278] sm:$0xf]
      %v347 = vld [vmem:[%s1 + $0x27c] sm:$0xf]
      %v348 = vld [vmem:[%s1 + $0x280] sm:$0xf]
      %v349 = vld [vmem:[%s1 + $0x284] sm:$0xf]
      %v350 = vld [vmem:[%s1 + $0x288] sm:$0xf]
      %v351 = vld [vmem:[%s1 + $0x28c] sm:$0xf]
      %v352 = vld [vmem:[%s1 + $0x290] sm:$0xf]
      %v353 = vld [vmem:[%s1 + $0x294] sm:$0xf]
      %v354 = vld [vmem:[%s1 + $0x298] sm:$0xf]
      %v355 = vld [vmem:[%s1 + $0x29c] sm:$0xf]
      %v356 = vld [vmem:[%s1 + $0x2a0] sm:$0xf]
      %v357 = vld [vmem:[%s1 + $0x2a4] sm:$0xf]
      %v358 = vld [vmem:[%s1 + $0x2a8] sm:$0xf]
      %v359 = vld [vmem:[%s1 + $0x2ac] sm:$0xf]
      %v360 = vld [vmem:[%s1 + $0x2b0] sm:$0xf]
      %v361 = vld [vmem:[%s1 + $0x2b4] sm:$0xf]
      %v362 = vld [vmem:[%s1 + $0x2b8] sm:$0xf]
      %v363 = vld [vmem:[%s1 + $0x2bc] sm:$0xf]
      %v364 = vld [vmem:[%s1 + $0x2c0] sm:$0xf]
      %v365 = vld [vmem:[%s1 + $0x2c4] sm:$0xf]
      %v366 = vld [vmem:[%s1 + $0x2c8] sm:$0xf]
      %v367 = vld [vmem:[%s1 + $0x2cc] sm:$0xf]
      %v368 = vld [vmem:[%s1 + $0x2d0] sm:$0xf]
      %v369 = vld [vmem:[%s1 + $0x2d4] sm:$0xf]
      %v370 = vld [vmem:[%s1 + $0x2d8] sm:$0xf]
      %v371 = vld [vmem:[%s1 + $0x2dc] sm:$0xf]
      %v372 = vld [vmem:[%s1 + $0x2e0] sm:$0xf]
      %v373 = vld [vmem:[%s1 + $0x2e4] sm:$0xf]
      %v374 = vld [vmem:[%s1 + $0x2e8] sm:$0xf]
      %v375 = vld [vmem:[%s1 + $0x2ec] sm:$0xf]
      %v376 = vld [vmem:[%s1 + $0x2f0] sm:$0xf]
      %v377 = vld [vmem:[%s1 + $0x2f4] sm:$0xf]
      %v378 = vld [vmem:[%s1 + $0x2f8] sm:$0xf]
      %v379 = vld [vmem:[%s1 + $0x2fc] sm:$0xf]
      %v380 = vld [vmem:[%s1 + $0x300] sm:$0xf]
      %v381 = vld [vmem:[%s1 + $0x304] sm:$0xf]
      %v382 = vld [vmem:[%s1 + $0x308] sm:$0xf]
      %v383 = vld [vmem:[%s1 + $0x30c] sm:$0xf]
      %v384 = vld [vmem:[%s1 + $0x310] sm:$0xf]
      %v385 = vld [vmem:[%s1 + $0x314] sm:$0xf]
      %v386 = vld [vmem:[%s1 + $0x318] sm:$0xf]
      %v387 = vld [vmem:[%s1 + $0x31c] sm:$0xf]
      %v388 = vld [vmem:[%s1 + $0x320] sm:$0xf]
      %v389 = vld [vmem:[%s1 + $0x324] sm:$0xf]
      %v390 = vld [vmem:[%s1 + $0x328] sm:$0xf]
      %v391 = vld [vmem:[%s1 + $0x32c] sm:$0xf]
      %v392 = vld [vmem:[%s1 + $0x330] sm:$0xf]
      %v393 = vld [vmem:[%s1 + $0x334] sm:$0xf]
      %v394 = vld [vmem:[%s1 + $0x338] sm:$0xf]
      %v395 = vld [vmem:[%s1 + $0x33c] sm:$0xf]
      %v396 = vld [vmem:[%s1 + $0x340] sm:$0xf]
      %v397 = vld [vmem:[%s1 + $0x344] sm:$0xf]
      %v398 = vld [vmem:[%s1 + $0x348] sm:$0xf]
      %v399 = vld [vmem:[%s1 + $0x34c] sm:$0xf]
      %v400 = vld [vmem:[%s1 + $0x350] sm:$0xf]
      %v401 = vld [vmem:[%s1 + $0x354] sm:$0xf]
      %v402 = vld [vmem:[%s1 + $0x358] sm:$0xf]
      %v403 = vld [vmem:[%s1 + $0x35c] sm:$0xf]
      %v404 = vld [vmem:[%s1 + $0x360] sm:$0xf]
      %v405 = vld [vmem:[%s1 + $0x364] sm:$0xf]
      %v406 = vld [vmem:[%s1 + $0x368] sm:$0xf]
      %v407 = vld [vmem:[%s1 + $0x36c] sm:$0xf]
      %v408 = vld [vmem:[%s1 + $0x370] sm:$0xf]
      %v409 = vld [vmem:[%s1 + $0x374] sm:$0xf]
      %v410 = vld [vmem:[%s1 + $0x378] sm:$0xf]
      %v411 = vld [vmem:[%s1 + $0x37c] sm:$0xf]
      %v412 = vld [vmem:[%s1 + $0x380] sm:$0xf]
      %v413 = vld [vmem:[%s1 + $0x384] sm:$0xf]
      %v414 = vld [vmem:[%s1 + $0x388] sm:$0xf]
      %v415 = vld [vmem:[%s1 + $0x38c] sm:$0xf]
      %v416 = vld [vmem:[%s1 + $0x390] sm:$0xf]
      %v417 = vld [vmem:[%s1 + $0x394] sm:$0xf]
      %v418 = vld [vmem:[%s1 + $0x398] sm:$0xf]
      %v419 = vld [vmem:[%s1 + $0x39c] sm:$0xf]
      %v420 = vld [vmem:[%s1 + $0x3a0] sm:$0xf]
      %v421 = vld [vmem:[%s1 + $0x3a4] sm:$0xf]
      %v422 = vld [vmem:[%s1 + $0x3a8] sm:$0xf]
      %v423 = vld [vmem:[%s1 + $0x3ac] sm:$0xf]
      %v424 = vld [vmem:[%s1 + $0x3b0] sm:$0xf]
      %v425 = vld [vmem:[%s1 + $0x3b4] sm:$0xf]
      %v426 = vld [vmem:[%s1 + $0x3b8] sm:$0xf]
      %v427 = vld [vmem:[%s1 + $0x3bc] sm:$0xf]
      %v428 = vld [vmem:[%s1 + $0x3c0] sm:$0xf]
      %v429 = vld [vmem:[%s1 + $0x3c4] sm:$0xf]
      %v430 = vld [vmem:[%s1 + $0x3c8] sm:$0xf]
      %v431 = vld [vmem:[%s1 + $0x3cc] sm:$0xf]
      %v432 = vld [vmem:[%s1 + $0x3d0] sm:$0xf]
      %v433 = vld [vmem:[%s1 + $0x3d4] sm:$0xf]
      %v434 = vld [vmem:[%s1 + $0x3d8] sm:$0xf]
      %v435 = vld [vmem:[%s1 + $0x3dc] sm:$0xf]
      %v436 = vld [vmem:[%s1 + $0x3e0] sm:$0xf]
      %v437 = vld [vmem:[%s1 + $0x3e4] sm:$0xf]
      %v438 = vld [vmem:[%s1 + $0x3e8] sm:$0xf]
      %v439 = vld [vmem:[%s1 + $0x3ec] sm:$0xf]
      %v440 = vld [vmem:[%s1 + $0x3f0] sm:$0xf]
      %v441 = vld [vmem:[%s1 + $0x3f4] sm:$0xf]
      %v442 = vld [vmem:[%s1 + $0x3f8] sm:$0xf]
      %v443 = vld [vmem:[%s1 + $0x3fc] sm:$0xf]
      %v444 = vld [vmem:[%s2] sm:$0x1]
      %v446 = vlaneseq
      %v447 = vshrl.u32 %v446, 7
      %v448 = vsub.s32 0, %v447
      %v449 = vrot.slane %v444, %v448
      %v467 = vunpack.c.l.b16 %v172
      %v468 = vunpack.c.h.b16 %v172
      %v469 = vunpack.c.l.b16 %v173
      %v470 = vunpack.c.h.b16 %v173
      %v471 = vunpack.c.l.b16 %v174
      %v472 = vunpack.c.h.b16 %v174
      %v473 = vunpack.c.l.b16 %v175
      %v474 = vunpack.c.h.b16 %v175
      %v475 = vunpack.c.l.b16 %v176
      %v476 = vunpack.c.h.b16 %v176
      %v477 = vunpack.c.l.b16 %v177
      %v478 = vunpack.c.h.b16 %v177
      %v479 = vunpack.c.l.b16 %v178
      %v480 = vunpack.c.h.b16 %v178
      %v481 = vunpack.c.l.b16 %v179
      %v482 = vunpack.c.h.b16 %v179
      %v483 = vunpack.c.l.b16 %v180
      %v484 = vunpack.c.h.b16 %v180
      %v485 = vunpack.c.l.b16 %v181
      %v486 = vunpack.c.h.b16 %v181
      %v487 = vunpack.c.l.b16 %v182
      %v488 = vunpack.c.h.b16 %v182
      %v489 = vunpack.c.l.b16 %v183
      %v490 = vunpack.c.h.b16 %v183
      %v491 = vunpack.c.l.b16 %v184
      %v492 = vunpack.c.h.b16 %v184
      %v493 = vunpack.c.l.b16 %v185
      %v494 = vunpack.c.h.b16 %v185
      %v495 = vunpack.c.l.b16 %v186
      %v496 = vunpack.c.h.b16 %v186
      %v497 = vunpack.c.l.b16 %v187
      %v498 = vunpack.c.h.b16 %v187
      %v499 = vpack.c.b16 %v483, %v467
      %v500 = vpack.c.b16 %v484, %v468
      %v501 = vpack.c.b16 %v485, %v469
      %v502 = vpack.c.b16 %v486, %v470
      %v503 = vpack.c.b16 %v487, %v471
      %v504 = vpack.c.b16 %v488, %v472
      %v505 = vpack.c.b16 %v489, %v473
      %v506 = vpack.c.b16 %v490, %v474
      %v507 = vpack.c.b16 %v491, %v475
      %v508 = vpack.c.b16 %v492, %v476
      %v509 = vpack.c.b16 %v493, %v477
      %v510 = vpack.c.b16 %v494, %v478
      %v511 = vpack.c.b16 %v495, %v479
      %v512 = vpack.c.b16 %v496, %v480
      %v513 = vpack.c.b16 %v497, %v481
      %v514 = vpack.c.b16 %v498, %v482
      %v787 = vunpack.c.l.b16 %v188
      %v788 = vunpack.c.l.b16 %v189
      %v789 = vunpack.c.l.b16 %v190
      %v790 = vunpack.c.l.b16 %v191
      %v791 = vunpack.c.l.b16 %v192
      %v792 = vunpack.c.l.b16 %v193
      %v793 = vunpack.c.l.b16 %v194
      %v794 = vunpack.c.l.b16 %v195
      %v795 = vunpack.c.l.b16 %v196
      %v796 = vunpack.c.l.b16 %v197
      %v797 = vunpack.c.l.b16 %v198
      %v798 = vunpack.c.l.b16 %v199
      %v799 = vunpack.c.l.b16 %v200
      %v800 = vunpack.c.l.b16 %v201
      %v801 = vunpack.c.l.b16 %v202
      %v802 = vunpack.c.l.b16 %v203
      %v803 = vunpack.c.l.b16 %v204
      %v804 = vunpack.c.l.b16 %v205
      %v805 = vunpack.c.l.b16 %v206
      %v806 = vunpack.c.l.b16 %v207
      %v807 = vunpack.c.l.b16 %v208
      %v808 = vunpack.c.l.b16 %v209
      %v809 = vunpack.c.l.b16 %v210
      %v810 = vunpack.c.l.b16 %v211
      %v811 = vunpack.c.l.b16 %v212
      %v812 = vunpack.c.l.b16 %v213
      %v813 = vunpack.c.l.b16 %v214
      %v814 = vunpack.c.l.b16 %v215
      %v815 = vunpack.c.l.b16 %v216
      %v816 = vunpack.c.l.b16 %v217
      %v817 = vunpack.c.l.b16 %v218
      %v818 = vunpack.c.l.b16 %v219
      %v819 = vunpack.c.l.b16 %v220
      %v820 = vunpack.c.l.b16 %v221
      %v821 = vunpack.c.l.b16 %v222
      %v822 = vunpack.c.l.b16 %v223
      %v823 = vunpack.c.l.b16 %v224
      %v824 = vunpack.c.l.b16 %v225
      %v825 = vunpack.c.l.b16 %v226
      %v826 = vunpack.c.l.b16 %v227
      %v827 = vunpack.c.l.b16 %v228
      %v828 = vunpack.c.l.b16 %v229
      %v829 = vunpack.c.l.b16 %v230
      %v830 = vunpack.c.l.b16 %v231
      %v831 = vunpack.c.l.b16 %v232
      %v832 = vunpack.c.l.b16 %v233
      %v833 = vunpack.c.l.b16 %v234
      %v834 = vunpack.c.l.b16 %v235
      %v835 = vunpack.c.l.b16 %v236
      %v836 = vunpack.c.l.b16 %v237
      %v837 = vunpack.c.l.b16 %v238
      %v838 = vunpack.c.l.b16 %v239
      %v839 = vunpack.c.l.b16 %v240
      %v840 = vunpack.c.l.b16 %v241
      %v841 = vunpack.c.l.b16 %v242
      %v842 = vunpack.c.l.b16 %v243
      %v843 = vunpack.c.l.b16 %v244
      %v844 = vunpack.c.l.b16 %v245
      %v845 = vunpack.c.l.b16 %v246
      %v846 = vunpack.c.l.b16 %v247
      %v847 = vunpack.c.l.b16 %v248
      %v848 = vunpack.c.l.b16 %v249
      %v849 = vunpack.c.l.b16 %v250
      %v850 = vunpack.c.l.b16 %v251
      %v851 = vunpack.c.l.b16 %v252
      %v852 = vunpack.c.l.b16 %v253
      %v853 = vunpack.c.l.b16 %v254
      %v854 = vunpack.c.l.b16 %v255
      %v855 = vunpack.c.l.b16 %v256
      %v856 = vunpack.c.l.b16 %v257
      %v857 = vunpack.c.l.b16 %v258
      %v858 = vunpack.c.l.b16 %v259
      %v859 = vunpack.c.l.b16 %v260
      %v860 = vunpack.c.l.b16 %v261
      %v861 = vunpack.c.l.b16 %v262
      %v862 = vunpack.c.l.b16 %v263
      %v863 = vunpack.c.l.b16 %v264
      %v864 = vunpack.c.l.b16 %v265
      %v865 = vunpack.c.l.b16 %v266
      %v866 = vunpack.c.l.b16 %v267
      %v867 = vunpack.c.l.b16 %v268
      %v868 = vunpack.c.l.b16 %v269
      %v869 = vunpack.c.l.b16 %v270
      %v870 = vunpack.c.l.b16 %v271
      %v871 = vunpack.c.l.b16 %v272
      %v872 = vunpack.c.l.b16 %v273
      %v873 = vunpack.c.l.b16 %v274
      %v874 = vunpack.c.l.b16 %v275
      %v875 = vunpack.c.l.b16 %v276
      %v876 = vunpack.c.l.b16 %v277
      %v877 = vunpack.c.l.b16 %v278
      %v878 = vunpack.c.l.b16 %v279
      %v879 = vunpack.c.l.b16 %v280
      %v880 = vunpack.c.l.b16 %v281
      %v881 = vunpack.c.l.b16 %v282
      %v882 = vunpack.c.l.b16 %v283
      %v883 = vunpack.c.l.b16 %v284
      %v884 = vunpack.c.l.b16 %v285
      %v885 = vunpack.c.l.b16 %v286
      %v886 = vunpack.c.l.b16 %v287
      %v887 = vunpack.c.l.b16 %v288
      %v888 = vunpack.c.l.b16 %v289
      %v889 = vunpack.c.l.b16 %v290
      %v890 = vunpack.c.l.b16 %v291
      %v891 = vunpack.c.l.b16 %v292
      %v892 = vunpack.c.l.b16 %v293
      %v893 = vunpack.c.l.b16 %v294
      %v894 = vunpack.c.l.b16 %v295
      %v895 = vunpack.c.l.b16 %v296
      %v896 = vunpack.c.l.b16 %v297
      %v897 = vunpack.c.l.b16 %v298
      %v898 = vunpack.c.l.b16 %v299
      %v899 = vunpack.c.l.b16 %v300
      %v900 = vunpack.c.l.b16 %v301
      %v901 = vunpack.c.l.b16 %v302
      %v902 = vunpack.c.l.b16 %v303
      %v903 = vunpack.c.l.b16 %v304
      %v904 = vunpack.c.l.b16 %v305
      %v905 = vunpack.c.l.b16 %v306
      %v906 = vunpack.c.l.b16 %v307
      %v907 = vunpack.c.l.b16 %v308
      %v908 = vunpack.c.l.b16 %v309
      %v909 = vunpack.c.l.b16 %v310
      %v910 = vunpack.c.l.b16 %v311
      %v911 = vunpack.c.l.b16 %v312
      %v912 = vunpack.c.l.b16 %v313
      %v913 = vunpack.c.l.b16 %v314
      %v914 = vunpack.c.l.b16 %v315
      %v915 = vunpack.c.l.b16 %v316
      %v916 = vunpack.c.l.b16 %v317
      %v917 = vunpack.c.l.b16 %v318
      %v918 = vunpack.c.l.b16 %v319
      %v919 = vunpack.c.l.b16 %v320
      %v920 = vunpack.c.l.b16 %v321
      %v921 = vunpack.c.l.b16 %v322
      %v922 = vunpack.c.l.b16 %v323
      %v923 = vunpack.c.l.b16 %v324
      %v924 = vunpack.c.l.b16 %v325
      %v925 = vunpack.c.l.b16 %v326
      %v926 = vunpack.c.l.b16 %v327
      %v927 = vunpack.c.l.b16 %v328
      %v928 = vunpack.c.l.b16 %v329
      %v929 = vunpack.c.l.b16 %v330
      %v930 = vunpack.c.l.b16 %v331
      %v931 = vunpack.c.l.b16 %v332
      %v932 = vunpack.c.l.b16 %v333
      %v933 = vunpack.c.l.b16 %v334
      %v934 = vunpack.c.l.b16 %v335
      %v935 = vunpack.c.l.b16 %v336
      %v936 = vunpack.c.l.b16 %v337
      %v937 = vunpack.c.l.b16 %v338
      %v938 = vunpack.c.l.b16 %v339
      %v939 = vunpack.c.l.b16 %v340
      %v940 = vunpack.c.l.b16 %v341
      %v941 = vunpack.c.l.b16 %v342
      %v942 = vunpack.c.l.b16 %v343
      %v943 = vunpack.c.l.b16 %v344
      %v944 = vunpack.c.l.b16 %v345
      %v945 = vunpack.c.l.b16 %v346
      %v946 = vunpack.c.l.b16 %v347
      %v947 = vunpack.c.l.b16 %v348
      %v948 = vunpack.c.l.b16 %v349
      %v949 = vunpack.c.l.b16 %v350
      %v950 = vunpack.c.l.b16 %v351
      %v951 = vunpack.c.l.b16 %v352
      %v952 = vunpack.c.l.b16 %v353
      %v953 = vunpack.c.l.b16 %v354
      %v954 = vunpack.c.l.b16 %v355
      %v955 = vunpack.c.l.b16 %v356
      %v956 = vunpack.c.l.b16 %v357
      %v957 = vunpack.c.l.b16 %v358
      %v958 = vunpack.c.l.b16 %v359
      %v959 = vunpack.c.l.b16 %v360
      %v960 = vunpack.c.l.b16 %v361
      %v961 = vunpack.c.l.b16 %v362
      %v962 = vunpack.c.l.b16 %v363
      %v963 = vunpack.c.l.b16 %v364
      %v964 = vunpack.c.l.b16 %v365
      %v965 = vunpack.c.l.b16 %v366
      %v966 = vunpack.c.l.b16 %v367
      %v967 = vunpack.c.l.b16 %v368
      %v968 = vunpack.c.l.b16 %v369
      %v969 = vunpack.c.l.b16 %v370
      %v970 = vunpack.c.l.b16 %v371
      %v971 = vunpack.c.l.b16 %v372
      %v972 = vunpack.c.l.b16 %v373
      %v973 = vunpack.c.l.b16 %v374
      %v974 = vunpack.c.l.b16 %v375
      %v975 = vunpack.c.l.b16 %v376
      %v976 = vunpack.c.l.b16 %v377
      %v977 = vunpack.c.l.b16 %v378
      %v978 = vunpack.c.l.b16 %v379
      %v979 = vunpack.c.l.b16 %v380
      %v980 = vunpack.c.l.b16 %v381
      %v981 = vunpack.c.l.b16 %v382
      %v982 = vunpack.c.l.b16 %v383
      %v983 = vunpack.c.l.b16 %v384
      %v984 = vunpack.c.l.b16 %v385
      %v985 = vunpack.c.l.b16 %v386
      %v986 = vunpack.c.l.b16 %v387
      %v987 = vunpack.c.l.b16 %v388
      %v988 = vunpack.c.l.b16 %v389
      %v989 = vunpack.c.l.b16 %v390
      %v990 = vunpack.c.l.b16 %v391
      %v991 = vunpack.c.l.b16 %v392
      %v992 = vunpack.c.l.b16 %v393
      %v993 = vunpack.c.l.b16 %v394
      %v994 = vunpack.c.l.b16 %v395
      %v995 = vunpack.c.l.b16 %v396
      %v996 = vunpack.c.l.b16 %v397
      %v997 = vunpack.c.l.b16 %v398
      %v998 = vunpack.c.l.b16 %v399
      %v999 = vunpack.c.l.b16 %v400
      %v1000 = vunpack.c.l.b16 %v401
      %v1001 = vunpack.c.l.b16 %v402
      %v1002 = vunpack.c.l.b16 %v403
      %v1003 = vunpack.c.l.b16 %v404
      %v1004 = vunpack.c.l.b16 %v405
      %v1005 = vunpack.c.l.b16 %v406
      %v1006 = vunpack.c.l.b16 %v407
      %v1007 = vunpack.c.l.b16 %v408
      %v1008 = vunpack.c.l.b16 %v409
      %v1009 = vunpack.c.l.b16 %v410
      %v1010 = vunpack.c.l.b16 %v411
      %v1011 = vunpack.c.l.b16 %v412
      %v1012 = vunpack.c.l.b16 %v413
      %v1013 = vunpack.c.l.b16 %v414
      %v1014 = vunpack.c.l.b16 %v415
      %v1015 = vunpack.c.l.b16 %v416
      %v1016 = vunpack.c.l.b16 %v417
      %v1017 = vunpack.c.l.b16 %v418
      %v1018 = vunpack.c.l.b16 %v419
      %v1019 = vunpack.c.l.b16 %v420
      %v1020 = vunpack.c.l.b16 %v421
      %v1021 = vunpack.c.l.b16 %v422
      %v1022 = vunpack.c.l.b16 %v423
      %v1023 = vunpack.c.l.b16 %v424
      %v1024 = vunpack.c.l.b16 %v425
      %v1025 = vunpack.c.l.b16 %v426
      %v1026 = vunpack.c.l.b16 %v427
      %v1027 = vunpack.c.l.b16 %v428
      %v1028 = vunpack.c.l.b16 %v429
      %v1029 = vunpack.c.l.b16 %v430
      %v1030 = vunpack.c.l.b16 %v431
      %v1031 = vunpack.c.l.b16 %v432
      %v1032 = vunpack.c.l.b16 %v433
      %v1033 = vunpack.c.l.b16 %v434
      %v1034 = vunpack.c.l.b16 %v435
      %v1035 = vunpack.c.l.b16 %v436
      %v1036 = vunpack.c.l.b16 %v437
      %v1037 = vunpack.c.l.b16 %v438
      %v1038 = vunpack.c.l.b16 %v439
      %v1039 = vunpack.c.l.b16 %v440
      %v1040 = vunpack.c.l.b16 %v441
      %v1041 = vunpack.c.l.b16 %v442
      %v1042 = vunpack.c.l.b16 %v443
      %v1043 = vpack.c.b16 %v788, %v787
      %v1044 = vpack.c.b16 %v790, %v789
      %v1045 = vpack.c.b16 %v792, %v791
      %v1046 = vpack.c.b16 %v794, %v793
      %v1047 = vpack.c.b16 %v796, %v795
      %v1048 = vpack.c.b16 %v798, %v797
      %v1049 = vpack.c.b16 %v800, %v799
      %v1050 = vpack.c.b16 %v802, %v801
      %v1051 = vpack.c.b16 %v804, %v803
      %v1052 = vpack.c.b16 %v806, %v805
      %v1053 = vpack.c.b16 %v808, %v807
      %v1054 = vpack.c.b16 %v810, %v809
      %v1055 = vpack.c.b16 %v812, %v811
      %v1056 = vpack.c.b16 %v814, %v813
      %v1057 = vpack.c.b16 %v816, %v815
      %v1058 = vpack.c.b16 %v818, %v817
      %v1059 = vpack.c.b16 %v820, %v819
      %v1060 = vpack.c.b16 %v822, %v821
      %v1061 = vpack.c.b16 %v824, %v823
      %v1062 = vpack.c.b16 %v826, %v825
      %v1063 = vpack.c.b16 %v828, %v827
      %v1064 = vpack.c.b16 %v830, %v829
      %v1065 = vpack.c.b16 %v832, %v831
      %v1066 = vpack.c.b16 %v834, %v833
      %v1067 = vpack.c.b16 %v836, %v835
      %v1068 = vpack.c.b16 %v838, %v837
      %v1069 = vpack.c.b16 %v840, %v839
      %v1070 = vpack.c.b16 %v842, %v841
      %v1071 = vpack.c.b16 %v844, %v843
      %v1072 = vpack.c.b16 %v846, %v845
      %v1073 = vpack.c.b16 %v848, %v847
      %v1074 = vpack.c.b16 %v850, %v849
      %v1075 = vpack.c.b16 %v852, %v851
      %v1076 = vpack.c.b16 %v854, %v853
      %v1077 = vpack.c.b16 %v856, %v855
      %v1078 = vpack.c.b16 %v858, %v857
      %v1079 = vpack.c.b16 %v860, %v859
      %v1080 = vpack.c.b16 %v862, %v861
      %v1081 = vpack.c.b16 %v864, %v863
      %v1082 = vpack.c.b16 %v866, %v865
      %v1083 = vpack.c.b16 %v868, %v867
      %v1084 = vpack.c.b16 %v870, %v869
      %v1085 = vpack.c.b16 %v872, %v871
      %v1086 = vpack.c.b16 %v874, %v873
      %v1087 = vpack.c.b16 %v876, %v875
      %v1088 = vpack.c.b16 %v878, %v877
      %v1089 = vpack.c.b16 %v880, %v879
      %v1090 = vpack.c.b16 %v882, %v881
      %v1091 = vpack.c.b16 %v884, %v883
      %v1092 = vpack.c.b16 %v886, %v885
      %v1093 = vpack.c.b16 %v888, %v887
      %v1094 = vpack.c.b16 %v890, %v889
      %v1095 = vpack.c.b16 %v892, %v891
      %v1096 = vpack.c.b16 %v894, %v893
      %v1097 = vpack.c.b16 %v896, %v895
      %v1098 = vpack.c.b16 %v898, %v897
      %v1099 = vpack.c.b16 %v900, %v899
      %v1100 = vpack.c.b16 %v902, %v901
      %v1101 = vpack.c.b16 %v904, %v903
      %v1102 = vpack.c.b16 %v906, %v905
      %v1103 = vpack.c.b16 %v908, %v907
      %v1104 = vpack.c.b16 %v910, %v909
      %v1105 = vpack.c.b16 %v912, %v911
      %v1106 = vpack.c.b16 %v914, %v913
      %v1107 = vpack.c.b16 %v916, %v915
      %v1108 = vpack.c.b16 %v918, %v917
      %v1109 = vpack.c.b16 %v920, %v919
      %v1110 = vpack.c.b16 %v922, %v921
      %v1111 = vpack.c.b16 %v924, %v923
      %v1112 = vpack.c.b16 %v926, %v925
      %v1113 = vpack.c.b16 %v928, %v927
      %v1114 = vpack.c.b16 %v930, %v929
      %v1115 = vpack.c.b16 %v932, %v931
      %v1116 = vpack.c.b16 %v934, %v933
      %v1117 = vpack.c.b16 %v936, %v935
      %v1118 = vpack.c.b16 %v938, %v937
      %v1119 = vpack.c.b16 %v940, %v939
      %v1120 = vpack.c.b16 %v942, %v941
      %v1121 = vpack.c.b16 %v944, %v943
      %v1122 = vpack.c.b16 %v946, %v945
      %v1123 = vpack.c.b16 %v948, %v947
      %v1124 = vpack.c.b16 %v950, %v949
      %v1125 = vpack.c.b16 %v952, %v951
      %v1126 = vpack.c.b16 %v954, %v953
      %v1127 = vpack.c.b16 %v956, %v955
      %v1128 = vpack.c.b16 %v958, %v957
      %v1129 = vpack.c.b16 %v960, %v959
      %v1130 = vpack.c.b16 %v962, %v961
      %v1131 = vpack.c.b16 %v964, %v963
      %v1132 = vpack.c.b16 %v966, %v965
      %v1133 = vpack.c.b16 %v968, %v967
      %v1134 = vpack.c.b16 %v970, %v969
      %v1135 = vpack.c.b16 %v972, %v971
      %v1136 = vpack.c.b16 %v974, %v973
      %v1137 = vpack.c.b16 %v976, %v975
      %v1138 = vpack.c.b16 %v978, %v977
      %v1139 = vpack.c.b16 %v980, %v979
      %v1140 = vpack.c.b16 %v982, %v981
      %v1141 = vpack.c.b16 %v984, %v983
      %v1142 = vpack.c.b16 %v986, %v985
      %v1143 = vpack.c.b16 %v988, %v987
      %v1144 = vpack.c.b16 %v990, %v989
      %v1145 = vpack.c.b16 %v992, %v991
      %v1146 = vpack.c.b16 %v994, %v993
      %v1147 = vpack.c.b16 %v996, %v995
      %v1148 = vpack.c.b16 %v998, %v997
      %v1149 = vpack.c.b16 %v1000, %v999
      %v1150 = vpack.c.b16 %v1002, %v1001
      %v1151 = vpack.c.b16 %v1004, %v1003
      %v1152 = vpack.c.b16 %v1006, %v1005
      %v1153 = vpack.c.b16 %v1008, %v1007
      %v1154 = vpack.c.b16 %v1010, %v1009
      %v1155 = vpack.c.b16 %v1012, %v1011
      %v1156 = vpack.c.b16 %v1014, %v1013
      %v1157 = vpack.c.b16 %v1016, %v1015
      %v1158 = vpack.c.b16 %v1018, %v1017
      %v1159 = vpack.c.b16 %v1020, %v1019
      %v1160 = vpack.c.b16 %v1022, %v1021
      %v1161 = vpack.c.b16 %v1024, %v1023
      %v1162 = vpack.c.b16 %v1026, %v1025
      %v1163 = vpack.c.b16 %v1028, %v1027
      %v1164 = vpack.c.b16 %v1030, %v1029
      %v1165 = vpack.c.b16 %v1032, %v1031
      %v1166 = vpack.c.b16 %v1034, %v1033
      %v1167 = vpack.c.b16 %v1036, %v1035
      %v1168 = vpack.c.b16 %v1038, %v1037
      %v1169 = vpack.c.b16 %v1040, %v1039
      %v1170 = vpack.c.b16 %v1042, %v1041
      %1299 = vmatprep.subr.bf16.mxu0 0
      %1300 = vmatpush1.bf16.msra.mxu0 %v1043
      %1301 = vmatprep.subr.bf16.mxu0 0
      %1302 = vmatpush1.bf16.msra.mxu0 %v1044
      %1303 = vmatprep.subr.bf16.mxu0 0
      %1304 = vmatpush1.bf16.msra.mxu0 %v1045
      %1305 = vmatprep.subr.bf16.mxu0 0
      %1306 = vmatpush1.bf16.msra.mxu0 %v1046
      %1307 = vmatprep.subr.bf16.mxu0 0
      %1308 = vmatpush1.bf16.msra.mxu0 %v1047
      %1309 = vmatprep.subr.bf16.mxu0 0
      %1310 = vmatpush1.bf16.msra.mxu0 %v1048
      %1311 = vmatprep.subr.bf16.mxu0 0
      %1312 = vmatpush1.bf16.msra.mxu0 %v1049
      %1313 = vmatprep.subr.bf16.mxu0 0
      %1314 = vmatpush1.bf16.msra.mxu0 %v1050
      %1315 = vmatprep.subr.bf16.mxu0 0
      %1316 = vmatpush1.bf16.msra.mxu0 %v1051
      %1317 = vmatprep.subr.bf16.mxu0 0
      %1318 = vmatpush1.bf16.msra.mxu0 %v1052
      %1319 = vmatprep.subr.bf16.mxu0 0
      %1320 = vmatpush1.bf16.msra.mxu0 %v1053
      %1321 = vmatprep.subr.bf16.mxu0 0
      %1322 = vmatpush1.bf16.msra.mxu0 %v1054
      %1323 = vmatprep.subr.bf16.mxu0 0
      %1324 = vmatpush1.bf16.msra.mxu0 %v1055
      %1325 = vmatprep.subr.bf16.mxu0 0
      %1326 = vmatpush1.bf16.msra.mxu0 %v1056
      %1327 = vmatprep.subr.bf16.mxu0 0
      %1328 = vmatpush1.bf16.msra.mxu0 %v1057
      %1329 = vmatprep.subr.bf16.mxu0 0
      %1330 = vmatpush1.bf16.msra.mxu0 %v1058
      %1331 = vmatprep.mubr.bf16.mxu0 %v500
      %1332 = vmatmul.mubr.bf16.gmra.mrb[0].mxu0 %v499
      %v1333 = vpop.f32.mrb[0].mxu0
      %v1334 = vadd.f32 %v449, %v1333
      %v1335 = vpop.f32.mrb[0].mxu0
      %v1336 = vpop.f32.mrb[0].mxu0
      %v1337 = vadd.f32 %v449, %v1336
      %v1338 = vpop.f32.mrb[0].mxu0
      %1339 = vdwg.mxu0
      %1340 = vmatprep.subr.bf16.mxu0 0
      %1341 = vmatpush1.bf16.msra.mxu0 %v1059
      %1342 = vmatprep.subr.bf16.mxu0 0
      %1343 = vmatpush1.bf16.msra.mxu0 %v1060
      %1344 = vmatprep.subr.bf16.mxu0 0
      %1345 = vmatpush1.bf16.msra.mxu0 %v1061
      %1346 = vmatprep.subr.bf16.mxu0 0
      %1347 = vmatpush1.bf16.msra.mxu0 %v1062
      %1348 = vmatprep.subr.bf16.mxu0 0
      %1349 = vmatpush1.bf16.msra.mxu0 %v1063
      %1350 = vmatprep.subr.bf16.mxu0 0
      %1351 = vmatpush1.bf16.msra.mxu0 %v1064
      %1352 = vmatprep.subr.bf16.mxu0 0
      %1353 = vmatpush1.bf16.msra.mxu0 %v1065
      %1354 = vmatprep.subr.bf16.mxu0 0
      %1355 = vmatpush1.bf16.msra.mxu0 %v1066
      %1356 = vmatprep.subr.bf16.mxu0 0
      %1357 = vmatpush1.bf16.msra.mxu0 %v1067
      %1358 = vmatprep.subr.bf16.mxu0 0
      %1359 = vmatpush1.bf16.msra.mxu0 %v1068
      %1360 = vmatprep.subr.bf16.mxu0 0
      %1361 = vmatpush1.bf16.msra.mxu0 %v1069
      %1362 = vmatprep.subr.bf16.mxu0 0
      %1363 = vmatpush1.bf16.msra.mxu0 %v1070
      %1364 = vmatprep.subr.bf16.mxu0 0
      %1365 = vmatpush1.bf16.msra.mxu0 %v1071
      %1366 = vmatprep.subr.bf16.mxu0 0
      %1367 = vmatpush1.bf16.msra.mxu0 %v1072
      %1368 = vmatprep.subr.bf16.mxu0 0
      %1369 = vmatpush1.bf16.msra.mxu0 %v1073
      %1370 = vmatprep.subr.bf16.mxu0 0
      %1371 = vmatpush1.bf16.msra.mxu0 %v1074
      %1372 = vmatprep.mubr.bf16.mxu0 %v502
      %1373 = vmatmul.mubr.bf16.gmra.mrb[0].mxu0 %v501
      %v1374 = vpop.f32.mrb[0].mxu0
      %v1375 = vadd.f32 %v1334, %v1374
      %v1376 = vpop.f32.mrb[0].mxu0
      %v1377 = vpop.f32.mrb[0].mxu0
      %v1378 = vadd.f32 %v1337, %v1377
      %v1379 = vpop.f32.mrb[0].mxu0
      %1380 = vdwg.mxu0
      %1381 = vmatprep.subr.bf16.mxu0 0
      %1382 = vmatpush1.bf16.msra.mxu0 %v1075
      %1383 = vmatprep.subr.bf16.mxu0 0
      %1384 = vmatpush1.bf16.msra.mxu0 %v1076
      %1385 = vmatprep.subr.bf16.mxu0 0
      %1386 = vmatpush1.bf16.msra.mxu0 %v1077
      %1387 = vmatprep.subr.bf16.mxu0 0
      %1388 = vmatpush1.bf16.msra.mxu0 %v1078
      %1389 = vmatprep.subr.bf16.mxu0 0
      %1390 = vmatpush1.bf16.msra.mxu0 %v1079
      %1391 = vmatprep.subr.bf16.mxu0 0
      %1392 = vmatpush1.bf16.msra.mxu0 %v1080
      %1393 = vmatprep.subr.bf16.mxu0 0
      %1394 = vmatpush1.bf16.msra.mxu0 %v1081
      %1395 = vmatprep.subr.bf16.mxu0 0
      %1396 = vmatpush1.bf16.msra.mxu0 %v1082
      %1397 = vmatprep.subr.bf16.mxu0 0
      %1398 = vmatpush1.bf16.msra.mxu0 %v1083
      %1399 = vmatprep.subr.bf16.mxu0 0
      %1400 = vmatpush1.bf16.msra.mxu0 %v1084
      %1401 = vmatprep.subr.bf16.mxu0 0
      %1402 = vmatpush1.bf16.msra.mxu0 %v1085
      %1403 = vmatprep.subr.bf16.mxu0 0
      %1404 = vmatpush1.bf16.msra.mxu0 %v1086
      %1405 = vmatprep.subr.bf16.mxu0 0
      %1406 = vmatpush1.bf16.msra.mxu0 %v1087
      %1407 = vmatprep.subr.bf16.mxu0 0
      %1408 = vmatpush1.bf16.msra.mxu0 %v1088
      %1409 = vmatprep.subr.bf16.mxu0 0
      %1410 = vmatpush1.bf16.msra.mxu0 %v1089
      %1411 = vmatprep.subr.bf16.mxu0 0
      %1412 = vmatpush1.bf16.msra.mxu0 %v1090
      %1413 = vmatprep.mubr.bf16.mxu0 %v504
      %1414 = vmatmul.mubr.bf16.gmra.mrb[0].mxu0 %v503
      %v1415 = vpop.f32.mrb[0].mxu0
      %v1416 = vadd.f32 %v1375, %v1415
      %v1417 = vpop.f32.mrb[0].mxu0
      %v1418 = vpop.f32.mrb[0].mxu0
      %v1419 = vadd.f32 %v1378, %v1418
      %v1420 = vpop.f32.mrb[0].mxu0
      %1421 = vdwg.mxu0
      %1422 = vmatprep.subr.bf16.mxu0 0
      %1423 = vmatpush1.bf16.msra.mxu0 %v1091
      %1424 = vmatprep.subr.bf16.mxu0 0
      %1425 = vmatpush1.bf16.msra.mxu0 %v1092
      %1426 = vmatprep.subr.bf16.mxu0 0
      %1427 = vmatpush1.bf16.msra.mxu0 %v1093
      %1428 = vmatprep.subr.bf16.mxu0 0
      %1429 = vmatpush1.bf16.msra.mxu0 %v1094
      %1430 = vmatprep.subr.bf16.mxu0 0
      %1431 = vmatpush1.bf16.msra.mxu0 %v1095
      %1432 = vmatprep.subr.bf16.mxu0 0
      %1433 = vmatpush1.bf16.msra.mxu0 %v1096
      %1434 = vmatprep.subr.bf16.mxu0 0
      %1435 = vmatpush1.bf16.msra.mxu0 %v1097
      %1436 = vmatprep.subr.bf16.mxu0 0
      %1437 = vmatpush1.bf16.msra.mxu0 %v1098
      %1438 = vmatprep.subr.bf16.mxu0 0
      %1439 = vmatpush1.bf16.msra.mxu0 %v1099
      %1440 = vmatprep.subr.bf16.mxu0 0
      %1441 = vmatpush1.bf16.msra.mxu0 %v1100
      %1442 = vmatprep.subr.bf16.mxu0 0
      %1443 = vmatpush1.bf16.msra.mxu0 %v1101
      %1444 = vmatprep.subr.bf16.mxu0 0
      %1445 = vmatpush1.bf16.msra.mxu0 %v1102
      %1446 = vmatprep.subr.bf16.mxu0 0
      %1447 = vmatpush1.bf16.msra.mxu0 %v1103
      %1448 = vmatprep.subr.bf16.mxu0 0
      %1449 = vmatpush1.bf16.msra.mxu0 %v1104
      %1450 = vmatprep.subr.bf16.mxu0 0
      %1451 = vmatpush1.bf16.msra.mxu0 %v1105
      %1452 = vmatprep.subr.bf16.mxu0 0
      %1453 = vmatpush1.bf16.msra.mxu0 %v1106
      %1454 = vmatprep.mubr.bf16.mxu0 %v506
      %1455 = vmatmul.mubr.bf16.gmra.mrb[0].mxu0 %v505
      %v1456 = vpop.f32.mrb[0].mxu0
      %v1457 = vadd.f32 %v1416, %v1456
      %v1458 = vpop.f32.mrb[0].mxu0
      %v1459 = vpop.f32.mrb[0].mxu0
      %v1460 = vadd.f32 %v1419, %v1459
      %v1461 = vpop.f32.mrb[0].mxu0
      %1462 = vdwg.mxu0
      %1463 = vmatprep.subr.bf16.mxu0 0
      %1464 = vmatpush1.bf16.msra.mxu0 %v1107
      %1465 = vmatprep.subr.bf16.mxu0 0
      %1466 = vmatpush1.bf16.msra.mxu0 %v1108
      %1467 = vmatprep.subr.bf16.mxu0 0
      %1468 = vmatpush1.bf16.msra.mxu0 %v1109
      %1469 = vmatprep.subr.bf16.mxu0 0
      %1470 = vmatpush1.bf16.msra.mxu0 %v1110
      %1471 = vmatprep.subr.bf16.mxu0 0
      %1472 = vmatpush1.bf16.msra.mxu0 %v1111
      %1473 = vmatprep.subr.bf16.mxu0 0
      %1474 = vmatpush1.bf16.msra.mxu0 %v1112
      %1475 = vmatprep.subr.bf16.mxu0 0
      %1476 = vmatpush1.bf16.msra.mxu0 %v1113
      %1477 = vmatprep.subr.bf16.mxu0 0
      %1478 = vmatpush1.bf16.msra.mxu0 %v1114
      %1479 = vmatprep.subr.bf16.mxu0 0
      %1480 = vmatpush1.bf16.msra.mxu0 %v1115
      %1481 = vmatprep.subr.bf16.mxu0 0
      %1482 = vmatpush1.bf16.msra.mxu0 %v1116
      %1483 = vmatprep.subr.bf16.mxu0 0
      %1484 = vmatpush1.bf16.msra.mxu0 %v1117
      %1485 = vmatprep.subr.bf16.mxu0 0
      %1486 = vmatpush1.bf16.msra.mxu0 %v1118
      %1487 = vmatprep.subr.bf16.mxu0 0
      %1488 = vmatpush1.bf16.msra.mxu0 %v1119
      %1489 = vmatprep.subr.bf16.mxu0 0
      %1490 = vmatpush1.bf16.msra.mxu0 %v1120
      %1491 = vmatprep.subr.bf16.mxu0 0
      %1492 = vmatpush1.bf16.msra.mxu0 %v1121
      %1493 = vmatprep.subr.bf16.mxu0 0
      %1494 = vmatpush1.bf16.msra.mxu0 %v1122
      %1495 = vmatprep.mubr.bf16.mxu0 %v508
      %1496 = vmatmul.mubr.bf16.gmra.mrb[0].mxu0 %v507
      %v1497 = vpop.f32.mrb[0].mxu0
      %v1498 = vadd.f32 %v1457, %v1497
      %v1499 = vpop.f32.mrb[0].mxu0
      %v1500 = vpop.f32.mrb[0].mxu0
      %v1501 = vadd.f32 %v1460, %v1500
      %v1502 = vpop.f32.mrb[0].mxu0
      %1503 = vdwg.mxu0
      %1504 = vmatprep.subr.bf16.mxu0 0
      %1505 = vmatpush1.bf16.msra.mxu0 %v1123
      %1506 = vmatprep.subr.bf16.mxu0 0
      %1507 = vmatpush1.bf16.msra.mxu0 %v1124
      %1508 = vmatprep.subr.bf16.mxu0 0
      %1509 = vmatpush1.bf16.msra.mxu0 %v1125
      %1510 = vmatprep.subr.bf16.mxu0 0
      %1511 = vmatpush1.bf16.msra.mxu0 %v1126
      %1512 = vmatprep.subr.bf16.mxu0 0
      %1513 = vmatpush1.bf16.msra.mxu0 %v1127
      %1514 = vmatprep.subr.bf16.mxu0 0
      %1515 = vmatpush1.bf16.msra.mxu0 %v1128
      %1516 = vmatprep.subr.bf16.mxu0 0
      %1517 = vmatpush1.bf16.msra.mxu0 %v1129
      %1518 = vmatprep.subr.bf16.mxu0 0
      %1519 = vmatpush1.bf16.msra.mxu0 %v1130
      %1520 = vmatprep.subr.bf16.mxu0 0
      %1521 = vmatpush1.bf16.msra.mxu0 %v1131
      %1522 = vmatprep.subr.bf16.mxu0 0
      %1523 = vmatpush1.bf16.msra.mxu0 %v1132
      %1524 = vmatprep.subr.bf16.mxu0 0
      %1525 = vmatpush1.bf16.msra.mxu0 %v1133
      %1526 = vmatprep.subr.bf16.mxu0 0
      %1527 = vmatpush1.bf16.msra.mxu0 %v1134
      %1528 = vmatprep.subr.bf16.mxu0 0
      %1529 = vmatpush1.bf16.msra.mxu0 %v1135
      %1530 = vmatprep.subr.bf16.mxu0 0
      %1531 = vmatpush1.bf16.msra.mxu0 %v1136
      %1532 = vmatprep.subr.bf16.mxu0 0
      %1533 = vmatpush1.bf16.msra.mxu0 %v1137
      %1534 = vmatprep.subr.bf16.mxu0 0
      %1535 = vmatpush1.bf16.msra.mxu0 %v1138
      %1536 = vmatprep.mubr.bf16.mxu0 %v510
      %1537 = vmatmul.mubr.bf16.gmra.mrb[0].mxu0 %v509
      %v1538 = vpop.f32.mrb[0].mxu0
      %v1539 = vadd.f32 %v1498, %v1538
      %v1540 = vpop.f32.mrb[0].mxu0
      %v1541 = vpop.f32.mrb[0].mxu0
      %v1542 = vadd.f32 %v1501, %v1541
      %v1543 = vpop.f32.mrb[0].mxu0
      %1544 = vdwg.mxu0
      %1545 = vmatprep.subr.bf16.mxu0 0
      %1546 = vmatpush1.bf16.msra.mxu0 %v1139
      %1547 = vmatprep.subr.bf16.mxu0 0
      %1548 = vmatpush1.bf16.msra.mxu0 %v1140
      %1549 = vmatprep.subr.bf16.mxu0 0
      %1550 = vmatpush1.bf16.msra.mxu0 %v1141
      %1551 = vmatprep.subr.bf16.mxu0 0
      %1552 = vmatpush1.bf16.msra.mxu0 %v1142
      %1553 = vmatprep.subr.bf16.mxu0 0
      %1554 = vmatpush1.bf16.msra.mxu0 %v1143
      %1555 = vmatprep.subr.bf16.mxu0 0
      %1556 = vmatpush1.bf16.msra.mxu0 %v1144
      %1557 = vmatprep.subr.bf16.mxu0 0
      %1558 = vmatpush1.bf16.msra.mxu0 %v1145
      %1559 = vmatprep.subr.bf16.mxu0 0
      %1560 = vmatpush1.bf16.msra.mxu0 %v1146
      %1561 = vmatprep.subr.bf16.mxu0 0
      %1562 = vmatpush1.bf16.msra.mxu0 %v1147
      %1563 = vmatprep.subr.bf16.mxu0 0
      %1564 = vmatpush1.bf16.msra.mxu0 %v1148
      %1565 = vmatprep.subr.bf16.mxu0 0
      %1566 = vmatpush1.bf16.msra.mxu0 %v1149
      %1567 = vmatprep.subr.bf16.mxu0 0
      %1568 = vmatpush1.bf16.msra.mxu0 %v1150
      %1569 = vmatprep.subr.bf16.mxu0 0
      %1570 = vmatpush1.bf16.msra.mxu0 %v1151
      %1571 = vmatprep.subr.bf16.mxu0 0
      %1572 = vmatpush1.bf16.msra.mxu0 %v1152
      %1573 = vmatprep.subr.bf16.mxu0 0
      %1574 = vmatpush1.bf16.msra.mxu0 %v1153
      %1575 = vmatprep.subr.bf16.mxu0 0
      %1576 = vmatpush1.bf16.msra.mxu0 %v1154
      %1577 = vmatprep.mubr.bf16.mxu0 %v512
      %1578 = vmatmul.mubr.bf16.gmra.mrb[0].mxu0 %v511
      %v1579 = vpop.f32.mrb[0].mxu0
      %v1580 = vadd.f32 %v1539, %v1579
      %v1581 = vpop.f32.mrb[0].mxu0
      %v1582 = vpop.f32.mrb[0].mxu0
      %v1583 = vadd.f32 %v1542, %v1582
      %v1584 = vpop.f32.mrb[0].mxu0
      %1585 = vdwg.mxu0
      %1586 = vmatprep.subr.bf16.mxu0 0
      %1587 = vmatpush1.bf16.msra.mxu0 %v1155
      %1588 = vmatprep.subr.bf16.mxu0 0
      %1589 = vmatpush1.bf16.msra.mxu0 %v1156
      %1590 = vmatprep.subr.bf16.mxu0 0
      %1591 = vmatpush1.bf16.msra.mxu0 %v1157
      %1592 = vmatprep.subr.bf16.mxu0 0
      %1593 = vmatpush1.bf16.msra.mxu0 %v1158
      %1594 = vmatprep.subr.bf16.mxu0 0
      %1595 = vmatpush1.bf16.msra.mxu0 %v1159
      %1596 = vmatprep.subr.bf16.mxu0 0
      %1597 = vmatpush1.bf16.msra.mxu0 %v1160
      %1598 = vmatprep.subr.bf16.mxu0 0
      %1599 = vmatpush1.bf16.msra.mxu0 %v1161
      %1600 = vmatprep.subr.bf16.mxu0 0
      %1601 = vmatpush1.bf16.msra.mxu0 %v1162
      %1602 = vmatprep.subr.bf16.mxu0 0
      %1603 = vmatpush1.bf16.msra.mxu0 %v1163
      %1604 = vmatprep.subr.bf16.mxu0 0
      %1605 = vmatpush1.bf16.msra.mxu0 %v1164
      %1606 = vmatprep.subr.bf16.mxu0 0
      %1607 = vmatpush1.bf16.msra.mxu0 %v1165
      %1608 = vmatprep.subr.bf16.mxu0 0
      %1609 = vmatpush1.bf16.msra.mxu0 %v1166
      %1610 = vmatprep.subr.bf16.mxu0 0
      %1611 = vmatpush1.bf16.msra.mxu0 %v1167
      %1612 = vmatprep.subr.bf16.mxu0 0
      %1613 = vmatpush1.bf16.msra.mxu0 %v1168
      %1614 = vmatprep.subr.bf16.mxu0 0
      %1615 = vmatpush1.bf16.msra.mxu0 %v1169
      %1616 = vmatprep.subr.bf16.mxu0 0
      %1617 = vmatpush1.bf16.msra.mxu0 %v1170
      %1618 = vmatprep.mubr.bf16.mxu0 %v514
      %1619 = vmatmul.mubr.bf16.gmra.mrb[0].mxu0 %v513
      %v1620 = vpop.f32.mrb[0].mxu0
      %v1621 = vadd.f32 %v1580, %v1620
      %v1622 = vpop.f32.mrb[0].mxu0
      %v1623 = vpop.f32.mrb[0].mxu0
      %v1624 = vadd.f32 %v1583, %v1623
      %v1625 = vpop.f32.mrb[0].mxu0
      %1626 = vdwg.mxu0
      %v1627 = vadd.f32 %v1621, %v1624
      %v1628 = vrot.slane %v1627, 4
      %v1629 = vadd.f32 %v1627, %v1628
      %v1630 = vrot.slane %v1629, 2
      %v1631 = vadd.f32 %v1629, %v1630
      %v1632 = vrot.slane %v1631, 1
      %v1633 = vadd.f32 %v1631, %v1632
      %v1634 = vrcp.pop 16.0
      %v1635 = vmul.f32 %v1633, %v1634
      %v1636 = vsub.f32 %v1621, %v1635
      %v1637 = vsub.f32 %v1624, %v1635
      %v1638 = vmul.f32 %v1636, %v1636
      %v1639 = vmul.f32 %v1637, %v1637
      %v1640 = vadd.f32 %v1638, %v1639
      %v1641 = vrot.slane %v1640, 4
      %v1642 = vadd.f32 %v1640, %v1641
      %v1643 = vrot.slane %v1642, 2
      %v1644 = vadd.f32 %v1642, %v1643
      %v1645 = vrot.slane %v1644, 1
      %v1646 = vadd.f32 %v1644, %v1645
      %v1647 = vmul.f32 %v1646, %v1634
      %v1648 = vadd.f32 %v1647, 1e-05
      %v1649 = vrsqrt.pop %v1648
      %v1650 = vmul.f32 %v1636, %v1649
      %v1651 = vmul.f32 %v1637, %v1649
      %vm1652 = vcmp.ge.f32.partialorder %v1650, 0.0
      %vm1653 = vcmp.ge.f32.partialorder %v1651, 0.0
      %v1654 = vmul.f32 %v1650, 0.2
      %v1655 = vmul.f32 %v1651, 0.2
      %v1656 = vsel %vm1652, %v1650, %v1654
      %v1657 = vsel %vm1653, %v1651, %v1655
      %v1658 = vpack.c.bf16 %v1657, %v1656
      %v1660 = vunpack.c.l.b16 %v1658
      %v1661 = vunpack.c.h.b16 %v1658
      %v1662 = vpack.c.b16 %v1660, %v1660
      %v1663 = vpack.c.b16 %v1661, %v1661
      %1666 = vst [vmem:[%s170] sm:$0xf] %v1662
      %1667 = vst [vmem:[%s170 + $0x4] sm:$0xf] %v1663
      %p1668 = scmp.lt.s32.totalorder %s14, 1
      %s1669 = scalar_select %p1668, %s14, 1
      %s1670 = smul.addr %s1669, 2
      %s1671 = smul.addr %s1670, 4
      %s1672 = scalar_lea.vmem %s3, %s1671
      // Predicated region
      $region33: #{define_d_forward.7} parent=31 // pred_check
        %p1673 = pneg %p100
      $region34: #{define_d_forward.7} parent=31 // pred_check_branch
        %1675 = sbr.rel (%p1673) target = $region36
      $region35: #{define_d_forward.7} parent=31 // pred_region
        _
      $region36: #{define_d_forward.7} parent=31 // pred_fallthru
        _
    $region32: #{define_d_forward.7} parent=5 // pred_fallthru
      _
    %p1676 = scmp.le.s32.totalorder 2, %s9
    // Predicated region
    $region37: #{define_d_forward.7} parent=5 // pred_check
      %p1677 = pneg %p1676
    $region38: #{define_d_forward.7} parent=5 // pred_check_branch
      %1679 = sbr.rel (%p1677) target = $region40
    $region39: #{define_d_forward.7} parent=5 // pred_region
      %s1680 = ssub.s32 %s9, 2
      // Predicated region
      $region41: #{define_d_forward.7} parent=39 // pred_check
        %p1681 = pneg %p106
      $region42: #{define_d_forward.7} parent=39 // pred_check_branch
        %1683 = sbr.rel (%p1681) target = $region44
      $region43: #{define_d_forward.7} parent=39 // pred_region
        %p1684 = scmp.lt.s32.totalorder %s15, 1
        %s1685 = scalar_select %p1684, %s15, 1
        %s1686 = smul.addr %s1685, 2
        %s1687 = smul.addr %s1686, 4
        %s1688 = scalar_lea.vmem %s3, %s1687
      $region44: #{define_d_forward.7} parent=39 // pred_fallthru
        _
    $region40: #{define_d_forward.7} parent=5 // pred_fallthru
      _
  $region6: #{define_d_forward.7} parent=0 // loop_footer
    %s13 = sadd.s32 1, %s9
  $region7: #{define_d_forward.7} parent=0 // loop_footer_branch
    %8 = sbr.rel target = $region3
  $region8: #{define_d_forward.7} parent=0 // loop_exit
    _

// kernel: define_d_forward.8
$region0: #{define_d_forward.8}
  #allocation0 [shape = 'u32[]', space=smem, size = 0x4, offset = 0x4, fixed_abs, tag = 'smem constant byte address 0x4 - core index']
  #allocation1 [shape = 'u32[144,128]{1,0:T(1,128)}', space=vmem, size = 0x12000, scoped, tag = 'internal scratch']
  %s0 = inlined_call_operand.vmem [shape: bf16[2,9,2048], index: 0, kind: input, shape index: {}]
  %s1 = inlined_call_operand.vmem [shape: bf16[2048,128], index: 1, kind: input, shape index: {}]
  %s2 = inlined_call_operand.vmem [shape: f32[1,128], index: 2, kind: input, shape index: {}]
  %s3 = inlined_call_operand.vmem [shape: bf16[2,9,128], index: 3, kind: output, shape index: {}]
  %s4 = sld [smem:[#allocation0]]
  $region45: #{define_d_forward.8} parent=0
    _
  %s6 = ssub.s32 1, %s4
  %s7 = scalar_select 0, %s6, %s4
  loop: start=0, step=1, limit=4
  $region2: #{define_d_forward.8} parent=0 // loop_pre_header
    _
  $region3: #{define_d_forward.8} parent=0 // loop_header
    %s9 = sphi 0, %s13
    %p10 = scmp.ge.s32.totalorder %s9, 4
    %s19 = sphi 0, %s21
    %s22 = sphi 0, %s19
    %s23 = sphi 0, %s22
    %s39 = sphi 0, %s23
    %s43 = sphi 0, %s43
    %s45 = sphi 0, %s43
    %s46 = sphi 0, %s45
    %s60 = sphi 0, %s46
    %s64 = sphi 0, %s64
    %s66 = sphi 0, %s64
    %s67 = sphi 0, %s66
    %s81 = sphi 0, %s67
    %s87 = sphi 0, %s89
    %s90 = sphi 0, %s87
    %s91 = sphi 0, %s90
    %s107 = sphi 0, %s91
  $region4: #{define_d_forward.8} parent=0 // loop_header_branch
    %12 = sbr.rel (%p10) target = $region8
  $region5: #{define_d_forward.8} parent=0 // loop_body
    %s14 = ssub.s32 %s9, 1
    %s15 = ssub.s32 %s9, 2
    %s16 = sadd.s32 %s9, 1
    %s17 = ssub.s32 %s9, %s16
    %p18 = scmp.eq.s32.totalorder %s17, 0
    %s20 = sadd.s32 %s19, 1
    %s21 = scalar_select %p18, %s19, %s20
    %p24 = pneg %p18
    %p25 = scmp.eq.s32.totalorder %s9, 1
    %p26 = por %p24, %p25
    %p27 = scmp.ne.s32.totalorder %s19, %s22
    %p28 = scmp.eq.s32.totalorder %s9, 0
    %p29 = por %p27, %p28
    %p30 = scmp.ne.s32.totalorder %s19, %s22
    %p31 = scmp.eq.s32.totalorder %s14, 1
    %p32 = por %p30, %p31
    %p33 = scmp.ne.s32.totalorder %s22, %s23
    %p34 = scmp.eq.s32.totalorder %s14, 0
    %p35 = por %p33, %p34
    %p36 = scmp.ne.s32.totalorder %s22, %s23
    %p37 = scmp.eq.s32.totalorder %s15, 1
    %p38 = por %p36, %p37
    %p40 = scmp.ne.s32.totalorder %s23, %s39
    %p41 = scmp.eq.s32.totalorder %s15, 0
    %p42 = por %p40, %p41
    %s44 = sadd.s32 %s43, 1
    %p47 = scmp.eq.s32.totalorder %s9, 1
    %p48 = scmp.ne.s32.totalorder %s43, %s45
    %p49 = scmp.eq.s32.totalorder %s9, 0
    %p50 = por %p48, %p49
    %p51 = scmp.ne.s32.totalorder %s43, %s45
    %p52 = scmp.eq.s32.totalorder %s14, 1
    %p53 = por %p51, %p52
    %p54 = scmp.ne.s32.totalorder %s45, %s46
    %p55 = scmp.eq.s32.totalorder %s14, 0
    %p56 = por %p54, %p55
    %p57 = scmp.ne.s32.totalorder %s45, %s46
    %p58 = scmp.eq.s32.totalorder %s15, 1
    %p59 = por %p57, %p58
    %p61 = scmp.ne.s32.totalorder %s46, %s60
    %p62 = scmp.eq.s32.totalorder %s15, 0
    %p63 = por %p61, %p62
    %s65 = sadd.s32 %s64, 1
    %p68 = scmp.eq.s32.totalorder %s9, 1
    %p69 = scmp.ne.s32.totalorder %s64, %s66
    %p70 = scmp.eq.s32.totalorder %s9, 0
    %p71 = por %p69, %p70
    %p72 = scmp.ne.s32.totalorder %s64, %s66
    %p73 = scmp.eq.s32.totalorder %s14, 1
    %p74 = por %p72, %p73
    %p75 = scmp.ne.s32.totalorder %s66, %s67
    %p76 = scmp.eq.s32.totalorder %s14, 0
    %p77 = por %p75, %p76
    %p78 = scmp.ne.s32.totalorder %s66, %s67
    %p79 = scmp.eq.s32.totalorder %s15, 1
    %p80 = por %p78, %p79
    %p82 = scmp.ne.s32.totalorder %s67, %s81
    %p83 = scmp.eq.s32.totalorder %s15, 0
    %p84 = por %p82, %p83
    %s85 = ssub.s32 %s9, %s16
    %p86 = scmp.eq.s32.totalorder %s85, 0
    %s88 = sadd.s32 %s87, 1
    %s89 = scalar_select %p86, %s87, %s88
    %p92 = pneg %p86
    %p93 = scmp.eq.s32.totalorder %s9, 1
    %p94 = por %p92, %p93
    %p95 = scmp.ne.s32.totalorder %s87, %s90
    %p96 = scmp.eq.s32.totalorder %s9, 0
    %p97 = por %p95, %p96
    %p98 = scmp.ne.s32.totalorder %s87, %s90
    %p99 = scmp.eq.s32.totalorder %s14, 1
    %p100 = por %p98, %p99
    %p101 = scmp.ne.s32.totalorder %s90, %s91
    %p102 = scmp.eq.s32.totalorder %s14, 0
    %p103 = por %p101, %p102
    %p104 = scmp.ne.s32.totalorder %s90, %s91
    %p105 = scmp.eq.s32.totalorder %s15, 1
    %p106 = por %p104, %p105
    %p108 = scmp.ne.s32.totalorder %s91, %s107
    %p109 = scmp.eq.s32.totalorder %s15, 0
    %p110 = por %p108, %p109
    %p111 = scmp.le.s32.totalorder 1, %s9
    %p112 = scmp.lt.s32.totalorder %s9, 3
    %p113 = pnand %p111, %p112
    %p114 = pneg %p113
    // Predicated region
    $region9: #{define_d_forward.8} parent=5 // pred_check
      _
    $region10: #{define_d_forward.8} parent=5 // pred_check_branch
      %116 = sbr.rel (%p113) target = $region12
    $region11: #{define_d_forward.8} parent=5 // pred_region
      %s117 = ssub.s32 %s9, 1
      // Predicated region
      $region13: #{define_d_forward.8} parent=11 // pred_check
        %p118 = pneg %p56
      $region14: #{define_d_forward.8} parent=11 // pred_check_branch
        %120 = sbr.rel (%p118) target = $region16
      $region15: #{define_d_forward.8} parent=11 // pred_region
        _
      $region16: #{define_d_forward.8} parent=11 // pred_fallthru
        _
      // Predicated region
      $region17: #{define_d_forward.8} parent=11 // pred_check
        %p121 = pneg %p77
      $region18: #{define_d_forward.8} parent=11 // pred_check_branch
        %123 = sbr.rel (%p121) target = $region20
      $region19: #{define_d_forward.8} parent=11 // pred_region
        _
      $region20: #{define_d_forward.8} parent=11 // pred_fallthru
        _
    $region12: #{define_d_forward.8} parent=5 // pred_fallthru
      _
    %p124 = scmp.lt.s32.totalorder %s9, 2
    // Predicated region
    $region21: #{define_d_forward.8} parent=5 // pred_check
      %p125 = pneg %p124
    $region22: #{define_d_forward.8} parent=5 // pred_check_branch
      %127 = sbr.rel (%p125) target = $region24
    $region23: #{define_d_forward.8} parent=5 // pred_region
      // Predicated region
      $region25: #{define_d_forward.8} parent=23 // pred_check
        %p128 = pneg %p29
      $region26: #{define_d_forward.8} parent=23 // pred_check_branch
        %130 = sbr.rel (%p128) target = $region28
      $region27: #{define_d_forward.8} parent=23 // pred_region
        %p131 = scmp.lt.s32.totalorder %s9, 1
        %s132 = scalar_select %p131, %s9, 1
        %s133 = smul.addr %s132, 32
        %s134 = smul.addr %s133, 4
        %s135 = scalar_lea.vmem %s0, %s134
      $region28: #{define_d_forward.8} parent=23 // pred_fallthru
        _
    $region24: #{define_d_forward.8} parent=5 // pred_fallthru
      _
    %p136 = scmp.le.s32.totalorder 1, %s9
    %p137 = scmp.lt.s32.totalorder %s9, 3
    %p138 = pnand %p136, %p137
    %p139 = pneg %p138
    // Predicated region
    $region29: #{define_d_forward.8} parent=5 // pred_check
      _
    $region30: #{define_d_forward.8} parent=5 // pred_check_branch
      %141 = sbr.rel (%p138) target = $region32
    $region31: #{define_d_forward.8} parent=5 // pred_region
      %s142 = ssub.s32 %s9, 1
      %p143 = scmp.lt.s32.totalorder %s14, 1
      %s144 = scalar_select %p143, %s14, 1
      %s145 = smul.addr %s144, 32
      %s146 = smul.addr %s145, 4
      %s147 = scalar_lea.vmem %s0, %s146
      %p148 = pneg %p35
      %p149 = pneg %p32
      %p150 = pneg %p56
      %p151 = pneg %p53
      %p152 = pneg %p77
      %p153 = pneg %p74
      %p154 = pneg %p103
      %p155 = pneg %p100
      %p156 = scmp.lt.s32.totalorder %s14, 1
      %s157 = scalar_select %p156, %s14, 1
      %s158 = smul.addr %s157, 2
      %s159 = smul.addr %s158, 4
      %s160 = scalar_lea.vmem %s3, %s159
      %p161 = scmp.lt.s32.totalorder %s14, 1
      %s162 = scalar_select %p161, %s14, 1
      %s163 = smul.addr %s162, 32
      %s164 = smul.addr %s163, 4
      %s165 = scalar_lea.vmem %s0, %s164
      %p166 = scmp.lt.s32.totalorder %s14, 1
      %s167 = scalar_select %p166, %s14, 1
      %s168 = smul.addr %s167, 2
      %s169 = smul.addr %s168, 4
      %s170 = scalar_lea.vmem %s3, %s169
      %v172 = vld [vmem:[%s165] sm:$0xff]
      %v173 = vld [vmem:[%s165 + $0x8] sm:$0xff]
      %v174 = vld [vmem:[%s165 + $0x10] sm:$0xff]
      %v175 = vld [vmem:[%s165 + $0x18] sm:$0xff]
      %v176 = vld [vmem:[%s165 + $0x20] sm:$0xff]
      %v177 = vld [vmem:[%s165 + $0x28] sm:$0xff]
      %v178 = vld [vmem:[%s165 + $0x30] sm:$0xff]
      %v179 = vld [vmem:[%s165 + $0x38] sm:$0xff]
      %v180 = vld [vmem:[%s165 + $0x40] sm:$0x11]
      %v181 = vld [vmem:[%s165 + $0x48] sm:$0x11]
      %v182 = vld [vmem:[%s165 + $0x50] sm:$0x11]
      %v183 = vld [vmem:[%s165 + $0x58] sm:$0x11]
      %v184 = vld [vmem:[%s165 + $0x60] sm:$0x11]
      %v185 = vld [vmem:[%s165 + $0x68] sm:$0x11]
      %v186 = vld [vmem:[%s165 + $0x70] sm:$0x11]
      %v187 = vld [vmem:[%s165 + $0x78] sm:$0x11]
      %v188 = vld [vmem:[%s1] sm:$0xf]
      %v189 = vld [vmem:[%s1 + $0x4] sm:$0xf]
      %v190 = vld [vmem:[%s1 + $0x8] sm:$0xf]
      %v191 = vld [vmem:[%s1 + $0xc] sm:$0xf]
      %v192 = vld [vmem:[%s1 + $0x10] sm:$0xf]
      %v193 = vld [vmem:[%s1 + $0x14] sm:$0xf]
      %v194 = vld [vmem:[%s1 + $0x18] sm:$0xf]
      %v195 = vld [vmem:[%s1 + $0x1c] sm:$0xf]
      %v196 = vld [vmem:[%s1 + $0x20] sm:$0xf]
      %v197 = vld [vmem:[%s1 + $0x24] sm:$0xf]
      %v198 = vld [vmem:[%s1 + $0x28] sm:$0xf]
      %v199 = vld [vmem:[%s1 + $0x2c] sm:$0xf]
      %v200 = vld [vmem:[%s1 + $0x30] sm:$0xf]
      %v201 = vld [vmem:[%s1 + $0x34] sm:$0xf]
      %v202 = vld [vmem:[%s1 + $0x38] sm:$0xf]
      %v203 = vld [vmem:[%s1 + $0x3c] sm:$0xf]
      %v204 = vld [vmem:[%s1 + $0x40] sm:$0xf]
      %v205 = vld [vmem:[%s1 + $0x44] sm:$0xf]
      %v206 = vld [vmem:[%s1 + $0x48] sm:$0xf]
      %v207 = vld [vmem:[%s1 + $0x4c] sm:$0xf]
      %v208 = vld [vmem:[%s1 + $0x50] sm:$0xf]
      %v209 = vld [vmem:[%s1 + $0x54] sm:$0xf]
      %v210 = vld [vmem:[%s1 + $0x58] sm:$0xf]
      %v211 = vld [vmem:[%s1 + $0x5c] sm:$0xf]
      %v212 = vld [vmem:[%s1 + $0x60] sm:$0xf]
      %v213 = vld [vmem:[%s1 + $0x64] sm:$0xf]
      %v214 = vld [vmem:[%s1 + $0x68] sm:$0xf]
      %v215 = vld [vmem:[%s1 + $0x6c] sm:$0xf]
      %v216 = vld [vmem:[%s1 + $0x70] sm:$0xf]
      %v217 = vld [vmem:[%s1 + $0x74] sm:$0xf]
      %v218 = vld [vmem:[%s1 + $0x78] sm:$0xf]
      %v219 = vld [vmem:[%s1 + $0x7c] sm:$0xf]
      %v220 = vld [vmem:[%s1 + $0x80] sm:$0xf]
      %v221 = vld [vmem:[%s1 + $0x84] sm:$0xf]
      %v222 = vld [vmem:[%s1 + $0x88] sm:$0xf]
      %v223 = vld [vmem:[%s1 + $0x8c] sm:$0xf]
      %v224 = vld [vmem:[%s1 + $0x90] sm:$0xf]
      %v225 = vld [vmem:[%s1 + $0x94] sm:$0xf]
      %v226 = vld [vmem:[%s1 + $0x98] sm:$0xf]
      %v227 = vld [vmem:[%s1 + $0x9c] sm:$0xf]
      %v228 = vld [vmem:[%s1 + $0xa0] sm:$0xf]
      %v229 = vld [vmem:[%s1 + $0xa4] sm:$0xf]
      %v230 = vld [vmem:[%s1 + $0xa8] sm:$0xf]
      %v231 = vld [vmem:[%s1 + $0xac] sm:$0xf]
      %v232 = vld [vmem:[%s1 + $0xb0] sm:$0xf]
      %v233 = vld [vmem:[%s1 + $0xb4] sm:$0xf]
      %v234 = vld [vmem:[%s1 + $0xb8] sm:$0xf]
      %v235 = vld [vmem:[%s1 + $0xbc] sm:$0xf]
      %v236 = vld [vmem:[%s1 + $0xc0] sm:$0xf]
      %v237 = vld [vmem:[%s1 + $0xc4] sm:$0xf]
      %v238 = vld [vmem:[%s1 + $0xc8] sm:$0xf]
      %v239 = vld [vmem:[%s1 + $0xcc] sm:$0xf]
      %v240 = vld [vmem:[%s1 + $0xd0] sm:$0xf]
      %v241 = vld [vmem:[%s1 + $0xd4] sm:$0xf]
      %v242 = vld [vmem:[%s1 + $0xd8] sm:$0xf]
      %v243 = vld [vmem:[%s1 + $0xdc] sm:$0xf]
      %v244 = vld [vmem:[%s1 + $0xe0] sm:$0xf]
      %v245 = vld [vmem:[%s1 + $0xe4] sm:$0xf]
      %v246 = vld [vmem:[%s1 + $0xe8] sm:$0xf]
      %v247 = vld [vmem:[%s1 + $0xec] sm:$0xf]
      %v248 = vld [vmem:[%s1 + $0xf0] sm:$0xf]
      %v249 = vld [vmem:[%s1 + $0xf4] sm:$0xf]
      %v250 = vld [vmem:[%s1 + $0xf8] sm:$0xf]
      %v251 = vld [vmem:[%s1 + $0xfc] sm:$0xf]
      %v252 = vld [vmem:[%s1 + $0x100] sm:$0xf]
      %v253 = vld [vmem:[%s1 + $0x104] sm:$0xf]
      %v254 = vld [vmem:[%s1 + $0x108] sm:$0xf]
      %v255 = vld [vmem:[%s1 + $0x10c] sm:$0xf]
      %v256 = vld [vmem:[%s1 + $0x110] sm:$0xf]
      %v257 = vld [vmem:[%s1 + $0x114] sm:$0xf]
      %v258 = vld [vmem:[%s1 + $0x118] sm:$0xf]
      %v259 = vld [vmem:[%s1 + $0x11c] sm:$0xf]
      %v260 = vld [vmem:[%s1 + $0x120] sm:$0xf]
      %v261 = vld [vmem:[%s1 + $0x124] sm:$0xf]
      %v262 = vld [vmem:[%s1 + $0x128] sm:$0xf]
      %v263 = vld [vmem:[%s1 + $0x12c] sm:$0xf]
      %v264 = vld [vmem:[%s1 + $0x130] sm:$0xf]
      %v265 = vld [vmem:[%s1 + $0x134] sm:$0xf]
      %v266 = vld [vmem:[%s1 + $0x138] sm:$0xf]
      %v267 = vld [vmem:[%s1 + $0x13c] sm:$0xf]
      %v268 = vld [vmem:[%s1 + $0x140] sm:$0xf]
      %v269 = vld [vmem:[%s1 + $0x144] sm:$0xf]
      %v270 = vld [vmem:[%s1 + $0x148] sm:$0xf]
      %v271 = vld [vmem:[%s1 + $0x14c] sm:$0xf]
      %v272 = vld [vmem:[%s1 + $0x150] sm:$0xf]
      %v273 = vld [vmem:[%s1 + $0x154] sm:$0xf]
      %v274 = vld [vmem:[%s1 + $0x158] sm:$0xf]
      %v275 = vld [vmem:[%s1 + $0x15c] sm:$0xf]
      %v276 = vld [vmem:[%s1 + $0x160] sm:$0xf]
      %v277 = vld [vmem:[%s1 + $0x164] sm:$0xf]
      %v278 = vld [vmem:[%s1 + $0x168] sm:$0xf]
      %v279 = vld [vmem:[%s1 + $0x16c] sm:$0xf]
      %v280 = vld [vmem:[%s1 + $0x170] sm:$0xf]
      %v281 = vld [vmem:[%s1 + $0x174] sm:$0xf]
      %v282 = vld [vmem:[%s1 + $0x178] sm:$0xf]
      %v283 = vld [vmem:[%s1 + $0x17c] sm:$0xf]
      %v284 = vld [vmem:[%s1 + $0x180] sm:$0xf]
      %v285 = vld [vmem:[%s1 + $0x184] sm:$0xf]
      %v286 = vld [vmem:[%s1 + $0x188] sm:$0xf]
      %v287 = vld [vmem:[%s1 + $0x18c] sm:$0xf]
      %v288 = vld [vmem:[%s1 + $0x190] sm:$0xf]
      %v289 = vld [vmem:[%s1 + $0x194] sm:$0xf]
      %v290 = vld [vmem:[%s1 + $0x198] sm:$0xf]
      %v291 = vld [vmem:[%s1 + $0x19c] sm:$0xf]
      %v292 = vld [vmem:[%s1 + $0x1a0] sm:$0xf]
      %v293 = vld [vmem:[%s1 + $0x1a4] sm:$0xf]
      %v294 = vld [vmem:[%s1 + $0x1a8] sm:$0xf]
      %v295 = vld [vmem:[%s1 + $0x1ac] sm:$0xf]
      %v296 = vld [vmem:[%s1 + $0x1b0] sm:$0xf]
      %v297 = vld [vmem:[%s1 + $0x1b4] sm:$0xf]
      %v298 = vld [vmem:[%s1 + $0x1b8] sm:$0xf]
      %v299 = vld [vmem:[%s1 + $0x1bc] sm:$0xf]
      %v300 = vld [vmem:[%s1 + $0x1c0] sm:$0xf]
      %v301 = vld [vmem:[%s1 + $0x1c4] sm:$0xf]
      %v302 = vld [vmem:[%s1 + $0x1c8] sm:$0xf]
      %v303 = vld [vmem:[%s1 + $0x1cc] sm:$0xf]
      %v304 = vld [vmem:[%s1 + $0x1d0] sm:$0xf]
      %v305 = vld [vmem:[%s1 + $0x1d4] sm:$0xf]
      %v306 = vld [vmem:[%s1 + $0x1d8] sm:$0xf]
      %v307 = vld [vmem:[%s1 + $0x1dc] sm:$0xf]
      %v308 = vld [vmem:[%s1 + $0x1e0] sm:$0xf]
      %v309 = vld [vmem:[%s1 + $0x1e4] sm:$0xf]
      %v310 = vld [vmem:[%s1 + $0x1e8] sm:$0xf]
      %v311 = vld [vmem:[%s1 + $0x1ec] sm:$0xf]
      %v312 = vld [vmem:[%s1 + $0x1f0] sm:$0xf]
      %v313 = vld [vmem:[%s1 + $0x1f4] sm:$0xf]
      %v314 = vld [vmem:[%s1 + $0x1f8] sm:$0xf]
      %v315 = vld [vmem:[%s1 + $0x1fc] sm:$0xf]
      %v316 = vld [vmem:[%s1 + $0x200] sm:$0xf]
      %v317 = vld [vmem:[%s1 + $0x204] sm:$0xf]
      %v318 = vld [vmem:[%s1 + $0x208] sm:$0xf]
      %v319 = vld [vmem:[%s1 + $0x20c] sm:$0xf]
      %v320 = vld [vmem:[%s1 + $0x210] sm:$0xf]
      %v321 = vld [vmem:[%s1 + $0x214] sm:$0xf]
      %v322 = vld [vmem:[%s1 + $0x218] sm:$0xf]
      %v323 = vld [vmem:[%s1 + $0x21c] sm:$0xf]
      %v324 = vld [vmem:[%s1 + $0x220] sm:$0xf]
      %v325 = vld [vmem:[%s1 + $0x224] sm:$0xf]
      %v326 = vld [vmem:[%s1 + $0x228] sm:$0xf]
      %v327 = vld [vmem:[%s1 + $0x22c] sm:$0xf]
      %v328 = vld [vmem:[%s1 + $0x230] sm:$0xf]
      %v329 = vld [vmem:[%s1 + $0x234] sm:$0xf]
      %v330 = vld [vmem:[%s1 + $0x238] sm:$0xf]
      %v331 = vld [vmem:[%s1 + $0x23c] sm:$0xf]
      %v332 = vld [vmem:[%s1 + $0x240] sm:$0xf]
      %v333 = vld [vmem:[%s1 + $0x244] sm:$0xf]
      %v334 = vld [vmem:[%s1 + $0x248] sm:$0xf]
      %v335 = vld [vmem:[%s1 + $0x24c] sm:$0xf]
      %v336 = vld [vmem:[%s1 + $0x250] sm:$0xf]
      %v337 = vld [vmem:[%s1 + $0x254] sm:$0xf]
      %v338 = vld [vmem:[%s1 + $0x258] sm:$0xf]
      %v339 = vld [vmem:[%s1 + $0x25c] sm:$0xf]
      %v340 = vld [vmem:[%s1 + $0x260] sm:$0xf]
      %v341 = vld [vmem:[%s1 + $0x264] sm:$0xf]
      %v342 = vld [vmem:[%s1 + $0x268] sm:$0xf]
      %v343 = vld [vmem:[%s1 + $0x26c] sm:$0xf]
      %v344 = vld [vmem:[%s1 + $0x270] sm:$0xf]
      %v345 = vld [vmem:[%s1 + $0x274] sm:$0xf]
      %v346 = vld [vmem:[%s1 + $0x278] sm:$0xf]
      %v347 = vld [vmem:[%s1 + $0x27c] sm:$0xf]
      %v348 = vld [vmem:[%s1 + $0x280] sm:$0xf]
      %v349 = vld [vmem:[%s1 + $0x284] sm:$0xf]
      %v350 = vld [vmem:[%s1 + $0x288] sm:$0xf]
      %v351 = vld [vmem:[%s1 + $0x28c] sm:$0xf]
      %v352 = vld [vmem:[%s1 + $0x290] sm:$0xf]
      %v353 = vld [vmem:[%s1 + $0x294] sm:$0xf]
      %v354 = vld [vmem:[%s1 + $0x298] sm:$0xf]
      %v355 = vld [vmem:[%s1 + $0x29c] sm:$0xf]
      %v356 = vld [vmem:[%s1 + $0x2a0] sm:$0xf]
      %v357 = vld [vmem:[%s1 + $0x2a4] sm:$0xf]
      %v358 = vld [vmem:[%s1 + $0x2a8] sm:$0xf]
      %v359 = vld [vmem:[%s1 + $0x2ac] sm:$0xf]
      %v360 = vld [vmem:[%s1 + $0x2b0] sm:$0xf]
      %v361 = vld [vmem:[%s1 + $0x2b4] sm:$0xf]
      %v362 = vld [vmem:[%s1 + $0x2b8] sm:$0xf]
      %v363 = vld [vmem:[%s1 + $0x2bc] sm:$0xf]
      %v364 = vld [vmem:[%s1 + $0x2c0] sm:$0xf]
      %v365 = vld [vmem:[%s1 + $0x2c4] sm:$0xf]
      %v366 = vld [vmem:[%s1 + $0x2c8] sm:$0xf]
      %v367 = vld [vmem:[%s1 + $0x2cc] sm:$0xf]
      %v368 = vld [vmem:[%s1 + $0x2d0] sm:$0xf]
      %v369 = vld [vmem:[%s1 + $0x2d4] sm:$0xf]
      %v370 = vld [vmem:[%s1 + $0x2d8] sm:$0xf]
      %v371 = vld [vmem:[%s1 + $0x2dc] sm:$0xf]
      %v372 = vld [vmem:[%s1 + $0x2e0] sm:$0xf]
      %v373 = vld [vmem:[%s1 + $0x2e4] sm:$0xf]
      %v374 = vld [vmem:[%s1 + $0x2e8] sm:$0xf]
      %v375 = vld [vmem:[%s1 + $0x2ec] sm:$0xf]
      %v376 = vld [vmem:[%s1 + $0x2f0] sm:$0xf]
      %v377 = vld [vmem:[%s1 + $0x2f4] sm:$0xf]
      %v378 = vld [vmem:[%s1 + $0x2f8] sm:$0xf]
      %v379 = vld [vmem:[%s1 + $0x2fc] sm:$0xf]
      %v380 = vld [vmem:[%s1 + $0x300] sm:$0xf]
      %v381 = vld [vmem:[%s1 + $0x304] sm:$0xf]
      %v382 = vld [vmem:[%s1 + $0x308] sm:$0xf]
      %v383 = vld [vmem:[%s1 + $0x30c] sm:$0xf]
      %v384 = vld [vmem:[%s1 + $0x310] sm:$0xf]
      %v385 = vld [vmem:[%s1 + $0x314] sm:$0xf]
      %v386 = vld [vmem:[%s1 + $0x318] sm:$0xf]
      %v387 = vld [vmem:[%s1 + $0x31c] sm:$0xf]
      %v388 = vld [vmem:[%s1 + $0x320] sm:$0xf]
      %v389 = vld [vmem:[%s1 + $0x324] sm:$0xf]
      %v390 = vld [vmem:[%s1 + $0x328] sm:$0xf]
      %v391 = vld [vmem:[%s1 + $0x32c] sm:$0xf]
      %v392 = vld [vmem:[%s1 + $0x330] sm:$0xf]
      %v393 = vld [vmem:[%s1 + $0x334] sm:$0xf]
      %v394 = vld [vmem:[%s1 + $0x338] sm:$0xf]
      %v395 = vld [vmem:[%s1 + $0x33c] sm:$0xf]
      %v396 = vld [vmem:[%s1 + $0x340] sm:$0xf]
      %v397 = vld [vmem:[%s1 + $0x344] sm:$0xf]
      %v398 = vld [vmem:[%s1 + $0x348] sm:$0xf]
      %v399 = vld [vmem:[%s1 + $0x34c] sm:$0xf]
      %v400 = vld [vmem:[%s1 + $0x350] sm:$0xf]
      %v401 = vld [vmem:[%s1 + $0x354] sm:$0xf]
      %v402 = vld [vmem:[%s1 + $0x358] sm:$0xf]
      %v403 = vld [vmem:[%s1 + $0x35c] sm:$0xf]
      %v404 = vld [vmem:[%s1 + $0x360] sm:$0xf]
      %v405 = vld [vmem:[%s1 + $0x364] sm:$0xf]
      %v406 = vld [vmem:[%s1 + $0x368] sm:$0xf]
      %v407 = vld [vmem:[%s1 + $0x36c] sm:$0xf]
      %v408 = vld [vmem:[%s1 + $0x370] sm:$0xf]
      %v409 = vld [vmem:[%s1 + $0x374] sm:$0xf]
      %v410 = vld [vmem:[%s1 + $0x378] sm:$0xf]
      %v411 = vld [vmem:[%s1 + $0x37c] sm:$0xf]
      %v412 = vld [vmem:[%s1 + $0x380] sm:$0xf]
      %v413 = vld [vmem:[%s1 + $0x384] sm:$0xf]
      %v414 = vld [vmem:[%s1 + $0x388] sm:$0xf]
      %v415 = vld [vmem:[%s1 + $0x38c] sm:$0xf]
      %v416 = vld [vmem:[%s1 + $0x390] sm:$0xf]
      %v417 = vld [vmem:[%s1 + $0x394] sm:$0xf]
      %v418 = vld [vmem:[%s1 + $0x398] sm:$0xf]
      %v419 = vld [vmem:[%s1 + $0x39c] sm:$0xf]
      %v420 = vld [vmem:[%s1 + $0x3a0] sm:$0xf]
      %v421 = vld [vmem:[%s1 + $0x3a4] sm:$0xf]
      %v422 = vld [vmem:[%s1 + $0x3a8] sm:$0xf]
      %v423 = vld [vmem:[%s1 + $0x3ac] sm:$0xf]
      %v424 = vld [vmem:[%s1 + $0x3b0] sm:$0xf]
      %v425 = vld [vmem:[%s1 + $0x3b4] sm:$0xf]
      %v426 = vld [vmem:[%s1 + $0x3b8] sm:$0xf]
      %v427 = vld [vmem:[%s1 + $0x3bc] sm:$0xf]
      %v428 = vld [vmem:[%s1 + $0x3c0] sm:$0xf]
      %v429 = vld [vmem:[%s1 + $0x3c4] sm:$0xf]
      %v430 = vld [vmem:[%s1 + $0x3c8] sm:$0xf]
      %v431 = vld [vmem:[%s1 + $0x3cc] sm:$0xf]
      %v432 = vld [vmem:[%s1 + $0x3d0] sm:$0xf]
      %v433 = vld [vmem:[%s1 + $0x3d4] sm:$0xf]
      %v434 = vld [vmem:[%s1 + $0x3d8] sm:$0xf]
      %v435 = vld [vmem:[%s1 + $0x3dc] sm:$0xf]
      %v436 = vld [vmem:[%s1 + $0x3e0] sm:$0xf]
      %v437 = vld [vmem:[%s1 + $0x3e4] sm:$0xf]
      %v438 = vld [vmem:[%s1 + $0x3e8] sm:$0xf]
      %v439 = vld [vmem:[%s1 + $0x3ec] sm:$0xf]
      %v440 = vld [vmem:[%s1 + $0x3f0] sm:$0xf]
      %v441 = vld [vmem:[%s1 + $0x3f4] sm:$0xf]
      %v442 = vld [vmem:[%s1 + $0x3f8] sm:$0xf]
      %v443 = vld [vmem:[%s1 + $0x3fc] sm:$0xf]
      %v444 = vld [vmem:[%s2] sm:$0x1]
      %v446 = vlaneseq
      %v447 = vshrl.u32 %v446, 7
      %v448 = vsub.s32 0, %v447
      %v449 = vrot.slane %v444, %v448
      %v467 = vunpack.c.l.b16 %v172
      %v468 = vunpack.c.h.b16 %v172
      %v469 = vunpack.c.l.b16 %v173
      %v470 = vunpack.c.h.b16 %v173
      %v471 = vunpack.c.l.b16 %v174
      %v472 = vunpack.c.h.b16 %v174
      %v473 = vunpack.c.l.b16 %v175
      %v474 = vunpack.c.h.b16 %v175
      %v475 = vunpack.c.l.b16 %v176
      %v476 = vunpack.c.h.b16 %v176
      %v477 = vunpack.c.l.b16 %v177
      %v478 = vunpack.c.h.b16 %v177
      %v479 = vunpack.c.l.b16 %v178
      %v480 = vunpack.c.h.b16 %v178
      %v481 = vunpack.c.l.b16 %v179
      %v482 = vunpack.c.h.b16 %v179
      %v483 = vunpack.c.l.b16 %v180
      %v484 = vunpack.c.h.b16 %v180
      %v485 = vunpack.c.l.b16 %v181
      %v486 = vunpack.c.h.b16 %v181
      %v487 = vunpack.c.l.b16 %v182
      %v488 = vunpack.c.h.b16 %v182
      %v489 = vunpack.c.l.b16 %v183
      %v490 = vunpack.c.h.b16 %v183
      %v491 = vunpack.c.l.b16 %v184
      %v492 = vunpack.c.h.b16 %v184
      %v493 = vunpack.c.l.b16 %v185
      %v494 = vunpack.c.h.b16 %v185
      %v495 = vunpack.c.l.b16 %v186
      %v496 = vunpack.c.h.b16 %v186
      %v497 = vunpack.c.l.b16 %v187
      %v498 = vunpack.c.h.b16 %v187
      %v499 = vpack.c.b16 %v483, %v467
      %v500 = vpack.c.b16 %v484, %v468
      %v501 = vpack.c.b16 %v485, %v469
      %v502 = vpack.c.b16 %v486, %v470
      %v503 = vpack.c.b16 %v487, %v471
      %v504 = vpack.c.b16 %v488, %v472
      %v505 = vpack.c.b16 %v489, %v473
      %v506 = vpack.c.b16 %v490, %v474
      %v507 = vpack.c.b16 %v491, %v475
      %v508 = vpack.c.b16 %v492, %v476
      %v509 = vpack.c.b16 %v493, %v477
      %v510 = vpack.c.b16 %v494, %v478
      %v511 = vpack.c.b16 %v495, %v479
      %v512 = vpack.c.b16 %v496, %v480
      %v513 = vpack.c.b16 %v497, %v481
      %v514 = vpack.c.b16 %v498, %v482
      %v787 = vunpack.c.l.b16 %v188
      %v788 = vunpack.c.l.b16 %v189
      %v789 = vunpack.c.l.b16 %v190
      %v790 = vunpack.c.l.b16 %v191
      %v791 = vunpack.c.l.b16 %v192
      %v792 = vunpack.c.l.b16 %v193
      %v793 = vunpack.c.l.b16 %v194
      %v794 = vunpack.c.l.b16 %v195
      %v795 = vunpack.c.l.b16 %v196
      %v796 = vunpack.c.l.b16 %v197
      %v797 = vunpack.c.l.b16 %v198
      %v798 = vunpack.c.l.b16 %v199
      %v799 = vunpack.c.l.b16 %v200
      %v800 = vunpack.c.l.b16 %v201
      %v801 = vunpack.c.l.b16 %v202
      %v802 = vunpack.c.l.b16 %v203
      %v803 = vunpack.c.l.b16 %v204
      %v804 = vunpack.c.l.b16 %v205
      %v805 = vunpack.c.l.b16 %v206
      %v806 = vunpack.c.l.b16 %v207
      %v807 = vunpack.c.l.b16 %v208
      %v808 = vunpack.c.l.b16 %v209
      %v809 = vunpack.c.l.b16 %v210
      %v810 = vunpack.c.l.b16 %v211
      %v811 = vunpack.c.l.b16 %v212
      %v812 = vunpack.c.l.b16 %v213
      %v813 = vunpack.c.l.b16 %v214
      %v814 = vunpack.c.l.b16 %v215
      %v815 = vunpack.c.l.b16 %v216
      %v816 = vunpack.c.l.b16 %v217
      %v817 = vunpack.c.l.b16 %v218
      %v818 = vunpack.c.l.b16 %v219
      %v819 = vunpack.c.l.b16 %v220
      %v820 = vunpack.c.l.b16 %v221
      %v821 = vunpack.c.l.b16 %v222
      %v822 = vunpack.c.l.b16 %v223
      %v823 = vunpack.c.l.b16 %v224
      %v824 = vunpack.c.l.b16 %v225
      %v825 = vunpack.c.l.b16 %v226
      %v826 = vunpack.c.l.b16 %v227
      %v827 = vunpack.c.l.b16 %v228
      %v828 = vunpack.c.l.b16 %v229
      %v829 = vunpack.c.l.b16 %v230
      %v830 = vunpack.c.l.b16 %v231
      %v831 = vunpack.c.l.b16 %v232
      %v832 = vunpack.c.l.b16 %v233
      %v833 = vunpack.c.l.b16 %v234
      %v834 = vunpack.c.l.b16 %v235
      %v835 = vunpack.c.l.b16 %v236
      %v836 = vunpack.c.l.b16 %v237
      %v837 = vunpack.c.l.b16 %v238
      %v838 = vunpack.c.l.b16 %v239
      %v839 = vunpack.c.l.b16 %v240
      %v840 = vunpack.c.l.b16 %v241
      %v841 = vunpack.c.l.b16 %v242
      %v842 = vunpack.c.l.b16 %v243
      %v843 = vunpack.c.l.b16 %v244
      %v844 = vunpack.c.l.b16 %v245
      %v845 = vunpack.c.l.b16 %v246
      %v846 = vunpack.c.l.b16 %v247
      %v847 = vunpack.c.l.b16 %v248
      %v848 = vunpack.c.l.b16 %v249
      %v849 = vunpack.c.l.b16 %v250
      %v850 = vunpack.c.l.b16 %v251
      %v851 = vunpack.c.l.b16 %v252
      %v852 = vunpack.c.l.b16 %v253
      %v853 = vunpack.c.l.b16 %v254
      %v854 = vunpack.c.l.b16 %v255
      %v855 = vunpack.c.l.b16 %v256
      %v856 = vunpack.c.l.b16 %v257
      %v857 = vunpack.c.l.b16 %v258
      %v858 = vunpack.c.l.b16 %v259
      %v859 = vunpack.c.l.b16 %v260
      %v860 = vunpack.c.l.b16 %v261
      %v861 = vunpack.c.l.b16 %v262
      %v862 = vunpack.c.l.b16 %v263
      %v863 = vunpack.c.l.b16 %v264
      %v864 = vunpack.c.l.b16 %v265
      %v865 = vunpack.c.l.b16 %v266
      %v866 = vunpack.c.l.b16 %v267
      %v867 = vunpack.c.l.b16 %v268
      %v868 = vunpack.c.l.b16 %v269
      %v869 = vunpack.c.l.b16 %v270
      %v870 = vunpack.c.l.b16 %v271
      %v871 = vunpack.c.l.b16 %v272
      %v872 = vunpack.c.l.b16 %v273
      %v873 = vunpack.c.l.b16 %v274
      %v874 = vunpack.c.l.b16 %v275
      %v875 = vunpack.c.l.b16 %v276
      %v876 = vunpack.c.l.b16 %v277
      %v877 = vunpack.c.l.b16 %v278
      %v878 = vunpack.c.l.b16 %v279
      %v879 = vunpack.c.l.b16 %v280
      %v880 = vunpack.c.l.b16 %v281
      %v881 = vunpack.c.l.b16 %v282
      %v882 = vunpack.c.l.b16 %v283
      %v883 = vunpack.c.l.b16 %v284
      %v884 = vunpack.c.l.b16 %v285
      %v885 = vunpack.c.l.b16 %v286
      %v886 = vunpack.c.l.b16 %v287
      %v887 = vunpack.c.l.b16 %v288
      %v888 = vunpack.c.l.b16 %v289
      %v889 = vunpack.c.l.b16 %v290
      %v890 = vunpack.c.l.b16 %v291
      %v891 = vunpack.c.l.b16 %v292
      %v892 = vunpack.c.l.b16 %v293
      %v893 = vunpack.c.l.b16 %v294
      %v894 = vunpack.c.l.b16 %v295
      %v895 = vunpack.c.l.b16 %v296
      %v896 = vunpack.c.l.b16 %v297
      %v897 = vunpack.c.l.b16 %v298
      %v898 = vunpack.c.l.b16 %v299
      %v899 = vunpack.c.l.b16 %v300
      %v900 = vunpack.c.l.b16 %v301
      %v901 = vunpack.c.l.b16 %v302
      %v902 = vunpack.c.l.b16 %v303
      %v903 = vunpack.c.l.b16 %v304
      %v904 = vunpack.c.l.b16 %v305
      %v905 = vunpack.c.l.b16 %v306
      %v906 = vunpack.c.l.b16 %v307
      %v907 = vunpack.c.l.b16 %v308
      %v908 = vunpack.c.l.b16 %v309
      %v909 = vunpack.c.l.b16 %v310
      %v910 = vunpack.c.l.b16 %v311
      %v911 = vunpack.c.l.b16 %v312
      %v912 = vunpack.c.l.b16 %v313
      %v913 = vunpack.c.l.b16 %v314
      %v914 = vunpack.c.l.b16 %v315
      %v915 = vunpack.c.l.b16 %v316
      %v916 = vunpack.c.l.b16 %v317
      %v917 = vunpack.c.l.b16 %v318
      %v918 = vunpack.c.l.b16 %v319
      %v919 = vunpack.c.l.b16 %v320
      %v920 = vunpack.c.l.b16 %v321
      %v921 = vunpack.c.l.b16 %v322
      %v922 = vunpack.c.l.b16 %v323
      %v923 = vunpack.c.l.b16 %v324
      %v924 = vunpack.c.l.b16 %v325
      %v925 = vunpack.c.l.b16 %v326
      %v926 = vunpack.c.l.b16 %v327
      %v927 = vunpack.c.l.b16 %v328
      %v928 = vunpack.c.l.b16 %v329
      %v929 = vunpack.c.l.b16 %v330
      %v930 = vunpack.c.l.b16 %v331
      %v931 = vunpack.c.l.b16 %v332
      %v932 = vunpack.c.l.b16 %v333
      %v933 = vunpack.c.l.b16 %v334
      %v934 = vunpack.c.l.b16 %v335
      %v935 = vunpack.c.l.b16 %v336
      %v936 = vunpack.c.l.b16 %v337
      %v937 = vunpack.c.l.b16 %v338
      %v938 = vunpack.c.l.b16 %v339
      %v939 = vunpack.c.l.b16 %v340
      %v940 = vunpack.c.l.b16 %v341
      %v941 = vunpack.c.l.b16 %v342
      %v942 = vunpack.c.l.b16 %v343
      %v943 = vunpack.c.l.b16 %v344
      %v944 = vunpack.c.l.b16 %v345
      %v945 = vunpack.c.l.b16 %v346
      %v946 = vunpack.c.l.b16 %v347
      %v947 = vunpack.c.l.b16 %v348
      %v948 = vunpack.c.l.b16 %v349
      %v949 = vunpack.c.l.b16 %v350
      %v950 = vunpack.c.l.b16 %v351
      %v951 = vunpack.c.l.b16 %v352
      %v952 = vunpack.c.l.b16 %v353
      %v953 = vunpack.c.l.b16 %v354
      %v954 = vunpack.c.l.b16 %v355
      %v955 = vunpack.c.l.b16 %v356
      %v956 = vunpack.c.l.b16 %v357
      %v957 = vunpack.c.l.b16 %v358
      %v958 = vunpack.c.l.b16 %v359
      %v959 = vunpack.c.l.b16 %v360
      %v960 = vunpack.c.l.b16 %v361
      %v961 = vunpack.c.l.b16 %v362
      %v962 = vunpack.c.l.b16 %v363
      %v963 = vunpack.c.l.b16 %v364
      %v964 = vunpack.c.l.b16 %v365
      %v965 = vunpack.c.l.b16 %v366
      %v966 = vunpack.c.l.b16 %v367
      %v967 = vunpack.c.l.b16 %v368
      %v968 = vunpack.c.l.b16 %v369
      %v969 = vunpack.c.l.b16 %v370
      %v970 = vunpack.c.l.b16 %v371
      %v971 = vunpack.c.l.b16 %v372
      %v972 = vunpack.c.l.b16 %v373
      %v973 = vunpack.c.l.b16 %v374
      %v974 = vunpack.c.l.b16 %v375
      %v975 = vunpack.c.l.b16 %v376
      %v976 = vunpack.c.l.b16 %v377
      %v977 = vunpack.c.l.b16 %v378
      %v978 = vunpack.c.l.b16 %v379
      %v979 = vunpack.c.l.b16 %v380
      %v980 = vunpack.c.l.b16 %v381
      %v981 = vunpack.c.l.b16 %v382
      %v982 = vunpack.c.l.b16 %v383
      %v983 = vunpack.c.l.b16 %v384
      %v984 = vunpack.c.l.b16 %v385
      %v985 = vunpack.c.l.b16 %v386
      %v986 = vunpack.c.l.b16 %v387
      %v987 = vunpack.c.l.b16 %v388
      %v988 = vunpack.c.l.b16 %v389
      %v989 = vunpack.c.l.b16 %v390
      %v990 = vunpack.c.l.b16 %v391
      %v991 = vunpack.c.l.b16 %v392
      %v992 = vunpack.c.l.b16 %v393
      %v993 = vunpack.c.l.b16 %v394
      %v994 = vunpack.c.l.b16 %v395
      %v995 = vunpack.c.l.b16 %v396
      %v996 = vunpack.c.l.b16 %v397
      %v997 = vunpack.c.l.b16 %v398
      %v998 = vunpack.c.l.b16 %v399
      %v999 = vunpack.c.l.b16 %v400
      %v1000 = vunpack.c.l.b16 %v401
      %v1001 = vunpack.c.l.b16 %v402
      %v1002 = vunpack.c.l.b16 %v403
      %v1003 = vunpack.c.l.b16 %v404
      %v1004 = vunpack.c.l.b16 %v405
      %v1005 = vunpack.c.l.b16 %v406
      %v1006 = vunpack.c.l.b16 %v407
      %v1007 = vunpack.c.l.b16 %v408
      %v1008 = vunpack.c.l.b16 %v409
      %v1009 = vunpack.c.l.b16 %v410
      %v1010 = vunpack.c.l.b16 %v411
      %v1011 = vunpack.c.l.b16 %v412
      %v1012 = vunpack.c.l.b16 %v413
      %v1013 = vunpack.c.l.b16 %v414
      %v1014 = vunpack.c.l.b16 %v415
      %v1015 = vunpack.c.l.b16 %v416
      %v1016 = vunpack.c.l.b16 %v417
      %v1017 = vunpack.c.l.b16 %v418
      %v1018 = vunpack.c.l.b16 %v419
      %v1019 = vunpack.c.l.b16 %v420
      %v1020 = vunpack.c.l.b16 %v421
      %v1021 = vunpack.c.l.b16 %v422
      %v1022 = vunpack.c.l.b16 %v423
      %v1023 = vunpack.c.l.b16 %v424
      %v1024 = vunpack.c.l.b16 %v425
      %v1025 = vunpack.c.l.b16 %v426
      %v1026 = vunpack.c.l.b16 %v427
      %v1027 = vunpack.c.l.b16 %v428
      %v1028 = vunpack.c.l.b16 %v429
      %v1029 = vunpack.c.l.b16 %v430
      %v1030 = vunpack.c.l.b16 %v431
      %v1031 = vunpack.c.l.b16 %v432
      %v1032 = vunpack.c.l.b16 %v433
      %v1033 = vunpack.c.l.b16 %v434
      %v1034 = vunpack.c.l.b16 %v435
      %v1035 = vunpack.c.l.b16 %v436
      %v1036 = vunpack.c.l.b16 %v437
      %v1037 = vunpack.c.l.b16 %v438
      %v1038 = vunpack.c.l.b16 %v439
      %v1039 = vunpack.c.l.b16 %v440
      %v1040 = vunpack.c.l.b16 %v441
      %v1041 = vunpack.c.l.b16 %v442
      %v1042 = vunpack.c.l.b16 %v443
      %v1043 = vpack.c.b16 %v788, %v787
      %v1044 = vpack.c.b16 %v790, %v789
      %v1045 = vpack.c.b16 %v792, %v791
      %v1046 = vpack.c.b16 %v794, %v793
      %v1047 = vpack.c.b16 %v796, %v795
      %v1048 = vpack.c.b16 %v798, %v797
      %v1049 = vpack.c.b16 %v800, %v799
      %v1050 = vpack.c.b16 %v802, %v801
      %v1051 = vpack.c.b16 %v804, %v803
      %v1052 = vpack.c.b16 %v806, %v805
      %v1053 = vpack.c.b16 %v808, %v807
      %v1054 = vpack.c.b16 %v810, %v809
      %v1055 = vpack.c.b16 %v812, %v811
      %v1056 = vpack.c.b16 %v814, %v813
      %v1057 = vpack.c.b16 %v816, %v815
      %v1058 = vpack.c.b16 %v818, %v817
      %v1059 = vpack.c.b16 %v820, %v819
      %v1060 = vpack.c.b16 %v822, %v821
      %v1061 = vpack.c.b16 %v824, %v823
      %v1062 = vpack.c.b16 %v826, %v825
      %v1063 = vpack.c.b16 %v828, %v827
      %v1064 = vpack.c.b16 %v830, %v829
      %v1065 = vpack.c.b16 %v832, %v831
      %v1066 = vpack.c.b16 %v834, %v833
      %v1067 = vpack.c.b16 %v836, %v835
      %v1068 = vpack.c.b16 %v838, %v837
      %v1069 = vpack.c.b16 %v840, %v839
      %v1070 = vpack.c.b16 %v842, %v841
      %v1071 = vpack.c.b16 %v844, %v843
      %v1072 = vpack.c.b16 %v846, %v845
      %v1073 = vpack.c.b16 %v848, %v847
      %v1074 = vpack.c.b16 %v850, %v849
      %v1075 = vpack.c.b16 %v852, %v851
      %v1076 = vpack.c.b16 %v854, %v853
      %v1077 = vpack.c.b16 %v856, %v855
      %v1078 = vpack.c.b16 %v858, %v857
      %v1079 = vpack.c.b16 %v860, %v859
      %v1080 = vpack.c.b16 %v862, %v861
      %v1081 = vpack.c.b16 %v864, %v863
      %v1082 = vpack.c.b16 %v866, %v865
      %v1083 = vpack.c.b16 %v868, %v867
      %v1084 = vpack.c.b16 %v870, %v869
      %v1085 = vpack.c.b16 %v872, %v871
      %v1086 = vpack.c.b16 %v874, %v873
      %v1087 = vpack.c.b16 %v876, %v875
      %v1088 = vpack.c.b16 %v878, %v877
      %v1089 = vpack.c.b16 %v880, %v879
      %v1090 = vpack.c.b16 %v882, %v881
      %v1091 = vpack.c.b16 %v884, %v883
      %v1092 = vpack.c.b16 %v886, %v885
      %v1093 = vpack.c.b16 %v888, %v887
      %v1094 = vpack.c.b16 %v890, %v889
      %v1095 = vpack.c.b16 %v892, %v891
      %v1096 = vpack.c.b16 %v894, %v893
      %v1097 = vpack.c.b16 %v896, %v895
      %v1098 = vpack.c.b16 %v898, %v897
      %v1099 = vpack.c.b16 %v900, %v899
      %v1100 = vpack.c.b16 %v902, %v901
      %v1101 = vpack.c.b16 %v904, %v903
      %v1102 = vpack.c.b16 %v906, %v905
      %v1103 = vpack.c.b16 %v908, %v907
      %v1104 = vpack.c.b16 %v910, %v909
      %v1105 = vpack.c.b16 %v912, %v911
      %v1106 = vpack.c.b16 %v914, %v913
      %v1107 = vpack.c.b16 %v916, %v915
      %v1108 = vpack.c.b16 %v918, %v917
      %v1109 = vpack.c.b16 %v920, %v919
      %v1110 = vpack.c.b16 %v922, %v921
      %v1111 = vpack.c.b16 %v924, %v923
      %v1112 = vpack.c.b16 %v926, %v925
      %v1113 = vpack.c.b16 %v928, %v927
      %v1114 = vpack.c.b16 %v930, %v929
      %v1115 = vpack.c.b16 %v932, %v931
      %v1116 = vpack.c.b16 %v934, %v933
      %v1117 = vpack.c.b16 %v936, %v935
      %v1118 = vpack.c.b16 %v938, %v937
      %v1119 = vpack.c.b16 %v940, %v939
      %v1120 = vpack.c.b16 %v942, %v941
      %v1121 = vpack.c.b16 %v944, %v943
      %v1122 = vpack.c.b16 %v946, %v945
      %v1123 = vpack.c.b16 %v948, %v947
      %v1124 = vpack.c.b16 %v950, %v949
      %v1125 = vpack.c.b16 %v952, %v951
      %v1126 = vpack.c.b16 %v954, %v953
      %v1127 = vpack.c.b16 %v956, %v955
      %v1128 = vpack.c.b16 %v958, %v957
      %v1129 = vpack.c.b16 %v960, %v959
      %v1130 = vpack.c.b16 %v962, %v961
      %v1131 = vpack.c.b16 %v964, %v963
      %v1132 = vpack.c.b16 %v966, %v965
      %v1133 = vpack.c.b16 %v968, %v967
      %v1134 = vpack.c.b16 %v970, %v969
      %v1135 = vpack.c.b16 %v972, %v971
      %v1136 = vpack.c.b16 %v974, %v973
      %v1137 = vpack.c.b16 %v976, %v975
      %v1138 = vpack.c.b16 %v978, %v977
      %v1139 = vpack.c.b16 %v980, %v979
      %v1140 = vpack.c.b16 %v982, %v981
      %v1141 = vpack.c.b16 %v984, %v983
      %v1142 = vpack.c.b16 %v986, %v985
      %v1143 = vpack.c.b16 %v988, %v987
      %v1144 = vpack.c.b16 %v990, %v989
      %v1145 = vpack.c.b16 %v992, %v991
      %v1146 = vpack.c.b16 %v994, %v993
      %v1147 = vpack.c.b16 %v996, %v995
      %v1148 = vpack.c.b16 %v998, %v997
      %v1149 = vpack.c.b16 %v1000, %v999
      %v1150 = vpack.c.b16 %v1002, %v1001
      %v1151 = vpack.c.b16 %v1004, %v1003
      %v1152 = vpack.c.b16 %v1006, %v1005
      %v1153 = vpack.c.b16 %v1008, %v1007
      %v1154 = vpack.c.b16 %v1010, %v1009
      %v1155 = vpack.c.b16 %v1012, %v1011
      %v1156 = vpack.c.b16 %v1014, %v1013
      %v1157 = vpack.c.b16 %v1016, %v1015
      %v1158 = vpack.c.b16 %v1018, %v1017
      %v1159 = vpack.c.b16 %v1020, %v1019
      %v1160 = vpack.c.b16 %v1022, %v1021
      %v1161 = vpack.c.b16 %v1024, %v1023
      %v1162 = vpack.c.b16 %v1026, %v1025
      %v1163 = vpack.c.b16 %v1028, %v1027
      %v1164 = vpack.c.b16 %v1030, %v1029
      %v1165 = vpack.c.b16 %v1032, %v1031
      %v1166 = vpack.c.b16 %v1034, %v1033
      %v1167 = vpack.c.b16 %v1036, %v1035
      %v1168 = vpack.c.b16 %v1038, %v1037
      %v1169 = vpack.c.b16 %v1040, %v1039
      %v1170 = vpack.c.b16 %v1042, %v1041
      %1299 = vmatprep.subr.bf16.mxu0 0
      %1300 = vmatpush1.bf16.msra.mxu0 %v1043
      %1301 = vmatprep.subr.bf16.mxu0 0
      %1302 = vmatpush1.bf16.msra.mxu0 %v1044
      %1303 = vmatprep.subr.bf16.mxu0 0
      %1304 = vmatpush1.bf16.msra.mxu0 %v1045
      %1305 = vmatprep.subr.bf16.mxu0 0
      %1306 = vmatpush1.bf16.msra.mxu0 %v1046
      %1307 = vmatprep.subr.bf16.mxu0 0
      %1308 = vmatpush1.bf16.msra.mxu0 %v1047
      %1309 = vmatprep.subr.bf16.mxu0 0
      %1310 = vmatpush1.bf16.msra.mxu0 %v1048
      %1311 = vmatprep.subr.bf16.mxu0 0
      %1312 = vmatpush1.bf16.msra.mxu0 %v1049
      %1313 = vmatprep.subr.bf16.mxu0 0
      %1314 = vmatpush1.bf16.msra.mxu0 %v1050
      %1315 = vmatprep.subr.bf16.mxu0 0
      %1316 = vmatpush1.bf16.msra.mxu0 %v1051
      %1317 = vmatprep.subr.bf16.mxu0 0
      %1318 = vmatpush1.bf16.msra.mxu0 %v1052
      %1319 = vmatprep.subr.bf16.mxu0 0
      %1320 = vmatpush1.bf16.msra.mxu0 %v1053
      %1321 = vmatprep.subr.bf16.mxu0 0
      %1322 = vmatpush1.bf16.msra.mxu0 %v1054
      %1323 = vmatprep.subr.bf16.mxu0 0
      %1324 = vmatpush1.bf16.msra.mxu0 %v1055
      %1325 = vmatprep.subr.bf16.mxu0 0
      %1326 = vmatpush1.bf16.msra.mxu0 %v1056
      %1327 = vmatprep.subr.bf16.mxu0 0
      %1328 = vmatpush1.bf16.msra.mxu0 %v1057
      %1329 = vmatprep.subr.bf16.mxu0 0
      %1330 = vmatpush1.bf16.msra.mxu0 %v1058
      %1331 = vmatprep.mubr.bf16.mxu0 %v500
      %1332 = vmatmul.mubr.bf16.gmra.mrb[0].mxu0 %v499
      %v1333 = vpop.f32.mrb[0].mxu0
      %v1334 = vadd.f32 %v449, %v1333
      %v1335 = vpop.f32.mrb[0].mxu0
      %v1336 = vpop.f32.mrb[0].mxu0
      %v1337 = vadd.f32 %v449, %v1336
      %v1338 = vpop.f32.mrb[0].mxu0
      %1339 = vdwg.mxu0
      %1340 = vmatprep.subr.bf16.mxu0 0
      %1341 = vmatpush1.bf16.msra.mxu0 %v1059
      %1342 = vmatprep.subr.bf16.mxu0 0
      %1343 = vmatpush1.bf16.msra.mxu0 %v1060
      %1344 = vmatprep.subr.bf16.mxu0 0
      %1345 = vmatpush1.bf16.msra.mxu0 %v1061
      %1346 = vmatprep.subr.bf16.mxu0 0
      %1347 = vmatpush1.bf16.msra.mxu0 %v1062
      %1348 = vmatprep.subr.bf16.mxu0 0
      %1349 = vmatpush1.bf16.msra.mxu0 %v1063
      %1350 = vmatprep.subr.bf16.mxu0 0
      %1351 = vmatpush1.bf16.msra.mxu0 %v1064
      %1352 = vmatprep.subr.bf16.mxu0 0
      %1353 = vmatpush1.bf16.msra.mxu0 %v1065
      %1354 = vmatprep.subr.bf16.mxu0 0
      %1355 = vmatpush1.bf16.msra.mxu0 %v1066
      %1356 = vmatprep.subr.bf16.mxu0 0
      %1357 = vmatpush1.bf16.msra.mxu0 %v1067
      %1358 = vmatprep.subr.bf16.mxu0 0
      %1359 = vmatpush1.bf16.msra.mxu0 %v1068
      %1360 = vmatprep.subr.bf16.mxu0 0
      %1361 = vmatpush1.bf16.msra.mxu0 %v1069
      %1362 = vmatprep.subr.bf16.mxu0 0
      %1363 = vmatpush1.bf16.msra.mxu0 %v1070
      %1364 = vmatprep.subr.bf16.mxu0 0
      %1365 = vmatpush1.bf16.msra.mxu0 %v1071
      %1366 = vmatprep.subr.bf16.mxu0 0
      %1367 = vmatpush1.bf16.msra.mxu0 %v1072
      %1368 = vmatprep.subr.bf16.mxu0 0
      %1369 = vmatpush1.bf16.msra.mxu0 %v1073
      %1370 = vmatprep.subr.bf16.mxu0 0
      %1371 = vmatpush1.bf16.msra.mxu0 %v1074
      %1372 = vmatprep.mubr.bf16.mxu0 %v502
      %1373 = vmatmul.mubr.bf16.gmra.mrb[0].mxu0 %v501
      %v1374 = vpop.f32.mrb[0].mxu0
      %v1375 = vadd.f32 %v1334, %v1374
      %v1376 = vpop.f32.mrb[0].mxu0
      %v1377 = vpop.f32.mrb[0].mxu0
      %v1378 = vadd.f32 %v1337, %v1377
      %v1379 = vpop.f32.mrb[0].mxu0
      %1380 = vdwg.mxu0
      %1381 = vmatprep.subr.bf16.mxu0 0
      %1382 = vmatpush1.bf16.msra.mxu0 %v1075
      %1383 = vmatprep.subr.bf16.mxu0 0
      %1384 = vmatpush1.bf16.msra.mxu0 %v1076
      %1385 = vmatprep.subr.bf16.mxu0 0
      %1386 = vmatpush1.bf16.msra.mxu0 %v1077
      %1387 = vmatprep.subr.bf16.mxu0 0
      %1388 = vmatpush1.bf16.msra.mxu0 %v1078
      %1389 = vmatprep.subr.bf16.mxu0 0
      %1390 = vmatpush1.bf16.msra.mxu0 %v1079
      %1391 = vmatprep.subr.bf16.mxu0 0
      %1392 = vmatpush1.bf16.msra.mxu0 %v1080
      %1393 = vmatprep.subr.bf16.mxu0 0
      %1394 = vmatpush1.bf16.msra.mxu0 %v1081
      %1395 = vmatprep.subr.bf16.mxu0 0
      %1396 = vmatpush1.bf16.msra.mxu0 %v1082
      %1397 = vmatprep.subr.bf16.mxu0 0
      %1398 = vmatpush1.bf16.msra.mxu0 %v1083
      %1399 = vmatprep.subr.bf16.mxu0 0
      %1400 = vmatpush1.bf16.msra.mxu0 %v1084
      %1401 = vmatprep.subr.bf16.mxu0 0
      %1402 = vmatpush1.bf16.msra.mxu0 %v1085
      %1403 = vmatprep.subr.bf16.mxu0 0
      %1404 = vmatpush1.bf16.msra.mxu0 %v1086
      %1405 = vmatprep.subr.bf16.mxu0 0
      %1406 = vmatpush1.bf16.msra.mxu0 %v1087
      %1407 = vmatprep.subr.bf16.mxu0 0
      %1408 = vmatpush1.bf16.msra.mxu0 %v1088
      %1409 = vmatprep.subr.bf16.mxu0 0
      %1410 = vmatpush1.bf16.msra.mxu0 %v1089
      %1411 = vmatprep.subr.bf16.mxu0 0
      %1412 = vmatpush1.bf16.msra.mxu0 %v1090
      %1413 = vmatprep.mubr.bf16.mxu0 %v504
      %1414 = vmatmul.mubr.bf16.gmra.mrb[0].mxu0 %v503
      %v1415 = vpop.f32.mrb[0].mxu0
      %v1416 = vadd.f32 %v1375, %v1415
      %v1417 = vpop.f32.mrb[0].mxu0
      %v1418 = vpop.f32.mrb[0].mxu0
      %v1419 = vadd.f32 %v1378, %v1418
      %v1420 = vpop.f32.mrb[0].mxu0
      %1421 = vdwg.mxu0
      %1422 = vmatprep.subr.bf16.mxu0 0
      %1423 = vmatpush1.bf16.msra.mxu0 %v1091
      %1424 = vmatprep.subr.bf16.mxu0 0
      %1425 = vmatpush1.bf16.msra.mxu0 %v1092
      %1426 = vmatprep.subr.bf16.mxu0 0
      %1427 = vmatpush1.bf16.msra.mxu0 %v1093
      %1428 = vmatprep.subr.bf16.mxu0 0
      %1429 = vmatpush1.bf16.msra.mxu0 %v1094
      %1430 = vmatprep.subr.bf16.mxu0 0
      %1431 = vmatpush1.bf16.msra.mxu0 %v1095
      %1432 = vmatprep.subr.bf16.mxu0 0
      %1433 = vmatpush1.bf16.msra.mxu0 %v1096
      %1434 = vmatprep.subr.bf16.mxu0 0
      %1435 = vmatpush1.bf16.msra.mxu0 %v1097
      %1436 = vmatprep.subr.bf16.mxu0 0
      %1437 = vmatpush1.bf16.msra.mxu0 %v1098
      %1438 = vmatprep.subr.bf16.mxu0 0
      %1439 = vmatpush1.bf16.msra.mxu0 %v1099
      %1440 = vmatprep.subr.bf16.mxu0 0
      %1441 = vmatpush1.bf16.msra.mxu0 %v1100
      %1442 = vmatprep.subr.bf16.mxu0 0
      %1443 = vmatpush1.bf16.msra.mxu0 %v1101
      %1444 = vmatprep.subr.bf16.mxu0 0
      %1445 = vmatpush1.bf16.msra.mxu0 %v1102
      %1446 = vmatprep.subr.bf16.mxu0 0
      %1447 = vmatpush1.bf16.msra.mxu0 %v1103
      %1448 = vmatprep.subr.bf16.mxu0 0
      %1449 = vmatpush1.bf16.msra.mxu0 %v1104
      %1450 = vmatprep.subr.bf16.mxu0 0
      %1451 = vmatpush1.bf16.msra.mxu0 %v1105
      %1452 = vmatprep.subr.bf16.mxu0 0
      %1453 = vmatpush1.bf16.msra.mxu0 %v1106
      %1454 = vmatprep.mubr.bf16.mxu0 %v506
      %1455 = vmatmul.mubr.bf16.gmra.mrb[0].mxu0 %v505
      %v1456 = vpop.f32.mrb[0].mxu0
      %v1457 = vadd.f32 %v1416, %v1456
      %v1458 = vpop.f32.mrb[0].mxu0
      %v1459 = vpop.f32.mrb[0].mxu0
      %v1460 = vadd.f32 %v1419, %v1459
      %v1461 = vpop.f32.mrb[0].mxu0
      %1462 = vdwg.mxu0
      %1463 = vmatprep.subr.bf16.mxu0 0
      %1464 = vmatpush1.bf16.msra.mxu0 %v1107
      %1465 = vmatprep.subr.bf16.mxu0 0
      %1466 = vmatpush1.bf16.msra.mxu0 %v1108
      %1467 = vmatprep.subr.bf16.mxu0 0
      %1468 = vmatpush1.bf16.msra.mxu0 %v1109
      %1469 = vmatprep.subr.bf16.mxu0 0
      %1470 = vmatpush1.bf16.msra.mxu0 %v1110
      %1471 = vmatprep.subr.bf16.mxu0 0
      %1472 = vmatpush1.bf16.msra.mxu0 %v1111
      %1473 = vmatprep.subr.bf16.mxu0 0
      %1474 = vmatpush1.bf16.msra.mxu0 %v1112
      %1475 = vmatprep.subr.bf16.mxu0 0
      %1476 = vmatpush1.bf16.msra.mxu0 %v1113
      %1477 = vmatprep.subr.bf16.mxu0 0
      %1478 = vmatpush1.bf16.msra.mxu0 %v1114
      %1479 = vmatprep.subr.bf16.mxu0 0
      %1480 = vmatpush1.bf16.msra.mxu0 %v1115
      %1481 = vmatprep.subr.bf16.mxu0 0
      %1482 = vmatpush1.bf16.msra.mxu0 %v1116
      %1483 = vmatprep.subr.bf16.mxu0 0
      %1484 = vmatpush1.bf16.msra.mxu0 %v1117
      %1485 = vmatprep.subr.bf16.mxu0 0
      %1486 = vmatpush1.bf16.msra.mxu0 %v1118
      %1487 = vmatprep.subr.bf16.mxu0 0
      %1488 = vmatpush1.bf16.msra.mxu0 %v1119
      %1489 = vmatprep.subr.bf16.mxu0 0
      %1490 = vmatpush1.bf16.msra.mxu0 %v1120
      %1491 = vmatprep.subr.bf16.mxu0 0
      %1492 = vmatpush1.bf16.msra.mxu0 %v1121
      %1493 = vmatprep.subr.bf16.mxu0 0
      %1494 = vmatpush1.bf16.msra.mxu0 %v1122
      %1495 = vmatprep.mubr.bf16.mxu0 %v508
      %1496 = vmatmul.mubr.bf16.gmra.mrb[0].mxu0 %v507
      %v1497 = vpop.f32.mrb[0].mxu0
      %v1498 = vadd.f32 %v1457, %v1497
      %v1499 = vpop.f32.mrb[0].mxu0
      %v1500 = vpop.f32.mrb[0].mxu0
      %v1501 = vadd.f32 %v1460, %v1500
      %v1502 = vpop.f32.mrb[0].mxu0
      %1503 = vdwg.mxu0
      %1504 = vmatprep.subr.bf16.mxu0 0
      %1505 = vmatpush1.bf16.msra.mxu0 %v1123
      %1506 = vmatprep.subr.bf16.mxu0 0
      %1507 = vmatpush1.bf16.msra.mxu0 %v1124
      %1508 = vmatprep.subr.bf16.mxu0 0
      %1509 = vmatpush1.bf16.msra.mxu0 %v1125
      %1510 = vmatprep.subr.bf16.mxu0 0
      %1511 = vmatpush1.bf16.msra.mxu0 %v1126
      %1512 = vmatprep.subr.bf16.mxu0 0
      %1513 = vmatpush1.bf16.msra.mxu0 %v1127
      %1514 = vmatprep.subr.bf16.mxu0 0
      %1515 = vmatpush1.bf16.msra.mxu0 %v1128
      %1516 = vmatprep.subr.bf16.mxu0 0
      %1517 = vmatpush1.bf16.msra.mxu0 %v1129
      %1518 = vmatprep.subr.bf16.mxu0 0
      %1519 = vmatpush1.bf16.msra.mxu0 %v1130
      %1520 = vmatprep.subr.bf16.mxu0 0
      %1521 = vmatpush1.bf16.msra.mxu0 %v1131
      %1522 = vmatprep.subr.bf16.mxu0 0
      %1523 = vmatpush1.bf16.msra.mxu0 %v1132
      %1524 = vmatprep.subr.bf16.mxu0 0
      %1525 = vmatpush1.bf16.msra.mxu0 %v1133
      %1526 = vmatprep.subr.bf16.mxu0 0
      %1527 = vmatpush1.bf16.msra.mxu0 %v1134
      %1528 = vmatprep.subr.bf16.mxu0 0
      %1529 = vmatpush1.bf16.msra.mxu0 %v1135
      %1530 = vmatprep.subr.bf16.mxu0 0
      %1531 = vmatpush1.bf16.msra.mxu0 %v1136
      %1532 = vmatprep.subr.bf16.mxu0 0
      %1533 = vmatpush1.bf16.msra.mxu0 %v1137
      %1534 = vmatprep.subr.bf16.mxu0 0
      %1535 = vmatpush1.bf16.msra.mxu0 %v1138
      %1536 = vmatprep.mubr.bf16.mxu0 %v510
      %1537 = vmatmul.mubr.bf16.gmra.mrb[0].mxu0 %v509
      %v1538 = vpop.f32.mrb[0].mxu0
      %v1539 = vadd.f32 %v1498, %v1538
      %v1540 = vpop.f32.mrb[0].mxu0
      %v1541 = vpop.f32.mrb[0].mxu0
      %v1542 = vadd.f32 %v1501, %v1541
      %v1543 = vpop.f32.mrb[0].mxu0
      %1544 = vdwg.mxu0
      %1545 = vmatprep.subr.bf16.mxu0 0
      %1546 = vmatpush1.bf16.msra.mxu0 %v1139
      %1547 = vmatprep.subr.bf16.mxu0 0
      %1548 = vmatpush1.bf16.msra.mxu0 %v1140
      %1549 = vmatprep.subr.bf16.mxu0 0
      %1550 = vmatpush1.bf16.msra.mxu0 %v1141
      %1551 = vmatprep.subr.bf16.mxu0 0
      %1552 = vmatpush1.bf16.msra.mxu0 %v1142
      %1553 = vmatprep.subr.bf16.mxu0 0
      %1554 = vmatpush1.bf16.msra.mxu0 %v1143
      %1555 = vmatprep.subr.bf16.mxu0 0
      %1556 = vmatpush1.bf16.msra.mxu0 %v1144
      %1557 = vmatprep.subr.bf16.mxu0 0
      %1558 = vmatpush1.bf16.msra.mxu0 %v1145
      %1559 = vmatprep.subr.bf16.mxu0 0
      %1560 = vmatpush1.bf16.msra.mxu0 %v1146
      %1561 = vmatprep.subr.bf16.mxu0 0
      %1562 = vmatpush1.bf16.msra.mxu0 %v1147
      %1563 = vmatprep.subr.bf16.mxu0 0
      %1564 = vmatpush1.bf16.msra.mxu0 %v1148
      %1565 = vmatprep.subr.bf16.mxu0 0
      %1566 = vmatpush1.bf16.msra.mxu0 %v1149
      %1567 = vmatprep.subr.bf16.mxu0 0
      %1568 = vmatpush1.bf16.msra.mxu0 %v1150
      %1569 = vmatprep.subr.bf16.mxu0 0
      %1570 = vmatpush1.bf16.msra.mxu0 %v1151
      %1571 = vmatprep.subr.bf16.mxu0 0
      %1572 = vmatpush1.bf16.msra.mxu0 %v1152
      %1573 = vmatprep.subr.bf16.mxu0 0
      %1574 = vmatpush1.bf16.msra.mxu0 %v1153
      %1575 = vmatprep.subr.bf16.mxu0 0
      %1576 = vmatpush1.bf16.msra.mxu0 %v1154
      %1577 = vmatprep.mubr.bf16.mxu0 %v512
      %1578 = vmatmul.mubr.bf16.gmra.mrb[0].mxu0 %v511
      %v1579 = vpop.f32.mrb[0].mxu0
      %v1580 = vadd.f32 %v1539, %v1579
      %v1581 = vpop.f32.mrb[0].mxu0
      %v1582 = vpop.f32.mrb[0].mxu0
      %v1583 = vadd.f32 %v1542, %v1582
      %v1584 = vpop.f32.mrb[0].mxu0
      %1585 = vdwg.mxu0
      %1586 = vmatprep.subr.bf16.mxu0 0
      %1587 = vmatpush1.bf16.msra.mxu0 %v1155
      %1588 = vmatprep.subr.bf16.mxu0 0
      %1589 = vmatpush1.bf16.msra.mxu0 %v1156
      %1590 = vmatprep.subr.bf16.mxu0 0
      %1591 = vmatpush1.bf16.msra.mxu0 %v1157
      %1592 = vmatprep.subr.bf16.mxu0 0
      %1593 = vmatpush1.bf16.msra.mxu0 %v1158
      %1594 = vmatprep.subr.bf16.mxu0 0
      %1595 = vmatpush1.bf16.msra.mxu0 %v1159
      %1596 = vmatprep.subr.bf16.mxu0 0
      %1597 = vmatpush1.bf16.msra.mxu0 %v1160
      %1598 = vmatprep.subr.bf16.mxu0 0
      %1599 = vmatpush1.bf16.msra.mxu0 %v1161
      %1600 = vmatprep.subr.bf16.mxu0 0
      %1601 = vmatpush1.bf16.msra.mxu0 %v1162
      %1602 = vmatprep.subr.bf16.mxu0 0
      %1603 = vmatpush1.bf16.msra.mxu0 %v1163
      %1604 = vmatprep.subr.bf16.mxu0 0
      %1605 = vmatpush1.bf16.msra.mxu0 %v1164
      %1606 = vmatprep.subr.bf16.mxu0 0
      %1607 = vmatpush1.bf16.msra.mxu0 %v1165
      %1608 = vmatprep.subr.bf16.mxu0 0
      %1609 = vmatpush1.bf16.msra.mxu0 %v1166
      %1610 = vmatprep.subr.bf16.mxu0 0
      %1611 = vmatpush1.bf16.msra.mxu0 %v1167
      %1612 = vmatprep.subr.bf16.mxu0 0
      %1613 = vmatpush1.bf16.msra.mxu0 %v1168
      %1614 = vmatprep.subr.bf16.mxu0 0
      %1615 = vmatpush1.bf16.msra.mxu0 %v1169
      %1616 = vmatprep.subr.bf16.mxu0 0
      %1617 = vmatpush1.bf16.msra.mxu0 %v1170
      %1618 = vmatprep.mubr.bf16.mxu0 %v514
      %1619 = vmatmul.mubr.bf16.gmra.mrb[0].mxu0 %v513
      %v1620 = vpop.f32.mrb[0].mxu0
      %v1621 = vadd.f32 %v1580, %v1620
      %v1622 = vpop.f32.mrb[0].mxu0
      %v1623 = vpop.f32.mrb[0].mxu0
      %v1624 = vadd.f32 %v1583, %v1623
      %v1625 = vpop.f32.mrb[0].mxu0
      %1626 = vdwg.mxu0
      %vm1627 = vcmask 1040384
      %v1628 = vsel %vm1627, %v1624, 0.0
      %v1629 = vadd.f32 %v1621, %v1628
      %v1630 = vrot.slane %v1629, 4
      %v1631 = vadd.f32 %v1629, %v1630
      %v1632 = vrot.slane %v1631, 2
      %v1633 = vadd.f32 %v1631, %v1632
      %v1634 = vrot.slane %v1633, 1
      %v1635 = vadd.f32 %v1633, %v1634
      %v1636 = vrcp.pop 9.0
      %v1637 = vmul.f32 %v1635, %v1636
      %v1638 = vsub.f32 %v1621, %v1637
      %v1639 = vsub.f32 %v1624, %v1637
      %v1640 = vmul.f32 %v1638, %v1638
      %v1641 = vmul.f32 %v1639, %v1639
      %v1642 = vsel %vm1627, %v1641, 0.0
      %v1643 = vadd.f32 %v1640, %v1642
      %v1644 = vrot.slane %v1643, 4
      %v1645 = vadd.f32 %v1643, %v1644
      %v1646 = vrot.slane %v1645, 2
      %v1647 = vadd.f32 %v1645, %v1646
      %v1648 = vrot.slane %v1647, 1
      %v1649 = vadd.f32 %v1647, %v1648
      %v1650 = vmul.f32 %v1649, %v1636
      %v1651 = vadd.f32 %v1650, 1e-05
      %v1652 = vrsqrt.pop %v1651
      %v1653 = vmul.f32 %v1638, %v1652
      %v1654 = vmul.f32 %v1639, %v1652
      %vm1655 = vcmp.ge.f32.partialorder %v1653, 0.0
      %vm1656 = vcmp.ge.f32.partialorder %v1654, 0.0
      %v1657 = vmul.f32 %v1653, 0.2
      %v1658 = vmul.f32 %v1654, 0.2
      %v1659 = vsel %vm1655, %v1653, %v1657
      %v1660 = vsel %vm1656, %v1654, %v1658
      %v1661 = vpack.c.bf16 %v1660, %v1659
      %v1663 = vunpack.c.l.b16 %v1661
      %v1664 = vunpack.c.h.b16 %v1661
      %v1665 = vpack.c.b16 %v1663, %v1663
      %v1666 = vpack.c.b16 %v1664, %v1664
      %1669 = vst [vmem:[%s170] sm:$0xf] %v1665
      %vm1670 = vcmask 1040384
      %vm1671 = vsmask.f32 256
      %vm1672 = vmand %vm1670, %vm1671
      %v1673 = vld [vmem:[%s170 + $0x4] sm:$0x1]
      %v1674 = vsel %vm1672, %v1666, %v1673
      %1675 = vst [vmem:[%s170 + $0x4] sm:$0x1] %v1674
      %p1676 = scmp.lt.s32.totalorder %s14, 1
      %s1677 = scalar_select %p1676, %s14, 1
      %s1678 = smul.addr %s1677, 2
      %s1679 = smul.addr %s1678, 4
      %s1680 = scalar_lea.vmem %s3, %s1679
      // Predicated region
      $region33: #{define_d_forward.8} parent=31 // pred_check
        %p1681 = pneg %p100
      $region34: #{define_d_forward.8} parent=31 // pred_check_branch
        %1683 = sbr.rel (%p1681) target = $region36
      $region35: #{define_d_forward.8} parent=31 // pred_region
        _
      $region36: #{define_d_forward.8} parent=31 // pred_fallthru
        _
    $region32: #{define_d_forward.8} parent=5 // pred_fallthru
      _
    %p1684 = scmp.le.s32.totalorder 2, %s9
    // Predicated region
    $region37: #{define_d_forward.8} parent=5 // pred_check
      %p1685 = pneg %p1684
    $region38: #{define_d_forward.8} parent=5 // pred_check_branch
      %1687 = sbr.rel (%p1685) target = $region40
    $region39: #{define_d_forward.8} parent=5 // pred_region
      %s1688 = ssub.s32 %s9, 2
      // Predicated region
      $region41: #{define_d_forward.8} parent=39 // pred_check
        %p1689 = pneg %p106
      $region42: #{define_d_forward.8} parent=39 // pred_check_branch
        %1691 = sbr.rel (%p1689) target = $region44
      $region43: #{define_d_forward.8} parent=39 // pred_region
        %p1692 = scmp.lt.s32.totalorder %s15, 1
        %s1693 = scalar_select %p1692, %s15, 1
        %s1694 = smul.addr %s1693, 2
        %s1695 = smul.addr %s1694, 4
        %s1696 = scalar_lea.vmem %s3, %s1695
      $region44: #{define_d_forward.8} parent=39 // pred_fallthru
        _
    $region40: #{define_d_forward.8} parent=5 // pred_fallthru
      _
  $region6: #{define_d_forward.8} parent=0 // loop_footer
    %s13 = sadd.s32 1, %s9
  $region7: #{define_d_forward.8} parent=0 // loop_footer_branch
    %8 = sbr.rel target = $region3
  $region8: #{define_d_forward.8} parent=0 // loop_exit
    _

// kernel: define_d_forward.9
$region0: #{define_d_forward.9}
  #allocation0 [shape = 'u32[]', space=smem, size = 0x4, offset = 0x4, fixed_abs, tag = 'smem constant byte address 0x4 - core index']
  #allocation1 [shape = 'u32[144,128]{1,0:T(1,128)}', space=vmem, size = 0x12000, scoped, tag = 'internal scratch']
  %s0 = inlined_call_operand.vmem [shape: bf16[2,4,2048], index: 0, kind: input, shape index: {}]
  %s1 = inlined_call_operand.vmem [shape: bf16[2048,128], index: 1, kind: input, shape index: {}]
  %s2 = inlined_call_operand.vmem [shape: f32[1,128], index: 2, kind: input, shape index: {}]
  %s3 = inlined_call_operand.vmem [shape: f32[2,4,128], index: 3, kind: output, shape index: {}]
  %s4 = sld [smem:[#allocation0]]
  $region45: #{define_d_forward.9} parent=0
    _
  %s6 = ssub.s32 1, %s4
  %s7 = scalar_select 0, %s6, %s4
  loop: start=0, step=1, limit=4
  $region2: #{define_d_forward.9} parent=0 // loop_pre_header
    _
  $region3: #{define_d_forward.9} parent=0 // loop_header
    %s9 = sphi 0, %s13
    %p10 = scmp.ge.s32.totalorder %s9, 4
    %s19 = sphi 0, %s21
    %s22 = sphi 0, %s19
    %s23 = sphi 0, %s22
    %s39 = sphi 0, %s23
    %s43 = sphi 0, %s43
    %s45 = sphi 0, %s43
    %s46 = sphi 0, %s45
    %s60 = sphi 0, %s46
    %s64 = sphi 0, %s64
    %s66 = sphi 0, %s64
    %s67 = sphi 0, %s66
    %s81 = sphi 0, %s67
    %s87 = sphi 0, %s89
    %s90 = sphi 0, %s87
    %s91 = sphi 0, %s90
    %s107 = sphi 0, %s91
  $region4: #{define_d_forward.9} parent=0 // loop_header_branch
    %12 = sbr.rel (%p10) target = $region8
  $region5: #{define_d_forward.9} parent=0 // loop_body
    %s14 = ssub.s32 %s9, 1
    %s15 = ssub.s32 %s9, 2
    %s16 = sadd.s32 %s9, 1
    %s17 = ssub.s32 %s9, %s16
    %p18 = scmp.eq.s32.totalorder %s17, 0
    %s20 = sadd.s32 %s19, 1
    %s21 = scalar_select %p18, %s19, %s20
    %p24 = pneg %p18
    %p25 = scmp.eq.s32.totalorder %s9, 1
    %p26 = por %p24, %p25
    %p27 = scmp.ne.s32.totalorder %s19, %s22
    %p28 = scmp.eq.s32.totalorder %s9, 0
    %p29 = por %p27, %p28
    %p30 = scmp.ne.s32.totalorder %s19, %s22
    %p31 = scmp.eq.s32.totalorder %s14, 1
    %p32 = por %p30, %p31
    %p33 = scmp.ne.s32.totalorder %s22, %s23
    %p34 = scmp.eq.s32.totalorder %s14, 0
    %p35 = por %p33, %p34
    %p36 = scmp.ne.s32.totalorder %s22, %s23
    %p37 = scmp.eq.s32.totalorder %s15, 1
    %p38 = por %p36, %p37
    %p40 = scmp.ne.s32.totalorder %s23, %s39
    %p41 = scmp.eq.s32.totalorder %s15, 0
    %p42 = por %p40, %p41
    %s44 = sadd.s32 %s43, 1
    %p47 = scmp.eq.s32.totalorder %s9, 1
    %p48 = scmp.ne.s32.totalorder %s43, %s45
    %p49 = scmp.eq.s32.totalorder %s9, 0
    %p50 = por %p48, %p49
    %p51 = scmp.ne.s32.totalorder %s43, %s45
    %p52 = scmp.eq.s32.totalorder %s14, 1
    %p53 = por %p51, %p52
    %p54 = scmp.ne.s32.totalorder %s45, %s46
    %p55 = scmp.eq.s32.totalorder %s14, 0
    %p56 = por %p54, %p55
    %p57 = scmp.ne.s32.totalorder %s45, %s46
    %p58 = scmp.eq.s32.totalorder %s15, 1
    %p59 = por %p57, %p58
    %p61 = scmp.ne.s32.totalorder %s46, %s60
    %p62 = scmp.eq.s32.totalorder %s15, 0
    %p63 = por %p61, %p62
    %s65 = sadd.s32 %s64, 1
    %p68 = scmp.eq.s32.totalorder %s9, 1
    %p69 = scmp.ne.s32.totalorder %s64, %s66
    %p70 = scmp.eq.s32.totalorder %s9, 0
    %p71 = por %p69, %p70
    %p72 = scmp.ne.s32.totalorder %s64, %s66
    %p73 = scmp.eq.s32.totalorder %s14, 1
    %p74 = por %p72, %p73
    %p75 = scmp.ne.s32.totalorder %s66, %s67
    %p76 = scmp.eq.s32.totalorder %s14, 0
    %p77 = por %p75, %p76
    %p78 = scmp.ne.s32.totalorder %s66, %s67
    %p79 = scmp.eq.s32.totalorder %s15, 1
    %p80 = por %p78, %p79
    %p82 = scmp.ne.s32.totalorder %s67, %s81
    %p83 = scmp.eq.s32.totalorder %s15, 0
    %p84 = por %p82, %p83
    %s85 = ssub.s32 %s9, %s16
    %p86 = scmp.eq.s32.totalorder %s85, 0
    %s88 = sadd.s32 %s87, 1
    %s89 = scalar_select %p86, %s87, %s88
    %p92 = pneg %p86
    %p93 = scmp.eq.s32.totalorder %s9, 1
    %p94 = por %p92, %p93
    %p95 = scmp.ne.s32.totalorder %s87, %s90
    %p96 = scmp.eq.s32.totalorder %s9, 0
    %p97 = por %p95, %p96
    %p98 = scmp.ne.s32.totalorder %s87, %s90
    %p99 = scmp.eq.s32.totalorder %s14, 1
    %p100 = por %p98, %p99
    %p101 = scmp.ne.s32.totalorder %s90, %s91
    %p102 = scmp.eq.s32.totalorder %s14, 0
    %p103 = por %p101, %p102
    %p104 = scmp.ne.s32.totalorder %s90, %s91
    %p105 = scmp.eq.s32.totalorder %s15, 1
    %p106 = por %p104, %p105
    %p108 = scmp.ne.s32.totalorder %s91, %s107
    %p109 = scmp.eq.s32.totalorder %s15, 0
    %p110 = por %p108, %p109
    %p111 = scmp.le.s32.totalorder 1, %s9
    %p112 = scmp.lt.s32.totalorder %s9, 3
    %p113 = pnand %p111, %p112
    %p114 = pneg %p113
    // Predicated region
    $region9: #{define_d_forward.9} parent=5 // pred_check
      _
    $region10: #{define_d_forward.9} parent=5 // pred_check_branch
      %116 = sbr.rel (%p113) target = $region12
    $region11: #{define_d_forward.9} parent=5 // pred_region
      %s117 = ssub.s32 %s9, 1
      // Predicated region
      $region13: #{define_d_forward.9} parent=11 // pred_check
        %p118 = pneg %p56
      $region14: #{define_d_forward.9} parent=11 // pred_check_branch
        %120 = sbr.rel (%p118) target = $region16
      $region15: #{define_d_forward.9} parent=11 // pred_region
        _
      $region16: #{define_d_forward.9} parent=11 // pred_fallthru
        _
      // Predicated region
      $region17: #{define_d_forward.9} parent=11 // pred_check
        %p121 = pneg %p77
      $region18: #{define_d_forward.9} parent=11 // pred_check_branch
        %123 = sbr.rel (%p121) target = $region20
      $region19: #{define_d_forward.9} parent=11 // pred_region
        _
      $region20: #{define_d_forward.9} parent=11 // pred_fallthru
        _
    $region12: #{define_d_forward.9} parent=5 // pred_fallthru
      _
    %p124 = scmp.lt.s32.totalorder %s9, 2
    // Predicated region
    $region21: #{define_d_forward.9} parent=5 // pred_check
      %p125 = pneg %p124
    $region22: #{define_d_forward.9} parent=5 // pred_check_branch
      %127 = sbr.rel (%p125) target = $region24
    $region23: #{define_d_forward.9} parent=5 // pred_region
      // Predicated region
      $region25: #{define_d_forward.9} parent=23 // pred_check
        %p128 = pneg %p29
      $region26: #{define_d_forward.9} parent=23 // pred_check_branch
        %130 = sbr.rel (%p128) target = $region28
      $region27: #{define_d_forward.9} parent=23 // pred_region
        %p131 = scmp.lt.s32.totalorder %s9, 1
        %s132 = scalar_select %p131, %s9, 1
        %s133 = smul.addr %s132, 16
        %s134 = smul.addr %s133, 2
        %s135 = scalar_lea.vmem %s0, %s134
      $region28: #{define_d_forward.9} parent=23 // pred_fallthru
        _
    $region24: #{define_d_forward.9} parent=5 // pred_fallthru
      _
    %p136 = scmp.le.s32.totalorder 1, %s9
    %p137 = scmp.lt.s32.totalorder %s9, 3
    %p138 = pnand %p136, %p137
    %p139 = pneg %p138
    // Predicated region
    $region29: #{define_d_forward.9} parent=5 // pred_check
      _
    $region30: #{define_d_forward.9} parent=5 // pred_check_branch
      %141 = sbr.rel (%p138) target = $region32
    $region31: #{define_d_forward.9} parent=5 // pred_region
      %s142 = ssub.s32 %s9, 1
      %p143 = scmp.lt.s32.totalorder %s14, 1
      %s144 = scalar_select %p143, %s14, 1
      %s145 = smul.addr %s144, 16
      %s146 = smul.addr %s145, 2
      %s147 = scalar_lea.vmem %s0, %s146
      %p148 = pneg %p35
      %p149 = pneg %p32
      %p150 = pneg %p56
      %p151 = pneg %p53
      %p152 = pneg %p77
      %p153 = pneg %p74
      %p154 = pneg %p103
      %p155 = pneg %p100
      %p156 = scmp.lt.s32.totalorder %s14, 1
      %s157 = scalar_select %p156, %s14, 1
      %s158 = smul.addr %s157, 4
      %s159 = scalar_lea.vmem %s3, %s158
      %p160 = scmp.lt.s32.totalorder %s14, 1
      %s161 = scalar_select %p160, %s14, 1
      %s162 = smul.addr %s161, 16
      %s163 = smul.addr %s162, 2
      %s164 = scalar_lea.vmem %s0, %s163
      %p165 = scmp.lt.s32.totalorder %s14, 1
      %s166 = scalar_select %p165, %s14, 1
      %s167 = smul.addr %s166, 4
      %s168 = scalar_lea.vmem %s3, %s167
      %v170 = vld [vmem:[%s164] sm:$0xff]
      %v171 = vld [vmem:[%s164 + $0x8] sm:$0xff]
      %v172 = vld [vmem:[%s164 + $0x10] sm:$0xff]
      %v173 = vld [vmem:[%s164 + $0x18] sm:$0xff]
      %v174 = vld [vmem:[%s1] sm:$0xf]
      %v175 = vld [vmem:[%s1 + $0x4] sm:$0xf]
      %v176 = vld [vmem:[%s1 + $0x8] sm:$0xf]
      %v177 = vld [vmem:[%s1 + $0xc] sm:$0xf]
      %v178 = vld [vmem:[%s1 + $0x10] sm:$0xf]
      %v179 = vld [vmem:[%s1 + $0x14] sm:$0xf]
      %v180 = vld [vmem:[%s1 + $0x18] sm:$0xf]
      %v181 = vld [vmem:[%s1 + $0x1c] sm:$0xf]
      %v182 = vld [vmem:[%s1 + $0x20] sm:$0xf]
      %v183 = vld [vmem:[%s1 + $0x24] sm:$0xf]
      %v184 = vld [vmem:[%s1 + $0x28] sm:$0xf]
      %v185 = vld [vmem:[%s1 + $0x2c] sm:$0xf]
      %v186 = vld [vmem:[%s1 + $0x30] sm:$0xf]
      %v187 = vld [vmem:[%s1 + $0x34] sm:$0xf]
      %v188 = vld [vmem:[%s1 + $0x38] sm:$0xf]
      %v189 = vld [vmem:[%s1 + $0x3c] sm:$0xf]
      %v190 = vld [vmem:[%s1 + $0x40] sm:$0xf]
      %v191 = vld [vmem:[%s1 + $0x44] sm:$0xf]
      %v192 = vld [vmem:[%s1 + $0x48] sm:$0xf]
      %v193 = vld [vmem:[%s1 + $0x4c] sm:$0xf]
      %v194 = vld [vmem:[%s1 + $0x50] sm:$0xf]
      %v195 = vld [vmem:[%s1 + $0x54] sm:$0xf]
      %v196 = vld [vmem:[%s1 + $0x58] sm:$0xf]
      %v197 = vld [vmem:[%s1 + $0x5c] sm:$0xf]
      %v198 = vld [vmem:[%s1 + $0x60] sm:$0xf]
      %v199 = vld [vmem:[%s1 + $0x64] sm:$0xf]
      %v200 = vld [vmem:[%s1 + $0x68] sm:$0xf]
      %v201 = vld [vmem:[%s1 + $0x6c] sm:$0xf]
      %v202 = vld [vmem:[%s1 + $0x70] sm:$0xf]
      %v203 = vld [vmem:[%s1 + $0x74] sm:$0xf]
      %v204 = vld [vmem:[%s1 + $0x78] sm:$0xf]
      %v205 = vld [vmem:[%s1 + $0x7c] sm:$0xf]
      %v206 = vld [vmem:[%s1 + $0x80] sm:$0xf]
      %v207 = vld [vmem:[%s1 + $0x84] sm:$0xf]
      %v208 = vld [vmem:[%s1 + $0x88] sm:$0xf]
      %v209 = vld [vmem:[%s1 + $0x8c] sm:$0xf]
      %v210 = vld [vmem:[%s1 + $0x90] sm:$0xf]
      %v211 = vld [vmem:[%s1 + $0x94] sm:$0xf]
      %v212 = vld [vmem:[%s1 + $0x98] sm:$0xf]
      %v213 = vld [vmem:[%s1 + $0x9c] sm:$0xf]
      %v214 = vld [vmem:[%s1 + $0xa0] sm:$0xf]
      %v215 = vld [vmem:[%s1 + $0xa4] sm:$0xf]
      %v216 = vld [vmem:[%s1 + $0xa8] sm:$0xf]
      %v217 = vld [vmem:[%s1 + $0xac] sm:$0xf]
      %v218 = vld [vmem:[%s1 + $0xb0] sm:$0xf]
      %v219 = vld [vmem:[%s1 + $0xb4] sm:$0xf]
      %v220 = vld [vmem:[%s1 + $0xb8] sm:$0xf]
      %v221 = vld [vmem:[%s1 + $0xbc] sm:$0xf]
      %v222 = vld [vmem:[%s1 + $0xc0] sm:$0xf]
      %v223 = vld [vmem:[%s1 + $0xc4] sm:$0xf]
      %v224 = vld [vmem:[%s1 + $0xc8] sm:$0xf]
      %v225 = vld [vmem:[%s1 + $0xcc] sm:$0xf]
      %v226 = vld [vmem:[%s1 + $0xd0] sm:$0xf]
      %v227 = vld [vmem:[%s1 + $0xd4] sm:$0xf]
      %v228 = vld [vmem:[%s1 + $0xd8] sm:$0xf]
      %v229 = vld [vmem:[%s1 + $0xdc] sm:$0xf]
      %v230 = vld [vmem:[%s1 + $0xe0] sm:$0xf]
      %v231 = vld [vmem:[%s1 + $0xe4] sm:$0xf]
      %v232 = vld [vmem:[%s1 + $0xe8] sm:$0xf]
      %v233 = vld [vmem:[%s1 + $0xec] sm:$0xf]
      %v234 = vld [vmem:[%s1 + $0xf0] sm:$0xf]
      %v235 = vld [vmem:[%s1 + $0xf4] sm:$0xf]
      %v236 = vld [vmem:[%s1 + $0xf8] sm:$0xf]
      %v237 = vld [vmem:[%s1 + $0xfc] sm:$0xf]
      %v238 = vld [vmem:[%s1 + $0x100] sm:$0xf]
      %v239 = vld [vmem:[%s1 + $0x104] sm:$0xf]
      %v240 = vld [vmem:[%s1 + $0x108] sm:$0xf]
      %v241 = vld [vmem:[%s1 + $0x10c] sm:$0xf]
      %v242 = vld [vmem:[%s1 + $0x110] sm:$0xf]
      %v243 = vld [vmem:[%s1 + $0x114] sm:$0xf]
      %v244 = vld [vmem:[%s1 + $0x118] sm:$0xf]
      %v245 = vld [vmem:[%s1 + $0x11c] sm:$0xf]
      %v246 = vld [vmem:[%s1 + $0x120] sm:$0xf]
      %v247 = vld [vmem:[%s1 + $0x124] sm:$0xf]
      %v248 = vld [vmem:[%s1 + $0x128] sm:$0xf]
      %v249 = vld [vmem:[%s1 + $0x12c] sm:$0xf]
      %v250 = vld [vmem:[%s1 + $0x130] sm:$0xf]
      %v251 = vld [vmem:[%s1 + $0x134] sm:$0xf]
      %v252 = vld [vmem:[%s1 + $0x138] sm:$0xf]
      %v253 = vld [vmem:[%s1 + $0x13c] sm:$0xf]
      %v254 = vld [vmem:[%s1 + $0x140] sm:$0xf]
      %v255 = vld [vmem:[%s1 + $0x144] sm:$0xf]
      %v256 = vld [vmem:[%s1 + $0x148] sm:$0xf]
      %v257 = vld [vmem:[%s1 + $0x14c] sm:$0xf]
      %v258 = vld [vmem:[%s1 + $0x150] sm:$0xf]
      %v259 = vld [vmem:[%s1 + $0x154] sm:$0xf]
      %v260 = vld [vmem:[%s1 + $0x158] sm:$0xf]
      %v261 = vld [vmem:[%s1 + $0x15c] sm:$0xf]
      %v262 = vld [vmem:[%s1 + $0x160] sm:$0xf]
      %v263 = vld [vmem:[%s1 + $0x164] sm:$0xf]
      %v264 = vld [vmem:[%s1 + $0x168] sm:$0xf]
      %v265 = vld [vmem:[%s1 + $0x16c] sm:$0xf]
      %v266 = vld [vmem:[%s1 + $0x170] sm:$0xf]
      %v267 = vld [vmem:[%s1 + $0x174] sm:$0xf]
      %v268 = vld [vmem:[%s1 + $0x178] sm:$0xf]
      %v269 = vld [vmem:[%s1 + $0x17c] sm:$0xf]
      %v270 = vld [vmem:[%s1 + $0x180] sm:$0xf]
      %v271 = vld [vmem:[%s1 + $0x184] sm:$0xf]
      %v272 = vld [vmem:[%s1 + $0x188] sm:$0xf]
      %v273 = vld [vmem:[%s1 + $0x18c] sm:$0xf]
      %v274 = vld [vmem:[%s1 + $0x190] sm:$0xf]
      %v275 = vld [vmem:[%s1 + $0x194] sm:$0xf]
      %v276 = vld [vmem:[%s1 + $0x198] sm:$0xf]
      %v277 = vld [vmem:[%s1 + $0x19c] sm:$0xf]
      %v278 = vld [vmem:[%s1 + $0x1a0] sm:$0xf]
      %v279 = vld [vmem:[%s1 + $0x1a4] sm:$0xf]
      %v280 = vld [vmem:[%s1 + $0x1a8] sm:$0xf]
      %v281 = vld [vmem:[%s1 + $0x1ac] sm:$0xf]
      %v282 = vld [vmem:[%s1 + $0x1b0] sm:$0xf]
      %v283 = vld [vmem:[%s1 + $0x1b4] sm:$0xf]
      %v284 = vld [vmem:[%s1 + $0x1b8] sm:$0xf]
      %v285 = vld [vmem:[%s1 + $0x1bc] sm:$0xf]
      %v286 = vld [vmem:[%s1 + $0x1c0] sm:$0xf]
      %v287 = vld [vmem:[%s1 + $0x1c4] sm:$0xf]
      %v288 = vld [vmem:[%s1 + $0x1c8] sm:$0xf]
      %v289 = vld [vmem:[%s1 + $0x1cc] sm:$0xf]
      %v290 = vld [vmem:[%s1 + $0x1d0] sm:$0xf]
      %v291 = vld [vmem:[%s1 + $0x1d4] sm:$0xf]
      %v292 = vld [vmem:[%s1 + $0x1d8] sm:$0xf]
      %v293 = vld [vmem:[%s1 + $0x1dc] sm:$0xf]
      %v294 = vld [vmem:[%s1 + $0x1e0] sm:$0xf]
      %v295 = vld [vmem:[%s1 + $0x1e4] sm:$0xf]
      %v296 = vld [vmem:[%s1 + $0x1e8] sm:$0xf]
      %v297 = vld [vmem:[%s1 + $0x1ec] sm:$0xf]
      %v298 = vld [vmem:[%s1 + $0x1f0] sm:$0xf]
      %v299 = vld [vmem:[%s1 + $0x1f4] sm:$0xf]
      %v300 = vld [vmem:[%s1 + $0x1f8] sm:$0xf]
      %v301 = vld [vmem:[%s1 + $0x1fc] sm:$0xf]
      %v302 = vld [vmem:[%s1 + $0x200] sm:$0xf]
      %v303 = vld [vmem:[%s1 + $0x204] sm:$0xf]
      %v304 = vld [vmem:[%s1 + $0x208] sm:$0xf]
      %v305 = vld [vmem:[%s1 + $0x20c] sm:$0xf]
      %v306 = vld [vmem:[%s1 + $0x210] sm:$0xf]
      %v307 = vld [vmem:[%s1 + $0x214] sm:$0xf]
      %v308 = vld [vmem:[%s1 + $0x218] sm:$0xf]
      %v309 = vld [vmem:[%s1 + $0x21c] sm:$0xf]
      %v310 = vld [vmem:[%s1 + $0x220] sm:$0xf]
      %v311 = vld [vmem:[%s1 + $0x224] sm:$0xf]
      %v312 = vld [vmem:[%s1 + $0x228] sm:$0xf]
      %v313 = vld [vmem:[%s1 + $0x22c] sm:$0xf]
      %v314 = vld [vmem:[%s1 + $0x230] sm:$0xf]
      %v315 = vld [vmem:[%s1 + $0x234] sm:$0xf]
      %v316 = vld [vmem:[%s1 + $0x238] sm:$0xf]
      %v317 = vld [vmem:[%s1 + $0x23c] sm:$0xf]
      %v318 = vld [vmem:[%s1 + $0x240] sm:$0xf]
      %v319 = vld [vmem:[%s1 + $0x244] sm:$0xf]
      %v320 = vld [vmem:[%s1 + $0x248] sm:$0xf]
      %v321 = vld [vmem:[%s1 + $0x24c] sm:$0xf]
      %v322 = vld [vmem:[%s1 + $0x250] sm:$0xf]
      %v323 = vld [vmem:[%s1 + $0x254] sm:$0xf]
      %v324 = vld [vmem:[%s1 + $0x258] sm:$0xf]
      %v325 = vld [vmem:[%s1 + $0x25c] sm:$0xf]
      %v326 = vld [vmem:[%s1 + $0x260] sm:$0xf]
      %v327 = vld [vmem:[%s1 + $0x264] sm:$0xf]
      %v328 = vld [vmem:[%s1 + $0x268] sm:$0xf]
      %v329 = vld [vmem:[%s1 + $0x26c] sm:$0xf]
      %v330 = vld [vmem:[%s1 + $0x270] sm:$0xf]
      %v331 = vld [vmem:[%s1 + $0x274] sm:$0xf]
      %v332 = vld [vmem:[%s1 + $0x278] sm:$0xf]
      %v333 = vld [vmem:[%s1 + $0x27c] sm:$0xf]
      %v334 = vld [vmem:[%s1 + $0x280] sm:$0xf]
      %v335 = vld [vmem:[%s1 + $0x284] sm:$0xf]
      %v336 = vld [vmem:[%s1 + $0x288] sm:$0xf]
      %v337 = vld [vmem:[%s1 + $0x28c] sm:$0xf]
      %v338 = vld [vmem:[%s1 + $0x290] sm:$0xf]
      %v339 = vld [vmem:[%s1 + $0x294] sm:$0xf]
      %v340 = vld [vmem:[%s1 + $0x298] sm:$0xf]
      %v341 = vld [vmem:[%s1 + $0x29c] sm:$0xf]
      %v342 = vld [vmem:[%s1 + $0x2a0] sm:$0xf]
      %v343 = vld [vmem:[%s1 + $0x2a4] sm:$0xf]
      %v344 = vld [vmem:[%s1 + $0x2a8] sm:$0xf]
      %v345 = vld [vmem:[%s1 + $0x2ac] sm:$0xf]
      %v346 = vld [vmem:[%s1 + $0x2b0] sm:$0xf]
      %v347 = vld [vmem:[%s1 + $0x2b4] sm:$0xf]
      %v348 = vld [vmem:[%s1 + $0x2b8] sm:$0xf]
      %v349 = vld [vmem:[%s1 + $0x2bc] sm:$0xf]
      %v350 = vld [vmem:[%s1 + $0x2c0] sm:$0xf]
      %v351 = vld [vmem:[%s1 + $0x2c4] sm:$0xf]
      %v352 = vld [vmem:[%s1 + $0x2c8] sm:$0xf]
      %v353 = vld [vmem:[%s1 + $0x2cc] sm:$0xf]
      %v354 = vld [vmem:[%s1 + $0x2d0] sm:$0xf]
      %v355 = vld [vmem:[%s1 + $0x2d4] sm:$0xf]
      %v356 = vld [vmem:[%s1 + $0x2d8] sm:$0xf]
      %v357 = vld [vmem:[%s1 + $0x2dc] sm:$0xf]
      %v358 = vld [vmem:[%s1 + $0x2e0] sm:$0xf]
      %v359 = vld [vmem:[%s1 + $0x2e4] sm:$0xf]
      %v360 = vld [vmem:[%s1 + $0x2e8] sm:$0xf]
      %v361 = vld [vmem:[%s1 + $0x2ec] sm:$0xf]
      %v362 = vld [vmem:[%s1 + $0x2f0] sm:$0xf]
      %v363 = vld [vmem:[%s1 + $0x2f4] sm:$0xf]
      %v364 = vld [vmem:[%s1 + $0x2f8] sm:$0xf]
      %v365 = vld [vmem:[%s1 + $0x2fc] sm:$0xf]
      %v366 = vld [vmem:[%s1 + $0x300] sm:$0xf]
      %v367 = vld [vmem:[%s1 + $0x304] sm:$0xf]
      %v368 = vld [vmem:[%s1 + $0x308] sm:$0xf]
      %v369 = vld [vmem:[%s1 + $0x30c] sm:$0xf]
      %v370 = vld [vmem:[%s1 + $0x310] sm:$0xf]
      %v371 = vld [vmem:[%s1 + $0x314] sm:$0xf]
      %v372 = vld [vmem:[%s1 + $0x318] sm:$0xf]
      %v373 = vld [vmem:[%s1 + $0x31c] sm:$0xf]
      %v374 = vld [vmem:[%s1 + $0x320] sm:$0xf]
      %v375 = vld [vmem:[%s1 + $0x324] sm:$0xf]
      %v376 = vld [vmem:[%s1 + $0x328] sm:$0xf]
      %v377 = vld [vmem:[%s1 + $0x32c] sm:$0xf]
      %v378 = vld [vmem:[%s1 + $0x330] sm:$0xf]
      %v379 = vld [vmem:[%s1 + $0x334] sm:$0xf]
      %v380 = vld [vmem:[%s1 + $0x338] sm:$0xf]
      %v381 = vld [vmem:[%s1 + $0x33c] sm:$0xf]
      %v382 = vld [vmem:[%s1 + $0x340] sm:$0xf]
      %v383 = vld [vmem:[%s1 + $0x344] sm:$0xf]
      %v384 = vld [vmem:[%s1 + $0x348] sm:$0xf]
      %v385 = vld [vmem:[%s1 + $0x34c] sm:$0xf]
      %v386 = vld [vmem:[%s1 + $0x350] sm:$0xf]
      %v387 = vld [vmem:[%s1 + $0x354] sm:$0xf]
      %v388 = vld [vmem:[%s1 + $0x358] sm:$0xf]
      %v389 = vld [vmem:[%s1 + $0x35c] sm:$0xf]
      %v390 = vld [vmem:[%s1 + $0x360] sm:$0xf]
      %v391 = vld [vmem:[%s1 + $0x364] sm:$0xf]
      %v392 = vld [vmem:[%s1 + $0x368] sm:$0xf]
      %v393 = vld [vmem:[%s1 + $0x36c] sm:$0xf]
      %v394 = vld [vmem:[%s1 + $0x370] sm:$0xf]
      %v395 = vld [vmem:[%s1 + $0x374] sm:$0xf]
      %v396 = vld [vmem:[%s1 + $0x378] sm:$0xf]
      %v397 = vld [vmem:[%s1 + $0x37c] sm:$0xf]
      %v398 = vld [vmem:[%s1 + $0x380] sm:$0xf]
      %v399 = vld [vmem:[%s1 + $0x384] sm:$0xf]
      %v400 = vld [vmem:[%s1 + $0x388] sm:$0xf]
      %v401 = vld [vmem:[%s1 + $0x38c] sm:$0xf]
      %v402 = vld [vmem:[%s1 + $0x390] sm:$0xf]
      %v403 = vld [vmem:[%s1 + $0x394] sm:$0xf]
      %v404 = vld [vmem:[%s1 + $0x398] sm:$0xf]
      %v405 = vld [vmem:[%s1 + $0x39c] sm:$0xf]
      %v406 = vld [vmem:[%s1 + $0x3a0] sm:$0xf]
      %v407 = vld [vmem:[%s1 + $0x3a4] sm:$0xf]
      %v408 = vld [vmem:[%s1 + $0x3a8] sm:$0xf]
      %v409 = vld [vmem:[%s1 + $0x3ac] sm:$0xf]
      %v410 = vld [vmem:[%s1 + $0x3b0] sm:$0xf]
      %v411 = vld [vmem:[%s1 + $0x3b4] sm:$0xf]
      %v412 = vld [vmem:[%s1 + $0x3b8] sm:$0xf]
      %v413 = vld [vmem:[%s1 + $0x3bc] sm:$0xf]
      %v414 = vld [vmem:[%s1 + $0x3c0] sm:$0xf]
      %v415 = vld [vmem:[%s1 + $0x3c4] sm:$0xf]
      %v416 = vld [vmem:[%s1 + $0x3c8] sm:$0xf]
      %v417 = vld [vmem:[%s1 + $0x3cc] sm:$0xf]
      %v418 = vld [vmem:[%s1 + $0x3d0] sm:$0xf]
      %v419 = vld [vmem:[%s1 + $0x3d4] sm:$0xf]
      %v420 = vld [vmem:[%s1 + $0x3d8] sm:$0xf]
      %v421 = vld [vmem:[%s1 + $0x3dc] sm:$0xf]
      %v422 = vld [vmem:[%s1 + $0x3e0] sm:$0xf]
      %v423 = vld [vmem:[%s1 + $0x3e4] sm:$0xf]
      %v424 = vld [vmem:[%s1 + $0x3e8] sm:$0xf]
      %v425 = vld [vmem:[%s1 + $0x3ec] sm:$0xf]
      %v426 = vld [vmem:[%s1 + $0x3f0] sm:$0xf]
      %v427 = vld [vmem:[%s1 + $0x3f4] sm:$0xf]
      %v428 = vld [vmem:[%s1 + $0x3f8] sm:$0xf]
      %v429 = vld [vmem:[%s1 + $0x3fc] sm:$0xf]
      %v430 = vld [vmem:[%s2] sm:$0x1]
      %v432 = vlaneseq
      %v433 = vshrl.u32 %v432, 7
      %v434 = vsub.s32 0, %v433
      %v435 = vrot.slane %v430, %v434
      %v441 = vcombine.high %v170, %v170
      %v443 = vunpack.c.l.s4 1983009808
      %v444 = vunpack.c.0.s8 %v443
      %v445 = vlaneseq
      %v446 = vshrl.u32 %v445, 7
      %v447 = vsub.s32 %v444, %v446
      %v448 = vrot.slane %v170, %v447
      %v450 = vunpack.c.l.s4 1983009808
      %v451 = vunpack.c.0.s8 %v450
      %v452 = vlaneseq
      %v453 = vshrl.u32 %v452, 7
      %v454 = vsub.s32 %v451, %v453
      %v455 = vrot.slane %v441, %v454
      %v456 = vcombine.high %v448, %v448
      %v457 = vcombine.high %v455, %v455
      %v458 = vcombine.high %v171, %v171
      %v460 = vunpack.c.l.s4 1983009808
      %v461 = vunpack.c.0.s8 %v460
      %v462 = vlaneseq
      %v463 = vshrl.u32 %v462, 7
      %v464 = vsub.s32 %v461, %v463
      %v465 = vrot.slane %v171, %v464
      %v467 = vunpack.c.l.s4 1983009808
      %v468 = vunpack.c.0.s8 %v467
      %v469 = vlaneseq
      %v470 = vshrl.u32 %v469, 7
      %v471 = vsub.s32 %v468, %v470
      %v472 = vrot.slane %v458, %v471
      %v473 = vcombine.high %v465, %v465
      %v474 = vcombine.high %v472, %v472
      %v475 = vcombine.high %v172, %v172
      %v477 = vunpack.c.l.s4 1983009808
      %v478 = vunpack.c.0.s8 %v477
      %v479 = vlaneseq
      %v480 = vshrl.u32 %v479, 7
      %v481 = vsub.s32 %v478, %v480
      %v482 = vrot.slane %v172, %v481
      %v484 = vunpack.c.l.s4 1983009808
      %v485 = vunpack.c.0.s8 %v484
      %v486 = vlaneseq
      %v487 = vshrl.u32 %v486, 7
      %v488 = vsub.s32 %v485, %v487
      %v489 = vrot.slane %v475, %v488
      %v490 = vcombine.high %v482, %v482
      %v491 = vcombine.high %v489, %v489
      %v492 = vcombine.high %v173, %v173
      %v494 = vunpack.c.l.s4 1983009808
      %v495 = vunpack.c.0.s8 %v494
      %v496 = vlaneseq
      %v497 = vshrl.u32 %v496, 7
      %v498 = vsub.s32 %v495, %v497
      %v499 = vrot.slane %v173, %v498
      %v501 = vunpack.c.l.s4 1983009808
      %v502 = vunpack.c.0.s8 %v501
      %v503 = vlaneseq
      %v504 = vshrl.u32 %v503, 7
      %v505 = vsub.s32 %v502, %v504
      %v506 = vrot.slane %v492, %v505
      %v507 = vcombine.high %v499, %v499
      %v508 = vcombine.high %v506, %v506
      %v781 = vunpack.c.l.b16 %v174
      %v782 = vunpack.c.l.b16 %v175
      %v783 = vunpack.c.l.b16 %v176
      %v784 = vunpack.c.l.b16 %v177
      %v785 = vunpack.c.l.b16 %v178
      %v786 = vunpack.c.l.b16 %v179
      %v787 = vunpack.c.l.b16 %v180
      %v788 = vunpack.c.l.b16 %v181
      %v789 = vunpack.c.l.b16 %v182
      %v790 = vunpack.c.l.b16 %v183
      %v791 = vunpack.c.l.b16 %v184
      %v792 = vunpack.c.l.b16 %v185
      %v793 = vunpack.c.l.b16 %v186
      %v794 = vunpack.c.l.b16 %v187
      %v795 = vunpack.c.l.b16 %v188
      %v796 = vunpack.c.l.b16 %v189
      %v797 = vunpack.c.l.b16 %v190
      %v798 = vunpack.c.l.b16 %v191
      %v799 = vunpack.c.l.b16 %v192
      %v800 = vunpack.c.l.b16 %v193
      %v801 = vunpack.c.l.b16 %v194
      %v802 = vunpack.c.l.b16 %v195
      %v803 = vunpack.c.l.b16 %v196
      %v804 = vunpack.c.l.b16 %v197
      %v805 = vunpack.c.l.b16 %v198
      %v806 = vunpack.c.l.b16 %v199
      %v807 = vunpack.c.l.b16 %v200
      %v808 = vunpack.c.l.b16 %v201
      %v809 = vunpack.c.l.b16 %v202
      %v810 = vunpack.c.l.b16 %v203
      %v811 = vunpack.c.l.b16 %v204
      %v812 = vunpack.c.l.b16 %v205
      %v813 = vunpack.c.l.b16 %v206
      %v814 = vunpack.c.l.b16 %v207
      %v815 = vunpack.c.l.b16 %v208
      %v816 = vunpack.c.l.b16 %v209
      %v817 = vunpack.c.l.b16 %v210
      %v818 = vunpack.c.l.b16 %v211
      %v819 = vunpack.c.l.b16 %v212
      %v820 = vunpack.c.l.b16 %v213
      %v821 = vunpack.c.l.b16 %v214
      %v822 = vunpack.c.l.b16 %v215
      %v823 = vunpack.c.l.b16 %v216
      %v824 = vunpack.c.l.b16 %v217
      %v825 = vunpack.c.l.b16 %v218
      %v826 = vunpack.c.l.b16 %v219
      %v827 = vunpack.c.l.b16 %v220
      %v828 = vunpack.c.l.b16 %v221
      %v829 = vunpack.c.l.b16 %v222
      %v830 = vunpack.c.l.b16 %v223
      %v831 = vunpack.c.l.b16 %v224
      %v832 = vunpack.c.l.b16 %v225
      %v833 = vunpack.c.l.b16 %v226
      %v834 = vunpack.c.l.b16 %v227
      %v835 = vunpack.c.l.b16 %v228
      %v836 = vunpack.c.l.b16 %v229
      %v837 = vunpack.c.l.b16 %v230
      %v838 = vunpack.c.l.b16 %v231
      %v839 = vunpack.c.l.b16 %v232
      %v840 = vunpack.c.l.b16 %v233
      %v841 = vunpack.c.l.b16 %v234
      %v842 = vunpack.c.l.b16 %v235
      %v843 = vunpack.c.l.b16 %v236
      %v844 = vunpack.c.l.b16 %v237
      %v845 = vunpack.c.l.b16 %v238
      %v846 = vunpack.c.l.b16 %v239
      %v847 = vunpack.c.l.b16 %v240
      %v848 = vunpack.c.l.b16 %v241
      %v849 = vunpack.c.l.b16 %v242
      %v850 = vunpack.c.l.b16 %v243
      %v851 = vunpack.c.l.b16 %v244
      %v852 = vunpack.c.l.b16 %v245
      %v853 = vunpack.c.l.b16 %v246
      %v854 = vunpack.c.l.b16 %v247
      %v855 = vunpack.c.l.b16 %v248
      %v856 = vunpack.c.l.b16 %v249
      %v857 = vunpack.c.l.b16 %v250
      %v858 = vunpack.c.l.b16 %v251
      %v859 = vunpack.c.l.b16 %v252
      %v860 = vunpack.c.l.b16 %v253
      %v861 = vunpack.c.l.b16 %v254
      %v862 = vunpack.c.l.b16 %v255
      %v863 = vunpack.c.l.b16 %v256
      %v864 = vunpack.c.l.b16 %v257
      %v865 = vunpack.c.l.b16 %v258
      %v866 = vunpack.c.l.b16 %v259
      %v867 = vunpack.c.l.b16 %v260
      %v868 = vunpack.c.l.b16 %v261
      %v869 = vunpack.c.l.b16 %v262
      %v870 = vunpack.c.l.b16 %v263
      %v871 = vunpack.c.l.b16 %v264
      %v872 = vunpack.c.l.b16 %v265
      %v873 = vunpack.c.l.b16 %v266
      %v874 = vunpack.c.l.b16 %v267
      %v875 = vunpack.c.l.b16 %v268
      %v876 = vunpack.c.l.b16 %v269
      %v877 = vunpack.c.l.b16 %v270
      %v878 = vunpack.c.l.b16 %v271
      %v879 = vunpack.c.l.b16 %v272
      %v880 = vunpack.c.l.b16 %v273
      %v881 = vunpack.c.l.b16 %v274
      %v882 = vunpack.c.l.b16 %v275
      %v883 = vunpack.c.l.b16 %v276
      %v884 = vunpack.c.l.b16 %v277
      %v885 = vunpack.c.l.b16 %v278
      %v886 = vunpack.c.l.b16 %v279
      %v887 = vunpack.c.l.b16 %v280
      %v888 = vunpack.c.l.b16 %v281
      %v889 = vunpack.c.l.b16 %v282
      %v890 = vunpack.c.l.b16 %v283
      %v891 = vunpack.c.l.b16 %v284
      %v892 = vunpack.c.l.b16 %v285
      %v893 = vunpack.c.l.b16 %v286
      %v894 = vunpack.c.l.b16 %v287
      %v895 = vunpack.c.l.b16 %v288
      %v896 = vunpack.c.l.b16 %v289
      %v897 = vunpack.c.l.b16 %v290
      %v898 = vunpack.c.l.b16 %v291
      %v899 = vunpack.c.l.b16 %v292
      %v900 = vunpack.c.l.b16 %v293
      %v901 = vunpack.c.l.b16 %v294
      %v902 = vunpack.c.l.b16 %v295
      %v903 = vunpack.c.l.b16 %v296
      %v904 = vunpack.c.l.b16 %v297
      %v905 = vunpack.c.l.b16 %v298
      %v906 = vunpack.c.l.b16 %v299
      %v907 = vunpack.c.l.b16 %v300
      %v908 = vunpack.c.l.b16 %v301
      %v909 = vunpack.c.l.b16 %v302
      %v910 = vunpack.c.l.b16 %v303
      %v911 = vunpack.c.l.b16 %v304
      %v912 = vunpack.c.l.b16 %v305
      %v913 = vunpack.c.l.b16 %v306
      %v914 = vunpack.c.l.b16 %v307
      %v915 = vunpack.c.l.b16 %v308
      %v916 = vunpack.c.l.b16 %v309
      %v917 = vunpack.c.l.b16 %v310
      %v918 = vunpack.c.l.b16 %v311
      %v919 = vunpack.c.l.b16 %v312
      %v920 = vunpack.c.l.b16 %v313
      %v921 = vunpack.c.l.b16 %v314
      %v922 = vunpack.c.l.b16 %v315
      %v923 = vunpack.c.l.b16 %v316
      %v924 = vunpack.c.l.b16 %v317
      %v925 = vunpack.c.l.b16 %v318
      %v926 = vunpack.c.l.b16 %v319
      %v927 = vunpack.c.l.b16 %v320
      %v928 = vunpack.c.l.b16 %v321
      %v929 = vunpack.c.l.b16 %v322
      %v930 = vunpack.c.l.b16 %v323
      %v931 = vunpack.c.l.b16 %v324
      %v932 = vunpack.c.l.b16 %v325
      %v933 = vunpack.c.l.b16 %v326
      %v934 = vunpack.c.l.b16 %v327
      %v935 = vunpack.c.l.b16 %v328
      %v936 = vunpack.c.l.b16 %v329
      %v937 = vunpack.c.l.b16 %v330
      %v938 = vunpack.c.l.b16 %v331
      %v939 = vunpack.c.l.b16 %v332
      %v940 = vunpack.c.l.b16 %v333
      %v941 = vunpack.c.l.b16 %v334
      %v942 = vunpack.c.l.b16 %v335
      %v943 = vunpack.c.l.b16 %v336
      %v944 = vunpack.c.l.b16 %v337
      %v945 = vunpack.c.l.b16 %v338
      %v946 = vunpack.c.l.b16 %v339
      %v947 = vunpack.c.l.b16 %v340
      %v948 = vunpack.c.l.b16 %v341
      %v949 = vunpack.c.l.b16 %v342
      %v950 = vunpack.c.l.b16 %v343
      %v951 = vunpack.c.l.b16 %v344
      %v952 = vunpack.c.l.b16 %v345
      %v953 = vunpack.c.l.b16 %v346
      %v954 = vunpack.c.l.b16 %v347
      %v955 = vunpack.c.l.b16 %v348
      %v956 = vunpack.c.l.b16 %v349
      %v957 = vunpack.c.l.b16 %v350
      %v958 = vunpack.c.l.b16 %v351
      %v959 = vunpack.c.l.b16 %v352
      %v960 = vunpack.c.l.b16 %v353
      %v961 = vunpack.c.l.b16 %v354
      %v962 = vunpack.c.l.b16 %v355
      %v963 = vunpack.c.l.b16 %v356
      %v964 = vunpack.c.l.b16 %v357
      %v965 = vunpack.c.l.b16 %v358
      %v966 = vunpack.c.l.b16 %v359
      %v967 = vunpack.c.l.b16 %v360
      %v968 = vunpack.c.l.b16 %v361
      %v969 = vunpack.c.l.b16 %v362
      %v970 = vunpack.c.l.b16 %v363
      %v971 = vunpack.c.l.b16 %v364
      %v972 = vunpack.c.l.b16 %v365
      %v973 = vunpack.c.l.b16 %v366
      %v974 = vunpack.c.l.b16 %v367
      %v975 = vunpack.c.l.b16 %v368
      %v976 = vunpack.c.l.b16 %v369
      %v977 = vunpack.c.l.b16 %v370
      %v978 = vunpack.c.l.b16 %v371
      %v979 = vunpack.c.l.b16 %v372
      %v980 = vunpack.c.l.b16 %v373
      %v981 = vunpack.c.l.b16 %v374
      %v982 = vunpack.c.l.b16 %v375
      %v983 = vunpack.c.l.b16 %v376
      %v984 = vunpack.c.l.b16 %v377
      %v985 = vunpack.c.l.b16 %v378
      %v986 = vunpack.c.l.b16 %v379
      %v987 = vunpack.c.l.b16 %v380
      %v988 = vunpack.c.l.b16 %v381
      %v989 = vunpack.c.l.b16 %v382
      %v990 = vunpack.c.l.b16 %v383
      %v991 = vunpack.c.l.b16 %v384
      %v992 = vunpack.c.l.b16 %v385
      %v993 = vunpack.c.l.b16 %v386
      %v994 = vunpack.c.l.b16 %v387
      %v995 = vunpack.c.l.b16 %v388
      %v996 = vunpack.c.l.b16 %v389
      %v997 = vunpack.c.l.b16 %v390
      %v998 = vunpack.c.l.b16 %v391
      %v999 = vunpack.c.l.b16 %v392
      %v1000 = vunpack.c.l.b16 %v393
      %v1001 = vunpack.c.l.b16 %v394
      %v1002 = vunpack.c.l.b16 %v395
      %v1003 = vunpack.c.l.b16 %v396
      %v1004 = vunpack.c.l.b16 %v397
      %v1005 = vunpack.c.l.b16 %v398
      %v1006 = vunpack.c.l.b16 %v399
      %v1007 = vunpack.c.l.b16 %v400
      %v1008 = vunpack.c.l.b16 %v401
      %v1009 = vunpack.c.l.b16 %v402
      %v1010 = vunpack.c.l.b16 %v403
      %v1011 = vunpack.c.l.b16 %v404
      %v1012 = vunpack.c.l.b16 %v405
      %v1013 = vunpack.c.l.b16 %v406
      %v1014 = vunpack.c.l.b16 %v407
      %v1015 = vunpack.c.l.b16 %v408
      %v1016 = vunpack.c.l.b16 %v409
      %v1017 = vunpack.c.l.b16 %v410
      %v1018 = vunpack.c.l.b16 %v411
      %v1019 = vunpack.c.l.b16 %v412
      %v1020 = vunpack.c.l.b16 %v413
      %v1021 = vunpack.c.l.b16 %v414
      %v1022 = vunpack.c.l.b16 %v415
      %v1023 = vunpack.c.l.b16 %v416
      %v1024 = vunpack.c.l.b16 %v417
      %v1025 = vunpack.c.l.b16 %v418
      %v1026 = vunpack.c.l.b16 %v419
      %v1027 = vunpack.c.l.b16 %v420
      %v1028 = vunpack.c.l.b16 %v421
      %v1029 = vunpack.c.l.b16 %v422
      %v1030 = vunpack.c.l.b16 %v423
      %v1031 = vunpack.c.l.b16 %v424
      %v1032 = vunpack.c.l.b16 %v425
      %v1033 = vunpack.c.l.b16 %v426
      %v1034 = vunpack.c.l.b16 %v427
      %v1035 = vunpack.c.l.b16 %v428
      %v1036 = vunpack.c.l.b16 %v429
      %v1037 = vpack.c.b16 %v782, %v781
      %v1038 = vpack.c.b16 %v784, %v783
      %v1039 = vpack.c.b16 %v786, %v785
      %v1040 = vpack.c.b16 %v788, %v787
      %v1041 = vpack.c.b16 %v790, %v789
      %v1042 = vpack.c.b16 %v792, %v791
      %v1043 = vpack.c.b16 %v794, %v793
      %v1044 = vpack.c.b16 %v796, %v795
      %v1045 = vpack.c.b16 %v798, %v797
      %v1046 = vpack.c.b16 %v800, %v799
      %v1047 = vpack.c.b16 %v802, %v801
      %v1048 = vpack.c.b16 %v804, %v803
      %v1049 = vpack.c.b16 %v806, %v805
      %v1050 = vpack.c.b16 %v808, %v807
      %v1051 = vpack.c.b16 %v810, %v809
      %v1052 = vpack.c.b16 %v812, %v811
      %v1053 = vpack.c.b16 %v814, %v813
      %v1054 = vpack.c.b16 %v816, %v815
      %v1055 = vpack.c.b16 %v818, %v817
      %v1056 = vpack.c.b16 %v820, %v819
      %v1057 = vpack.c.b16 %v822, %v821
      %v1058 = vpack.c.b16 %v824, %v823
      %v1059 = vpack.c.b16 %v826, %v825
      %v1060 = vpack.c.b16 %v828, %v827
      %v1061 = vpack.c.b16 %v830, %v829
      %v1062 = vpack.c.b16 %v832, %v831
      %v1063 = vpack.c.b16 %v834, %v833
      %v1064 = vpack.c.b16 %v836, %v835
      %v1065 = vpack.c.b16 %v838, %v837
      %v1066 = vpack.c.b16 %v840, %v839
      %v1067 = vpack.c.b16 %v842, %v841
      %v1068 = vpack.c.b16 %v844, %v843
      %v1069 = vpack.c.b16 %v846, %v845
      %v1070 = vpack.c.b16 %v848, %v847
      %v1071 = vpack.c.b16 %v850, %v849
      %v1072 = vpack.c.b16 %v852, %v851
      %v1073 = vpack.c.b16 %v854, %v853
      %v1074 = vpack.c.b16 %v856, %v855
      %v1075 = vpack.c.b16 %v858, %v857
      %v1076 = vpack.c.b16 %v860, %v859
      %v1077 = vpack.c.b16 %v862, %v861
      %v1078 = vpack.c.b16 %v864, %v863
      %v1079 = vpack.c.b16 %v866, %v865
      %v1080 = vpack.c.b16 %v868, %v867
      %v1081 = vpack.c.b16 %v870, %v869
      %v1082 = vpack.c.b16 %v872, %v871
      %v1083 = vpack.c.b16 %v874, %v873
      %v1084 = vpack.c.b16 %v876, %v875
      %v1085 = vpack.c.b16 %v878, %v877
      %v1086 = vpack.c.b16 %v880, %v879
      %v1087 = vpack.c.b16 %v882, %v881
      %v1088 = vpack.c.b16 %v884, %v883
      %v1089 = vpack.c.b16 %v886, %v885
      %v1090 = vpack.c.b16 %v888, %v887
      %v1091 = vpack.c.b16 %v890, %v889
      %v1092 = vpack.c.b16 %v892, %v891
      %v1093 = vpack.c.b16 %v894, %v893
      %v1094 = vpack.c.b16 %v896, %v895
      %v1095 = vpack.c.b16 %v898, %v897
      %v1096 = vpack.c.b16 %v900, %v899
      %v1097 = vpack.c.b16 %v902, %v901
      %v1098 = vpack.c.b16 %v904, %v903
      %v1099 = vpack.c.b16 %v906, %v905
      %v1100 = vpack.c.b16 %v908, %v907
      %v1101 = vpack.c.b16 %v910, %v909
      %v1102 = vpack.c.b16 %v912, %v911
      %v1103 = vpack.c.b16 %v914, %v913
      %v1104 = vpack.c.b16 %v916, %v915
      %v1105 = vpack.c.b16 %v918, %v917
      %v1106 = vpack.c.b16 %v920, %v919
      %v1107 = vpack.c.b16 %v922, %v921
      %v1108 = vpack.c.b16 %v924, %v923
      %v1109 = vpack.c.b16 %v926, %v925
      %v1110 = vpack.c.b16 %v928, %v927
      %v1111 = vpack.c.b16 %v930, %v929
      %v1112 = vpack.c.b16 %v932, %v931
      %v1113 = vpack.c.b16 %v934, %v933
      %v1114 = vpack.c.b16 %v936, %v935
      %v1115 = vpack.c.b16 %v938, %v937
      %v1116 = vpack.c.b16 %v940, %v939
      %v1117 = vpack.c.b16 %v942, %v941
      %v1118 = vpack.c.b16 %v944, %v943
      %v1119 = vpack.c.b16 %v946, %v945
      %v1120 = vpack.c.b16 %v948, %v947
      %v1121 = vpack.c.b16 %v950, %v949
      %v1122 = vpack.c.b16 %v952, %v951
      %v1123 = vpack.c.b16 %v954, %v953
      %v1124 = vpack.c.b16 %v956, %v955
      %v1125 = vpack.c.b16 %v958, %v957
      %v1126 = vpack.c.b16 %v960, %v959
      %v1127 = vpack.c.b16 %v962, %v961
      %v1128 = vpack.c.b16 %v964, %v963
      %v1129 = vpack.c.b16 %v966, %v965
      %v1130 = vpack.c.b16 %v968, %v967
      %v1131 = vpack.c.b16 %v970, %v969
      %v1132 = vpack.c.b16 %v972, %v971
      %v1133 = vpack.c.b16 %v974, %v973
      %v1134 = vpack.c.b16 %v976, %v975
      %v1135 = vpack.c.b16 %v978, %v977
      %v1136 = vpack.c.b16 %v980, %v979
      %v1137 = vpack.c.b16 %v982, %v981
      %v1138 = vpack.c.b16 %v984, %v983
      %v1139 = vpack.c.b16 %v986, %v985
      %v1140 = vpack.c.b16 %v988, %v987
      %v1141 = vpack.c.b16 %v990, %v989
      %v1142 = vpack.c.b16 %v992, %v991
      %v1143 = vpack.c.b16 %v994, %v993
      %v1144 = vpack.c.b16 %v996, %v995
      %v1145 = vpack.c.b16 %v998, %v997
      %v1146 = vpack.c.b16 %v1000, %v999
      %v1147 = vpack.c.b16 %v1002, %v1001
      %v1148 = vpack.c.b16 %v1004, %v1003
      %v1149 = vpack.c.b16 %v1006, %v1005
      %v1150 = vpack.c.b16 %v1008, %v1007
      %v1151 = vpack.c.b16 %v1010, %v1009
      %v1152 = vpack.c.b16 %v1012, %v1011
      %v1153 = vpack.c.b16 %v1014, %v1013
      %v1154 = vpack.c.b16 %v1016, %v1015
      %v1155 = vpack.c.b16 %v1018, %v1017
      %v1156 = vpack.c.b16 %v1020, %v1019
      %v1157 = vpack.c.b16 %v1022, %v1021
      %v1158 = vpack.c.b16 %v1024, %v1023
      %v1159 = vpack.c.b16 %v1026, %v1025
      %v1160 = vpack.c.b16 %v1028, %v1027
      %v1161 = vpack.c.b16 %v1030, %v1029
      %v1162 = vpack.c.b16 %v1032, %v1031
      %v1163 = vpack.c.b16 %v1034, %v1033
      %v1164 = vpack.c.b16 %v1036, %v1035
      %1293 = vmatprep.subr.bf16.mxu0 0
      %1294 = vmatpush1.bf16.msra.mxu0 %v1037
      %1295 = vmatprep.subr.bf16.mxu0 0
      %1296 = vmatpush1.bf16.msra.mxu0 %v1038
      %1297 = vmatprep.subr.bf16.mxu0 0
      %1298 = vmatpush1.bf16.msra.mxu0 %v1039
      %1299 = vmatprep.subr.bf16.mxu0 0
      %1300 = vmatpush1.bf16.msra.mxu0 %v1040
      %1301 = vmatprep.subr.bf16.mxu0 0
      %1302 = vmatpush1.bf16.msra.mxu0 %v1041
      %1303 = vmatprep.subr.bf16.mxu0 0
      %1304 = vmatpush1.bf16.msra.mxu0 %v1042
      %1305 = vmatprep.subr.bf16.mxu0 0
      %1306 = vmatpush1.bf16.msra.mxu0 %v1043
      %1307 = vmatprep.subr.bf16.mxu0 0
      %1308 = vmatpush1.bf16.msra.mxu0 %v1044
      %1309 = vmatprep.subr.bf16.mxu0 0
      %1310 = vmatpush1.bf16.msra.mxu0 %v1045
      %1311 = vmatprep.subr.bf16.mxu0 0
      %1312 = vmatpush1.bf16.msra.mxu0 %v1046
      %1313 = vmatprep.subr.bf16.mxu0 0
      %1314 = vmatpush1.bf16.msra.mxu0 %v1047
      %1315 = vmatprep.subr.bf16.mxu0 0
      %1316 = vmatpush1.bf16.msra.mxu0 %v1048
      %1317 = vmatprep.subr.bf16.mxu0 0
      %1318 = vmatpush1.bf16.msra.mxu0 %v1049
      %1319 = vmatprep.subr.bf16.mxu0 0
      %1320 = vmatpush1.bf16.msra.mxu0 %v1050
      %1321 = vmatprep.subr.bf16.mxu0 0
      %1322 = vmatpush1.bf16.msra.mxu0 %v1051
      %1323 = vmatprep.subr.bf16.mxu0 0
      %1324 = vmatpush1.bf16.msra.mxu0 %v1052
      %1325 = vmatprep.mubr.bf16.mxu0 %v456
      %1326 = vmatmul.mubr.bf16.gmra.mrb[0].mxu0 %v448
      %v1327 = vpop.f32.mrb[0].mxu0
      %v1328 = vadd.f32 %v435, %v1327
      %v1329 = vpop.f32.mrb[0].mxu0
      %v1330 = vpop.f32.mrb[0].mxu0
      %v1331 = vpop.f32.mrb[0].mxu0
      %1332 = vdwg.mxu0
      %1333 = vmatprep.subr.bf16.mxu0 0
      %1334 = vmatpush1.bf16.msra.mxu0 %v1053
      %1335 = vmatprep.subr.bf16.mxu0 0
      %1336 = vmatpush1.bf16.msra.mxu0 %v1054
      %1337 = vmatprep.subr.bf16.mxu0 0
      %1338 = vmatpush1.bf16.msra.mxu0 %v1055
      %1339 = vmatprep.subr.bf16.mxu0 0
      %1340 = vmatpush1.bf16.msra.mxu0 %v1056
      %1341 = vmatprep.subr.bf16.mxu0 0
      %1342 = vmatpush1.bf16.msra.mxu0 %v1057
      %1343 = vmatprep.subr.bf16.mxu0 0
      %1344 = vmatpush1.bf16.msra.mxu0 %v1058
      %1345 = vmatprep.subr.bf16.mxu0 0
      %1346 = vmatpush1.bf16.msra.mxu0 %v1059
      %1347 = vmatprep.subr.bf16.mxu0 0
      %1348 = vmatpush1.bf16.msra.mxu0 %v1060
      %1349 = vmatprep.subr.bf16.mxu0 0
      %1350 = vmatpush1.bf16.msra.mxu0 %v1061
      %1351 = vmatprep.subr.bf16.mxu0 0
      %1352 = vmatpush1.bf16.msra.mxu0 %v1062
      %1353 = vmatprep.subr.bf16.mxu0 0
      %1354 = vmatpush1.bf16.msra.mxu0 %v1063
      %1355 = vmatprep.subr.bf16.mxu0 0
      %1356 = vmatpush1.bf16.msra.mxu0 %v1064
      %1357 = vmatprep.subr.bf16.mxu0 0
      %1358 = vmatpush1.bf16.msra.mxu0 %v1065
      %1359 = vmatprep.subr.bf16.mxu0 0
      %1360 = vmatpush1.bf16.msra.mxu0 %v1066
      %1361 = vmatprep.subr.bf16.mxu0 0
      %1362 = vmatpush1.bf16.msra.mxu0 %v1067
      %1363 = vmatprep.subr.bf16.mxu0 0
      %1364 = vmatpush1.bf16.msra.mxu0 %v1068
      %1365 = vmatprep.mubr.bf16.mxu0 %v457
      %1366 = vmatmul.mubr.bf16.gmra.mrb[0].mxu0 %v455
      %v1367 = vpop.f32.mrb[0].mxu0
      %v1368 = vadd.f32 %v1328, %v1367
      %v1369 = vpop.f32.mrb[0].mxu0
      %v1370 = vpop.f32.mrb[0].mxu0
      %v1371 = vpop.f32.mrb[0].mxu0
      %1372 = vdwg.mxu0
      %1373 = vmatprep.subr.bf16.mxu0 0
      %1374 = vmatpush1.bf16.msra.mxu0 %v1069
      %1375 = vmatprep.subr.bf16.mxu0 0
      %1376 = vmatpush1.bf16.msra.mxu0 %v1070
      %1377 = vmatprep.subr.bf16.mxu0 0
      %1378 = vmatpush1.bf16.msra.mxu0 %v1071
      %1379 = vmatprep.subr.bf16.mxu0 0
      %1380 = vmatpush1.bf16.msra.mxu0 %v1072
      %1381 = vmatprep.subr.bf16.mxu0 0
      %1382 = vmatpush1.bf16.msra.mxu0 %v1073
      %1383 = vmatprep.subr.bf16.mxu0 0
      %1384 = vmatpush1.bf16.msra.mxu0 %v1074
      %1385 = vmatprep.subr.bf16.mxu0 0
      %1386 = vmatpush1.bf16.msra.mxu0 %v1075
      %1387 = vmatprep.subr.bf16.mxu0 0
      %1388 = vmatpush1.bf16.msra.mxu0 %v1076
      %1389 = vmatprep.subr.bf16.mxu0 0
      %1390 = vmatpush1.bf16.msra.mxu0 %v1077
      %1391 = vmatprep.subr.bf16.mxu0 0
      %1392 = vmatpush1.bf16.msra.mxu0 %v1078
      %1393 = vmatprep.subr.bf16.mxu0 0
      %1394 = vmatpush1.bf16.msra.mxu0 %v1079
      %1395 = vmatprep.subr.bf16.mxu0 0
      %1396 = vmatpush1.bf16.msra.mxu0 %v1080
      %1397 = vmatprep.subr.bf16.mxu0 0
      %1398 = vmatpush1.bf16.msra.mxu0 %v1081
      %1399 = vmatprep.subr.bf16.mxu0 0
      %1400 = vmatpush1.bf16.msra.mxu0 %v1082
      %1401 = vmatprep.subr.bf16.mxu0 0
      %1402 = vmatpush1.bf16.msra.mxu0 %v1083
      %1403 = vmatprep.subr.bf16.mxu0 0
      %1404 = vmatpush1.bf16.msra.mxu0 %v1084
      %1405 = vmatprep.mubr.bf16.mxu0 %v473
      %1406 = vmatmul.mubr.bf16.gmra.mrb[0].mxu0 %v465
      %v1407 = vpop.f32.mrb[0].mxu0
      %v1408 = vadd.f32 %v1368, %v1407
      %v1409 = vpop.f32.mrb[0].mxu0
      %v1410 = vpop.f32.mrb[0].mxu0
      %v1411 = vpop.f32.mrb[0].mxu0
      %1412 = vdwg.mxu0
      %1413 = vmatprep.subr.bf16.mxu0 0
      %1414 = vmatpush1.bf16.msra.mxu0 %v1085
      %1415 = vmatprep.subr.bf16.mxu0 0
      %1416 = vmatpush1.bf16.msra.mxu0 %v1086
      %1417 = vmatprep.subr.bf16.mxu0 0
      %1418 = vmatpush1.bf16.msra.mxu0 %v1087
      %1419 = vmatprep.subr.bf16.mxu0 0
      %1420 = vmatpush1.bf16.msra.mxu0 %v1088
      %1421 = vmatprep.subr.bf16.mxu0 0
      %1422 = vmatpush1.bf16.msra.mxu0 %v1089
      %1423 = vmatprep.subr.bf16.mxu0 0
      %1424 = vmatpush1.bf16.msra.mxu0 %v1090
      %1425 = vmatprep.subr.bf16.mxu0 0
      %1426 = vmatpush1.bf16.msra.mxu0 %v1091
      %1427 = vmatprep.subr.bf16.mxu0 0
      %1428 = vmatpush1.bf16.msra.mxu0 %v1092
      %1429 = vmatprep.subr.bf16.mxu0 0
      %1430 = vmatpush1.bf16.msra.mxu0 %v1093
      %1431 = vmatprep.subr.bf16.mxu0 0
      %1432 = vmatpush1.bf16.msra.mxu0 %v1094
      %1433 = vmatprep.subr.bf16.mxu0 0
      %1434 = vmatpush1.bf16.msra.mxu0 %v1095
      %1435 = vmatprep.subr.bf16.mxu0 0
      %1436 = vmatpush1.bf16.msra.mxu0 %v1096
      %1437 = vmatprep.subr.bf16.mxu0 0
      %1438 = vmatpush1.bf16.msra.mxu0 %v1097
      %1439 = vmatprep.subr.bf16.mxu0 0
      %1440 = vmatpush1.bf16.msra.mxu0 %v1098
      %1441 = vmatprep.subr.bf16.mxu0 0
      %1442 = vmatpush1.bf16.msra.mxu0 %v1099
      %1443 = vmatprep.subr.bf16.mxu0 0
      %1444 = vmatpush1.bf16.msra.mxu0 %v1100
      %1445 = vmatprep.mubr.bf16.mxu0 %v474
      %1446 = vmatmul.mubr.bf16.gmra.mrb[0].mxu0 %v472
      %v1447 = vpop.f32.mrb[0].mxu0
      %v1448 = vadd.f32 %v1408, %v1447
      %v1449 = vpop.f32.mrb[0].mxu0
      %v1450 = vpop.f32.mrb[0].mxu0
      %v1451 = vpop.f32.mrb[0].mxu0
      %1452 = vdwg.mxu0
      %1453 = vmatprep.subr.bf16.mxu0 0
      %1454 = vmatpush1.bf16.msra.mxu0 %v1101
      %1455 = vmatprep.subr.bf16.mxu0 0
      %1456 = vmatpush1.bf16.msra.mxu0 %v1102
      %1457 = vmatprep.subr.bf16.mxu0 0
      %1458 = vmatpush1.bf16.msra.mxu0 %v1103
      %1459 = vmatprep.subr.bf16.mxu0 0
      %1460 = vmatpush1.bf16.msra.mxu0 %v1104
      %1461 = vmatprep.subr.bf16.mxu0 0
      %1462 = vmatpush1.bf16.msra.mxu0 %v1105
      %1463 = vmatprep.subr.bf16.mxu0 0
      %1464 = vmatpush1.bf16.msra.mxu0 %v1106
      %1465 = vmatprep.subr.bf16.mxu0 0
      %1466 = vmatpush1.bf16.msra.mxu0 %v1107
      %1467 = vmatprep.subr.bf16.mxu0 0
      %1468 = vmatpush1.bf16.msra.mxu0 %v1108
      %1469 = vmatprep.subr.bf16.mxu0 0
      %1470 = vmatpush1.bf16.msra.mxu0 %v1109
      %1471 = vmatprep.subr.bf16.mxu0 0
      %1472 = vmatpush1.bf16.msra.mxu0 %v1110
      %1473 = vmatprep.subr.bf16.mxu0 0
      %1474 = vmatpush1.bf16.msra.mxu0 %v1111
      %1475 = vmatprep.subr.bf16.mxu0 0
      %1476 = vmatpush1.bf16.msra.mxu0 %v1112
      %1477 = vmatprep.subr.bf16.mxu0 0
      %1478 = vmatpush1.bf16.msra.mxu0 %v1113
      %1479 = vmatprep.subr.bf16.mxu0 0
      %1480 = vmatpush1.bf16.msra.mxu0 %v1114
      %1481 = vmatprep.subr.bf16.mxu0 0
      %1482 = vmatpush1.bf16.msra.mxu0 %v1115
      %1483 = vmatprep.subr.bf16.mxu0 0
      %1484 = vmatpush1.bf16.msra.mxu0 %v1116
      %1485 = vmatprep.mubr.bf16.mxu0 %v490
      %1486 = vmatmul.mubr.bf16.gmra.mrb[0].mxu0 %v482
      %v1487 = vpop.f32.mrb[0].mxu0
      %v1488 = vadd.f32 %v1448, %v1487
      %v1489 = vpop.f32.mrb[0].mxu0
      %v1490 = vpop.f32.mrb[0].mxu0
      %v1491 = vpop.f32.mrb[0].mxu0
      %1492 = vdwg.mxu0
      %1493 = vmatprep.subr.bf16.mxu0 0
      %1494 = vmatpush1.bf16.msra.mxu0 %v1117
      %1495 = vmatprep.subr.bf16.mxu0 0
      %1496 = vmatpush1.bf16.msra.mxu0 %v1118
      %1497 = vmatprep.subr.bf16.mxu0 0
      %1498 = vmatpush1.bf16.msra.mxu0 %v1119
      %1499 = vmatprep.subr.bf16.mxu0 0
      %1500 = vmatpush1.bf16.msra.mxu0 %v1120
      %1501 = vmatprep.subr.bf16.mxu0 0
      %1502 = vmatpush1.bf16.msra.mxu0 %v1121
      %1503 = vmatprep.subr.bf16.mxu0 0
      %1504 = vmatpush1.bf16.msra.mxu0 %v1122
      %1505 = vmatprep.subr.bf16.mxu0 0
      %1506 = vmatpush1.bf16.msra.mxu0 %v1123
      %1507 = vmatprep.subr.bf16.mxu0 0
      %1508 = vmatpush1.bf16.msra.mxu0 %v1124
      %1509 = vmatprep.subr.bf16.mxu0 0
      %1510 = vmatpush1.bf16.msra.mxu0 %v1125
      %1511 = vmatprep.subr.bf16.mxu0 0
      %1512 = vmatpush1.bf16.msra.mxu0 %v1126
      %1513 = vmatprep.subr.bf16.mxu0 0
      %1514 = vmatpush1.bf16.msra.mxu0 %v1127
      %1515 = vmatprep.subr.bf16.mxu0 0
      %1516 = vmatpush1.bf16.msra.mxu0 %v1128
      %1517 = vmatprep.subr.bf16.mxu0 0
      %1518 = vmatpush1.bf16.msra.mxu0 %v1129
      %1519 = vmatprep.subr.bf16.mxu0 0
      %1520 = vmatpush1.bf16.msra.mxu0 %v1130
      %1521 = vmatprep.subr.bf16.mxu0 0
      %1522 = vmatpush1.bf16.msra.mxu0 %v1131
      %1523 = vmatprep.subr.bf16.mxu0 0
      %1524 = vmatpush1.bf16.msra.mxu0 %v1132
      %1525 = vmatprep.mubr.bf16.mxu0 %v491
      %1526 = vmatmul.mubr.bf16.gmra.mrb[0].mxu0 %v489
      %v1527 = vpop.f32.mrb[0].mxu0
      %v1528 = vadd.f32 %v1488, %v1527
      %v1529 = vpop.f32.mrb[0].mxu0
      %v1530 = vpop.f32.mrb[0].mxu0
      %v1531 = vpop.f32.mrb[0].mxu0
      %1532 = vdwg.mxu0
      %1533 = vmatprep.subr.bf16.mxu0 0
      %1534 = vmatpush1.bf16.msra.mxu0 %v1133
      %1535 = vmatprep.subr.bf16.mxu0 0
      %1536 = vmatpush1.bf16.msra.mxu0 %v1134
      %1537 = vmatprep.subr.bf16.mxu0 0
      %1538 = vmatpush1.bf16.msra.mxu0 %v1135
      %1539 = vmatprep.subr.bf16.mxu0 0
      %1540 = vmatpush1.bf16.msra.mxu0 %v1136
      %1541 = vmatprep.subr.bf16.mxu0 0
      %1542 = vmatpush1.bf16.msra.mxu0 %v1137
      %1543 = vmatprep.subr.bf16.mxu0 0
      %1544 = vmatpush1.bf16.msra.mxu0 %v1138
      %1545 = vmatprep.subr.bf16.mxu0 0
      %1546 = vmatpush1.bf16.msra.mxu0 %v1139
      %1547 = vmatprep.subr.bf16.mxu0 0
      %1548 = vmatpush1.bf16.msra.mxu0 %v1140
      %1549 = vmatprep.subr.bf16.mxu0 0
      %1550 = vmatpush1.bf16.msra.mxu0 %v1141
      %1551 = vmatprep.subr.bf16.mxu0 0
      %1552 = vmatpush1.bf16.msra.mxu0 %v1142
      %1553 = vmatprep.subr.bf16.mxu0 0
      %1554 = vmatpush1.bf16.msra.mxu0 %v1143
      %1555 = vmatprep.subr.bf16.mxu0 0
      %1556 = vmatpush1.bf16.msra.mxu0 %v1144
      %1557 = vmatprep.subr.bf16.mxu0 0
      %1558 = vmatpush1.bf16.msra.mxu0 %v1145
      %1559 = vmatprep.subr.bf16.mxu0 0
      %1560 = vmatpush1.bf16.msra.mxu0 %v1146
      %1561 = vmatprep.subr.bf16.mxu0 0
      %1562 = vmatpush1.bf16.msra.mxu0 %v1147
      %1563 = vmatprep.subr.bf16.mxu0 0
      %1564 = vmatpush1.bf16.msra.mxu0 %v1148
      %1565 = vmatprep.mubr.bf16.mxu0 %v507
      %1566 = vmatmul.mubr.bf16.gmra.mrb[0].mxu0 %v499
      %v1567 = vpop.f32.mrb[0].mxu0
      %v1568 = vadd.f32 %v1528, %v1567
      %v1569 = vpop.f32.mrb[0].mxu0
      %v1570 = vpop.f32.mrb[0].mxu0
      %v1571 = vpop.f32.mrb[0].mxu0
      %1572 = vdwg.mxu0
      %1573 = vmatprep.subr.bf16.mxu0 0
      %1574 = vmatpush1.bf16.msra.mxu0 %v1149
      %1575 = vmatprep.subr.bf16.mxu0 0
      %1576 = vmatpush1.bf16.msra.mxu0 %v1150
      %1577 = vmatprep.subr.bf16.mxu0 0
      %1578 = vmatpush1.bf16.msra.mxu0 %v1151
      %1579 = vmatprep.subr.bf16.mxu0 0
      %1580 = vmatpush1.bf16.msra.mxu0 %v1152
      %1581 = vmatprep.subr.bf16.mxu0 0
      %1582 = vmatpush1.bf16.msra.mxu0 %v1153
      %1583 = vmatprep.subr.bf16.mxu0 0
      %1584 = vmatpush1.bf16.msra.mxu0 %v1154
      %1585 = vmatprep.subr.bf16.mxu0 0
      %1586 = vmatpush1.bf16.msra.mxu0 %v1155
      %1587 = vmatprep.subr.bf16.mxu0 0
      %1588 = vmatpush1.bf16.msra.mxu0 %v1156
      %1589 = vmatprep.subr.bf16.mxu0 0
      %1590 = vmatpush1.bf16.msra.mxu0 %v1157
      %1591 = vmatprep.subr.bf16.mxu0 0
      %1592 = vmatpush1.bf16.msra.mxu0 %v1158
      %1593 = vmatprep.subr.bf16.mxu0 0
      %1594 = vmatpush1.bf16.msra.mxu0 %v1159
      %1595 = vmatprep.subr.bf16.mxu0 0
      %1596 = vmatpush1.bf16.msra.mxu0 %v1160
      %1597 = vmatprep.subr.bf16.mxu0 0
      %1598 = vmatpush1.bf16.msra.mxu0 %v1161
      %1599 = vmatprep.subr.bf16.mxu0 0
      %1600 = vmatpush1.bf16.msra.mxu0 %v1162
      %1601 = vmatprep.subr.bf16.mxu0 0
      %1602 = vmatpush1.bf16.msra.mxu0 %v1163
      %1603 = vmatprep.subr.bf16.mxu0 0
      %1604 = vmatpush1.bf16.msra.mxu0 %v1164
      %1605 = vmatprep.mubr.bf16.mxu0 %v508
      %1606 = vmatmul.mubr.bf16.gmra.mrb[0].mxu0 %v506
      %v1607 = vpop.f32.mrb[0].mxu0
      %v1608 = vadd.f32 %v1568, %v1607
      %v1609 = vpop.f32.mrb[0].mxu0
      %v1610 = vpop.f32.mrb[0].mxu0
      %v1611 = vpop.f32.mrb[0].mxu0
      %1612 = vdwg.mxu0
      %1613 = vst [vmem:[%s168] sm:$0xf] %v1608
      %p1614 = scmp.lt.s32.totalorder %s14, 1
      %s1615 = scalar_select %p1614, %s14, 1
      %s1616 = smul.addr %s1615, 4
      %s1617 = scalar_lea.vmem %s3, %s1616
      // Predicated region
      $region33: #{define_d_forward.9} parent=31 // pred_check
        %p1618 = pneg %p100
      $region34: #{define_d_forward.9} parent=31 // pred_check_branch
        %1620 = sbr.rel (%p1618) target = $region36
      $region35: #{define_d_forward.9} parent=31 // pred_region
        _
      $region36: #{define_d_forward.9} parent=31 // pred_fallthru
        _
    $region32: #{define_d_forward.9} parent=5 // pred_fallthru
      _
    %p1621 = scmp.le.s32.totalorder 2, %s9
    // Predicated region
    $region37: #{define_d_forward.9} parent=5 // pred_check
      %p1622 = pneg %p1621
    $region38: #{define_d_forward.9} parent=5 // pred_check_branch
      %1624 = sbr.rel (%p1622) target = $region40
    $region39: #{define_d_forward.9} parent=5 // pred_region
      %s1625 = ssub.s32 %s9, 2
      // Predicated region
      $region41: #{define_d_forward.9} parent=39 // pred_check
        %p1626 = pneg %p106
      $region42: #{define_d_forward.9} parent=39 // pred_check_branch
        %1628 = sbr.rel (%p1626) target = $region44
      $region43: #{define_d_forward.9} parent=39 // pred_region
        %p1629 = scmp.lt.s32.totalorder %s15, 1
        %s1630 = scalar_select %p1629, %s15, 1
        %s1631 = smul.addr %s1630, 4
        %s1632 = scalar_lea.vmem %s3, %s1631
      $region44: #{define_d_forward.9} parent=39 // pred_fallthru
        _
    $region40: #{define_d_forward.9} parent=5 // pred_fallthru
      _
  $region6: #{define_d_forward.9} parent=0 // loop_footer
    %s13 = sadd.s32 1, %s9
  $region7: #{define_d_forward.9} parent=0 // loop_footer_branch
    %8 = sbr.rel target = $region3
  $region8: #{define_d_forward.9} parent=0 // loop_exit
    _

</llo_original>
